<compile_context>
chip_gen: v7x
topology: tpu7x:2x2x1
jax: 0.10.0
libtpu: 0.0.40
codegen_flags: <defaults>
</compile_context>

<pallas_src>
import functools

import jax
import jax.numpy as jnp
from jax.experimental import pallas as pl
from jax.experimental.pallas import tpu as pltpu

EPS = 1e-5          # PyTorch BatchNorm2d default eps

H = W = 16          # input spatial size
HP = WP = H + 2     # spatial size incl. the 1-pixel zero-pad ring kept in the layout
IMG = HP * WP       # lanes per image in the padded-flat layout (324)
C1, C2 = 16, 32     # channel widths
MARGIN = 128        # zero lanes on each side of the scratch (needs >= 2*WP + 2 = 38)

_TAPS = tuple((dy, dx) for dy in (-1, 0, 1) for dx in (-1, 0, 1))


# ----------------------------------------------------------------------------
# Fused kernel: one grid step = `batch` images end-to-end
# ----------------------------------------------------------------------------
def _resnet_kernel(x_ref, mask_ref,
                   w1, b1, w11, b11, w12, b12, w21, b21, w22, b22,
                   wsc, bsc, wfc, bfc,
                   out_ref,
                   sa, sb, *, batch, lanes):
    base = MARGIN
    mint = mask_ref[0:1, :]      # (1, lanes): 1.0 inside the 16x16 image, 0.0 on pads
    mpool = mask_ref[1:2, :]     # (1, lanes): 1/64 at the 8x8 stride-2 output lanes

    # Tap slices run up to 2*WP+2 lanes past the image block; keep the margins zero.
    # (Done every step so the kernel is correct even when the grid is core-sharded.)
    sa[:, 0:MARGIN] = jnp.zeros((C1, MARGIN), jnp.float32)
    sa[:, base + lanes:base + lanes + MARGIN] = jnp.zeros((C1, MARGIN), jnp.float32)
    sb[:, 0:MARGIN] = jnp.zeros((C2, MARGIN), jnp.float32)
    sb[:, base + lanes:base + lanes + MARGIN] = jnp.zeros((C2, MARGIN), jnp.float32)

    def conv3x3(src, wt, bias, cin, step):
        # src : padded-flat scratch (cin, MARGIN + lanes + MARGIN) with zero pads.
        # wt  : (cout, 9*cin) weights with BN scale folded in.
        # step: lane distance of one spatial hop (1 = full-res grid, 2 = the
        #       stride-2-spaced 8x8 grid used by layer2's second conv).
        acc = None
        for t, (dy, dx) in enumerate(_TAPS):
            off = (dy * WP + dx) * step
            xt = src[:, base + off:base + off + lanes]              # (cin, lanes)
            d = jnp.dot(wt[:, t * cin:(t + 1) * cin], xt,
                        preferred_element_type=jnp.float32)
            acc = d if acc is None else acc + d
        return acc + bias

    # ---- stem: relu(bn1(conv1(x))); Cin=1 im2col built in the wrapper ----
    h0 = jnp.maximum(
        jnp.dot(w1[...], x_ref[0], preferred_element_type=jnp.float32) + b1[...],
        0.0) * mint                                                 # (16, lanes)
    sa[:, base:base + lanes] = h0

    # ---- layer1 BasicBlock (16 -> 16, stride 1, identity shortcut) ----
    t1 = jnp.maximum(conv3x3(sa, w11[...], b11[...], C1, 1), 0.0) * mint
    sa[:, base:base + lanes] = t1
    t2 = conv3x3(sa, w12[...], b12[...], C1, 1)
    h1 = jnp.maximum(t2 + h0, 0.0) * mint                           # (16, lanes)
    sa[:, base:base + lanes] = h1

    # ---- layer2 BasicBlock (16 -> 32, stride 2, 1x1-conv shortcut) ----
    # The stride-2 conv is evaluated densely; its valid outputs live at the even
    # (i, j) lanes and the unused odd lanes are never read downstream.
    g = jnp.maximum(conv3x3(sa, w21[...], b21[...], C1, 1), 0.0) * mint   # (32, lanes)
    sb[:, base:base + lanes] = g
    sc = jnp.dot(wsc[...], h1, preferred_element_type=jnp.float32) + bsc[...]
    v = conv3x3(sb, w22[...], b22[...], C2, 2)
    out2 = jnp.maximum(v + sc, 0.0)                                  # (32, lanes)

    # ---- head: per-image global average pool + fc + log_softmax ----
    masked = out2 * mpool
    for b in range(batch):
        col = jnp.sum(masked[:, b * IMG:(b + 1) * IMG], axis=1, keepdims=True)  # (32,1)
        logit = jnp.dot(wfc[...], col, preferred_element_type=jnp.float32) + bfc[...]
        zmax = jnp.max(logit, axis=0, keepdims=True)
        z = logit - zmax
        lse = jnp.log(jnp.sum(jnp.exp(z), axis=0, keepdims=True))
        out_ref[0, :, b:b + 1] = (z - lse).astype(out_ref.dtype)


# ----------------------------------------------------------------------------
# Wrapper: one pallas_call for the whole network
# ----------------------------------------------------------------------------
@jax.jit
def shallow_resnet_forward(params, x_nchw):
    x = x_nchw[:, 0].astype(jnp.float32)                  # (N, 16, 16)
    n = x.shape[0]
    ncls = params["fc_w"].shape[-1]

    batch = max(1, min(8, n // 2))                        # images per grid step
    groups = -(-n // batch)
    npad = groups * batch - n
    if npad:
        x = jnp.concatenate([x, jnp.zeros((npad, H, W), jnp.float32)], axis=0)
    lanes = batch * IMG

    # Stem im2col (Cin = 1): 9 shifted copies of the zero-padded image, flattened
    # into the padded-flat (b, r, c) lane layout used throughout the kernel.
    canvas = jnp.pad(x.reshape(groups, batch, H, W),
                     ((0, 0), (0, 0), (2, 2), (2, 2)))    # (G, B, 20, 20)
    taps = jnp.stack(
        [canvas[:, :, 1 + dy:1 + dy + HP, 1 + dx:1 + dx + WP] for dy, dx in _TAPS],
        axis=1)                                           # (G, 9, B, 18, 18)
    x_taps = taps.reshape(groups, 9, lanes)

    # Interior / pooling masks in the same flat layout (per-image pattern tiled).
    rr = jnp.arange(HP)
    inside = (rr >= 1) & (rr <= H)
    m_int = (inside[:, None] & inside[None, :]).astype(jnp.float32)
    odd = (rr % 2 == 1) & (rr <= H - 1)
    m_pool = (odd[:, None] & odd[None, :]).astype(jnp.float32) / 64.0
    masks = jnp.stack([jnp.tile(m_int.reshape(-1), batch),
                       jnp.tile(m_pool.reshape(-1), batch)], axis=0)   # (2, lanes)

    def fold_conv(w9, bn):
        s, b = bn                                         # folded eval-mode BN
        cout = w9.shape[-1]
        wt = jnp.transpose(w9 * s.reshape(1, 1, cout), (2, 0, 1)).reshape(cout, -1)
        return wt, b.reshape(cout, 1)

    w1, b1 = fold_conv(params["conv1_w"], params["bn1"])
    w11, b11 = fold_conv(params["l1_conv1_w"], params["l1_bn1"])
    w12, b12 = fold_conv(params["l1_conv2_w"], params["l1_bn2"])
    w21, b21 = fold_conv(params["l2_conv1_w"], params["l2_bn1"])
    w22, b22 = fold_conv(params["l2_conv2_w"], params["l2_bn2"])
    ssc, bsc0 = params["l2_sc_bn"]
    wsc = (params["l2_sc_w"] * ssc.reshape(1, C2)).T       # (32, 16), scale folded
    bsc = bsc0.reshape(C2, 1)
    wfc = params["fc_w"].T                                 # (K, 32)
    bfc = params["fc_b"].reshape(ncls, 1)

    args = [x_taps, masks,
            w1, b1, w11, b11, w12, b12, w21, b21, w22, b22,
            wsc, bsc, wfc, bfc]

    in_specs = [pl.BlockSpec((1, 9, lanes), lambda g: (g, 0, 0))]
    in_specs += [pl.BlockSpec(a.shape, lambda g, nd=a.ndim: (0,) * nd)
                 for a in args[1:]]

    out = pl.pallas_call(
        functools.partial(_resnet_kernel, batch=batch, lanes=lanes),
        out_shape=jax.ShapeDtypeStruct((groups, ncls, batch), jnp.float32),
        grid=(groups,),
        in_specs=in_specs,
        out_specs=pl.BlockSpec((1, ncls, batch), lambda g: (g, 0, 0)),
        scratch_shapes=[
            pltpu.VMEM((C1, lanes + 2 * MARGIN), jnp.float32),   # layer0/1 activations
            pltpu.VMEM((C2, lanes + 2 * MARGIN), jnp.float32),   # layer2 activations
        ],
        compiler_params=pltpu.CompilerParams(dimension_semantics=("parallel",)),
    )(*args)

    return jnp.transpose(out, (0, 2, 1)).reshape(groups * batch, ncls)[:n]


# ----------------------------------------------------------------------------
# Parameters (deterministic, synthetic) - BatchNorm folded into scale/bias
# ----------------------------------------------------------------------------
def init_params(key, num_classes=2):
    keys = iter(jax.random.split(key, 32))

    def conv_w(cin, cout):
        return 0.1 * jax.random.normal(next(keys), (9, cin, cout), jnp.float32)

    def bn(c):
        gamma = 1.0 + 0.1 * jax.random.normal(next(keys), (c,), jnp.float32)
        beta = 0.1 * jax.random.normal(next(keys), (c,), jnp.float32)
        mean = 0.1 * jax.random.normal(next(keys), (c,), jnp.float32)
        var = 0.5 + 0.5 * jax.random.uniform(next(keys), (c,), jnp.float32)
        scale = gamma / jnp.sqrt(var + EPS)
        bias = beta - mean * scale
        return scale.reshape(1, c), bias.reshape(1, c)

    p = {}
    p["conv1_w"], p["bn1"] = conv_w(1, 16), bn(16)
    # layer1: BasicBlock(16 -> 16, stride 1)
    p["l1_conv1_w"], p["l1_bn1"] = conv_w(16, 16), bn(16)
    p["l1_conv2_w"], p["l1_bn2"] = conv_w(16, 16), bn(16)
    # layer2: BasicBlock(16 -> 32, stride 2) with 1x1 shortcut
    p["l2_conv1_w"], p["l2_bn1"] = conv_w(16, 32), bn(32)
    p["l2_conv2_w"], p["l2_bn2"] = conv_w(32, 32), bn(32)
    p["l2_sc_w"] = 0.1 * jax.random.normal(next(keys), (16, 32), jnp.float32)
    p["l2_sc_bn"] = bn(32)
    p["fc_w"] = 0.1 * jax.random.normal(next(keys), (32, num_classes), jnp.float32)
    p["fc_b"] = 0.1 * jax.random.normal(next(keys), (1, num_classes), jnp.float32)
    return p


# ----------------------------------------------------------------------------
# Pure-JAX reference (for verification only)
# ----------------------------------------------------------------------------
def reference_forward(params, x_nchw):
    x = jnp.transpose(x_nchw, (0, 2, 3, 1)).astype(jnp.float32)

    def conv(x, w9, stride):
        cin, cout = w9.shape[1], w9.shape[2]
        w = w9.reshape(3, 3, cin, cout)
        return jax.lax.conv_general_dilated(
            x, w, window_strides=(stride, stride), padding=((1, 1), (1, 1)),
            dimension_numbers=("NHWC", "HWIO", "NHWC"))

    def bn(x, sb):
        s, b = sb
        return x * s.reshape(1, 1, 1, -1) + b.reshape(1, 1, 1, -1)

    h = jax.nn.relu(bn(conv(x, params["conv1_w"], 1), params["bn1"]))
    h1 = jax.nn.relu(bn(conv(h, params["l1_conv1_w"], 1), params["l1_bn1"]))
    h = jax.nn.relu(bn(conv(h1, params["l1_conv2_w"], 1), params["l1_bn2"]) + h)
    g = jax.nn.relu(bn(conv(h, params["l2_conv1_w"], 2), params["l2_bn1"]))
    sc = bn(jnp.einsum("nhwc,cd->nhwd", h[:, ::2, ::2, :], params["l2_sc_w"]),
            params["l2_sc_bn"])
    out = jax.nn.relu(bn(conv(g, params["l2_conv2_w"], 1), params["l2_bn2"]) + sc)
    pooled = jnp.mean(out, axis=(1, 2))
    logits = pooled @ params["fc_w"] + params["fc_b"]
    return jax.nn.log_softmax(logits, axis=-1)


if __name__ == "__main__":
    key = jax.random.PRNGKey(0)
    pkey, xkey = jax.random.split(key)
    params = init_params(pkey, num_classes=2)
    x = jax.random.normal(xkey, (2, 1, 16, 16), jnp.float32)   # NCHW, like PyTorch

    out = shallow_resnet_forward(params, x)
    out = jax.block_until_ready(out)

    ref = reference_forward(params, x)
    assert out.shape == (2, 2), out.shape
    assert jnp.allclose(out, ref, atol=2e-3, rtol=2e-3), (out, ref)
    print("KERNEL_OK")
</pallas_src>

<mosaic_0001>
module attributes {stable_mosaic.version = 11 : i64} {
  func.func @_resnet_kernel(%arg0: i32, %arg1: memref<1x9x324xf32, #tpu.memory_space<vmem>>, %arg2: memref<2x324xf32, #tpu.memory_space<vmem>>, %arg3: memref<16x9xf32, #tpu.memory_space<vmem>>, %arg4: memref<16x1xf32, #tpu.memory_space<vmem>>, %arg5: memref<16x144xf32, #tpu.memory_space<vmem>>, %arg6: memref<16x1xf32, #tpu.memory_space<vmem>>, %arg7: memref<16x144xf32, #tpu.memory_space<vmem>>, %arg8: memref<16x1xf32, #tpu.memory_space<vmem>>, %arg9: memref<32x144xf32, #tpu.memory_space<vmem>>, %arg10: memref<32x1xf32, #tpu.memory_space<vmem>>, %arg11: memref<32x288xf32, #tpu.memory_space<vmem>>, %arg12: memref<32x1xf32, #tpu.memory_space<vmem>>, %arg13: memref<32x16xf32, #tpu.memory_space<vmem>>, %arg14: memref<32x1xf32, #tpu.memory_space<vmem>>, %arg15: memref<2x32xf32, #tpu.memory_space<vmem>>, %arg16: memref<2x1xf32, #tpu.memory_space<vmem>>, %arg17: memref<1x2x1xf32, #tpu.memory_space<vmem>>, %arg18: memref<16x580xf32, #tpu.memory_space<vmem>>, %arg19: memref<32x580xf32, #tpu.memory_space<vmem>>) attributes {dimension_semantics = [#tpu.dimension_semantics<parallel>], iteration_bounds = array<i64: 2>, scalar_prefetch = 0 : i64, scratch_operands = 2 : i64, tpu.core_type = #tpu.core_type<tc>, window_params = [{transform_indices = @transform_0, window_bounds = array<i64: 1, 9, 324>}, {pipeline_mode = #tpu.pipeline_mode<synchronous>, transform_indices = @transform_1, window_bounds = array<i64: 2, 324>}, {pipeline_mode = #tpu.pipeline_mode<synchronous>, transform_indices = @transform_2, window_bounds = array<i64: 16, 9>}, {pipeline_mode = #tpu.pipeline_mode<synchronous>, transform_indices = @transform_3, window_bounds = array<i64: 16, 1>}, {pipeline_mode = #tpu.pipeline_mode<synchronous>, transform_indices = @transform_4, window_bounds = array<i64: 16, 144>}, {pipeline_mode = #tpu.pipeline_mode<synchronous>, transform_indices = @transform_5, window_bounds = array<i64: 16, 1>}, {pipeline_mode = #tpu.pipeline_mode<synchronous>, transform_indices = @transform_6, window_bounds = array<i64: 16, 144>}, {pipeline_mode = #tpu.pipeline_mode<synchronous>, transform_indices = @transform_7, window_bounds = array<i64: 16, 1>}, {pipeline_mode = #tpu.pipeline_mode<synchronous>, transform_indices = @transform_8, window_bounds = array<i64: 32, 144>}, {pipeline_mode = #tpu.pipeline_mode<synchronous>, transform_indices = @transform_9, window_bounds = array<i64: 32, 1>}, {pipeline_mode = #tpu.pipeline_mode<synchronous>, transform_indices = @transform_10, window_bounds = array<i64: 32, 288>}, {pipeline_mode = #tpu.pipeline_mode<synchronous>, transform_indices = @transform_11, window_bounds = array<i64: 32, 1>}, {pipeline_mode = #tpu.pipeline_mode<synchronous>, transform_indices = @transform_12, window_bounds = array<i64: 32, 16>}, {pipeline_mode = #tpu.pipeline_mode<synchronous>, transform_indices = @transform_13, window_bounds = array<i64: 32, 1>}, {pipeline_mode = #tpu.pipeline_mode<synchronous>, transform_indices = @transform_14, window_bounds = array<i64: 2, 32>}, {pipeline_mode = #tpu.pipeline_mode<synchronous>, transform_indices = @transform_15, window_bounds = array<i64: 2, 1>}, {transform_indices = @transform_16, window_bounds = array<i64: 1, 2, 1>}]} {
    %c0 = arith.constant 0 : index
    %c0_0 = arith.constant 0 : index
    %0 = vector.load %arg2[%c0, %c0_0] : memref<2x324xf32, #tpu.memory_space<vmem>>, vector<1x324xf32>
    %c1 = arith.constant 1 : index
    %c0_1 = arith.constant 0 : index
    %1 = vector.load %arg2[%c1, %c0_1] : memref<2x324xf32, #tpu.memory_space<vmem>>, vector<1x324xf32>
    %cst = arith.constant 0.000000e+00 : f32
    %2 = vector.broadcast %cst : f32 to vector<16x128xf32>
    %c0_2 = arith.constant 0 : index
    %c0_3 = arith.constant 0 : index
    %3 = vector.load %arg18[%c0_2, %c0_3] : memref<16x580xf32, #tpu.memory_space<vmem>>, vector<16x128xf32>
    tpu.vector_store %arg18[%c0_2, %c0_3], %2 {strides = array<i32>} : memref<16x580xf32, #tpu.memory_space<vmem>>, vector<16x128xf32>,
    %cst_4 = arith.constant 0.000000e+00 : f32
    %4 = vector.broadcast %cst_4 : f32 to vector<16x128xf32>
    %c0_5 = arith.constant 0 : index
    %c452 = arith.constant 452 : index
    %5 = vector.load %arg18[%c0_5, %c452] : memref<16x580xf32, #tpu.memory_space<vmem>>, vector<16x128xf32>
    tpu.vector_store %arg18[%c0_5, %c452], %4 {strides = array<i32>} : memref<16x580xf32, #tpu.memory_space<vmem>>, vector<16x128xf32>,
    %cst_6 = arith.constant 0.000000e+00 : f32
    %6 = vector.broadcast %cst_6 : f32 to vector<32x128xf32>
    %c0_7 = arith.constant 0 : index
    %c0_8 = arith.constant 0 : index
    %7 = vector.load %arg19[%c0_7, %c0_8] : memref<32x580xf32, #tpu.memory_space<vmem>>, vector<32x128xf32>
    tpu.vector_store %arg19[%c0_7, %c0_8], %6 {strides = array<i32>} : memref<32x580xf32, #tpu.memory_space<vmem>>, vector<32x128xf32>,
    %cst_9 = arith.constant 0.000000e+00 : f32
    %8 = vector.broadcast %cst_9 : f32 to vector<32x128xf32>
    %c0_10 = arith.constant 0 : index
    %c452_11 = arith.constant 452 : index
    %9 = vector.load %arg19[%c0_10, %c452_11] : memref<32x580xf32, #tpu.memory_space<vmem>>, vector<32x128xf32>
    tpu.vector_store %arg19[%c0_10, %c452_11], %8 {strides = array<i32>} : memref<32x580xf32, #tpu.memory_space<vmem>>, vector<32x128xf32>,
    %c0_12 = arith.constant 0 : index
    %c0_13 = arith.constant 0 : index
    %10 = vector.load %arg3[%c0_12, %c0_13] : memref<16x9xf32, #tpu.memory_space<vmem>>, vector<16x9xf32>
    %c0_14 = arith.constant 0 : index
    %c0_15 = arith.constant 0 : index
    %c0_16 = arith.constant 0 : index
    %11 = vector.load %arg1[%c0_14, %c0_15, %c0_16] : memref<1x9x324xf32, #tpu.memory_space<vmem>>, vector<1x9x324xf32>
    %12 = vector.shape_cast %11 : vector<1x9x324xf32> to vector<9x324xf32>
    %cst_17 = arith.constant dense<0.000000e+00> : vector<16x324xf32>
    %13 = tpu.matmul %10, %12, %cst_17 {dimension_numbers = #tpu.dot_dimension_numbers<[1], [0], [0], [1], [0, 0, 1, 1], [], []>} : vector<16x9xf32>, vector<9x324xf32>, vector<16x324xf32> -> vector<16x324xf32>
    %c0_18 = arith.constant 0 : index
    %c0_19 = arith.constant 0 : index
    %14 = vector.load %arg4[%c0_18, %c0_19] : memref<16x1xf32, #tpu.memory_space<vmem>>, vector<16x1xf32>
    %15 = vector.broadcast %14 : vector<16x1xf32> to vector<16x324xf32>
    %16 = arith.addf %13, %15 : vector<16x324xf32>
    %cst_20 = arith.constant 0.000000e+00 : f32
    %17 = vector.broadcast %cst_20 : f32 to vector<16x324xf32>
    %18 = arith.maximumf %16, %17 : vector<16x324xf32>
    %19 = vector.broadcast %0 : vector<1x324xf32> to vector<16x324xf32>
    %20 = arith.mulf %18, %19 : vector<16x324xf32>
    %c0_21 = arith.constant 0 : index
    %c128 = arith.constant 128 : index
    %21 = vector.load %arg18[%c0_21, %c128] : memref<16x580xf32, #tpu.memory_space<vmem>>, vector<16x324xf32>
    tpu.vector_store %arg18[%c0_21, %c128], %20 {strides = array<i32>} : memref<16x580xf32, #tpu.memory_space<vmem>>, vector<16x324xf32>,
    %c0_22 = arith.constant 0 : index
    %c0_23 = arith.constant 0 : index
    %22 = vector.load %arg5[%c0_22, %c0_23] : memref<16x144xf32, #tpu.memory_space<vmem>>, vector<16x144xf32>
    %c0_24 = arith.constant 0 : index
    %c0_25 = arith.constant 0 : index
    %23 = vector.load %arg6[%c0_24, %c0_25] : memref<16x1xf32, #tpu.memory_space<vmem>>, vector<16x1xf32>
    %c0_26 = arith.constant 0 : index
    %c109 = arith.constant 109 : index
    %24 = vector.load %arg18[%c0_26, %c109] : memref<16x580xf32, #tpu.memory_space<vmem>>, vector<16x324xf32>
    %25 = vector.extract_strided_slice %22 {offsets = [0, 0], sizes = [16, 16], strides = [1, 1]} : vector<16x144xf32> to vector<16x16xf32>
    %cst_27 = arith.constant dense<0.000000e+00> : vector<16x324xf32>
    %26 = tpu.matmul %25, %24, %cst_27 {dimension_numbers = #tpu.dot_dimension_numbers<[1], [0], [0], [1], [0, 0, 1, 1], [], []>} : vector<16x16xf32>, vector<16x324xf32>, vector<16x324xf32> -> vector<16x324xf32>
    %c0_28 = arith.constant 0 : index
    %c110 = arith.constant 110 : index
    %27 = vector.load %arg18[%c0_28, %c110] : memref<16x580xf32, #tpu.memory_space<vmem>>, vector<16x324xf32>
    %28 = vector.extract_strided_slice %22 {offsets = [0, 16], sizes = [16, 16], strides = [1, 1]} : vector<16x144xf32> to vector<16x16xf32>
    %cst_29 = arith.constant dense<0.000000e+00> : vector<16x324xf32>
    %29 = tpu.matmul %28, %27, %cst_29 {dimension_numbers = #tpu.dot_dimension_numbers<[1], [0], [0], [1], [0, 0, 1, 1], [], []>} : vector<16x16xf32>, vector<16x324xf32>, vector<16x324xf32> -> vector<16x324xf32>
    %30 = arith.addf %26, %29 : vector<16x324xf32>
    %c0_30 = arith.constant 0 : index
    %c111 = arith.constant 111 : index
    %31 = vector.load %arg18[%c0_30, %c111] : memref<16x580xf32, #tpu.memory_space<vmem>>, vector<16x324xf32>
    %32 = vector.extract_strided_slice %22 {offsets = [0, 32], sizes = [16, 16], strides = [1, 1]} : vector<16x144xf32> to vector<16x16xf32>
    %cst_31 = arith.constant dense<0.000000e+00> : vector<16x324xf32>
    %33 = tpu.matmul %32, %31, %cst_31 {dimension_numbers = #tpu.dot_dimension_numbers<[1], [0], [0], [1], [0, 0, 1, 1], [], []>} : vector<16x16xf32>, vector<16x324xf32>, vector<16x324xf32> -> vector<16x324xf32>
    %34 = arith.addf %30, %33 : vector<16x324xf32>
    %c0_32 = arith.constant 0 : index
    %c127 = arith.constant 127 : index
    %35 = vector.load %arg18[%c0_32, %c127] : memref<16x580xf32, #tpu.memory_space<vmem>>, vector<16x324xf32>
    %36 = vector.extract_strided_slice %22 {offsets = [0, 48], sizes = [16, 16], strides = [1, 1]} : vector<16x144xf32> to vector<16x16xf32>
    %cst_33 = arith.constant dense<0.000000e+00> : vector<16x324xf32>
    %37 = tpu.matmul %36, %35, %cst_33 {dimension_numbers = #tpu.dot_dimension_numbers<[1], [0], [0], [1], [0, 0, 1, 1], [], []>} : vector<16x16xf32>, vector<16x324xf32>, vector<16x324xf32> -> vector<16x324xf32>
    %38 = arith.addf %34, %37 : vector<16x324xf32>
    %c0_34 = arith.constant 0 : index
    %c128_35 = arith.constant 128 : index
    %39 = vector.load %arg18[%c0_34, %c128_35] : memref<16x580xf32, #tpu.memory_space<vmem>>, vector<16x324xf32>
    %40 = vector.extract_strided_slice %22 {offsets = [0, 64], sizes = [16, 16], strides = [1, 1]} : vector<16x144xf32> to vector<16x16xf32>
    %cst_36 = arith.constant dense<0.000000e+00> : vector<16x324xf32>
    %41 = tpu.matmul %40, %39, %cst_36 {dimension_numbers = #tpu.dot_dimension_numbers<[1], [0], [0], [1], [0, 0, 1, 1], [], []>} : vector<16x16xf32>, vector<16x324xf32>, vector<16x324xf32> -> vector<16x324xf32>
    %42 = arith.addf %38, %41 : vector<16x324xf32>
    %c0_37 = arith.constant 0 : index
    %c129 = arith.constant 129 : index
    %43 = vector.load %arg18[%c0_37, %c129] : memref<16x580xf32, #tpu.memory_space<vmem>>, vector<16x324xf32>
    %44 = vector.extract_strided_slice %22 {offsets = [0, 80], sizes = [16, 16], strides = [1, 1]} : vector<16x144xf32> to vector<16x16xf32>
    %cst_38 = arith.constant dense<0.000000e+00> : vector<16x324xf32>
    %45 = tpu.matmul %44, %43, %cst_38 {dimension_numbers = #tpu.dot_dimension_numbers<[1], [0], [0], [1], [0, 0, 1, 1], [], []>} : vector<16x16xf32>, vector<16x324xf32>, vector<16x324xf32> -> vector<16x324xf32>
    %46 = arith.addf %42, %45 : vector<16x324xf32>
    %c0_39 = arith.constant 0 : index
    %c145 = arith.constant 145 : index
    %47 = vector.load %arg18[%c0_39, %c145] : memref<16x580xf32, #tpu.memory_space<vmem>>, vector<16x324xf32>
    %48 = vector.extract_strided_slice %22 {offsets = [0, 96], sizes = [16, 16], strides = [1, 1]} : vector<16x144xf32> to vector<16x16xf32>
    %cst_40 = arith.constant dense<0.000000e+00> : vector<16x324xf32>
    %49 = tpu.matmul %48, %47, %cst_40 {dimension_numbers = #tpu.dot_dimension_numbers<[1], [0], [0], [1], [0, 0, 1, 1], [], []>} : vector<16x16xf32>, vector<16x324xf32>, vector<16x324xf32> -> vector<16x324xf32>
    %50 = arith.addf %46, %49 : vector<16x324xf32>
    %c0_41 = arith.constant 0 : index
    %c146 = arith.constant 146 : index
    %51 = vector.load %arg18[%c0_41, %c146] : memref<16x580xf32, #tpu.memory_space<vmem>>, vector<16x324xf32>
    %52 = vector.extract_strided_slice %22 {offsets = [0, 112], sizes = [16, 16], strides = [1, 1]} : vector<16x144xf32> to vector<16x16xf32>
    %cst_42 = arith.constant dense<0.000000e+00> : vector<16x324xf32>
    %53 = tpu.matmul %52, %51, %cst_42 {dimension_numbers = #tpu.dot_dimension_numbers<[1], [0], [0], [1], [0, 0, 1, 1], [], []>} : vector<16x16xf32>, vector<16x324xf32>, vector<16x324xf32> -> vector<16x324xf32>
    %54 = arith.addf %50, %53 : vector<16x324xf32>
    %c0_43 = arith.constant 0 : index
    %c147 = arith.constant 147 : index
    %55 = vector.load %arg18[%c0_43, %c147] : memref<16x580xf32, #tpu.memory_space<vmem>>, vector<16x324xf32>
    %56 = vector.extract_strided_slice %22 {offsets = [0, 128], sizes = [16, 16], strides = [1, 1]} : vector<16x144xf32> to vector<16x16xf32>
    %cst_44 = arith.constant dense<0.000000e+00> : vector<16x324xf32>
    %57 = tpu.matmul %56, %55, %cst_44 {dimension_numbers = #tpu.dot_dimension_numbers<[1], [0], [0], [1], [0, 0, 1, 1], [], []>} : vector<16x16xf32>, vector<16x324xf32>, vector<16x324xf32> -> vector<16x324xf32>
    %58 = arith.addf %54, %57 : vector<16x324xf32>
    %59 = vector.broadcast %23 : vector<16x1xf32> to vector<16x324xf32>
    %60 = arith.addf %58, %59 : vector<16x324xf32>
    %cst_45 = arith.constant 0.000000e+00 : f32
    %61 = vector.broadcast %cst_45 : f32 to vector<16x324xf32>
    %62 = arith.maximumf %60, %61 : vector<16x324xf32>
    %63 = vector.broadcast %0 : vector<1x324xf32> to vector<16x324xf32>
    %64 = arith.mulf %62, %63 : vector<16x324xf32>
    %c0_46 = arith.constant 0 : index
    %c128_47 = arith.constant 128 : index
    %65 = vector.load %arg18[%c0_46, %c128_47] : memref<16x580xf32, #tpu.memory_space<vmem>>, vector<16x324xf32>
    tpu.vector_store %arg18[%c0_46, %c128_47], %64 {strides = array<i32>} : memref<16x580xf32, #tpu.memory_space<vmem>>, vector<16x324xf32>,
    %c0_48 = arith.constant 0 : index
    %c0_49 = arith.constant 0 : index
    %66 = vector.load %arg7[%c0_48, %c0_49] : memref<16x144xf32, #tpu.memory_space<vmem>>, vector<16x144xf32>
    %c0_50 = arith.constant 0 : index
    %c0_51 = arith.constant 0 : index
    %67 = vector.load %arg8[%c0_50, %c0_51] : memref<16x1xf32, #tpu.memory_space<vmem>>, vector<16x1xf32>
    %c0_52 = arith.constant 0 : index
    %c109_53 = arith.constant 109 : index
    %68 = vector.load %arg18[%c0_52, %c109_53] : memref<16x580xf32, #tpu.memory_space<vmem>>, vector<16x324xf32>
    %69 = vector.extract_strided_slice %66 {offsets = [0, 0], sizes = [16, 16], strides = [1, 1]} : vector<16x144xf32> to vector<16x16xf32>
    %cst_54 = arith.constant dense<0.000000e+00> : vector<16x324xf32>
    %70 = tpu.matmul %69, %68, %cst_54 {dimension_numbers = #tpu.dot_dimension_numbers<[1], [0], [0], [1], [0, 0, 1, 1], [], []>} : vector<16x16xf32>, vector<16x324xf32>, vector<16x324xf32> -> vector<16x324xf32>
    %c0_55 = arith.constant 0 : index
    %c110_56 = arith.constant 110 : index
    %71 = vector.load %arg18[%c0_55, %c110_56] : memref<16x580xf32, #tpu.memory_space<vmem>>, vector<16x324xf32>
    %72 = vector.extract_strided_slice %66 {offsets = [0, 16], sizes = [16, 16], strides = [1, 1]} : vector<16x144xf32> to vector<16x16xf32>
    %cst_57 = arith.constant dense<0.000000e+00> : vector<16x324xf32>
    %73 = tpu.matmul %72, %71, %cst_57 {dimension_numbers = #tpu.dot_dimension_numbers<[1], [0], [0], [1], [0, 0, 1, 1], [], []>} : vector<16x16xf32>, vector<16x324xf32>, vector<16x324xf32> -> vector<16x324xf32>
    %74 = arith.addf %70, %73 : vector<16x324xf32>
    %c0_58 = arith.constant 0 : index
    %c111_59 = arith.constant 111 : index
    %75 = vector.load %arg18[%c0_58, %c111_59] : memref<16x580xf32, #tpu.memory_space<vmem>>, vector<16x324xf32>
    %76 = vector.extract_strided_slice %66 {offsets = [0, 32], sizes = [16, 16], strides = [1, 1]} : vector<16x144xf32> to vector<16x16xf32>
    %cst_60 = arith.constant dense<0.000000e+00> : vector<16x324xf32>
    %77 = tpu.matmul %76, %75, %cst_60 {dimension_numbers = #tpu.dot_dimension_numbers<[1], [0], [0], [1], [0, 0, 1, 1], [], []>} : vector<16x16xf32>, vector<16x324xf32>, vector<16x324xf32> -> vector<16x324xf32>
    %78 = arith.addf %74, %77 : vector<16x324xf32>
    %c0_61 = arith.constant 0 : index
    %c127_62 = arith.constant 127 : index
    %79 = vector.load %arg18[%c0_61, %c127_62] : memref<16x580xf32, #tpu.memory_space<vmem>>, vector<16x324xf32>
    %80 = vector.extract_strided_slice %66 {offsets = [0, 48], sizes = [16, 16], strides = [1, 1]} : vector<16x144xf32> to vector<16x16xf32>
    %cst_63 = arith.constant dense<0.000000e+00> : vector<16x324xf32>
    %81 = tpu.matmul %80, %79, %cst_63 {dimension_numbers = #tpu.dot_dimension_numbers<[1], [0], [0], [1], [0, 0, 1, 1], [], []>} : vector<16x16xf32>, vector<16x324xf32>, vector<16x324xf32> -> vector<16x324xf32>
    %82 = arith.addf %78, %81 : vector<16x324xf32>
    %c0_64 = arith.constant 0 : index
    %c128_65 = arith.constant 128 : index
    %83 = vector.load %arg18[%c0_64, %c128_65] : memref<16x580xf32, #tpu.memory_space<vmem>>, vector<16x324xf32>
    %84 = vector.extract_strided_slice %66 {offsets = [0, 64], sizes = [16, 16], strides = [1, 1]} : vector<16x144xf32> to vector<16x16xf32>
    %cst_66 = arith.constant dense<0.000000e+00> : vector<16x324xf32>
    %85 = tpu.matmul %84, %83, %cst_66 {dimension_numbers = #tpu.dot_dimension_numbers<[1], [0], [0], [1], [0, 0, 1, 1], [], []>} : vector<16x16xf32>, vector<16x324xf32>, vector<16x324xf32> -> vector<16x324xf32>
    %86 = arith.addf %82, %85 : vector<16x324xf32>
    %c0_67 = arith.constant 0 : index
    %c129_68 = arith.constant 129 : index
    %87 = vector.load %arg18[%c0_67, %c129_68] : memref<16x580xf32, #tpu.memory_space<vmem>>, vector<16x324xf32>
    %88 = vector.extract_strided_slice %66 {offsets = [0, 80], sizes = [16, 16], strides = [1, 1]} : vector<16x144xf32> to vector<16x16xf32>
    %cst_69 = arith.constant dense<0.000000e+00> : vector<16x324xf32>
    %89 = tpu.matmul %88, %87, %cst_69 {dimension_numbers = #tpu.dot_dimension_numbers<[1], [0], [0], [1], [0, 0, 1, 1], [], []>} : vector<16x16xf32>, vector<16x324xf32>, vector<16x324xf32> -> vector<16x324xf32>
    %90 = arith.addf %86, %89 : vector<16x324xf32>
    %c0_70 = arith.constant 0 : index
    %c145_71 = arith.constant 145 : index
    %91 = vector.load %arg18[%c0_70, %c145_71] : memref<16x580xf32, #tpu.memory_space<vmem>>, vector<16x324xf32>
    %92 = vector.extract_strided_slice %66 {offsets = [0, 96], sizes = [16, 16], strides = [1, 1]} : vector<16x144xf32> to vector<16x16xf32>
    %cst_72 = arith.constant dense<0.000000e+00> : vector<16x324xf32>
    %93 = tpu.matmul %92, %91, %cst_72 {dimension_numbers = #tpu.dot_dimension_numbers<[1], [0], [0], [1], [0, 0, 1, 1], [], []>} : vector<16x16xf32>, vector<16x324xf32>, vector<16x324xf32> -> vector<16x324xf32>
    %94 = arith.addf %90, %93 : vector<16x324xf32>
    %c0_73 = arith.constant 0 : index
    %c146_74 = arith.constant 146 : index
    %95 = vector.load %arg18[%c0_73, %c146_74] : memref<16x580xf32, #tpu.memory_space<vmem>>, vector<16x324xf32>
    %96 = vector.extract_strided_slice %66 {offsets = [0, 112], sizes = [16, 16], strides = [1, 1]} : vector<16x144xf32> to vector<16x16xf32>
    %cst_75 = arith.constant dense<0.000000e+00> : vector<16x324xf32>
    %97 = tpu.matmul %96, %95, %cst_75 {dimension_numbers = #tpu.dot_dimension_numbers<[1], [0], [0], [1], [0, 0, 1, 1], [], []>} : vector<16x16xf32>, vector<16x324xf32>, vector<16x324xf32> -> vector<16x324xf32>
    %98 = arith.addf %94, %97 : vector<16x324xf32>
    %c0_76 = arith.constant 0 : index
    %c147_77 = arith.constant 147 : index
    %99 = vector.load %arg18[%c0_76, %c147_77] : memref<16x580xf32, #tpu.memory_space<vmem>>, vector<16x324xf32>
    %100 = vector.extract_strided_slice %66 {offsets = [0, 128], sizes = [16, 16], strides = [1, 1]} : vector<16x144xf32> to vector<16x16xf32>
    %cst_78 = arith.constant dense<0.000000e+00> : vector<16x324xf32>
    %101 = tpu.matmul %100, %99, %cst_78 {dimension_numbers = #tpu.dot_dimension_numbers<[1], [0], [0], [1], [0, 0, 1, 1], [], []>} : vector<16x16xf32>, vector<16x324xf32>, vector<16x324xf32> -> vector<16x324xf32>
    %102 = arith.addf %98, %101 : vector<16x324xf32>
    %103 = vector.broadcast %67 : vector<16x1xf32> to vector<16x324xf32>
    %104 = arith.addf %102, %103 : vector<16x324xf32>
    %105 = arith.addf %104, %20 : vector<16x324xf32>
    %cst_79 = arith.constant 0.000000e+00 : f32
    %106 = vector.broadcast %cst_79 : f32 to vector<16x324xf32>
    %107 = arith.maximumf %105, %106 : vector<16x324xf32>
    %108 = vector.broadcast %0 : vector<1x324xf32> to vector<16x324xf32>
    %109 = arith.mulf %107, %108 : vector<16x324xf32>
    %c0_80 = arith.constant 0 : index
    %c128_81 = arith.constant 128 : index
    %110 = vector.load %arg18[%c0_80, %c128_81] : memref<16x580xf32, #tpu.memory_space<vmem>>, vector<16x324xf32>
    tpu.vector_store %arg18[%c0_80, %c128_81], %109 {strides = array<i32>} : memref<16x580xf32, #tpu.memory_space<vmem>>, vector<16x324xf32>,
    %c0_82 = arith.constant 0 : index
    %c0_83 = arith.constant 0 : index
    %111 = vector.load %arg9[%c0_82, %c0_83] : memref<32x144xf32, #tpu.memory_space<vmem>>, vector<32x144xf32>
    %c0_84 = arith.constant 0 : index
    %c0_85 = arith.constant 0 : index
    %112 = vector.load %arg10[%c0_84, %c0_85] : memref<32x1xf32, #tpu.memory_space<vmem>>, vector<32x1xf32>
    %c0_86 = arith.constant 0 : index
    %c109_87 = arith.constant 109 : index
    %113 = vector.load %arg18[%c0_86, %c109_87] : memref<16x580xf32, #tpu.memory_space<vmem>>, vector<16x324xf32>
    %114 = vector.extract_strided_slice %111 {offsets = [0, 0], sizes = [32, 16], strides = [1, 1]} : vector<32x144xf32> to vector<32x16xf32>
    %cst_88 = arith.constant dense<0.000000e+00> : vector<32x324xf32>
    %115 = tpu.matmul %114, %113, %cst_88 {dimension_numbers = #tpu.dot_dimension_numbers<[1], [0], [0], [1], [0, 0, 1, 1], [], []>} : vector<32x16xf32>, vector<16x324xf32>, vector<32x324xf32> -> vector<32x324xf32>
    %c0_89 = arith.constant 0 : index
    %c110_90 = arith.constant 110 : index
    %116 = vector.load %arg18[%c0_89, %c110_90] : memref<16x580xf32, #tpu.memory_space<vmem>>, vector<16x324xf32>
    %117 = vector.extract_strided_slice %111 {offsets = [0, 16], sizes = [32, 16], strides = [1, 1]} : vector<32x144xf32> to vector<32x16xf32>
    %cst_91 = arith.constant dense<0.000000e+00> : vector<32x324xf32>
    %118 = tpu.matmul %117, %116, %cst_91 {dimension_numbers = #tpu.dot_dimension_numbers<[1], [0], [0], [1], [0, 0, 1, 1], [], []>} : vector<32x16xf32>, vector<16x324xf32>, vector<32x324xf32> -> vector<32x324xf32>
    %119 = arith.addf %115, %118 : vector<32x324xf32>
    %c0_92 = arith.constant 0 : index
    %c111_93 = arith.constant 111 : index
    %120 = vector.load %arg18[%c0_92, %c111_93] : memref<16x580xf32, #tpu.memory_space<vmem>>, vector<16x324xf32>
    %121 = vector.extract_strided_slice %111 {offsets = [0, 32], sizes = [32, 16], strides = [1, 1]} : vector<32x144xf32> to vector<32x16xf32>
    %cst_94 = arith.constant dense<0.000000e+00> : vector<32x324xf32>
    %122 = tpu.matmul %121, %120, %cst_94 {dimension_numbers = #tpu.dot_dimension_numbers<[1], [0], [0], [1], [0, 0, 1, 1], [], []>} : vector<32x16xf32>, vector<16x324xf32>, vector<32x324xf32> -> vector<32x324xf32>
    %123 = arith.addf %119, %122 : vector<32x324xf32>
    %c0_95 = arith.constant 0 : index
    %c127_96 = arith.constant 127 : index
    %124 = vector.load %arg18[%c0_95, %c127_96] : memref<16x580xf32, #tpu.memory_space<vmem>>, vector<16x324xf32>
    %125 = vector.extract_strided_slice %111 {offsets = [0, 48], sizes = [32, 16], strides = [1, 1]} : vector<32x144xf32> to vector<32x16xf32>
    %cst_97 = arith.constant dense<0.000000e+00> : vector<32x324xf32>
    %126 = tpu.matmul %125, %124, %cst_97 {dimension_numbers = #tpu.dot_dimension_numbers<[1], [0], [0], [1], [0, 0, 1, 1], [], []>} : vector<32x16xf32>, vector<16x324xf32>, vector<32x324xf32> -> vector<32x324xf32>
    %127 = arith.addf %123, %126 : vector<32x324xf32>
    %c0_98 = arith.constant 0 : index
    %c128_99 = arith.constant 128 : index
    %128 = vector.load %arg18[%c0_98, %c128_99] : memref<16x580xf32, #tpu.memory_space<vmem>>, vector<16x324xf32>
    %129 = vector.extract_strided_slice %111 {offsets = [0, 64], sizes = [32, 16], strides = [1, 1]} : vector<32x144xf32> to vector<32x16xf32>
    %cst_100 = arith.constant dense<0.000000e+00> : vector<32x324xf32>
    %130 = tpu.matmul %129, %128, %cst_100 {dimension_numbers = #tpu.dot_dimension_numbers<[1], [0], [0], [1], [0, 0, 1, 1], [], []>} : vector<32x16xf32>, vector<16x324xf32>, vector<32x324xf32> -> vector<32x324xf32>
    %131 = arith.addf %127, %130 : vector<32x324xf32>
    %c0_101 = arith.constant 0 : index
    %c129_102 = arith.constant 129 : index
    %132 = vector.load %arg18[%c0_101, %c129_102] : memref<16x580xf32, #tpu.memory_space<vmem>>, vector<16x324xf32>
    %133 = vector.extract_strided_slice %111 {offsets = [0, 80], sizes = [32, 16], strides = [1, 1]} : vector<32x144xf32> to vector<32x16xf32>
    %cst_103 = arith.constant dense<0.000000e+00> : vector<32x324xf32>
    %134 = tpu.matmul %133, %132, %cst_103 {dimension_numbers = #tpu.dot_dimension_numbers<[1], [0], [0], [1], [0, 0, 1, 1], [], []>} : vector<32x16xf32>, vector<16x324xf32>, vector<32x324xf32> -> vector<32x324xf32>
    %135 = arith.addf %131, %134 : vector<32x324xf32>
    %c0_104 = arith.constant 0 : index
    %c145_105 = arith.constant 145 : index
    %136 = vector.load %arg18[%c0_104, %c145_105] : memref<16x580xf32, #tpu.memory_space<vmem>>, vector<16x324xf32>
    %137 = vector.extract_strided_slice %111 {offsets = [0, 96], sizes = [32, 16], strides = [1, 1]} : vector<32x144xf32> to vector<32x16xf32>
    %cst_106 = arith.constant dense<0.000000e+00> : vector<32x324xf32>
    %138 = tpu.matmul %137, %136, %cst_106 {dimension_numbers = #tpu.dot_dimension_numbers<[1], [0], [0], [1], [0, 0, 1, 1], [], []>} : vector<32x16xf32>, vector<16x324xf32>, vector<32x324xf32> -> vector<32x324xf32>
    %139 = arith.addf %135, %138 : vector<32x324xf32>
    %c0_107 = arith.constant 0 : index
    %c146_108 = arith.constant 146 : index
    %140 = vector.load %arg18[%c0_107, %c146_108] : memref<16x580xf32, #tpu.memory_space<vmem>>, vector<16x324xf32>
    %141 = vector.extract_strided_slice %111 {offsets = [0, 112], sizes = [32, 16], strides = [1, 1]} : vector<32x144xf32> to vector<32x16xf32>
    %cst_109 = arith.constant dense<0.000000e+00> : vector<32x324xf32>
    %142 = tpu.matmul %141, %140, %cst_109 {dimension_numbers = #tpu.dot_dimension_numbers<[1], [0], [0], [1], [0, 0, 1, 1], [], []>} : vector<32x16xf32>, vector<16x324xf32>, vector<32x324xf32> -> vector<32x324xf32>
    %143 = arith.addf %139, %142 : vector<32x324xf32>
    %c0_110 = arith.constant 0 : index
    %c147_111 = arith.constant 147 : index
    %144 = vector.load %arg18[%c0_110, %c147_111] : memref<16x580xf32, #tpu.memory_space<vmem>>, vector<16x324xf32>
    %145 = vector.extract_strided_slice %111 {offsets = [0, 128], sizes = [32, 16], strides = [1, 1]} : vector<32x144xf32> to vector<32x16xf32>
    %cst_112 = arith.constant dense<0.000000e+00> : vector<32x324xf32>
    %146 = tpu.matmul %145, %144, %cst_112 {dimension_numbers = #tpu.dot_dimension_numbers<[1], [0], [0], [1], [0, 0, 1, 1], [], []>} : vector<32x16xf32>, vector<16x324xf32>, vector<32x324xf32> -> vector<32x324xf32>
    %147 = arith.addf %143, %146 : vector<32x324xf32>
    %148 = vector.broadcast %112 : vector<32x1xf32> to vector<32x324xf32>
    %149 = arith.addf %147, %148 : vector<32x324xf32>
    %cst_113 = arith.constant 0.000000e+00 : f32
    %150 = vector.broadcast %cst_113 : f32 to vector<32x324xf32>
    %151 = arith.maximumf %149, %150 : vector<32x324xf32>
    %152 = vector.broadcast %0 : vector<1x324xf32> to vector<32x324xf32>
    %153 = arith.mulf %151, %152 : vector<32x324xf32>
    %c0_114 = arith.constant 0 : index
    %c128_115 = arith.constant 128 : index
    %154 = vector.load %arg19[%c0_114, %c128_115] : memref<32x580xf32, #tpu.memory_space<vmem>>, vector<32x324xf32>
    tpu.vector_store %arg19[%c0_114, %c128_115], %153 {strides = array<i32>} : memref<32x580xf32, #tpu.memory_space<vmem>>, vector<32x324xf32>,
    %c0_116 = arith.constant 0 : index
    %c0_117 = arith.constant 0 : index
    %155 = vector.load %arg13[%c0_116, %c0_117] : memref<32x16xf32, #tpu.memory_space<vmem>>, vector<32x16xf32>
    %cst_118 = arith.constant dense<0.000000e+00> : vector<32x324xf32>
    %156 = tpu.matmul %155, %109, %cst_118 {dimension_numbers = #tpu.dot_dimension_numbers<[1], [0], [0], [1], [0, 0, 1, 1], [], []>} : vector<32x16xf32>, vector<16x324xf32>, vector<32x324xf32> -> vector<32x324xf32>
    %c0_119 = arith.constant 0 : index
    %c0_120 = arith.constant 0 : index
    %157 = vector.load %arg14[%c0_119, %c0_120] : memref<32x1xf32, #tpu.memory_space<vmem>>, vector<32x1xf32>
    %158 = vector.broadcast %157 : vector<32x1xf32> to vector<32x324xf32>
    %159 = arith.addf %156, %158 : vector<32x324xf32>
    %c0_121 = arith.constant 0 : index
    %c0_122 = arith.constant 0 : index
    %160 = vector.load %arg11[%c0_121, %c0_122] : memref<32x288xf32, #tpu.memory_space<vmem>>, vector<32x288xf32>
    %c0_123 = arith.constant 0 : index
    %c0_124 = arith.constant 0 : index
    %161 = vector.load %arg12[%c0_123, %c0_124] : memref<32x1xf32, #tpu.memory_space<vmem>>, vector<32x1xf32>
    %c0_125 = arith.constant 0 : index
    %c90 = arith.constant 90 : index
    %162 = vector.load %arg19[%c0_125, %c90] : memref<32x580xf32, #tpu.memory_space<vmem>>, vector<32x324xf32>
    %163 = vector.extract_strided_slice %160 {offsets = [0, 0], sizes = [32, 32], strides = [1, 1]} : vector<32x288xf32> to vector<32x32xf32>
    %cst_126 = arith.constant dense<0.000000e+00> : vector<32x324xf32>
    %164 = tpu.matmul %163, %162, %cst_126 {dimension_numbers = #tpu.dot_dimension_numbers<[1], [0], [0], [1], [0, 0, 1, 1], [], []>} : vector<32x32xf32>, vector<32x324xf32>, vector<32x324xf32> -> vector<32x324xf32>
    %c0_127 = arith.constant 0 : index
    %c92 = arith.constant 92 : index
    %165 = vector.load %arg19[%c0_127, %c92] : memref<32x580xf32, #tpu.memory_space<vmem>>, vector<32x324xf32>
    %166 = vector.extract_strided_slice %160 {offsets = [0, 32], sizes = [32, 32], strides = [1, 1]} : vector<32x288xf32> to vector<32x32xf32>
    %cst_128 = arith.constant dense<0.000000e+00> : vector<32x324xf32>
    %167 = tpu.matmul %166, %165, %cst_128 {dimension_numbers = #tpu.dot_dimension_numbers<[1], [0], [0], [1], [0, 0, 1, 1], [], []>} : vector<32x32xf32>, vector<32x324xf32>, vector<32x324xf32> -> vector<32x324xf32>
    %168 = arith.addf %164, %167 : vector<32x324xf32>
    %c0_129 = arith.constant 0 : index
    %c94 = arith.constant 94 : index
    %169 = vector.load %arg19[%c0_129, %c94] : memref<32x580xf32, #tpu.memory_space<vmem>>, vector<32x324xf32>
    %170 = vector.extract_strided_slice %160 {offsets = [0, 64], sizes = [32, 32], strides = [1, 1]} : vector<32x288xf32> to vector<32x32xf32>
    %cst_130 = arith.constant dense<0.000000e+00> : vector<32x324xf32>
    %171 = tpu.matmul %170, %169, %cst_130 {dimension_numbers = #tpu.dot_dimension_numbers<[1], [0], [0], [1], [0, 0, 1, 1], [], []>} : vector<32x32xf32>, vector<32x324xf32>, vector<32x324xf32> -> vector<32x324xf32>
    %172 = arith.addf %168, %171 : vector<32x324xf32>
    %c0_131 = arith.constant 0 : index
    %c126 = arith.constant 126 : index
    %173 = vector.load %arg19[%c0_131, %c126] : memref<32x580xf32, #tpu.memory_space<vmem>>, vector<32x324xf32>
    %174 = vector.extract_strided_slice %160 {offsets = [0, 96], sizes = [32, 32], strides = [1, 1]} : vector<32x288xf32> to vector<32x32xf32>
    %cst_132 = arith.constant dense<0.000000e+00> : vector<32x324xf32>
    %175 = tpu.matmul %174, %173, %cst_132 {dimension_numbers = #tpu.dot_dimension_numbers<[1], [0], [0], [1], [0, 0, 1, 1], [], []>} : vector<32x32xf32>, vector<32x324xf32>, vector<32x324xf32> -> vector<32x324xf32>
    %176 = arith.addf %172, %175 : vector<32x324xf32>
    %c0_133 = arith.constant 0 : index
    %c128_134 = arith.constant 128 : index
    %177 = vector.load %arg19[%c0_133, %c128_134] : memref<32x580xf32, #tpu.memory_space<vmem>>, vector<32x324xf32>
    %178 = vector.extract_strided_slice %160 {offsets = [0, 128], sizes = [32, 32], strides = [1, 1]} : vector<32x288xf32> to vector<32x32xf32>
    %cst_135 = arith.constant dense<0.000000e+00> : vector<32x324xf32>
    %179 = tpu.matmul %178, %177, %cst_135 {dimension_numbers = #tpu.dot_dimension_numbers<[1], [0], [0], [1], [0, 0, 1, 1], [], []>} : vector<32x32xf32>, vector<32x324xf32>, vector<32x324xf32> -> vector<32x324xf32>
    %180 = arith.addf %176, %179 : vector<32x324xf32>
    %c0_136 = arith.constant 0 : index
    %c130 = arith.constant 130 : index
    %181 = vector.load %arg19[%c0_136, %c130] : memref<32x580xf32, #tpu.memory_space<vmem>>, vector<32x324xf32>
    %182 = vector.extract_strided_slice %160 {offsets = [0, 160], sizes = [32, 32], strides = [1, 1]} : vector<32x288xf32> to vector<32x32xf32>
    %cst_137 = arith.constant dense<0.000000e+00> : vector<32x324xf32>
    %183 = tpu.matmul %182, %181, %cst_137 {dimension_numbers = #tpu.dot_dimension_numbers<[1], [0], [0], [1], [0, 0, 1, 1], [], []>} : vector<32x32xf32>, vector<32x324xf32>, vector<32x324xf32> -> vector<32x324xf32>
    %184 = arith.addf %180, %183 : vector<32x324xf32>
    %c0_138 = arith.constant 0 : index
    %c162 = arith.constant 162 : index
    %185 = vector.load %arg19[%c0_138, %c162] : memref<32x580xf32, #tpu.memory_space<vmem>>, vector<32x324xf32>
    %186 = vector.extract_strided_slice %160 {offsets = [0, 192], sizes = [32, 32], strides = [1, 1]} : vector<32x288xf32> to vector<32x32xf32>
    %cst_139 = arith.constant dense<0.000000e+00> : vector<32x324xf32>
    %187 = tpu.matmul %186, %185, %cst_139 {dimension_numbers = #tpu.dot_dimension_numbers<[1], [0], [0], [1], [0, 0, 1, 1], [], []>} : vector<32x32xf32>, vector<32x324xf32>, vector<32x324xf32> -> vector<32x324xf32>
    %188 = arith.addf %184, %187 : vector<32x324xf32>
    %c0_140 = arith.constant 0 : index
    %c164 = arith.constant 164 : index
    %189 = vector.load %arg19[%c0_140, %c164] : memref<32x580xf32, #tpu.memory_space<vmem>>, vector<32x324xf32>
    %190 = vector.extract_strided_slice %160 {offsets = [0, 224], sizes = [32, 32], strides = [1, 1]} : vector<32x288xf32> to vector<32x32xf32>
    %cst_141 = arith.constant dense<0.000000e+00> : vector<32x324xf32>
    %191 = tpu.matmul %190, %189, %cst_141 {dimension_numbers = #tpu.dot_dimension_numbers<[1], [0], [0], [1], [0, 0, 1, 1], [], []>} : vector<32x32xf32>, vector<32x324xf32>, vector<32x324xf32> -> vector<32x324xf32>
    %192 = arith.addf %188, %191 : vector<32x324xf32>
    %c0_142 = arith.constant 0 : index
    %c166 = arith.constant 166 : index
    %193 = vector.load %arg19[%c0_142, %c166] : memref<32x580xf32, #tpu.memory_space<vmem>>, vector<32x324xf32>
    %194 = vector.extract_strided_slice %160 {offsets = [0, 256], sizes = [32, 32], strides = [1, 1]} : vector<32x288xf32> to vector<32x32xf32>
    %cst_143 = arith.constant dense<0.000000e+00> : vector<32x324xf32>
    %195 = tpu.matmul %194, %193, %cst_143 {dimension_numbers = #tpu.dot_dimension_numbers<[1], [0], [0], [1], [0, 0, 1, 1], [], []>} : vector<32x32xf32>, vector<32x324xf32>, vector<32x324xf32> -> vector<32x324xf32>
    %196 = arith.addf %192, %195 : vector<32x324xf32>
    %197 = vector.broadcast %161 : vector<32x1xf32> to vector<32x324xf32>
    %198 = arith.addf %196, %197 : vector<32x324xf32>
    %199 = arith.addf %198, %159 : vector<32x324xf32>
    %cst_144 = arith.constant 0.000000e+00 : f32
    %200 = vector.broadcast %cst_144 : f32 to vector<32x324xf32>
    %201 = arith.maximumf %199, %200 : vector<32x324xf32>
    %202 = vector.broadcast %1 : vector<1x324xf32> to vector<32x324xf32>
    %203 = arith.mulf %201, %202 : vector<32x324xf32>
    %cst_145 = arith.constant dense<0.000000e+00> : vector<32xf32>
    %204 = vector.multi_reduction <add>, %203, %cst_145 [1] : vector<32x324xf32> to vector<32xf32>
    %205 = vector.shape_cast %204 : vector<32xf32> to vector<32x1xf32>
    %c0_146 = arith.constant 0 : index
    %c0_147 = arith.constant 0 : index
    %206 = vector.load %arg15[%c0_146, %c0_147] : memref<2x32xf32, #tpu.memory_space<vmem>>, vector<2x32xf32>
    %cst_148 = arith.constant dense<0.000000e+00> : vector<2x1xf32>
    %207 = tpu.matmul %206, %205, %cst_148 {dimension_numbers = #tpu.dot_dimension_numbers<[1], [0], [0], [1], [0, 0, 1, 1], [], []>} : vector<2x32xf32>, vector<32x1xf32>, vector<2x1xf32> -> vector<2x1xf32>
    %c0_149 = arith.constant 0 : index
    %c0_150 = arith.constant 0 : index
    %208 = vector.load %arg16[%c0_149, %c0_150] : memref<2x1xf32, #tpu.memory_space<vmem>>, vector<2x1xf32>
    %209 = arith.addf %207, %208 : vector<2x1xf32>
    %cst_151 = arith.constant dense<0xFF800000> : vector<1xf32>
    %210 = vector.multi_reduction <maximumf>, %209, %cst_151 [0] : vector<2x1xf32> to vector<1xf32>
    %211 = vector.shape_cast %210 : vector<1xf32> to vector<1x1xf32>
    %212 = vector.broadcast %211 : vector<1x1xf32> to vector<2x1xf32>
    %213 = arith.subf %209, %212 : vector<2x1xf32>
    %214 = math.exp %213 : vector<2x1xf32>
    %cst_152 = arith.constant dense<0.000000e+00> : vector<1xf32>
    %215 = vector.multi_reduction <add>, %214, %cst_152 [0] : vector<2x1xf32> to vector<1xf32>
    %216 = vector.shape_cast %215 : vector<1xf32> to vector<1x1xf32>
    %217 = math.log %216 : vector<1x1xf32>
    %218 = vector.broadcast %217 : vector<1x1xf32> to vector<2x1xf32>
    %219 = arith.subf %213, %218 : vector<2x1xf32>
    %c0_153 = arith.constant 0 : index
    %c0_154 = arith.constant 0 : index
    %c0_155 = arith.constant 0 : index
    %220 = vector.load %arg17[%c0_153, %c0_154, %c0_155] : memref<1x2x1xf32, #tpu.memory_space<vmem>>, vector<1x2x1xf32>
    %221 = vector.shape_cast %220 : vector<1x2x1xf32> to vector<2x1xf32>
    %222 = vector.shape_cast %219 : vector<2x1xf32> to vector<1x2x1xf32>
    tpu.vector_store %arg17[%c0_153, %c0_154, %c0_155], %222 {strides = array<i32>} : memref<1x2x1xf32, #tpu.memory_space<vmem>>, vector<1x2x1xf32>,
    return
  }
  func.func @transform_0(%arg0: i32) -> (i32, i32, i32) {
    %c0_i32 = arith.constant 0 : i32
    %c0_i32_0 = arith.constant 0 : i32
    %c0_i32_1 = arith.constant 0 : i32
    return %arg0, %c0_i32, %c0_i32_0 : i32, i32, i32
  }
  func.func @transform_1(%arg0: i32) -> (i32, i32) {
    %c0_i32 = arith.constant 0 : i32
    %c0_i32_0 = arith.constant 0 : i32
    %c0_i32_1 = arith.constant 0 : i32
    return %c0_i32, %c0_i32_0 : i32, i32
  }
  func.func @transform_2(%arg0: i32) -> (i32, i32) {
    %c0_i32 = arith.constant 0 : i32
    %c0_i32_0 = arith.constant 0 : i32
    %c0_i32_1 = arith.constant 0 : i32
    return %c0_i32, %c0_i32_0 : i32, i32
  }
  func.func @transform_3(%arg0: i32) -> (i32, i32) {
    %c0_i32 = arith.constant 0 : i32
    %c0_i32_0 = arith.constant 0 : i32
    %c0_i32_1 = arith.constant 0 : i32
    return %c0_i32, %c0_i32_0 : i32, i32
  }
  func.func @transform_4(%arg0: i32) -> (i32, i32) {
    %c0_i32 = arith.constant 0 : i32
    %c0_i32_0 = arith.constant 0 : i32
    %c0_i32_1 = arith.constant 0 : i32
    return %c0_i32, %c0_i32_0 : i32, i32
  }
  func.func @transform_5(%arg0: i32) -> (i32, i32) {
    %c0_i32 = arith.constant 0 : i32
    %c0_i32_0 = arith.constant 0 : i32
    %c0_i32_1 = arith.constant 0 : i32
    return %c0_i32, %c0_i32_0 : i32, i32
  }
  func.func @transform_6(%arg0: i32) -> (i32, i32) {
    %c0_i32 = arith.constant 0 : i32
    %c0_i32_0 = arith.constant 0 : i32
    %c0_i32_1 = arith.constant 0 : i32
    return %c0_i32, %c0_i32_0 : i32, i32
  }
  func.func @transform_7(%arg0: i32) -> (i32, i32) {
    %c0_i32 = arith.constant 0 : i32
    %c0_i32_0 = arith.constant 0 : i32
    %c0_i32_1 = arith.constant 0 : i32
    return %c0_i32, %c0_i32_0 : i32, i32
  }
  func.func @transform_8(%arg0: i32) -> (i32, i32) {
    %c0_i32 = arith.constant 0 : i32
    %c0_i32_0 = arith.constant 0 : i32
    %c0_i32_1 = arith.constant 0 : i32
    return %c0_i32, %c0_i32_0 : i32, i32
  }
  func.func @transform_9(%arg0: i32) -> (i32, i32) {
    %c0_i32 = arith.constant 0 : i32
    %c0_i32_0 = arith.constant 0 : i32
    %c0_i32_1 = arith.constant 0 : i32
    return %c0_i32, %c0_i32_0 : i32, i32
  }
  func.func @transform_10(%arg0: i32) -> (i32, i32) {
    %c0_i32 = arith.constant 0 : i32
    %c0_i32_0 = arith.constant 0 : i32
    %c0_i32_1 = arith.constant 0 : i32
    return %c0_i32, %c0_i32_0 : i32, i32
  }
  func.func @transform_11(%arg0: i32) -> (i32, i32) {
    %c0_i32 = arith.constant 0 : i32
    %c0_i32_0 = arith.constant 0 : i32
    %c0_i32_1 = arith.constant 0 : i32
    return %c0_i32, %c0_i32_0 : i32, i32
  }
  func.func @transform_12(%arg0: i32) -> (i32, i32) {
    %c0_i32 = arith.constant 0 : i32
    %c0_i32_0 = arith.constant 0 : i32
    %c0_i32_1 = arith.constant 0 : i32
    return %c0_i32, %c0_i32_0 : i32, i32
  }
  func.func @transform_13(%arg0: i32) -> (i32, i32) {
    %c0_i32 = arith.constant 0 : i32
    %c0_i32_0 = arith.constant 0 : i32
    %c0_i32_1 = arith.constant 0 : i32
    return %c0_i32, %c0_i32_0 : i32, i32
  }
  func.func @transform_14(%arg0: i32) -> (i32, i32) {
    %c0_i32 = arith.constant 0 : i32
    %c0_i32_0 = arith.constant 0 : i32
    %c0_i32_1 = arith.constant 0 : i32
    return %c0_i32, %c0_i32_0 : i32, i32
  }
  func.func @transform_15(%arg0: i32) -> (i32, i32) {
    %c0_i32 = arith.constant 0 : i32
    %c0_i32_0 = arith.constant 0 : i32
    %c0_i32_1 = arith.constant 0 : i32
    return %c0_i32, %c0_i32_0 : i32, i32
  }
  func.func @transform_16(%arg0: i32) -> (i32, i32, i32) {
    %c0_i32 = arith.constant 0 : i32
    %c0_i32_0 = arith.constant 0 : i32
    %c0_i32_1 = arith.constant 0 : i32
    return %arg0, %c0_i32, %c0_i32_0 : i32, i32, i32
  }
}

</mosaic_0001>

<llo_original>
// kernel: shallow_resnet_forward.1
$region0: #{shallow_resnet_forward.1}
  #allocation0 [shape = 'u32[]', space=smem, size = 0x4, offset = 0x4, fixed_abs, tag = 'smem constant byte address 0x4 - core index']
  #allocation1 [shape = 'u32[144,128]{1,0:T(1,128)}', space=vmem, size = 0x12000, scoped, tag = 'internal scratch']
  #allocation2 [shape = 'f32[16,580]{1,0:T(8,128)}', space=vmem, size = 0xa000, scoped, tag = 'scratch operand']
  #allocation3 [shape = 'f32[32,580]{1,0:T(8,128)}', space=vmem, size = 0x14000, scoped, tag = 'scratch operand']
  %s0 = inlined_call_operand.vmem [shape: f32[2,9,324], index: 0, kind: input, shape index: {}]
  %s1 = inlined_call_operand.vmem [shape: f32[2,324], index: 1, kind: input, shape index: {}]
  %s2 = inlined_call_operand.vmem [shape: f32[16,9], index: 2, kind: input, shape index: {}]
  %s3 = inlined_call_operand.vmem [shape: f32[16,1], index: 3, kind: input, shape index: {}]
  %s4 = inlined_call_operand.vmem [shape: f32[16,144], index: 4, kind: input, shape index: {}]
  %s5 = inlined_call_operand.vmem [shape: f32[16,1], index: 5, kind: input, shape index: {}]
  %s6 = inlined_call_operand.vmem [shape: f32[16,144], index: 6, kind: input, shape index: {}]
  %s7 = inlined_call_operand.vmem [shape: f32[16,1], index: 7, kind: input, shape index: {}]
  %s8 = inlined_call_operand.vmem [shape: f32[32,144], index: 8, kind: input, shape index: {}]
  %s9 = inlined_call_operand.vmem [shape: f32[32,1], index: 9, kind: input, shape index: {}]
  %s10 = inlined_call_operand.vmem [shape: f32[32,288], index: 10, kind: input, shape index: {}]
  %s11 = inlined_call_operand.vmem [shape: f32[32,1], index: 11, kind: input, shape index: {}]
  %s12 = inlined_call_operand.vmem [shape: f32[32,16], index: 12, kind: input, shape index: {}]
  %s13 = inlined_call_operand.vmem [shape: f32[32,1], index: 13, kind: input, shape index: {}]
  %s14 = inlined_call_operand.vmem [shape: f32[2,32], index: 14, kind: input, shape index: {}]
  %s15 = inlined_call_operand.vmem [shape: f32[2,1], index: 15, kind: input, shape index: {}]
  %s16 = inlined_call_operand.vmem [shape: f32[2,2,1], index: 16, kind: output, shape index: {}]
  %s17 = sld [smem:[#allocation0]]
  $region97: #{shallow_resnet_forward.1} parent=0
    _
  %s19 = ssub.s32 1, %s17
  %s20 = scalar_select 0, %s19, %s17
  loop: start=0, step=1, limit=4
  $region2: #{shallow_resnet_forward.1} parent=0 // loop_pre_header
    _
  $region3: #{shallow_resnet_forward.1} parent=0 // loop_header
    %s22 = sphi 0, %s26
    %p23 = scmp.ge.s32.totalorder %s22, 4
    %s32 = sphi 0, %s34
    %s35 = sphi 0, %s32
    %s36 = sphi 0, %s35
    %s52 = sphi 0, %s36
    %s56 = sphi 0, %s56
    %s58 = sphi 0, %s56
    %s59 = sphi 0, %s58
    %s73 = sphi 0, %s59
    %s77 = sphi 0, %s77
    %s79 = sphi 0, %s77
    %s80 = sphi 0, %s79
    %s94 = sphi 0, %s80
    %s98 = sphi 0, %s98
    %s100 = sphi 0, %s98
    %s101 = sphi 0, %s100
    %s115 = sphi 0, %s101
    %s119 = sphi 0, %s119
    %s121 = sphi 0, %s119
    %s122 = sphi 0, %s121
    %s136 = sphi 0, %s122
    %s140 = sphi 0, %s140
    %s142 = sphi 0, %s140
    %s143 = sphi 0, %s142
    %s157 = sphi 0, %s143
    %s161 = sphi 0, %s161
    %s163 = sphi 0, %s161
    %s164 = sphi 0, %s163
    %s178 = sphi 0, %s164
    %s182 = sphi 0, %s182
    %s184 = sphi 0, %s182
    %s185 = sphi 0, %s184
    %s199 = sphi 0, %s185
    %s203 = sphi 0, %s203
    %s205 = sphi 0, %s203
    %s206 = sphi 0, %s205
    %s220 = sphi 0, %s206
    %s224 = sphi 0, %s224
    %s226 = sphi 0, %s224
    %s227 = sphi 0, %s226
    %s241 = sphi 0, %s227
    %s245 = sphi 0, %s245
    %s247 = sphi 0, %s245
    %s248 = sphi 0, %s247
    %s262 = sphi 0, %s248
    %s266 = sphi 0, %s266
    %s268 = sphi 0, %s266
    %s269 = sphi 0, %s268
    %s283 = sphi 0, %s269
    %s287 = sphi 0, %s287
    %s289 = sphi 0, %s287
    %s290 = sphi 0, %s289
    %s304 = sphi 0, %s290
    %s308 = sphi 0, %s308
    %s310 = sphi 0, %s308
    %s311 = sphi 0, %s310
    %s325 = sphi 0, %s311
    %s329 = sphi 0, %s329
    %s331 = sphi 0, %s329
    %s332 = sphi 0, %s331
    %s346 = sphi 0, %s332
    %s350 = sphi 0, %s350
    %s352 = sphi 0, %s350
    %s353 = sphi 0, %s352
    %s367 = sphi 0, %s353
    %s373 = sphi 0, %s375
    %s376 = sphi 0, %s373
    %s377 = sphi 0, %s376
    %s393 = sphi 0, %s377
  $region4: #{shallow_resnet_forward.1} parent=0 // loop_header_branch
    %25 = sbr.rel (%p23) target = $region8
  $region5: #{shallow_resnet_forward.1} parent=0 // loop_body
    %s27 = ssub.s32 %s22, 1
    %s28 = ssub.s32 %s22, 2
    %s29 = sadd.s32 %s22, 1
    %s30 = ssub.s32 %s22, %s29
    %p31 = scmp.eq.s32.totalorder %s30, 0
    %s33 = sadd.s32 %s32, 1
    %s34 = scalar_select %p31, %s32, %s33
    %p37 = pneg %p31
    %p38 = scmp.eq.s32.totalorder %s22, 1
    %p39 = por %p37, %p38
    %p40 = scmp.ne.s32.totalorder %s32, %s35
    %p41 = scmp.eq.s32.totalorder %s22, 0
    %p42 = por %p40, %p41
    %p43 = scmp.ne.s32.totalorder %s32, %s35
    %p44 = scmp.eq.s32.totalorder %s27, 1
    %p45 = por %p43, %p44
    %p46 = scmp.ne.s32.totalorder %s35, %s36
    %p47 = scmp.eq.s32.totalorder %s27, 0
    %p48 = por %p46, %p47
    %p49 = scmp.ne.s32.totalorder %s35, %s36
    %p50 = scmp.eq.s32.totalorder %s28, 1
    %p51 = por %p49, %p50
    %p53 = scmp.ne.s32.totalorder %s36, %s52
    %p54 = scmp.eq.s32.totalorder %s28, 0
    %p55 = por %p53, %p54
    %s57 = sadd.s32 %s56, 1
    %p60 = scmp.eq.s32.totalorder %s22, 1
    %p61 = scmp.ne.s32.totalorder %s56, %s58
    %p62 = scmp.eq.s32.totalorder %s22, 0
    %p63 = por %p61, %p62
    %p64 = scmp.ne.s32.totalorder %s56, %s58
    %p65 = scmp.eq.s32.totalorder %s27, 1
    %p66 = por %p64, %p65
    %p67 = scmp.ne.s32.totalorder %s58, %s59
    %p68 = scmp.eq.s32.totalorder %s27, 0
    %p69 = por %p67, %p68
    %p70 = scmp.ne.s32.totalorder %s58, %s59
    %p71 = scmp.eq.s32.totalorder %s28, 1
    %p72 = por %p70, %p71
    %p74 = scmp.ne.s32.totalorder %s59, %s73
    %p75 = scmp.eq.s32.totalorder %s28, 0
    %p76 = por %p74, %p75
    %s78 = sadd.s32 %s77, 1
    %p81 = scmp.eq.s32.totalorder %s22, 1
    %p82 = scmp.ne.s32.totalorder %s77, %s79
    %p83 = scmp.eq.s32.totalorder %s22, 0
    %p84 = por %p82, %p83
    %p85 = scmp.ne.s32.totalorder %s77, %s79
    %p86 = scmp.eq.s32.totalorder %s27, 1
    %p87 = por %p85, %p86
    %p88 = scmp.ne.s32.totalorder %s79, %s80
    %p89 = scmp.eq.s32.totalorder %s27, 0
    %p90 = por %p88, %p89
    %p91 = scmp.ne.s32.totalorder %s79, %s80
    %p92 = scmp.eq.s32.totalorder %s28, 1
    %p93 = por %p91, %p92
    %p95 = scmp.ne.s32.totalorder %s80, %s94
    %p96 = scmp.eq.s32.totalorder %s28, 0
    %p97 = por %p95, %p96
    %s99 = sadd.s32 %s98, 1
    %p102 = scmp.eq.s32.totalorder %s22, 1
    %p103 = scmp.ne.s32.totalorder %s98, %s100
    %p104 = scmp.eq.s32.totalorder %s22, 0
    %p105 = por %p103, %p104
    %p106 = scmp.ne.s32.totalorder %s98, %s100
    %p107 = scmp.eq.s32.totalorder %s27, 1
    %p108 = por %p106, %p107
    %p109 = scmp.ne.s32.totalorder %s100, %s101
    %p110 = scmp.eq.s32.totalorder %s27, 0
    %p111 = por %p109, %p110
    %p112 = scmp.ne.s32.totalorder %s100, %s101
    %p113 = scmp.eq.s32.totalorder %s28, 1
    %p114 = por %p112, %p113
    %p116 = scmp.ne.s32.totalorder %s101, %s115
    %p117 = scmp.eq.s32.totalorder %s28, 0
    %p118 = por %p116, %p117
    %s120 = sadd.s32 %s119, 1
    %p123 = scmp.eq.s32.totalorder %s22, 1
    %p124 = scmp.ne.s32.totalorder %s119, %s121
    %p125 = scmp.eq.s32.totalorder %s22, 0
    %p126 = por %p124, %p125
    %p127 = scmp.ne.s32.totalorder %s119, %s121
    %p128 = scmp.eq.s32.totalorder %s27, 1
    %p129 = por %p127, %p128
    %p130 = scmp.ne.s32.totalorder %s121, %s122
    %p131 = scmp.eq.s32.totalorder %s27, 0
    %p132 = por %p130, %p131
    %p133 = scmp.ne.s32.totalorder %s121, %s122
    %p134 = scmp.eq.s32.totalorder %s28, 1
    %p135 = por %p133, %p134
    %p137 = scmp.ne.s32.totalorder %s122, %s136
    %p138 = scmp.eq.s32.totalorder %s28, 0
    %p139 = por %p137, %p138
    %s141 = sadd.s32 %s140, 1
    %p144 = scmp.eq.s32.totalorder %s22, 1
    %p145 = scmp.ne.s32.totalorder %s140, %s142
    %p146 = scmp.eq.s32.totalorder %s22, 0
    %p147 = por %p145, %p146
    %p148 = scmp.ne.s32.totalorder %s140, %s142
    %p149 = scmp.eq.s32.totalorder %s27, 1
    %p150 = por %p148, %p149
    %p151 = scmp.ne.s32.totalorder %s142, %s143
    %p152 = scmp.eq.s32.totalorder %s27, 0
    %p153 = por %p151, %p152
    %p154 = scmp.ne.s32.totalorder %s142, %s143
    %p155 = scmp.eq.s32.totalorder %s28, 1
    %p156 = por %p154, %p155
    %p158 = scmp.ne.s32.totalorder %s143, %s157
    %p159 = scmp.eq.s32.totalorder %s28, 0
    %p160 = por %p158, %p159
    %s162 = sadd.s32 %s161, 1
    %p165 = scmp.eq.s32.totalorder %s22, 1
    %p166 = scmp.ne.s32.totalorder %s161, %s163
    %p167 = scmp.eq.s32.totalorder %s22, 0
    %p168 = por %p166, %p167
    %p169 = scmp.ne.s32.totalorder %s161, %s163
    %p170 = scmp.eq.s32.totalorder %s27, 1
    %p171 = por %p169, %p170
    %p172 = scmp.ne.s32.totalorder %s163, %s164
    %p173 = scmp.eq.s32.totalorder %s27, 0
    %p174 = por %p172, %p173
    %p175 = scmp.ne.s32.totalorder %s163, %s164
    %p176 = scmp.eq.s32.totalorder %s28, 1
    %p177 = por %p175, %p176
    %p179 = scmp.ne.s32.totalorder %s164, %s178
    %p180 = scmp.eq.s32.totalorder %s28, 0
    %p181 = por %p179, %p180
    %s183 = sadd.s32 %s182, 1
    %p186 = scmp.eq.s32.totalorder %s22, 1
    %p187 = scmp.ne.s32.totalorder %s182, %s184
    %p188 = scmp.eq.s32.totalorder %s22, 0
    %p189 = por %p187, %p188
    %p190 = scmp.ne.s32.totalorder %s182, %s184
    %p191 = scmp.eq.s32.totalorder %s27, 1
    %p192 = por %p190, %p191
    %p193 = scmp.ne.s32.totalorder %s184, %s185
    %p194 = scmp.eq.s32.totalorder %s27, 0
    %p195 = por %p193, %p194
    %p196 = scmp.ne.s32.totalorder %s184, %s185
    %p197 = scmp.eq.s32.totalorder %s28, 1
    %p198 = por %p196, %p197
    %p200 = scmp.ne.s32.totalorder %s185, %s199
    %p201 = scmp.eq.s32.totalorder %s28, 0
    %p202 = por %p200, %p201
    %s204 = sadd.s32 %s203, 1
    %p207 = scmp.eq.s32.totalorder %s22, 1
    %p208 = scmp.ne.s32.totalorder %s203, %s205
    %p209 = scmp.eq.s32.totalorder %s22, 0
    %p210 = por %p208, %p209
    %p211 = scmp.ne.s32.totalorder %s203, %s205
    %p212 = scmp.eq.s32.totalorder %s27, 1
    %p213 = por %p211, %p212
    %p214 = scmp.ne.s32.totalorder %s205, %s206
    %p215 = scmp.eq.s32.totalorder %s27, 0
    %p216 = por %p214, %p215
    %p217 = scmp.ne.s32.totalorder %s205, %s206
    %p218 = scmp.eq.s32.totalorder %s28, 1
    %p219 = por %p217, %p218
    %p221 = scmp.ne.s32.totalorder %s206, %s220
    %p222 = scmp.eq.s32.totalorder %s28, 0
    %p223 = por %p221, %p222
    %s225 = sadd.s32 %s224, 1
    %p228 = scmp.eq.s32.totalorder %s22, 1
    %p229 = scmp.ne.s32.totalorder %s224, %s226
    %p230 = scmp.eq.s32.totalorder %s22, 0
    %p231 = por %p229, %p230
    %p232 = scmp.ne.s32.totalorder %s224, %s226
    %p233 = scmp.eq.s32.totalorder %s27, 1
    %p234 = por %p232, %p233
    %p235 = scmp.ne.s32.totalorder %s226, %s227
    %p236 = scmp.eq.s32.totalorder %s27, 0
    %p237 = por %p235, %p236
    %p238 = scmp.ne.s32.totalorder %s226, %s227
    %p239 = scmp.eq.s32.totalorder %s28, 1
    %p240 = por %p238, %p239
    %p242 = scmp.ne.s32.totalorder %s227, %s241
    %p243 = scmp.eq.s32.totalorder %s28, 0
    %p244 = por %p242, %p243
    %s246 = sadd.s32 %s245, 1
    %p249 = scmp.eq.s32.totalorder %s22, 1
    %p250 = scmp.ne.s32.totalorder %s245, %s247
    %p251 = scmp.eq.s32.totalorder %s22, 0
    %p252 = por %p250, %p251
    %p253 = scmp.ne.s32.totalorder %s245, %s247
    %p254 = scmp.eq.s32.totalorder %s27, 1
    %p255 = por %p253, %p254
    %p256 = scmp.ne.s32.totalorder %s247, %s248
    %p257 = scmp.eq.s32.totalorder %s27, 0
    %p258 = por %p256, %p257
    %p259 = scmp.ne.s32.totalorder %s247, %s248
    %p260 = scmp.eq.s32.totalorder %s28, 1
    %p261 = por %p259, %p260
    %p263 = scmp.ne.s32.totalorder %s248, %s262
    %p264 = scmp.eq.s32.totalorder %s28, 0
    %p265 = por %p263, %p264
    %s267 = sadd.s32 %s266, 1
    %p270 = scmp.eq.s32.totalorder %s22, 1
    %p271 = scmp.ne.s32.totalorder %s266, %s268
    %p272 = scmp.eq.s32.totalorder %s22, 0
    %p273 = por %p271, %p272
    %p274 = scmp.ne.s32.totalorder %s266, %s268
    %p275 = scmp.eq.s32.totalorder %s27, 1
    %p276 = por %p274, %p275
    %p277 = scmp.ne.s32.totalorder %s268, %s269
    %p278 = scmp.eq.s32.totalorder %s27, 0
    %p279 = por %p277, %p278
    %p280 = scmp.ne.s32.totalorder %s268, %s269
    %p281 = scmp.eq.s32.totalorder %s28, 1
    %p282 = por %p280, %p281
    %p284 = scmp.ne.s32.totalorder %s269, %s283
    %p285 = scmp.eq.s32.totalorder %s28, 0
    %p286 = por %p284, %p285
    %s288 = sadd.s32 %s287, 1
    %p291 = scmp.eq.s32.totalorder %s22, 1
    %p292 = scmp.ne.s32.totalorder %s287, %s289
    %p293 = scmp.eq.s32.totalorder %s22, 0
    %p294 = por %p292, %p293
    %p295 = scmp.ne.s32.totalorder %s287, %s289
    %p296 = scmp.eq.s32.totalorder %s27, 1
    %p297 = por %p295, %p296
    %p298 = scmp.ne.s32.totalorder %s289, %s290
    %p299 = scmp.eq.s32.totalorder %s27, 0
    %p300 = por %p298, %p299
    %p301 = scmp.ne.s32.totalorder %s289, %s290
    %p302 = scmp.eq.s32.totalorder %s28, 1
    %p303 = por %p301, %p302
    %p305 = scmp.ne.s32.totalorder %s290, %s304
    %p306 = scmp.eq.s32.totalorder %s28, 0
    %p307 = por %p305, %p306
    %s309 = sadd.s32 %s308, 1
    %p312 = scmp.eq.s32.totalorder %s22, 1
    %p313 = scmp.ne.s32.totalorder %s308, %s310
    %p314 = scmp.eq.s32.totalorder %s22, 0
    %p315 = por %p313, %p314
    %p316 = scmp.ne.s32.totalorder %s308, %s310
    %p317 = scmp.eq.s32.totalorder %s27, 1
    %p318 = por %p316, %p317
    %p319 = scmp.ne.s32.totalorder %s310, %s311
    %p320 = scmp.eq.s32.totalorder %s27, 0
    %p321 = por %p319, %p320
    %p322 = scmp.ne.s32.totalorder %s310, %s311
    %p323 = scmp.eq.s32.totalorder %s28, 1
    %p324 = por %p322, %p323
    %p326 = scmp.ne.s32.totalorder %s311, %s325
    %p327 = scmp.eq.s32.totalorder %s28, 0
    %p328 = por %p326, %p327
    %s330 = sadd.s32 %s329, 1
    %p333 = scmp.eq.s32.totalorder %s22, 1
    %p334 = scmp.ne.s32.totalorder %s329, %s331
    %p335 = scmp.eq.s32.totalorder %s22, 0
    %p336 = por %p334, %p335
    %p337 = scmp.ne.s32.totalorder %s329, %s331
    %p338 = scmp.eq.s32.totalorder %s27, 1
    %p339 = por %p337, %p338
    %p340 = scmp.ne.s32.totalorder %s331, %s332
    %p341 = scmp.eq.s32.totalorder %s27, 0
    %p342 = por %p340, %p341
    %p343 = scmp.ne.s32.totalorder %s331, %s332
    %p344 = scmp.eq.s32.totalorder %s28, 1
    %p345 = por %p343, %p344
    %p347 = scmp.ne.s32.totalorder %s332, %s346
    %p348 = scmp.eq.s32.totalorder %s28, 0
    %p349 = por %p347, %p348
    %s351 = sadd.s32 %s350, 1
    %p354 = scmp.eq.s32.totalorder %s22, 1
    %p355 = scmp.ne.s32.totalorder %s350, %s352
    %p356 = scmp.eq.s32.totalorder %s22, 0
    %p357 = por %p355, %p356
    %p358 = scmp.ne.s32.totalorder %s350, %s352
    %p359 = scmp.eq.s32.totalorder %s27, 1
    %p360 = por %p358, %p359
    %p361 = scmp.ne.s32.totalorder %s352, %s353
    %p362 = scmp.eq.s32.totalorder %s27, 0
    %p363 = por %p361, %p362
    %p364 = scmp.ne.s32.totalorder %s352, %s353
    %p365 = scmp.eq.s32.totalorder %s28, 1
    %p366 = por %p364, %p365
    %p368 = scmp.ne.s32.totalorder %s353, %s367
    %p369 = scmp.eq.s32.totalorder %s28, 0
    %p370 = por %p368, %p369
    %s371 = ssub.s32 %s22, %s29
    %p372 = scmp.eq.s32.totalorder %s371, 0
    %s374 = sadd.s32 %s373, 1
    %s375 = scalar_select %p372, %s373, %s374
    %p378 = pneg %p372
    %p379 = scmp.eq.s32.totalorder %s22, 1
    %p380 = por %p378, %p379
    %p381 = scmp.ne.s32.totalorder %s373, %s376
    %p382 = scmp.eq.s32.totalorder %s22, 0
    %p383 = por %p381, %p382
    %p384 = scmp.ne.s32.totalorder %s373, %s376
    %p385 = scmp.eq.s32.totalorder %s27, 1
    %p386 = por %p384, %p385
    %p387 = scmp.ne.s32.totalorder %s376, %s377
    %p388 = scmp.eq.s32.totalorder %s27, 0
    %p389 = por %p387, %p388
    %p390 = scmp.ne.s32.totalorder %s376, %s377
    %p391 = scmp.eq.s32.totalorder %s28, 1
    %p392 = por %p390, %p391
    %p394 = scmp.ne.s32.totalorder %s377, %s393
    %p395 = scmp.eq.s32.totalorder %s28, 0
    %p396 = por %p394, %p395
    %p397 = scmp.le.s32.totalorder 1, %s22
    %p398 = scmp.lt.s32.totalorder %s22, 3
    %p399 = pnand %p397, %p398
    %p400 = pneg %p399
    // Predicated region
    $region9: #{shallow_resnet_forward.1} parent=5 // pred_check
      _
    $region10: #{shallow_resnet_forward.1} parent=5 // pred_check_branch
      %402 = sbr.rel (%p399) target = $region12
    $region11: #{shallow_resnet_forward.1} parent=5 // pred_region
      %s403 = ssub.s32 %s22, 1
      // Predicated region
      $region13: #{shallow_resnet_forward.1} parent=11 // pred_check
        %p404 = pneg %p69
      $region14: #{shallow_resnet_forward.1} parent=11 // pred_check_branch
        %406 = sbr.rel (%p404) target = $region16
      $region15: #{shallow_resnet_forward.1} parent=11 // pred_region
        _
      $region16: #{shallow_resnet_forward.1} parent=11 // pred_fallthru
        _
      // Predicated region
      $region17: #{shallow_resnet_forward.1} parent=11 // pred_check
        %p407 = pneg %p90
      $region18: #{shallow_resnet_forward.1} parent=11 // pred_check_branch
        %409 = sbr.rel (%p407) target = $region20
      $region19: #{shallow_resnet_forward.1} parent=11 // pred_region
        _
      $region20: #{shallow_resnet_forward.1} parent=11 // pred_fallthru
        _
      // Predicated region
      $region21: #{shallow_resnet_forward.1} parent=11 // pred_check
        %p410 = pneg %p111
      $region22: #{shallow_resnet_forward.1} parent=11 // pred_check_branch
        %412 = sbr.rel (%p410) target = $region24
      $region23: #{shallow_resnet_forward.1} parent=11 // pred_region
        _
      $region24: #{shallow_resnet_forward.1} parent=11 // pred_fallthru
        _
      // Predicated region
      $region25: #{shallow_resnet_forward.1} parent=11 // pred_check
        %p413 = pneg %p132
      $region26: #{shallow_resnet_forward.1} parent=11 // pred_check_branch
        %415 = sbr.rel (%p413) target = $region28
      $region27: #{shallow_resnet_forward.1} parent=11 // pred_region
        _
      $region28: #{shallow_resnet_forward.1} parent=11 // pred_fallthru
        _
      // Predicated region
      $region29: #{shallow_resnet_forward.1} parent=11 // pred_check
        %p416 = pneg %p153
      $region30: #{shallow_resnet_forward.1} parent=11 // pred_check_branch
        %418 = sbr.rel (%p416) target = $region32
      $region31: #{shallow_resnet_forward.1} parent=11 // pred_region
        _
      $region32: #{shallow_resnet_forward.1} parent=11 // pred_fallthru
        _
      // Predicated region
      $region33: #{shallow_resnet_forward.1} parent=11 // pred_check
        %p419 = pneg %p174
      $region34: #{shallow_resnet_forward.1} parent=11 // pred_check_branch
        %421 = sbr.rel (%p419) target = $region36
      $region35: #{shallow_resnet_forward.1} parent=11 // pred_region
        _
      $region36: #{shallow_resnet_forward.1} parent=11 // pred_fallthru
        _
      // Predicated region
      $region37: #{shallow_resnet_forward.1} parent=11 // pred_check
        %p422 = pneg %p195
      $region38: #{shallow_resnet_forward.1} parent=11 // pred_check_branch
        %424 = sbr.rel (%p422) target = $region40
      $region39: #{shallow_resnet_forward.1} parent=11 // pred_region
        _
      $region40: #{shallow_resnet_forward.1} parent=11 // pred_fallthru
        _
      // Predicated region
      $region41: #{shallow_resnet_forward.1} parent=11 // pred_check
        %p425 = pneg %p216
      $region42: #{shallow_resnet_forward.1} parent=11 // pred_check_branch
        %427 = sbr.rel (%p425) target = $region44
      $region43: #{shallow_resnet_forward.1} parent=11 // pred_region
        _
      $region44: #{shallow_resnet_forward.1} parent=11 // pred_fallthru
        _
      // Predicated region
      $region45: #{shallow_resnet_forward.1} parent=11 // pred_check
        %p428 = pneg %p237
      $region46: #{shallow_resnet_forward.1} parent=11 // pred_check_branch
        %430 = sbr.rel (%p428) target = $region48
      $region47: #{shallow_resnet_forward.1} parent=11 // pred_region
        _
      $region48: #{shallow_resnet_forward.1} parent=11 // pred_fallthru
        _
      // Predicated region
      $region49: #{shallow_resnet_forward.1} parent=11 // pred_check
        %p431 = pneg %p258
      $region50: #{shallow_resnet_forward.1} parent=11 // pred_check_branch
        %433 = sbr.rel (%p431) target = $region52
      $region51: #{shallow_resnet_forward.1} parent=11 // pred_region
        _
      $region52: #{shallow_resnet_forward.1} parent=11 // pred_fallthru
        _
      // Predicated region
      $region53: #{shallow_resnet_forward.1} parent=11 // pred_check
        %p434 = pneg %p279
      $region54: #{shallow_resnet_forward.1} parent=11 // pred_check_branch
        %436 = sbr.rel (%p434) target = $region56
      $region55: #{shallow_resnet_forward.1} parent=11 // pred_region
        _
      $region56: #{shallow_resnet_forward.1} parent=11 // pred_fallthru
        _
      // Predicated region
      $region57: #{shallow_resnet_forward.1} parent=11 // pred_check
        %p437 = pneg %p300
      $region58: #{shallow_resnet_forward.1} parent=11 // pred_check_branch
        %439 = sbr.rel (%p437) target = $region60
      $region59: #{shallow_resnet_forward.1} parent=11 // pred_region
        _
      $region60: #{shallow_resnet_forward.1} parent=11 // pred_fallthru
        _
      // Predicated region
      $region61: #{shallow_resnet_forward.1} parent=11 // pred_check
        %p440 = pneg %p321
      $region62: #{shallow_resnet_forward.1} parent=11 // pred_check_branch
        %442 = sbr.rel (%p440) target = $region64
      $region63: #{shallow_resnet_forward.1} parent=11 // pred_region
        _
      $region64: #{shallow_resnet_forward.1} parent=11 // pred_fallthru
        _
      // Predicated region
      $region65: #{shallow_resnet_forward.1} parent=11 // pred_check
        %p443 = pneg %p342
      $region66: #{shallow_resnet_forward.1} parent=11 // pred_check_branch
        %445 = sbr.rel (%p443) target = $region68
      $region67: #{shallow_resnet_forward.1} parent=11 // pred_region
        _
      $region68: #{shallow_resnet_forward.1} parent=11 // pred_fallthru
        _
      // Predicated region
      $region69: #{shallow_resnet_forward.1} parent=11 // pred_check
        %p446 = pneg %p363
      $region70: #{shallow_resnet_forward.1} parent=11 // pred_check_branch
        %448 = sbr.rel (%p446) target = $region72
      $region71: #{shallow_resnet_forward.1} parent=11 // pred_region
        _
      $region72: #{shallow_resnet_forward.1} parent=11 // pred_fallthru
        _
    $region12: #{shallow_resnet_forward.1} parent=5 // pred_fallthru
      _
    %p449 = scmp.lt.s32.totalorder %s22, 2
    // Predicated region
    $region73: #{shallow_resnet_forward.1} parent=5 // pred_check
      %p450 = pneg %p449
    $region74: #{shallow_resnet_forward.1} parent=5 // pred_check_branch
      %452 = sbr.rel (%p450) target = $region76
    $region75: #{shallow_resnet_forward.1} parent=5 // pred_region
      // Predicated region
      $region77: #{shallow_resnet_forward.1} parent=75 // pred_check
        %p453 = pneg %p42
      $region78: #{shallow_resnet_forward.1} parent=75 // pred_check_branch
        %455 = sbr.rel (%p453) target = $region80
      $region79: #{shallow_resnet_forward.1} parent=75 // pred_region
        %p456 = scmp.lt.s32.totalorder %s22, 1
        %s457 = scalar_select %p456, %s22, 1
        %s458 = smul.addr %s457, 6
        %s459 = smul.addr %s458, 8
        %s460 = scalar_lea.vmem %s0, %s459
      $region80: #{shallow_resnet_forward.1} parent=75 // pred_fallthru
        _
    $region76: #{shallow_resnet_forward.1} parent=5 // pred_fallthru
      _
    %p461 = scmp.le.s32.totalorder 1, %s22
    %p462 = scmp.lt.s32.totalorder %s22, 3
    %p463 = pnand %p461, %p462
    %p464 = pneg %p463
    // Predicated region
    $region81: #{shallow_resnet_forward.1} parent=5 // pred_check
      _
    $region82: #{shallow_resnet_forward.1} parent=5 // pred_check_branch
      %466 = sbr.rel (%p463) target = $region84
    $region83: #{shallow_resnet_forward.1} parent=5 // pred_region
      %s467 = ssub.s32 %s22, 1
      %p468 = scmp.lt.s32.totalorder %s27, 1
      %s469 = scalar_select %p468, %s27, 1
      %s470 = smul.addr %s469, 6
      %s471 = smul.addr %s470, 8
      %s472 = scalar_lea.vmem %s0, %s471
      %p473 = pneg %p48
      %p474 = pneg %p45
      %p475 = pneg %p69
      %p476 = pneg %p66
      %p477 = pneg %p90
      %p478 = pneg %p87
      %p479 = pneg %p111
      %p480 = pneg %p108
      %p481 = pneg %p132
      %p482 = pneg %p129
      %p483 = pneg %p153
      %p484 = pneg %p150
      %p485 = pneg %p174
      %p486 = pneg %p171
      %p487 = pneg %p195
      %p488 = pneg %p192
      %p489 = pneg %p216
      %p490 = pneg %p213
      %p491 = pneg %p237
      %p492 = pneg %p234
      %p493 = pneg %p258
      %p494 = pneg %p255
      %p495 = pneg %p279
      %p496 = pneg %p276
      %p497 = pneg %p300
      %p498 = pneg %p297
      %p499 = pneg %p321
      %p500 = pneg %p318
      %p501 = pneg %p342
      %p502 = pneg %p339
      %p503 = pneg %p363
      %p504 = pneg %p360
      %p505 = pneg %p389
      %p506 = pneg %p386
      %p507 = scmp.lt.s32.totalorder %s27, 1
      %s508 = scalar_select %p507, %s27, 1
      %s509 = smul.addr %s508, 2
      %s510 = scalar_lea.vmem %s16, %s509
      %p511 = scmp.lt.s32.totalorder %s27, 1
      %s512 = scalar_select %p511, %s27, 1
      %s513 = smul.addr %s512, 6
      %s514 = smul.addr %s513, 8
      %s515 = scalar_lea.vmem %s0, %s514
      %p516 = scmp.lt.s32.totalorder %s27, 1
      %s517 = scalar_select %p516, %s27, 1
      %s518 = smul.addr %s517, 2
      %s519 = scalar_lea.vmem %s16, %s518
      %v520 = vld [vmem:[%s1] ss:$2 sm:$0x7]
      %s521 = scalar_lea.vmem %s1, 1
      %v522 = vld [vmem:[%s521] ss:$2 sm:$0x7]
      %523 = vst [vmem:[#allocation2] sm:$0xff] 0.0
      %524 = vst [vmem:[#allocation2 + $0x28] sm:$0xff] 0.0
      %vm525 = vcmask 1048096
      %526 = vst.msk [vmem:[#allocation2 + $0x18] sm:$0xff] %vm525, 0.0
      %vm527 = vcmask 556032
      %528 = vst.msk [vmem:[#allocation2 + $0x20] sm:$0xff] %vm527, 0.0
      %529 = vst.msk [vmem:[#allocation2 + $0x40] sm:$0xff] %vm525, 0.0
      %530 = vst.msk [vmem:[#allocation2 + $0x48] sm:$0xff] %vm527, 0.0
      %531 = vst [vmem:[#allocation3] sm:$0xff] 0.0
      %532 = vst [vmem:[#allocation3 + $0x28] sm:$0xff] 0.0
      %533 = vst [vmem:[#allocation3 + $0x50] sm:$0xff] 0.0
      %534 = vst [vmem:[#allocation3 + $0x78] sm:$0xff] 0.0
      %535 = vst.msk [vmem:[#allocation3 + $0x18] sm:$0xff] %vm525, 0.0
      %536 = vst.msk [vmem:[#allocation3 + $0x20] sm:$0xff] %vm527, 0.0
      %537 = vst.msk [vmem:[#allocation3 + $0x40] sm:$0xff] %vm525, 0.0
      %538 = vst.msk [vmem:[#allocation3 + $0x48] sm:$0xff] %vm527, 0.0
      %539 = vst.msk [vmem:[#allocation3 + $0x68] sm:$0xff] %vm525, 0.0
      %540 = vst.msk [vmem:[#allocation3 + $0x70] sm:$0xff] %vm527, 0.0
      %541 = vst.msk [vmem:[#allocation3 + $0x90] sm:$0xff] %vm525, 0.0
      %542 = vst.msk [vmem:[#allocation3 + $0x98] sm:$0xff] %vm527, 0.0
      %v543 = vld [vmem:[%s2] sm:$0xff]
      %v544 = vld [vmem:[%s2 + $0x8] sm:$0xff]
      %v545 = vld [vmem:[%s515] sm:$0xff]
      %v546 = vld [vmem:[%s515 + $0x8] sm:$0xff]
      %v547 = vld [vmem:[%s515 + $0x10] sm:$0xff]
      %v548 = vld [vmem:[%s515 + $0x18] sm:$0x1]
      %v549 = vld [vmem:[%s515 + $0x20] sm:$0x1]
      %v550 = vld [vmem:[%s515 + $0x28] sm:$0x1]
      %v551 = vld [vmem:[%s3] sm:$0xff]
      %v552 = vld [vmem:[%s3 + $0x8] sm:$0xff]
      %554 = vset.pattern.permute.xlu0 0
      %555 = vperm.xlu0 %554, %v551
      %v556 = vpop.permute.xlu0 %555
      %559 = vset.pattern.permute.xlu0 0
      %560 = vperm.xlu0 %559, %v552
      %v561 = vpop.permute.xlu0 %560
      %vm563 = vcmask 72704
      %v565 = vsel %vm563, %v543, 0
      %v568 = vsel %vm563, %v544, 0
      %vm570 = vcmask 1040384
      %v572 = vsel %vm570, %v548, 0
      %v575 = vsel %vm570, %v549, 0
      %v578 = vsel %vm570, %v550, 0
      %580 = vmatprep.subr.mxu0 %v546
      %581 = vmatpush1.msra.mxu0 %v545
      %582 = vmatprep.subr.mxu0 %v575
      %583 = vmatpush1.msra.mxu0 %v572
      %584 = vmatprep.subr.mxu0 0.0
      %585 = vmatpush1.msra.mxu0 0.0
      %586 = vmatprep.subr.mxu0 0.0
      %587 = vmatpush1.msra.mxu0 0.0
      %588 = vmatprep.subr.mxu0 0.0
      %589 = vmatpush1.msra.mxu0 0.0
      %590 = vmatprep.subr.mxu0 0.0
      %591 = vmatpush1.msra.mxu0 0.0
      %592 = vmatprep.subr.mxu0 0.0
      %593 = vmatpush1.msra.mxu0 0.0
      %594 = vmatprep.subr.mxu0 0.0
      %595 = vmatpush1.msra.mxu0 0.0
      %596 = vmatprep.subr.mxu0 0.0
      %597 = vmatpush1.msra.mxu0 0.0
      %598 = vmatprep.subr.mxu0 0.0
      %599 = vmatpush1.msra.mxu0 0.0
      %600 = vmatprep.subr.mxu0 0.0
      %601 = vmatpush1.msra.mxu0 0.0
      %602 = vmatprep.subr.mxu0 0.0
      %603 = vmatpush1.msra.mxu0 0.0
      %604 = vmatprep.subr.mxu0 0.0
      %605 = vmatpush1.msra.mxu0 0.0
      %606 = vmatprep.subr.mxu0 0.0
      %607 = vmatpush1.msra.mxu0 0.0
      %608 = vmatprep.subr.mxu0 0.0
      %609 = vmatpush1.msra.mxu0 0.0
      %610 = vmatprep.subr.mxu0 0.0
      %611 = vmatpush1.msra.mxu0 0.0
      %612 = vmatprep.subr.mxu0 0.0
      %613 = vmatpush1.msra.mxu0 0.0
      %614 = vmatprep.subr.mxu0 0.0
      %615 = vmatpush1.msra.mxu0 0.0
      %616 = vmatprep.subr.mxu0 0.0
      %617 = vmatpush1.msra.mxu0 0.0
      %618 = vmatprep.subr.mxu0 0.0
      %619 = vmatpush1.msra.mxu0 0.0
      %620 = vmatprep.subr.mxu0 0.0
      %621 = vmatpush1.msra.mxu0 0.0
      %622 = vmatprep.subr.mxu0 0.0
      %623 = vmatpush1.msra.mxu0 0.0
      %624 = vmatprep.subr.mxu0 0.0
      %625 = vmatpush1.msra.mxu0 0.0
      %626 = vmatprep.subr.mxu0 0.0
      %627 = vmatpush1.msra.mxu0 0.0
      %628 = vmatprep.subr.mxu0 0.0
      %629 = vmatpush1.msra.mxu0 0.0
      %630 = vmatprep.subr.mxu0 0.0
      %631 = vmatpush1.msra.mxu0 0.0
      %632 = vmatprep.subr.mxu0 0.0
      %633 = vmatpush1.msra.mxu0 0.0
      %634 = vmatprep.subr.mxu0 0.0
      %635 = vmatpush1.msra.mxu0 0.0
      %636 = vmatprep.subr.mxu0 0.0
      %637 = vmatpush1.msra.mxu0 0.0
      %638 = vmatprep.subr.mxu0 0.0
      %639 = vmatpush1.msra.mxu0 0.0
      %640 = vmatprep.subr.mxu0 0.0
      %641 = vmatpush1.msra.mxu0 0.0
      %642 = vmatprep.subr.mxu0 0.0
      %643 = vmatpush1.msra.mxu0 0.0
      %644 = vmatprep.mubr.f32.mxu0 0.0
      %645 = vmatmul.mubr.f32.gmra.mrb[0].mxu0 %v565
      %v646 = vpop.f32.mrb[0].mxu0
      %v647 = vadd.f32 %v556, %v646
      %v648 = vpop.f32.mrb[0].mxu0
      %v649 = vadd.f32 %v556, %v648
      %650 = vmatprep.mubr.f32.mxu0 0.0
      %651 = vmatmul.mubr.f32.gmra.mrb[0].mxu0 %v568
      %v652 = vpop.f32.mrb[0].mxu0
      %v653 = vadd.f32 %v561, %v652
      %v654 = vpop.f32.mrb[0].mxu0
      %v655 = vadd.f32 %v561, %v654
      %656 = vdwg.mxu0
      %657 = vmatprep.subr.mxu0 0.0
      %658 = vmatpush1.msra.mxu0 %v547
      %659 = vmatprep.subr.mxu0 0.0
      %660 = vmatpush1.msra.mxu0 %v578
      %661 = vmatprep.subr.mxu0 0.0
      %662 = vmatpush1.msra.mxu0 0.0
      %663 = vmatprep.subr.mxu0 0.0
      %664 = vmatpush1.msra.mxu0 0.0
      %665 = vmatprep.subr.mxu0 0.0
      %666 = vmatpush1.msra.mxu0 0.0
      %667 = vmatprep.subr.mxu0 0.0
      %668 = vmatpush1.msra.mxu0 0.0
      %669 = vmatprep.subr.mxu0 0.0
      %670 = vmatpush1.msra.mxu0 0.0
      %671 = vmatprep.subr.mxu0 0.0
      %672 = vmatpush1.msra.mxu0 0.0
      %673 = vmatprep.subr.mxu0 0.0
      %674 = vmatpush1.msra.mxu0 0.0
      %675 = vmatprep.subr.mxu0 0.0
      %676 = vmatpush1.msra.mxu0 0.0
      %677 = vmatprep.subr.mxu0 0.0
      %678 = vmatpush1.msra.mxu0 0.0
      %679 = vmatprep.subr.mxu0 0.0
      %680 = vmatpush1.msra.mxu0 0.0
      %681 = vmatprep.subr.mxu0 0.0
      %682 = vmatpush1.msra.mxu0 0.0
      %683 = vmatprep.subr.mxu0 0.0
      %684 = vmatpush1.msra.mxu0 0.0
      %685 = vmatprep.subr.mxu0 0.0
      %686 = vmatpush1.msra.mxu0 0.0
      %687 = vmatprep.subr.mxu0 0.0
      %688 = vmatpush1.msra.mxu0 0.0
      %689 = vmatprep.subr.mxu0 0.0
      %690 = vmatpush1.msra.mxu0 0.0
      %691 = vmatprep.subr.mxu0 0.0
      %692 = vmatpush1.msra.mxu0 0.0
      %693 = vmatprep.subr.mxu0 0.0
      %694 = vmatpush1.msra.mxu0 0.0
      %695 = vmatprep.subr.mxu0 0.0
      %696 = vmatpush1.msra.mxu0 0.0
      %697 = vmatprep.subr.mxu0 0.0
      %698 = vmatpush1.msra.mxu0 0.0
      %699 = vmatprep.subr.mxu0 0.0
      %700 = vmatpush1.msra.mxu0 0.0
      %701 = vmatprep.subr.mxu0 0.0
      %702 = vmatpush1.msra.mxu0 0.0
      %703 = vmatprep.subr.mxu0 0.0
      %704 = vmatpush1.msra.mxu0 0.0
      %705 = vmatprep.subr.mxu0 0.0
      %706 = vmatpush1.msra.mxu0 0.0
      %707 = vmatprep.subr.mxu0 0.0
      %708 = vmatpush1.msra.mxu0 0.0
      %709 = vmatprep.subr.mxu0 0.0
      %710 = vmatpush1.msra.mxu0 0.0
      %711 = vmatprep.subr.mxu0 0.0
      %712 = vmatpush1.msra.mxu0 0.0
      %713 = vmatprep.subr.mxu0 0.0
      %714 = vmatpush1.msra.mxu0 0.0
      %715 = vmatprep.subr.mxu0 0.0
      %716 = vmatpush1.msra.mxu0 0.0
      %717 = vmatprep.subr.mxu0 0.0
      %718 = vmatpush1.msra.mxu0 0.0
      %719 = vmatprep.subr.mxu0 0.0
      %720 = vmatpush1.msra.mxu0 0.0
      %721 = vmatprep.mubr.f32.mxu0 0.0
      %722 = vmatmul.mubr.f32.gmra.mrb[0].mxu0 %v565
      %v723 = vpop.f32.mrb[0].mxu0
      %v724 = vadd.f32 %v556, %v723
      %v725 = vpop.f32.mrb[0].mxu0
      %726 = vmatprep.mubr.f32.mxu0 0.0
      %727 = vmatmul.mubr.f32.gmra.mrb[0].mxu0 %v568
      %v728 = vpop.f32.mrb[0].mxu0
      %v729 = vadd.f32 %v561, %v728
      %v730 = vpop.f32.mrb[0].mxu0
      %731 = vdwg.mxu0
      %v732 = vmax.f32 %v647, 0.0
      %v733 = vmax.f32 %v649, 0.0
      %v734 = vmax.f32 %v724, 0.0
      %v735 = vmax.f32 %v653, 0.0
      %v736 = vmax.f32 %v655, 0.0
      %v737 = vmax.f32 %v729, 0.0
      %v739 = vlaneseq
      %v740 = vshrl.u32 %v739, 7
      %v741 = vsub.s32 0, %v740
      %v742 = vrot.slane %v520, %v741
      %v743 = vlaneseq
      %v744 = vshrl.u32 %v743, 7
      %v745 = vsub.s32 1, %v744
      %v746 = vrot.slane %v520, %v745
      %v747 = vlaneseq
      %v748 = vshrl.u32 %v747, 7
      %v749 = vsub.s32 2, %v748
      %v750 = vrot.slane %v520, %v749
      %v754 = vmul.f32 %v732, %v742
      %v755 = vmul.f32 %v733, %v746
      %v756 = vmul.f32 %v734, %v750
      %v757 = vmul.f32 %v735, %v742
      %v758 = vmul.f32 %v736, %v746
      %v759 = vmul.f32 %v737, %v750
      %760 = vst [vmem:[#allocation2 + $0x8] sm:$0xff] %v754
      %761 = vst [vmem:[#allocation2 + $0x10] sm:$0xff] %v755
      %762 = vst.msk [vmem:[#allocation2 + $0x18] sm:$0xff] %vm527, %v756
      %763 = vst [vmem:[#allocation2 + $0x30] sm:$0xff] %v757
      %764 = vst [vmem:[#allocation2 + $0x38] sm:$0xff] %v758
      %765 = vst.msk [vmem:[#allocation2 + $0x40] sm:$0xff] %vm527, %v759
      %v766 = vld [vmem:[%s4] sm:$0xff]
      %v767 = vld [vmem:[%s4 + $0x8] sm:$0xff]
      %v768 = vld [vmem:[%s4 + $0x10] sm:$0xff]
      %v769 = vld [vmem:[%s4 + $0x18] sm:$0xff]
      %v770 = vld [vmem:[%s5] sm:$0xff]
      %v771 = vld [vmem:[%s5 + $0x8] sm:$0xff]
      %v772 = vld [vmem:[#allocation2] sm:$0xff]
      %v773 = vld [vmem:[#allocation2 + $0x8] sm:$0xff]
      %v774 = vld [vmem:[#allocation2 + $0x10] sm:$0xff]
      %v775 = vld [vmem:[#allocation2 + $0x18] sm:$0xff]
      %v776 = vld [vmem:[#allocation2 + $0x28] sm:$0xff]
      %v777 = vld [vmem:[#allocation2 + $0x30] sm:$0xff]
      %v778 = vld [vmem:[#allocation2 + $0x38] sm:$0xff]
      %v779 = vld [vmem:[#allocation2 + $0x40] sm:$0xff]
      %782 = vrot.lane.b32.xlu0 %v766, 112
      %v783 = vpop.permute.xlu0 %782
      %784 = vrot.lane.b32.xlu0 %v768, 112
      %v785 = vpop.permute.xlu0 %784
      %794 = vrot.lane.b32.xlu0 %v772, 18
      %v795 = vpop.permute.xlu0 %794
      %796 = vrot.lane.b32.xlu0 %v773, 18
      %v797 = vpop.permute.xlu0 %796
      %798 = vrot.lane.b32.xlu0 %v774, 18
      %v799 = vpop.permute.xlu0 %798
      %800 = vrot.lane.b32.xlu0 %v775, 18
      %v801 = vpop.permute.xlu0 %800
      %802 = vrot.lane.b32.xlu0 %v776, 18
      %v803 = vpop.permute.xlu0 %802
      %804 = vrot.lane.b32.xlu0 %v777, 18
      %v805 = vpop.permute.xlu0 %804
      %806 = vrot.lane.b32.xlu0 %v778, 18
      %v807 = vpop.permute.xlu0 %806
      %808 = vrot.lane.b32.xlu0 %v779, 18
      %v809 = vpop.permute.xlu0 %808
      %vm810 = vcmask 146432
      %v811 = vsel %vm810, %v795, %v797
      %v812 = vsel %vm810, %v797, %v799
      %v813 = vsel %vm810, %v799, %v801
      %v814 = vsel %vm810, %v803, %v805
      %v815 = vsel %vm810, %v805, %v807
      %v816 = vsel %vm810, %v807, %v809
      %vm823 = vcmask 130048
      %v824 = vsel %vm823, %v783, 0
      %v826 = vsel %vm823, %v785, 0
      %828 = vmatprep.subr.mxu0 %v812
      %829 = vmatpush1.msra.mxu0 %v811
      %830 = vmatprep.subr.mxu0 %v815
      %831 = vmatpush1.msra.mxu0 %v814
      %832 = vmatprep.subr.mxu0 0.0
      %833 = vmatpush1.msra.mxu0 0.0
      %834 = vmatprep.subr.mxu0 0.0
      %835 = vmatpush1.msra.mxu0 0.0
      %836 = vmatprep.subr.mxu0 0.0
      %837 = vmatpush1.msra.mxu0 0.0
      %838 = vmatprep.subr.mxu0 0.0
      %839 = vmatpush1.msra.mxu0 0.0
      %840 = vmatprep.subr.mxu0 0.0
      %841 = vmatpush1.msra.mxu0 0.0
      %842 = vmatprep.subr.mxu0 0.0
      %843 = vmatpush1.msra.mxu0 0.0
      %844 = vmatprep.subr.mxu0 0.0
      %845 = vmatpush1.msra.mxu0 0.0
      %846 = vmatprep.subr.mxu0 0.0
      %847 = vmatpush1.msra.mxu0 0.0
      %848 = vmatprep.subr.mxu0 0.0
      %849 = vmatpush1.msra.mxu0 0.0
      %850 = vmatprep.subr.mxu0 0.0
      %851 = vmatpush1.msra.mxu0 0.0
      %852 = vmatprep.subr.mxu0 0.0
      %853 = vmatpush1.msra.mxu0 0.0
      %854 = vmatprep.subr.mxu0 0.0
      %855 = vmatpush1.msra.mxu0 0.0
      %856 = vmatprep.subr.mxu0 0.0
      %857 = vmatpush1.msra.mxu0 0.0
      %858 = vmatprep.subr.mxu0 0.0
      %859 = vmatpush1.msra.mxu0 0.0
      %860 = vmatprep.subr.mxu0 0.0
      %861 = vmatpush1.msra.mxu0 0.0
      %862 = vmatprep.subr.mxu0 0.0
      %863 = vmatpush1.msra.mxu0 0.0
      %864 = vmatprep.subr.mxu0 0.0
      %865 = vmatpush1.msra.mxu0 0.0
      %866 = vmatprep.subr.mxu0 0.0
      %867 = vmatpush1.msra.mxu0 0.0
      %868 = vmatprep.subr.mxu0 0.0
      %869 = vmatpush1.msra.mxu0 0.0
      %870 = vmatprep.subr.mxu0 0.0
      %871 = vmatpush1.msra.mxu0 0.0
      %872 = vmatprep.subr.mxu0 0.0
      %873 = vmatpush1.msra.mxu0 0.0
      %874 = vmatprep.subr.mxu0 0.0
      %875 = vmatpush1.msra.mxu0 0.0
      %876 = vmatprep.subr.mxu0 0.0
      %877 = vmatpush1.msra.mxu0 0.0
      %878 = vmatprep.subr.mxu0 0.0
      %879 = vmatpush1.msra.mxu0 0.0
      %880 = vmatprep.subr.mxu0 0.0
      %881 = vmatpush1.msra.mxu0 0.0
      %882 = vmatprep.subr.mxu0 0.0
      %883 = vmatpush1.msra.mxu0 0.0
      %884 = vmatprep.subr.mxu0 0.0
      %885 = vmatpush1.msra.mxu0 0.0
      %886 = vmatprep.subr.mxu0 0.0
      %887 = vmatpush1.msra.mxu0 0.0
      %888 = vmatprep.subr.mxu0 0.0
      %889 = vmatpush1.msra.mxu0 0.0
      %890 = vmatprep.subr.mxu0 0.0
      %891 = vmatpush1.msra.mxu0 0.0
      %892 = vmatprep.mubr.f32.mxu0 0.0
      %893 = vmatmul.mubr.f32.gmra.mrb[0].mxu0 %v824
      %v894 = vpop.f32.mrb[0].mxu0
      %v895 = vadd.f32 0.0, %v894
      %v896 = vpop.f32.mrb[0].mxu0
      %v897 = vadd.f32 0.0, %v896
      %898 = vmatprep.mubr.f32.mxu0 0.0
      %899 = vmatmul.mubr.f32.gmra.mrb[0].mxu0 %v826
      %v900 = vpop.f32.mrb[0].mxu0
      %v901 = vadd.f32 0.0, %v900
      %v902 = vpop.f32.mrb[0].mxu0
      %v903 = vadd.f32 0.0, %v902
      %904 = vdwg.mxu0
      %905 = vmatprep.subr.mxu0 0.0
      %906 = vmatpush1.msra.mxu0 %v813
      %907 = vmatprep.subr.mxu0 0.0
      %908 = vmatpush1.msra.mxu0 %v816
      %909 = vmatprep.subr.mxu0 0.0
      %910 = vmatpush1.msra.mxu0 0.0
      %911 = vmatprep.subr.mxu0 0.0
      %912 = vmatpush1.msra.mxu0 0.0
      %913 = vmatprep.subr.mxu0 0.0
      %914 = vmatpush1.msra.mxu0 0.0
      %915 = vmatprep.subr.mxu0 0.0
      %916 = vmatpush1.msra.mxu0 0.0
      %917 = vmatprep.subr.mxu0 0.0
      %918 = vmatpush1.msra.mxu0 0.0
      %919 = vmatprep.subr.mxu0 0.0
      %920 = vmatpush1.msra.mxu0 0.0
      %921 = vmatprep.subr.mxu0 0.0
      %922 = vmatpush1.msra.mxu0 0.0
      %923 = vmatprep.subr.mxu0 0.0
      %924 = vmatpush1.msra.mxu0 0.0
      %925 = vmatprep.subr.mxu0 0.0
      %926 = vmatpush1.msra.mxu0 0.0
      %927 = vmatprep.subr.mxu0 0.0
      %928 = vmatpush1.msra.mxu0 0.0
      %929 = vmatprep.subr.mxu0 0.0
      %930 = vmatpush1.msra.mxu0 0.0
      %931 = vmatprep.subr.mxu0 0.0
      %932 = vmatpush1.msra.mxu0 0.0
      %933 = vmatprep.subr.mxu0 0.0
      %934 = vmatpush1.msra.mxu0 0.0
      %935 = vmatprep.subr.mxu0 0.0
      %936 = vmatpush1.msra.mxu0 0.0
      %937 = vmatprep.subr.mxu0 0.0
      %938 = vmatpush1.msra.mxu0 0.0
      %939 = vmatprep.subr.mxu0 0.0
      %940 = vmatpush1.msra.mxu0 0.0
      %941 = vmatprep.subr.mxu0 0.0
      %942 = vmatpush1.msra.mxu0 0.0
      %943 = vmatprep.subr.mxu0 0.0
      %944 = vmatpush1.msra.mxu0 0.0
      %945 = vmatprep.subr.mxu0 0.0
      %946 = vmatpush1.msra.mxu0 0.0
      %947 = vmatprep.subr.mxu0 0.0
      %948 = vmatpush1.msra.mxu0 0.0
      %949 = vmatprep.subr.mxu0 0.0
      %950 = vmatpush1.msra.mxu0 0.0
      %951 = vmatprep.subr.mxu0 0.0
      %952 = vmatpush1.msra.mxu0 0.0
      %953 = vmatprep.subr.mxu0 0.0
      %954 = vmatpush1.msra.mxu0 0.0
      %955 = vmatprep.subr.mxu0 0.0
      %956 = vmatpush1.msra.mxu0 0.0
      %957 = vmatprep.subr.mxu0 0.0
      %958 = vmatpush1.msra.mxu0 0.0
      %959 = vmatprep.subr.mxu0 0.0
      %960 = vmatpush1.msra.mxu0 0.0
      %961 = vmatprep.subr.mxu0 0.0
      %962 = vmatpush1.msra.mxu0 0.0
      %963 = vmatprep.subr.mxu0 0.0
      %964 = vmatpush1.msra.mxu0 0.0
      %965 = vmatprep.subr.mxu0 0.0
      %966 = vmatpush1.msra.mxu0 0.0
      %967 = vmatprep.subr.mxu0 0.0
      %968 = vmatpush1.msra.mxu0 0.0
      %969 = vmatprep.mubr.f32.mxu0 0.0
      %970 = vmatmul.mubr.f32.gmra.mrb[0].mxu0 %v824
      %v971 = vpop.f32.mrb[0].mxu0
      %v972 = vadd.f32 0.0, %v971
      %v973 = vpop.f32.mrb[0].mxu0
      %974 = vmatprep.mubr.f32.mxu0 0.0
      %975 = vmatmul.mubr.f32.gmra.mrb[0].mxu0 %v826
      %v976 = vpop.f32.mrb[0].mxu0
      %v977 = vadd.f32 0.0, %v976
      %v978 = vpop.f32.mrb[0].mxu0
      %979 = vdwg.mxu0
      %980 = vrot.lane.b32.xlu0 %v772, 19
      %v981 = vpop.permute.xlu0 %980
      %982 = vrot.lane.b32.xlu0 %v773, 19
      %v983 = vpop.permute.xlu0 %982
      %984 = vrot.lane.b32.xlu0 %v774, 19
      %v985 = vpop.permute.xlu0 %984
      %986 = vrot.lane.b32.xlu0 %v775, 19
      %v987 = vpop.permute.xlu0 %986
      %988 = vrot.lane.b32.xlu0 %v776, 19
      %v989 = vpop.permute.xlu0 %988
      %990 = vrot.lane.b32.xlu0 %v777, 19
      %v991 = vpop.permute.xlu0 %990
      %992 = vrot.lane.b32.xlu0 %v778, 19
      %v993 = vpop.permute.xlu0 %992
      %994 = vrot.lane.b32.xlu0 %v779, 19
      %v995 = vpop.permute.xlu0 %994
      %vm996 = vcmask 154624
      %v997 = vsel %vm996, %v981, %v983
      %v998 = vsel %vm996, %v983, %v985
      %v999 = vsel %vm996, %v985, %v987
      %v1000 = vsel %vm996, %v989, %v991
      %v1001 = vsel %vm996, %v991, %v993
      %v1002 = vsel %vm996, %v993, %v995
      %v1009 = vsel %vm823, %v766, 0
      %v1011 = vsel %vm823, %v768, 0
      %1013 = vmatprep.subr.mxu0 %v998
      %1014 = vmatpush1.msra.mxu0 %v997
      %1015 = vmatprep.subr.mxu0 %v1001
      %1016 = vmatpush1.msra.mxu0 %v1000
      %1017 = vmatprep.subr.mxu0 0.0
      %1018 = vmatpush1.msra.mxu0 0.0
      %1019 = vmatprep.subr.mxu0 0.0
      %1020 = vmatpush1.msra.mxu0 0.0
      %1021 = vmatprep.subr.mxu0 0.0
      %1022 = vmatpush1.msra.mxu0 0.0
      %1023 = vmatprep.subr.mxu0 0.0
      %1024 = vmatpush1.msra.mxu0 0.0
      %1025 = vmatprep.subr.mxu0 0.0
      %1026 = vmatpush1.msra.mxu0 0.0
      %1027 = vmatprep.subr.mxu0 0.0
      %1028 = vmatpush1.msra.mxu0 0.0
      %1029 = vmatprep.subr.mxu0 0.0
      %1030 = vmatpush1.msra.mxu0 0.0
      %1031 = vmatprep.subr.mxu0 0.0
      %1032 = vmatpush1.msra.mxu0 0.0
      %1033 = vmatprep.subr.mxu0 0.0
      %1034 = vmatpush1.msra.mxu0 0.0
      %1035 = vmatprep.subr.mxu0 0.0
      %1036 = vmatpush1.msra.mxu0 0.0
      %1037 = vmatprep.subr.mxu0 0.0
      %1038 = vmatpush1.msra.mxu0 0.0
      %1039 = vmatprep.subr.mxu0 0.0
      %1040 = vmatpush1.msra.mxu0 0.0
      %1041 = vmatprep.subr.mxu0 0.0
      %1042 = vmatpush1.msra.mxu0 0.0
      %1043 = vmatprep.subr.mxu0 0.0
      %1044 = vmatpush1.msra.mxu0 0.0
      %1045 = vmatprep.subr.mxu0 0.0
      %1046 = vmatpush1.msra.mxu0 0.0
      %1047 = vmatprep.subr.mxu0 0.0
      %1048 = vmatpush1.msra.mxu0 0.0
      %1049 = vmatprep.subr.mxu0 0.0
      %1050 = vmatpush1.msra.mxu0 0.0
      %1051 = vmatprep.subr.mxu0 0.0
      %1052 = vmatpush1.msra.mxu0 0.0
      %1053 = vmatprep.subr.mxu0 0.0
      %1054 = vmatpush1.msra.mxu0 0.0
      %1055 = vmatprep.subr.mxu0 0.0
      %1056 = vmatpush1.msra.mxu0 0.0
      %1057 = vmatprep.subr.mxu0 0.0
      %1058 = vmatpush1.msra.mxu0 0.0
      %1059 = vmatprep.subr.mxu0 0.0
      %1060 = vmatpush1.msra.mxu0 0.0
      %1061 = vmatprep.subr.mxu0 0.0
      %1062 = vmatpush1.msra.mxu0 0.0
      %1063 = vmatprep.subr.mxu0 0.0
      %1064 = vmatpush1.msra.mxu0 0.0
      %1065 = vmatprep.subr.mxu0 0.0
      %1066 = vmatpush1.msra.mxu0 0.0
      %1067 = vmatprep.subr.mxu0 0.0
      %1068 = vmatpush1.msra.mxu0 0.0
      %1069 = vmatprep.subr.mxu0 0.0
      %1070 = vmatpush1.msra.mxu0 0.0
      %1071 = vmatprep.subr.mxu0 0.0
      %1072 = vmatpush1.msra.mxu0 0.0
      %1073 = vmatprep.subr.mxu0 0.0
      %1074 = vmatpush1.msra.mxu0 0.0
      %1075 = vmatprep.subr.mxu0 0.0
      %1076 = vmatpush1.msra.mxu0 0.0
      %1077 = vmatprep.mubr.f32.mxu0 0.0
      %1078 = vmatmul.mubr.f32.gmra.mrb[0].mxu0 %v1009
      %v1079 = vpop.f32.mrb[0].mxu0
      %v1080 = vadd.f32 %v895, %v1079
      %v1081 = vpop.f32.mrb[0].mxu0
      %v1082 = vadd.f32 %v897, %v1081
      %1083 = vmatprep.mubr.f32.mxu0 0.0
      %1084 = vmatmul.mubr.f32.gmra.mrb[0].mxu0 %v1011
      %v1085 = vpop.f32.mrb[0].mxu0
      %v1086 = vadd.f32 %v901, %v1085
      %v1087 = vpop.f32.mrb[0].mxu0
      %v1088 = vadd.f32 %v903, %v1087
      %1089 = vdwg.mxu0
      %1090 = vmatprep.subr.mxu0 0.0
      %1091 = vmatpush1.msra.mxu0 %v999
      %1092 = vmatprep.subr.mxu0 0.0
      %1093 = vmatpush1.msra.mxu0 %v1002
      %1094 = vmatprep.subr.mxu0 0.0
      %1095 = vmatpush1.msra.mxu0 0.0
      %1096 = vmatprep.subr.mxu0 0.0
      %1097 = vmatpush1.msra.mxu0 0.0
      %1098 = vmatprep.subr.mxu0 0.0
      %1099 = vmatpush1.msra.mxu0 0.0
      %1100 = vmatprep.subr.mxu0 0.0
      %1101 = vmatpush1.msra.mxu0 0.0
      %1102 = vmatprep.subr.mxu0 0.0
      %1103 = vmatpush1.msra.mxu0 0.0
      %1104 = vmatprep.subr.mxu0 0.0
      %1105 = vmatpush1.msra.mxu0 0.0
      %1106 = vmatprep.subr.mxu0 0.0
      %1107 = vmatpush1.msra.mxu0 0.0
      %1108 = vmatprep.subr.mxu0 0.0
      %1109 = vmatpush1.msra.mxu0 0.0
      %1110 = vmatprep.subr.mxu0 0.0
      %1111 = vmatpush1.msra.mxu0 0.0
      %1112 = vmatprep.subr.mxu0 0.0
      %1113 = vmatpush1.msra.mxu0 0.0
      %1114 = vmatprep.subr.mxu0 0.0
      %1115 = vmatpush1.msra.mxu0 0.0
      %1116 = vmatprep.subr.mxu0 0.0
      %1117 = vmatpush1.msra.mxu0 0.0
      %1118 = vmatprep.subr.mxu0 0.0
      %1119 = vmatpush1.msra.mxu0 0.0
      %1120 = vmatprep.subr.mxu0 0.0
      %1121 = vmatpush1.msra.mxu0 0.0
      %1122 = vmatprep.subr.mxu0 0.0
      %1123 = vmatpush1.msra.mxu0 0.0
      %1124 = vmatprep.subr.mxu0 0.0
      %1125 = vmatpush1.msra.mxu0 0.0
      %1126 = vmatprep.subr.mxu0 0.0
      %1127 = vmatpush1.msra.mxu0 0.0
      %1128 = vmatprep.subr.mxu0 0.0
      %1129 = vmatpush1.msra.mxu0 0.0
      %1130 = vmatprep.subr.mxu0 0.0
      %1131 = vmatpush1.msra.mxu0 0.0
      %1132 = vmatprep.subr.mxu0 0.0
      %1133 = vmatpush1.msra.mxu0 0.0
      %1134 = vmatprep.subr.mxu0 0.0
      %1135 = vmatpush1.msra.mxu0 0.0
      %1136 = vmatprep.subr.mxu0 0.0
      %1137 = vmatpush1.msra.mxu0 0.0
      %1138 = vmatprep.subr.mxu0 0.0
      %1139 = vmatpush1.msra.mxu0 0.0
      %1140 = vmatprep.subr.mxu0 0.0
      %1141 = vmatpush1.msra.mxu0 0.0
      %1142 = vmatprep.subr.mxu0 0.0
      %1143 = vmatpush1.msra.mxu0 0.0
      %1144 = vmatprep.subr.mxu0 0.0
      %1145 = vmatpush1.msra.mxu0 0.0
      %1146 = vmatprep.subr.mxu0 0.0
      %1147 = vmatpush1.msra.mxu0 0.0
      %1148 = vmatprep.subr.mxu0 0.0
      %1149 = vmatpush1.msra.mxu0 0.0
      %1150 = vmatprep.subr.mxu0 0.0
      %1151 = vmatpush1.msra.mxu0 0.0
      %1152 = vmatprep.subr.mxu0 0.0
      %1153 = vmatpush1.msra.mxu0 0.0
      %1154 = vmatprep.mubr.f32.mxu0 0.0
      %1155 = vmatmul.mubr.f32.gmra.mrb[0].mxu0 %v1009
      %v1156 = vpop.f32.mrb[0].mxu0
      %v1157 = vadd.f32 %v972, %v1156
      %v1158 = vpop.f32.mrb[0].mxu0
      %1159 = vmatprep.mubr.f32.mxu0 0.0
      %1160 = vmatmul.mubr.f32.gmra.mrb[0].mxu0 %v1011
      %v1161 = vpop.f32.mrb[0].mxu0
      %v1162 = vadd.f32 %v977, %v1161
      %v1163 = vpop.f32.mrb[0].mxu0
      %1164 = vdwg.mxu0
      %1165 = vrot.lane.b32.xlu0 %v766, 96
      %v1166 = vpop.permute.xlu0 %1165
      %1167 = vrot.lane.b32.xlu0 %v768, 96
      %v1168 = vpop.permute.xlu0 %1167
      %1169 = vrot.lane.b32.xlu0 %v772, 17
      %v1170 = vpop.permute.xlu0 %1169
      %1171 = vrot.lane.b32.xlu0 %v773, 17
      %v1172 = vpop.permute.xlu0 %1171
      %1173 = vrot.lane.b32.xlu0 %v774, 17
      %v1174 = vpop.permute.xlu0 %1173
      %1175 = vrot.lane.b32.xlu0 %v775, 17
      %v1176 = vpop.permute.xlu0 %1175
      %1177 = vrot.lane.b32.xlu0 %v776, 17
      %v1178 = vpop.permute.xlu0 %1177
      %1179 = vrot.lane.b32.xlu0 %v777, 17
      %v1180 = vpop.permute.xlu0 %1179
      %1181 = vrot.lane.b32.xlu0 %v778, 17
      %v1182 = vpop.permute.xlu0 %1181
      %1183 = vrot.lane.b32.xlu0 %v779, 17
      %v1184 = vpop.permute.xlu0 %1183
      %vm1185 = vcmask 138240
      %v1186 = vsel %vm1185, %v1170, %v1172
      %v1187 = vsel %vm1185, %v1172, %v1174
      %v1188 = vsel %vm1185, %v1174, %v1176
      %v1189 = vsel %vm1185, %v1178, %v1180
      %v1190 = vsel %vm1185, %v1180, %v1182
      %v1191 = vsel %vm1185, %v1182, %v1184
      %v1198 = vsel %vm823, %v1166, 0
      %v1200 = vsel %vm823, %v1168, 0
      %1202 = vmatprep.subr.mxu0 %v1187
      %1203 = vmatpush1.msra.mxu0 %v1186
      %1204 = vmatprep.subr.mxu0 %v1190
      %1205 = vmatpush1.msra.mxu0 %v1189
      %1206 = vmatprep.subr.mxu0 0.0
      %1207 = vmatpush1.msra.mxu0 0.0
      %1208 = vmatprep.subr.mxu0 0.0
      %1209 = vmatpush1.msra.mxu0 0.0
      %1210 = vmatprep.subr.mxu0 0.0
      %1211 = vmatpush1.msra.mxu0 0.0
      %1212 = vmatprep.subr.mxu0 0.0
      %1213 = vmatpush1.msra.mxu0 0.0
      %1214 = vmatprep.subr.mxu0 0.0
      %1215 = vmatpush1.msra.mxu0 0.0
      %1216 = vmatprep.subr.mxu0 0.0
      %1217 = vmatpush1.msra.mxu0 0.0
      %1218 = vmatprep.subr.mxu0 0.0
      %1219 = vmatpush1.msra.mxu0 0.0
      %1220 = vmatprep.subr.mxu0 0.0
      %1221 = vmatpush1.msra.mxu0 0.0
      %1222 = vmatprep.subr.mxu0 0.0
      %1223 = vmatpush1.msra.mxu0 0.0
      %1224 = vmatprep.subr.mxu0 0.0
      %1225 = vmatpush1.msra.mxu0 0.0
      %1226 = vmatprep.subr.mxu0 0.0
      %1227 = vmatpush1.msra.mxu0 0.0
      %1228 = vmatprep.subr.mxu0 0.0
      %1229 = vmatpush1.msra.mxu0 0.0
      %1230 = vmatprep.subr.mxu0 0.0
      %1231 = vmatpush1.msra.mxu0 0.0
      %1232 = vmatprep.subr.mxu0 0.0
      %1233 = vmatpush1.msra.mxu0 0.0
      %1234 = vmatprep.subr.mxu0 0.0
      %1235 = vmatpush1.msra.mxu0 0.0
      %1236 = vmatprep.subr.mxu0 0.0
      %1237 = vmatpush1.msra.mxu0 0.0
      %1238 = vmatprep.subr.mxu0 0.0
      %1239 = vmatpush1.msra.mxu0 0.0
      %1240 = vmatprep.subr.mxu0 0.0
      %1241 = vmatpush1.msra.mxu0 0.0
      %1242 = vmatprep.subr.mxu0 0.0
      %1243 = vmatpush1.msra.mxu0 0.0
      %1244 = vmatprep.subr.mxu0 0.0
      %1245 = vmatpush1.msra.mxu0 0.0
      %1246 = vmatprep.subr.mxu0 0.0
      %1247 = vmatpush1.msra.mxu0 0.0
      %1248 = vmatprep.subr.mxu0 0.0
      %1249 = vmatpush1.msra.mxu0 0.0
      %1250 = vmatprep.subr.mxu0 0.0
      %1251 = vmatpush1.msra.mxu0 0.0
      %1252 = vmatprep.subr.mxu0 0.0
      %1253 = vmatpush1.msra.mxu0 0.0
      %1254 = vmatprep.subr.mxu0 0.0
      %1255 = vmatpush1.msra.mxu0 0.0
      %1256 = vmatprep.subr.mxu0 0.0
      %1257 = vmatpush1.msra.mxu0 0.0
      %1258 = vmatprep.subr.mxu0 0.0
      %1259 = vmatpush1.msra.mxu0 0.0
      %1260 = vmatprep.subr.mxu0 0.0
      %1261 = vmatpush1.msra.mxu0 0.0
      %1262 = vmatprep.subr.mxu0 0.0
      %1263 = vmatpush1.msra.mxu0 0.0
      %1264 = vmatprep.subr.mxu0 0.0
      %1265 = vmatpush1.msra.mxu0 0.0
      %1266 = vmatprep.mubr.f32.mxu0 0.0
      %1267 = vmatmul.mubr.f32.gmra.mrb[0].mxu0 %v1198
      %v1268 = vpop.f32.mrb[0].mxu0
      %v1269 = vadd.f32 0.0, %v1268
      %v1270 = vpop.f32.mrb[0].mxu0
      %v1271 = vadd.f32 0.0, %v1270
      %1272 = vmatprep.mubr.f32.mxu0 0.0
      %1273 = vmatmul.mubr.f32.gmra.mrb[0].mxu0 %v1200
      %v1274 = vpop.f32.mrb[0].mxu0
      %v1275 = vadd.f32 0.0, %v1274
      %v1276 = vpop.f32.mrb[0].mxu0
      %v1277 = vadd.f32 0.0, %v1276
      %1278 = vdwg.mxu0
      %1279 = vmatprep.subr.mxu0 0.0
      %1280 = vmatpush1.msra.mxu0 %v1188
      %1281 = vmatprep.subr.mxu0 0.0
      %1282 = vmatpush1.msra.mxu0 %v1191
      %1283 = vmatprep.subr.mxu0 0.0
      %1284 = vmatpush1.msra.mxu0 0.0
      %1285 = vmatprep.subr.mxu0 0.0
      %1286 = vmatpush1.msra.mxu0 0.0
      %1287 = vmatprep.subr.mxu0 0.0
      %1288 = vmatpush1.msra.mxu0 0.0
      %1289 = vmatprep.subr.mxu0 0.0
      %1290 = vmatpush1.msra.mxu0 0.0
      %1291 = vmatprep.subr.mxu0 0.0
      %1292 = vmatpush1.msra.mxu0 0.0
      %1293 = vmatprep.subr.mxu0 0.0
      %1294 = vmatpush1.msra.mxu0 0.0
      %1295 = vmatprep.subr.mxu0 0.0
      %1296 = vmatpush1.msra.mxu0 0.0
      %1297 = vmatprep.subr.mxu0 0.0
      %1298 = vmatpush1.msra.mxu0 0.0
      %1299 = vmatprep.subr.mxu0 0.0
      %1300 = vmatpush1.msra.mxu0 0.0
      %1301 = vmatprep.subr.mxu0 0.0
      %1302 = vmatpush1.msra.mxu0 0.0
      %1303 = vmatprep.subr.mxu0 0.0
      %1304 = vmatpush1.msra.mxu0 0.0
      %1305 = vmatprep.subr.mxu0 0.0
      %1306 = vmatpush1.msra.mxu0 0.0
      %1307 = vmatprep.subr.mxu0 0.0
      %1308 = vmatpush1.msra.mxu0 0.0
      %1309 = vmatprep.subr.mxu0 0.0
      %1310 = vmatpush1.msra.mxu0 0.0
      %1311 = vmatprep.subr.mxu0 0.0
      %1312 = vmatpush1.msra.mxu0 0.0
      %1313 = vmatprep.subr.mxu0 0.0
      %1314 = vmatpush1.msra.mxu0 0.0
      %1315 = vmatprep.subr.mxu0 0.0
      %1316 = vmatpush1.msra.mxu0 0.0
      %1317 = vmatprep.subr.mxu0 0.0
      %1318 = vmatpush1.msra.mxu0 0.0
      %1319 = vmatprep.subr.mxu0 0.0
      %1320 = vmatpush1.msra.mxu0 0.0
      %1321 = vmatprep.subr.mxu0 0.0
      %1322 = vmatpush1.msra.mxu0 0.0
      %1323 = vmatprep.subr.mxu0 0.0
      %1324 = vmatpush1.msra.mxu0 0.0
      %1325 = vmatprep.subr.mxu0 0.0
      %1326 = vmatpush1.msra.mxu0 0.0
      %1327 = vmatprep.subr.mxu0 0.0
      %1328 = vmatpush1.msra.mxu0 0.0
      %1329 = vmatprep.subr.mxu0 0.0
      %1330 = vmatpush1.msra.mxu0 0.0
      %1331 = vmatprep.subr.mxu0 0.0
      %1332 = vmatpush1.msra.mxu0 0.0
      %1333 = vmatprep.subr.mxu0 0.0
      %1334 = vmatpush1.msra.mxu0 0.0
      %1335 = vmatprep.subr.mxu0 0.0
      %1336 = vmatpush1.msra.mxu0 0.0
      %1337 = vmatprep.subr.mxu0 0.0
      %1338 = vmatpush1.msra.mxu0 0.0
      %1339 = vmatprep.subr.mxu0 0.0
      %1340 = vmatpush1.msra.mxu0 0.0
      %1341 = vmatprep.subr.mxu0 0.0
      %1342 = vmatpush1.msra.mxu0 0.0
      %1343 = vmatprep.mubr.f32.mxu0 0.0
      %1344 = vmatmul.mubr.f32.gmra.mrb[0].mxu0 %v1198
      %v1345 = vpop.f32.mrb[0].mxu0
      %v1346 = vadd.f32 0.0, %v1345
      %v1347 = vpop.f32.mrb[0].mxu0
      %1348 = vmatprep.mubr.f32.mxu0 0.0
      %1349 = vmatmul.mubr.f32.gmra.mrb[0].mxu0 %v1200
      %v1350 = vpop.f32.mrb[0].mxu0
      %v1351 = vadd.f32 0.0, %v1350
      %v1352 = vpop.f32.mrb[0].mxu0
      %1353 = vdwg.mxu0
      %v1354 = vadd.f32 %v1080, %v1269
      %v1355 = vadd.f32 %v1082, %v1271
      %v1356 = vadd.f32 %v1157, %v1346
      %v1357 = vadd.f32 %v1086, %v1275
      %v1358 = vadd.f32 %v1088, %v1277
      %v1359 = vadd.f32 %v1162, %v1351
      %1360 = vrot.lane.b32.xlu0 %v766, 80
      %v1361 = vpop.permute.xlu0 %1360
      %1362 = vrot.lane.b32.xlu0 %v768, 80
      %v1363 = vpop.permute.xlu0 %1362
      %1364 = vrot.lane.b32.xlu0 %v772, 1
      %v1365 = vpop.permute.xlu0 %1364
      %1366 = vrot.lane.b32.xlu0 %v773, 1
      %v1367 = vpop.permute.xlu0 %1366
      %1368 = vrot.lane.b32.xlu0 %v774, 1
      %v1369 = vpop.permute.xlu0 %1368
      %1370 = vrot.lane.b32.xlu0 %v775, 1
      %v1371 = vpop.permute.xlu0 %1370
      %1372 = vrot.lane.b32.xlu0 %v776, 1
      %v1373 = vpop.permute.xlu0 %1372
      %1374 = vrot.lane.b32.xlu0 %v777, 1
      %v1375 = vpop.permute.xlu0 %1374
      %1376 = vrot.lane.b32.xlu0 %v778, 1
      %v1377 = vpop.permute.xlu0 %1376
      %1378 = vrot.lane.b32.xlu0 %v779, 1
      %v1379 = vpop.permute.xlu0 %1378
      %vm1380 = vcmask 7168
      %v1381 = vsel %vm1380, %v1365, %v1367
      %v1382 = vsel %vm1380, %v1367, %v1369
      %v1383 = vsel %vm1380, %v1369, %v1371
      %v1384 = vsel %vm1380, %v1373, %v1375
      %v1385 = vsel %vm1380, %v1375, %v1377
      %v1386 = vsel %vm1380, %v1377, %v1379
      %v1393 = vsel %vm823, %v1361, 0
      %v1395 = vsel %vm823, %v1363, 0
      %1397 = vmatprep.subr.mxu0 %v1382
      %1398 = vmatpush1.msra.mxu0 %v1381
      %1399 = vmatprep.subr.mxu0 %v1385
      %1400 = vmatpush1.msra.mxu0 %v1384
      %1401 = vmatprep.subr.mxu0 0.0
      %1402 = vmatpush1.msra.mxu0 0.0
      %1403 = vmatprep.subr.mxu0 0.0
      %1404 = vmatpush1.msra.mxu0 0.0
      %1405 = vmatprep.subr.mxu0 0.0
      %1406 = vmatpush1.msra.mxu0 0.0
      %1407 = vmatprep.subr.mxu0 0.0
      %1408 = vmatpush1.msra.mxu0 0.0
      %1409 = vmatprep.subr.mxu0 0.0
      %1410 = vmatpush1.msra.mxu0 0.0
      %1411 = vmatprep.subr.mxu0 0.0
      %1412 = vmatpush1.msra.mxu0 0.0
      %1413 = vmatprep.subr.mxu0 0.0
      %1414 = vmatpush1.msra.mxu0 0.0
      %1415 = vmatprep.subr.mxu0 0.0
      %1416 = vmatpush1.msra.mxu0 0.0
      %1417 = vmatprep.subr.mxu0 0.0
      %1418 = vmatpush1.msra.mxu0 0.0
      %1419 = vmatprep.subr.mxu0 0.0
      %1420 = vmatpush1.msra.mxu0 0.0
      %1421 = vmatprep.subr.mxu0 0.0
      %1422 = vmatpush1.msra.mxu0 0.0
      %1423 = vmatprep.subr.mxu0 0.0
      %1424 = vmatpush1.msra.mxu0 0.0
      %1425 = vmatprep.subr.mxu0 0.0
      %1426 = vmatpush1.msra.mxu0 0.0
      %1427 = vmatprep.subr.mxu0 0.0
      %1428 = vmatpush1.msra.mxu0 0.0
      %1429 = vmatprep.subr.mxu0 0.0
      %1430 = vmatpush1.msra.mxu0 0.0
      %1431 = vmatprep.subr.mxu0 0.0
      %1432 = vmatpush1.msra.mxu0 0.0
      %1433 = vmatprep.subr.mxu0 0.0
      %1434 = vmatpush1.msra.mxu0 0.0
      %1435 = vmatprep.subr.mxu0 0.0
      %1436 = vmatpush1.msra.mxu0 0.0
      %1437 = vmatprep.subr.mxu0 0.0
      %1438 = vmatpush1.msra.mxu0 0.0
      %1439 = vmatprep.subr.mxu0 0.0
      %1440 = vmatpush1.msra.mxu0 0.0
      %1441 = vmatprep.subr.mxu0 0.0
      %1442 = vmatpush1.msra.mxu0 0.0
      %1443 = vmatprep.subr.mxu0 0.0
      %1444 = vmatpush1.msra.mxu0 0.0
      %1445 = vmatprep.subr.mxu0 0.0
      %1446 = vmatpush1.msra.mxu0 0.0
      %1447 = vmatprep.subr.mxu0 0.0
      %1448 = vmatpush1.msra.mxu0 0.0
      %1449 = vmatprep.subr.mxu0 0.0
      %1450 = vmatpush1.msra.mxu0 0.0
      %1451 = vmatprep.subr.mxu0 0.0
      %1452 = vmatpush1.msra.mxu0 0.0
      %1453 = vmatprep.subr.mxu0 0.0
      %1454 = vmatpush1.msra.mxu0 0.0
      %1455 = vmatprep.subr.mxu0 0.0
      %1456 = vmatpush1.msra.mxu0 0.0
      %1457 = vmatprep.subr.mxu0 0.0
      %1458 = vmatpush1.msra.mxu0 0.0
      %1459 = vmatprep.subr.mxu0 0.0
      %1460 = vmatpush1.msra.mxu0 0.0
      %1461 = vmatprep.mubr.f32.mxu0 0.0
      %1462 = vmatmul.mubr.f32.gmra.mrb[0].mxu0 %v1393
      %v1463 = vpop.f32.mrb[0].mxu0
      %v1464 = vadd.f32 0.0, %v1463
      %v1465 = vpop.f32.mrb[0].mxu0
      %v1466 = vadd.f32 0.0, %v1465
      %1467 = vmatprep.mubr.f32.mxu0 0.0
      %1468 = vmatmul.mubr.f32.gmra.mrb[0].mxu0 %v1395
      %v1469 = vpop.f32.mrb[0].mxu0
      %v1470 = vadd.f32 0.0, %v1469
      %v1471 = vpop.f32.mrb[0].mxu0
      %v1472 = vadd.f32 0.0, %v1471
      %1473 = vdwg.mxu0
      %1474 = vmatprep.subr.mxu0 0.0
      %1475 = vmatpush1.msra.mxu0 %v1383
      %1476 = vmatprep.subr.mxu0 0.0
      %1477 = vmatpush1.msra.mxu0 %v1386
      %1478 = vmatprep.subr.mxu0 0.0
      %1479 = vmatpush1.msra.mxu0 0.0
      %1480 = vmatprep.subr.mxu0 0.0
      %1481 = vmatpush1.msra.mxu0 0.0
      %1482 = vmatprep.subr.mxu0 0.0
      %1483 = vmatpush1.msra.mxu0 0.0
      %1484 = vmatprep.subr.mxu0 0.0
      %1485 = vmatpush1.msra.mxu0 0.0
      %1486 = vmatprep.subr.mxu0 0.0
      %1487 = vmatpush1.msra.mxu0 0.0
      %1488 = vmatprep.subr.mxu0 0.0
      %1489 = vmatpush1.msra.mxu0 0.0
      %1490 = vmatprep.subr.mxu0 0.0
      %1491 = vmatpush1.msra.mxu0 0.0
      %1492 = vmatprep.subr.mxu0 0.0
      %1493 = vmatpush1.msra.mxu0 0.0
      %1494 = vmatprep.subr.mxu0 0.0
      %1495 = vmatpush1.msra.mxu0 0.0
      %1496 = vmatprep.subr.mxu0 0.0
      %1497 = vmatpush1.msra.mxu0 0.0
      %1498 = vmatprep.subr.mxu0 0.0
      %1499 = vmatpush1.msra.mxu0 0.0
      %1500 = vmatprep.subr.mxu0 0.0
      %1501 = vmatpush1.msra.mxu0 0.0
      %1502 = vmatprep.subr.mxu0 0.0
      %1503 = vmatpush1.msra.mxu0 0.0
      %1504 = vmatprep.subr.mxu0 0.0
      %1505 = vmatpush1.msra.mxu0 0.0
      %1506 = vmatprep.subr.mxu0 0.0
      %1507 = vmatpush1.msra.mxu0 0.0
      %1508 = vmatprep.subr.mxu0 0.0
      %1509 = vmatpush1.msra.mxu0 0.0
      %1510 = vmatprep.subr.mxu0 0.0
      %1511 = vmatpush1.msra.mxu0 0.0
      %1512 = vmatprep.subr.mxu0 0.0
      %1513 = vmatpush1.msra.mxu0 0.0
      %1514 = vmatprep.subr.mxu0 0.0
      %1515 = vmatpush1.msra.mxu0 0.0
      %1516 = vmatprep.subr.mxu0 0.0
      %1517 = vmatpush1.msra.mxu0 0.0
      %1518 = vmatprep.subr.mxu0 0.0
      %1519 = vmatpush1.msra.mxu0 0.0
      %1520 = vmatprep.subr.mxu0 0.0
      %1521 = vmatpush1.msra.mxu0 0.0
      %1522 = vmatprep.subr.mxu0 0.0
      %1523 = vmatpush1.msra.mxu0 0.0
      %1524 = vmatprep.subr.mxu0 0.0
      %1525 = vmatpush1.msra.mxu0 0.0
      %1526 = vmatprep.subr.mxu0 0.0
      %1527 = vmatpush1.msra.mxu0 0.0
      %1528 = vmatprep.subr.mxu0 0.0
      %1529 = vmatpush1.msra.mxu0 0.0
      %1530 = vmatprep.subr.mxu0 0.0
      %1531 = vmatpush1.msra.mxu0 0.0
      %1532 = vmatprep.subr.mxu0 0.0
      %1533 = vmatpush1.msra.mxu0 0.0
      %1534 = vmatprep.subr.mxu0 0.0
      %1535 = vmatpush1.msra.mxu0 0.0
      %1536 = vmatprep.subr.mxu0 0.0
      %1537 = vmatpush1.msra.mxu0 0.0
      %1538 = vmatprep.mubr.f32.mxu0 0.0
      %1539 = vmatmul.mubr.f32.gmra.mrb[0].mxu0 %v1393
      %v1540 = vpop.f32.mrb[0].mxu0
      %v1541 = vadd.f32 0.0, %v1540
      %v1542 = vpop.f32.mrb[0].mxu0
      %1543 = vmatprep.mubr.f32.mxu0 0.0
      %1544 = vmatmul.mubr.f32.gmra.mrb[0].mxu0 %v1395
      %v1545 = vpop.f32.mrb[0].mxu0
      %v1546 = vadd.f32 0.0, %v1545
      %v1547 = vpop.f32.mrb[0].mxu0
      %1548 = vdwg.mxu0
      %v1549 = vadd.f32 %v1354, %v1464
      %v1550 = vadd.f32 %v1355, %v1466
      %v1551 = vadd.f32 %v1356, %v1541
      %v1552 = vadd.f32 %v1357, %v1470
      %v1553 = vadd.f32 %v1358, %v1472
      %v1554 = vadd.f32 %v1359, %v1546
      %1555 = vrot.lane.b32.xlu0 %v766, 64
      %v1556 = vpop.permute.xlu0 %1555
      %1557 = vrot.lane.b32.xlu0 %v768, 64
      %v1558 = vpop.permute.xlu0 %1557
      %v1559 = vsel %vm823, %v1556, 0
      %v1561 = vsel %vm823, %v1558, 0
      %1563 = vmatprep.subr.mxu0 %v774
      %1564 = vmatpush1.msra.mxu0 %v773
      %1565 = vmatprep.subr.mxu0 %v778
      %1566 = vmatpush1.msra.mxu0 %v777
      %1567 = vmatprep.subr.mxu0 0.0
      %1568 = vmatpush1.msra.mxu0 0.0
      %1569 = vmatprep.subr.mxu0 0.0
      %1570 = vmatpush1.msra.mxu0 0.0
      %1571 = vmatprep.subr.mxu0 0.0
      %1572 = vmatpush1.msra.mxu0 0.0
      %1573 = vmatprep.subr.mxu0 0.0
      %1574 = vmatpush1.msra.mxu0 0.0
      %1575 = vmatprep.subr.mxu0 0.0
      %1576 = vmatpush1.msra.mxu0 0.0
      %1577 = vmatprep.subr.mxu0 0.0
      %1578 = vmatpush1.msra.mxu0 0.0
      %1579 = vmatprep.subr.mxu0 0.0
      %1580 = vmatpush1.msra.mxu0 0.0
      %1581 = vmatprep.subr.mxu0 0.0
      %1582 = vmatpush1.msra.mxu0 0.0
      %1583 = vmatprep.subr.mxu0 0.0
      %1584 = vmatpush1.msra.mxu0 0.0
      %1585 = vmatprep.subr.mxu0 0.0
      %1586 = vmatpush1.msra.mxu0 0.0
      %1587 = vmatprep.subr.mxu0 0.0
      %1588 = vmatpush1.msra.mxu0 0.0
      %1589 = vmatprep.subr.mxu0 0.0
      %1590 = vmatpush1.msra.mxu0 0.0
      %1591 = vmatprep.subr.mxu0 0.0
      %1592 = vmatpush1.msra.mxu0 0.0
      %1593 = vmatprep.subr.mxu0 0.0
      %1594 = vmatpush1.msra.mxu0 0.0
      %1595 = vmatprep.subr.mxu0 0.0
      %1596 = vmatpush1.msra.mxu0 0.0
      %1597 = vmatprep.subr.mxu0 0.0
      %1598 = vmatpush1.msra.mxu0 0.0
      %1599 = vmatprep.subr.mxu0 0.0
      %1600 = vmatpush1.msra.mxu0 0.0
      %1601 = vmatprep.subr.mxu0 0.0
      %1602 = vmatpush1.msra.mxu0 0.0
      %1603 = vmatprep.subr.mxu0 0.0
      %1604 = vmatpush1.msra.mxu0 0.0
      %1605 = vmatprep.subr.mxu0 0.0
      %1606 = vmatpush1.msra.mxu0 0.0
      %1607 = vmatprep.subr.mxu0 0.0
      %1608 = vmatpush1.msra.mxu0 0.0
      %1609 = vmatprep.subr.mxu0 0.0
      %1610 = vmatpush1.msra.mxu0 0.0
      %1611 = vmatprep.subr.mxu0 0.0
      %1612 = vmatpush1.msra.mxu0 0.0
      %1613 = vmatprep.subr.mxu0 0.0
      %1614 = vmatpush1.msra.mxu0 0.0
      %1615 = vmatprep.subr.mxu0 0.0
      %1616 = vmatpush1.msra.mxu0 0.0
      %1617 = vmatprep.subr.mxu0 0.0
      %1618 = vmatpush1.msra.mxu0 0.0
      %1619 = vmatprep.subr.mxu0 0.0
      %1620 = vmatpush1.msra.mxu0 0.0
      %1621 = vmatprep.subr.mxu0 0.0
      %1622 = vmatpush1.msra.mxu0 0.0
      %1623 = vmatprep.subr.mxu0 0.0
      %1624 = vmatpush1.msra.mxu0 0.0
      %1625 = vmatprep.subr.mxu0 0.0
      %1626 = vmatpush1.msra.mxu0 0.0
      %1627 = vmatprep.mubr.f32.mxu0 0.0
      %1628 = vmatmul.mubr.f32.gmra.mrb[0].mxu0 %v1559
      %v1629 = vpop.f32.mrb[0].mxu0
      %v1630 = vadd.f32 0.0, %v1629
      %v1631 = vpop.f32.mrb[0].mxu0
      %v1632 = vadd.f32 0.0, %v1631
      %1633 = vmatprep.mubr.f32.mxu0 0.0
      %1634 = vmatmul.mubr.f32.gmra.mrb[0].mxu0 %v1561
      %v1635 = vpop.f32.mrb[0].mxu0
      %v1636 = vadd.f32 0.0, %v1635
      %v1637 = vpop.f32.mrb[0].mxu0
      %v1638 = vadd.f32 0.0, %v1637
      %1639 = vdwg.mxu0
      %1640 = vmatprep.subr.mxu0 0.0
      %1641 = vmatpush1.msra.mxu0 %v775
      %1642 = vmatprep.subr.mxu0 0.0
      %1643 = vmatpush1.msra.mxu0 %v779
      %1644 = vmatprep.subr.mxu0 0.0
      %1645 = vmatpush1.msra.mxu0 0.0
      %1646 = vmatprep.subr.mxu0 0.0
      %1647 = vmatpush1.msra.mxu0 0.0
      %1648 = vmatprep.subr.mxu0 0.0
      %1649 = vmatpush1.msra.mxu0 0.0
      %1650 = vmatprep.subr.mxu0 0.0
      %1651 = vmatpush1.msra.mxu0 0.0
      %1652 = vmatprep.subr.mxu0 0.0
      %1653 = vmatpush1.msra.mxu0 0.0
      %1654 = vmatprep.subr.mxu0 0.0
      %1655 = vmatpush1.msra.mxu0 0.0
      %1656 = vmatprep.subr.mxu0 0.0
      %1657 = vmatpush1.msra.mxu0 0.0
      %1658 = vmatprep.subr.mxu0 0.0
      %1659 = vmatpush1.msra.mxu0 0.0
      %1660 = vmatprep.subr.mxu0 0.0
      %1661 = vmatpush1.msra.mxu0 0.0
      %1662 = vmatprep.subr.mxu0 0.0
      %1663 = vmatpush1.msra.mxu0 0.0
      %1664 = vmatprep.subr.mxu0 0.0
      %1665 = vmatpush1.msra.mxu0 0.0
      %1666 = vmatprep.subr.mxu0 0.0
      %1667 = vmatpush1.msra.mxu0 0.0
      %1668 = vmatprep.subr.mxu0 0.0
      %1669 = vmatpush1.msra.mxu0 0.0
      %1670 = vmatprep.subr.mxu0 0.0
      %1671 = vmatpush1.msra.mxu0 0.0
      %1672 = vmatprep.subr.mxu0 0.0
      %1673 = vmatpush1.msra.mxu0 0.0
      %1674 = vmatprep.subr.mxu0 0.0
      %1675 = vmatpush1.msra.mxu0 0.0
      %1676 = vmatprep.subr.mxu0 0.0
      %1677 = vmatpush1.msra.mxu0 0.0
      %1678 = vmatprep.subr.mxu0 0.0
      %1679 = vmatpush1.msra.mxu0 0.0
      %1680 = vmatprep.subr.mxu0 0.0
      %1681 = vmatpush1.msra.mxu0 0.0
      %1682 = vmatprep.subr.mxu0 0.0
      %1683 = vmatpush1.msra.mxu0 0.0
      %1684 = vmatprep.subr.mxu0 0.0
      %1685 = vmatpush1.msra.mxu0 0.0
      %1686 = vmatprep.subr.mxu0 0.0
      %1687 = vmatpush1.msra.mxu0 0.0
      %1688 = vmatprep.subr.mxu0 0.0
      %1689 = vmatpush1.msra.mxu0 0.0
      %1690 = vmatprep.subr.mxu0 0.0
      %1691 = vmatpush1.msra.mxu0 0.0
      %1692 = vmatprep.subr.mxu0 0.0
      %1693 = vmatpush1.msra.mxu0 0.0
      %1694 = vmatprep.subr.mxu0 0.0
      %1695 = vmatpush1.msra.mxu0 0.0
      %1696 = vmatprep.subr.mxu0 0.0
      %1697 = vmatpush1.msra.mxu0 0.0
      %1698 = vmatprep.subr.mxu0 0.0
      %1699 = vmatpush1.msra.mxu0 0.0
      %1700 = vmatprep.subr.mxu0 0.0
      %1701 = vmatpush1.msra.mxu0 0.0
      %1702 = vmatprep.subr.mxu0 0.0
      %1703 = vmatpush1.msra.mxu0 0.0
      %1704 = vmatprep.mubr.f32.mxu0 0.0
      %1705 = vmatmul.mubr.f32.gmra.mrb[0].mxu0 %v1559
      %v1706 = vpop.f32.mrb[0].mxu0
      %v1707 = vadd.f32 0.0, %v1706
      %v1708 = vpop.f32.mrb[0].mxu0
      %1709 = vmatprep.mubr.f32.mxu0 0.0
      %1710 = vmatmul.mubr.f32.gmra.mrb[0].mxu0 %v1561
      %v1711 = vpop.f32.mrb[0].mxu0
      %v1712 = vadd.f32 0.0, %v1711
      %v1713 = vpop.f32.mrb[0].mxu0
      %1714 = vdwg.mxu0
      %v1715 = vadd.f32 %v1549, %v1630
      %v1716 = vadd.f32 %v1550, %v1632
      %v1717 = vadd.f32 %v1551, %v1707
      %v1718 = vadd.f32 %v1552, %v1636
      %v1719 = vadd.f32 %v1553, %v1638
      %v1720 = vadd.f32 %v1554, %v1712
      %1721 = vrot.lane.b32.xlu0 %v766, 48
      %v1722 = vpop.permute.xlu0 %1721
      %1723 = vrot.lane.b32.xlu0 %v768, 48
      %v1724 = vpop.permute.xlu0 %1723
      %1725 = vrot.lane.b32.xlu0 %v773, 127
      %v1726 = vpop.permute.xlu0 %1725
      %1727 = vrot.lane.b32.xlu0 %v774, 127
      %v1728 = vpop.permute.xlu0 %1727
      %1729 = vrot.lane.b32.xlu0 %v775, 127
      %v1730 = vpop.permute.xlu0 %1729
      %1731 = vrot.lane.b32.xlu0 %v777, 127
      %v1732 = vpop.permute.xlu0 %1731
      %1733 = vrot.lane.b32.xlu0 %v778, 127
      %v1734 = vpop.permute.xlu0 %1733
      %1735 = vrot.lane.b32.xlu0 %v779, 127
      %v1736 = vpop.permute.xlu0 %1735
      %vm1737 = vcmask 1039360
      %v1738 = vsel %vm1737, %v1726, %v1728
      %v1739 = vsel %vm1737, %v1728, %v1730
      %v1740 = vsel %vm1737, %v1732, %v1734
      %v1741 = vsel %vm1737, %v1734, %v1736
      %v1748 = vsel %vm823, %v1722, 0
      %v1750 = vsel %vm823, %v1724, 0
      %1752 = vmatprep.subr.mxu0 %v1739
      %1753 = vmatpush1.msra.mxu0 %v1738
      %1754 = vmatprep.subr.mxu0 %v1741
      %1755 = vmatpush1.msra.mxu0 %v1740
      %1756 = vmatprep.subr.mxu0 0.0
      %1757 = vmatpush1.msra.mxu0 0.0
      %1758 = vmatprep.subr.mxu0 0.0
      %1759 = vmatpush1.msra.mxu0 0.0
      %1760 = vmatprep.subr.mxu0 0.0
      %1761 = vmatpush1.msra.mxu0 0.0
      %1762 = vmatprep.subr.mxu0 0.0
      %1763 = vmatpush1.msra.mxu0 0.0
      %1764 = vmatprep.subr.mxu0 0.0
      %1765 = vmatpush1.msra.mxu0 0.0
      %1766 = vmatprep.subr.mxu0 0.0
      %1767 = vmatpush1.msra.mxu0 0.0
      %1768 = vmatprep.subr.mxu0 0.0
      %1769 = vmatpush1.msra.mxu0 0.0
      %1770 = vmatprep.subr.mxu0 0.0
      %1771 = vmatpush1.msra.mxu0 0.0
      %1772 = vmatprep.subr.mxu0 0.0
      %1773 = vmatpush1.msra.mxu0 0.0
      %1774 = vmatprep.subr.mxu0 0.0
      %1775 = vmatpush1.msra.mxu0 0.0
      %1776 = vmatprep.subr.mxu0 0.0
      %1777 = vmatpush1.msra.mxu0 0.0
      %1778 = vmatprep.subr.mxu0 0.0
      %1779 = vmatpush1.msra.mxu0 0.0
      %1780 = vmatprep.subr.mxu0 0.0
      %1781 = vmatpush1.msra.mxu0 0.0
      %1782 = vmatprep.subr.mxu0 0.0
      %1783 = vmatpush1.msra.mxu0 0.0
      %1784 = vmatprep.subr.mxu0 0.0
      %1785 = vmatpush1.msra.mxu0 0.0
      %1786 = vmatprep.subr.mxu0 0.0
      %1787 = vmatpush1.msra.mxu0 0.0
      %1788 = vmatprep.subr.mxu0 0.0
      %1789 = vmatpush1.msra.mxu0 0.0
      %1790 = vmatprep.subr.mxu0 0.0
      %1791 = vmatpush1.msra.mxu0 0.0
      %1792 = vmatprep.subr.mxu0 0.0
      %1793 = vmatpush1.msra.mxu0 0.0
      %1794 = vmatprep.subr.mxu0 0.0
      %1795 = vmatpush1.msra.mxu0 0.0
      %1796 = vmatprep.subr.mxu0 0.0
      %1797 = vmatpush1.msra.mxu0 0.0
      %1798 = vmatprep.subr.mxu0 0.0
      %1799 = vmatpush1.msra.mxu0 0.0
      %1800 = vmatprep.subr.mxu0 0.0
      %1801 = vmatpush1.msra.mxu0 0.0
      %1802 = vmatprep.subr.mxu0 0.0
      %1803 = vmatpush1.msra.mxu0 0.0
      %1804 = vmatprep.subr.mxu0 0.0
      %1805 = vmatpush1.msra.mxu0 0.0
      %1806 = vmatprep.subr.mxu0 0.0
      %1807 = vmatpush1.msra.mxu0 0.0
      %1808 = vmatprep.subr.mxu0 0.0
      %1809 = vmatpush1.msra.mxu0 0.0
      %1810 = vmatprep.subr.mxu0 0.0
      %1811 = vmatpush1.msra.mxu0 0.0
      %1812 = vmatprep.subr.mxu0 0.0
      %1813 = vmatpush1.msra.mxu0 0.0
      %1814 = vmatprep.subr.mxu0 0.0
      %1815 = vmatpush1.msra.mxu0 0.0
      %1816 = vmatprep.mubr.f32.mxu0 0.0
      %1817 = vmatmul.mubr.f32.gmra.mrb[0].mxu0 %v1748
      %v1818 = vpop.f32.mrb[0].mxu0
      %v1819 = vadd.f32 0.0, %v1818
      %v1820 = vpop.f32.mrb[0].mxu0
      %v1821 = vadd.f32 0.0, %v1820
      %1822 = vmatprep.mubr.f32.mxu0 0.0
      %1823 = vmatmul.mubr.f32.gmra.mrb[0].mxu0 %v1750
      %v1824 = vpop.f32.mrb[0].mxu0
      %v1825 = vadd.f32 0.0, %v1824
      %v1826 = vpop.f32.mrb[0].mxu0
      %v1827 = vadd.f32 0.0, %v1826
      %1828 = vdwg.mxu0
      %1829 = vmatprep.subr.mxu0 0.0
      %1830 = vmatpush1.msra.mxu0 %v1730
      %1831 = vmatprep.subr.mxu0 0.0
      %1832 = vmatpush1.msra.mxu0 %v1736
      %1833 = vmatprep.subr.mxu0 0.0
      %1834 = vmatpush1.msra.mxu0 0.0
      %1835 = vmatprep.subr.mxu0 0.0
      %1836 = vmatpush1.msra.mxu0 0.0
      %1837 = vmatprep.subr.mxu0 0.0
      %1838 = vmatpush1.msra.mxu0 0.0
      %1839 = vmatprep.subr.mxu0 0.0
      %1840 = vmatpush1.msra.mxu0 0.0
      %1841 = vmatprep.subr.mxu0 0.0
      %1842 = vmatpush1.msra.mxu0 0.0
      %1843 = vmatprep.subr.mxu0 0.0
      %1844 = vmatpush1.msra.mxu0 0.0
      %1845 = vmatprep.subr.mxu0 0.0
      %1846 = vmatpush1.msra.mxu0 0.0
      %1847 = vmatprep.subr.mxu0 0.0
      %1848 = vmatpush1.msra.mxu0 0.0
      %1849 = vmatprep.subr.mxu0 0.0
      %1850 = vmatpush1.msra.mxu0 0.0
      %1851 = vmatprep.subr.mxu0 0.0
      %1852 = vmatpush1.msra.mxu0 0.0
      %1853 = vmatprep.subr.mxu0 0.0
      %1854 = vmatpush1.msra.mxu0 0.0
      %1855 = vmatprep.subr.mxu0 0.0
      %1856 = vmatpush1.msra.mxu0 0.0
      %1857 = vmatprep.subr.mxu0 0.0
      %1858 = vmatpush1.msra.mxu0 0.0
      %1859 = vmatprep.subr.mxu0 0.0
      %1860 = vmatpush1.msra.mxu0 0.0
      %1861 = vmatprep.subr.mxu0 0.0
      %1862 = vmatpush1.msra.mxu0 0.0
      %1863 = vmatprep.subr.mxu0 0.0
      %1864 = vmatpush1.msra.mxu0 0.0
      %1865 = vmatprep.subr.mxu0 0.0
      %1866 = vmatpush1.msra.mxu0 0.0
      %1867 = vmatprep.subr.mxu0 0.0
      %1868 = vmatpush1.msra.mxu0 0.0
      %1869 = vmatprep.subr.mxu0 0.0
      %1870 = vmatpush1.msra.mxu0 0.0
      %1871 = vmatprep.subr.mxu0 0.0
      %1872 = vmatpush1.msra.mxu0 0.0
      %1873 = vmatprep.subr.mxu0 0.0
      %1874 = vmatpush1.msra.mxu0 0.0
      %1875 = vmatprep.subr.mxu0 0.0
      %1876 = vmatpush1.msra.mxu0 0.0
      %1877 = vmatprep.subr.mxu0 0.0
      %1878 = vmatpush1.msra.mxu0 0.0
      %1879 = vmatprep.subr.mxu0 0.0
      %1880 = vmatpush1.msra.mxu0 0.0
      %1881 = vmatprep.subr.mxu0 0.0
      %1882 = vmatpush1.msra.mxu0 0.0
      %1883 = vmatprep.subr.mxu0 0.0
      %1884 = vmatpush1.msra.mxu0 0.0
      %1885 = vmatprep.subr.mxu0 0.0
      %1886 = vmatpush1.msra.mxu0 0.0
      %1887 = vmatprep.subr.mxu0 0.0
      %1888 = vmatpush1.msra.mxu0 0.0
      %1889 = vmatprep.subr.mxu0 0.0
      %1890 = vmatpush1.msra.mxu0 0.0
      %1891 = vmatprep.subr.mxu0 0.0
      %1892 = vmatpush1.msra.mxu0 0.0
      %1893 = vmatprep.mubr.f32.mxu0 0.0
      %1894 = vmatmul.mubr.f32.gmra.mrb[0].mxu0 %v1748
      %v1895 = vpop.f32.mrb[0].mxu0
      %v1896 = vadd.f32 0.0, %v1895
      %v1897 = vpop.f32.mrb[0].mxu0
      %1898 = vmatprep.mubr.f32.mxu0 0.0
      %1899 = vmatmul.mubr.f32.gmra.mrb[0].mxu0 %v1750
      %v1900 = vpop.f32.mrb[0].mxu0
      %v1901 = vadd.f32 0.0, %v1900
      %v1902 = vpop.f32.mrb[0].mxu0
      %1903 = vdwg.mxu0
      %v1904 = vadd.f32 %v1715, %v1819
      %v1905 = vadd.f32 %v1716, %v1821
      %v1906 = vadd.f32 %v1717, %v1896
      %v1907 = vadd.f32 %v1718, %v1825
      %v1908 = vadd.f32 %v1719, %v1827
      %v1909 = vadd.f32 %v1720, %v1901
      %1910 = vrot.lane.b32.xlu0 %v766, 32
      %v1911 = vpop.permute.xlu0 %1910
      %1912 = vrot.lane.b32.xlu0 %v768, 32
      %v1913 = vpop.permute.xlu0 %1912
      %1914 = vrot.lane.b32.xlu0 %v773, 111
      %v1915 = vpop.permute.xlu0 %1914
      %1916 = vrot.lane.b32.xlu0 %v774, 111
      %v1917 = vpop.permute.xlu0 %1916
      %1918 = vrot.lane.b32.xlu0 %v775, 111
      %v1919 = vpop.permute.xlu0 %1918
      %1920 = vrot.lane.b32.xlu0 %v777, 111
      %v1921 = vpop.permute.xlu0 %1920
      %1922 = vrot.lane.b32.xlu0 %v778, 111
      %v1923 = vpop.permute.xlu0 %1922
      %1924 = vrot.lane.b32.xlu0 %v779, 111
      %v1925 = vpop.permute.xlu0 %1924
      %vm1926 = vcmask 908288
      %v1927 = vsel %vm1926, %v1915, %v1917
      %v1928 = vsel %vm1926, %v1917, %v1919
      %v1929 = vsel %vm1926, %v1921, %v1923
      %v1930 = vsel %vm1926, %v1923, %v1925
      %v1937 = vsel %vm823, %v1911, 0
      %v1939 = vsel %vm823, %v1913, 0
      %1941 = vmatprep.subr.mxu0 %v1928
      %1942 = vmatpush1.msra.mxu0 %v1927
      %1943 = vmatprep.subr.mxu0 %v1930
      %1944 = vmatpush1.msra.mxu0 %v1929
      %1945 = vmatprep.subr.mxu0 0.0
      %1946 = vmatpush1.msra.mxu0 0.0
      %1947 = vmatprep.subr.mxu0 0.0
      %1948 = vmatpush1.msra.mxu0 0.0
      %1949 = vmatprep.subr.mxu0 0.0
      %1950 = vmatpush1.msra.mxu0 0.0
      %1951 = vmatprep.subr.mxu0 0.0
      %1952 = vmatpush1.msra.mxu0 0.0
      %1953 = vmatprep.subr.mxu0 0.0
      %1954 = vmatpush1.msra.mxu0 0.0
      %1955 = vmatprep.subr.mxu0 0.0
      %1956 = vmatpush1.msra.mxu0 0.0
      %1957 = vmatprep.subr.mxu0 0.0
      %1958 = vmatpush1.msra.mxu0 0.0
      %1959 = vmatprep.subr.mxu0 0.0
      %1960 = vmatpush1.msra.mxu0 0.0
      %1961 = vmatprep.subr.mxu0 0.0
      %1962 = vmatpush1.msra.mxu0 0.0
      %1963 = vmatprep.subr.mxu0 0.0
      %1964 = vmatpush1.msra.mxu0 0.0
      %1965 = vmatprep.subr.mxu0 0.0
      %1966 = vmatpush1.msra.mxu0 0.0
      %1967 = vmatprep.subr.mxu0 0.0
      %1968 = vmatpush1.msra.mxu0 0.0
      %1969 = vmatprep.subr.mxu0 0.0
      %1970 = vmatpush1.msra.mxu0 0.0
      %1971 = vmatprep.subr.mxu0 0.0
      %1972 = vmatpush1.msra.mxu0 0.0
      %1973 = vmatprep.subr.mxu0 0.0
      %1974 = vmatpush1.msra.mxu0 0.0
      %1975 = vmatprep.subr.mxu0 0.0
      %1976 = vmatpush1.msra.mxu0 0.0
      %1977 = vmatprep.subr.mxu0 0.0
      %1978 = vmatpush1.msra.mxu0 0.0
      %1979 = vmatprep.subr.mxu0 0.0
      %1980 = vmatpush1.msra.mxu0 0.0
      %1981 = vmatprep.subr.mxu0 0.0
      %1982 = vmatpush1.msra.mxu0 0.0
      %1983 = vmatprep.subr.mxu0 0.0
      %1984 = vmatpush1.msra.mxu0 0.0
      %1985 = vmatprep.subr.mxu0 0.0
      %1986 = vmatpush1.msra.mxu0 0.0
      %1987 = vmatprep.subr.mxu0 0.0
      %1988 = vmatpush1.msra.mxu0 0.0
      %1989 = vmatprep.subr.mxu0 0.0
      %1990 = vmatpush1.msra.mxu0 0.0
      %1991 = vmatprep.subr.mxu0 0.0
      %1992 = vmatpush1.msra.mxu0 0.0
      %1993 = vmatprep.subr.mxu0 0.0
      %1994 = vmatpush1.msra.mxu0 0.0
      %1995 = vmatprep.subr.mxu0 0.0
      %1996 = vmatpush1.msra.mxu0 0.0
      %1997 = vmatprep.subr.mxu0 0.0
      %1998 = vmatpush1.msra.mxu0 0.0
      %1999 = vmatprep.subr.mxu0 0.0
      %2000 = vmatpush1.msra.mxu0 0.0
      %2001 = vmatprep.subr.mxu0 0.0
      %2002 = vmatpush1.msra.mxu0 0.0
      %2003 = vmatprep.subr.mxu0 0.0
      %2004 = vmatpush1.msra.mxu0 0.0
      %2005 = vmatprep.mubr.f32.mxu0 0.0
      %2006 = vmatmul.mubr.f32.gmra.mrb[0].mxu0 %v1937
      %v2007 = vpop.f32.mrb[0].mxu0
      %v2008 = vadd.f32 0.0, %v2007
      %v2009 = vpop.f32.mrb[0].mxu0
      %v2010 = vadd.f32 0.0, %v2009
      %2011 = vmatprep.mubr.f32.mxu0 0.0
      %2012 = vmatmul.mubr.f32.gmra.mrb[0].mxu0 %v1939
      %v2013 = vpop.f32.mrb[0].mxu0
      %v2014 = vadd.f32 0.0, %v2013
      %v2015 = vpop.f32.mrb[0].mxu0
      %v2016 = vadd.f32 0.0, %v2015
      %2017 = vdwg.mxu0
      %2018 = vmatprep.subr.mxu0 0.0
      %2019 = vmatpush1.msra.mxu0 %v1919
      %2020 = vmatprep.subr.mxu0 0.0
      %2021 = vmatpush1.msra.mxu0 %v1925
      %2022 = vmatprep.subr.mxu0 0.0
      %2023 = vmatpush1.msra.mxu0 0.0
      %2024 = vmatprep.subr.mxu0 0.0
      %2025 = vmatpush1.msra.mxu0 0.0
      %2026 = vmatprep.subr.mxu0 0.0
      %2027 = vmatpush1.msra.mxu0 0.0
      %2028 = vmatprep.subr.mxu0 0.0
      %2029 = vmatpush1.msra.mxu0 0.0
      %2030 = vmatprep.subr.mxu0 0.0
      %2031 = vmatpush1.msra.mxu0 0.0
      %2032 = vmatprep.subr.mxu0 0.0
      %2033 = vmatpush1.msra.mxu0 0.0
      %2034 = vmatprep.subr.mxu0 0.0
      %2035 = vmatpush1.msra.mxu0 0.0
      %2036 = vmatprep.subr.mxu0 0.0
      %2037 = vmatpush1.msra.mxu0 0.0
      %2038 = vmatprep.subr.mxu0 0.0
      %2039 = vmatpush1.msra.mxu0 0.0
      %2040 = vmatprep.subr.mxu0 0.0
      %2041 = vmatpush1.msra.mxu0 0.0
      %2042 = vmatprep.subr.mxu0 0.0
      %2043 = vmatpush1.msra.mxu0 0.0
      %2044 = vmatprep.subr.mxu0 0.0
      %2045 = vmatpush1.msra.mxu0 0.0
      %2046 = vmatprep.subr.mxu0 0.0
      %2047 = vmatpush1.msra.mxu0 0.0
      %2048 = vmatprep.subr.mxu0 0.0
      %2049 = vmatpush1.msra.mxu0 0.0
      %2050 = vmatprep.subr.mxu0 0.0
      %2051 = vmatpush1.msra.mxu0 0.0
      %2052 = vmatprep.subr.mxu0 0.0
      %2053 = vmatpush1.msra.mxu0 0.0
      %2054 = vmatprep.subr.mxu0 0.0
      %2055 = vmatpush1.msra.mxu0 0.0
      %2056 = vmatprep.subr.mxu0 0.0
      %2057 = vmatpush1.msra.mxu0 0.0
      %2058 = vmatprep.subr.mxu0 0.0
      %2059 = vmatpush1.msra.mxu0 0.0
      %2060 = vmatprep.subr.mxu0 0.0
      %2061 = vmatpush1.msra.mxu0 0.0
      %2062 = vmatprep.subr.mxu0 0.0
      %2063 = vmatpush1.msra.mxu0 0.0
      %2064 = vmatprep.subr.mxu0 0.0
      %2065 = vmatpush1.msra.mxu0 0.0
      %2066 = vmatprep.subr.mxu0 0.0
      %2067 = vmatpush1.msra.mxu0 0.0
      %2068 = vmatprep.subr.mxu0 0.0
      %2069 = vmatpush1.msra.mxu0 0.0
      %2070 = vmatprep.subr.mxu0 0.0
      %2071 = vmatpush1.msra.mxu0 0.0
      %2072 = vmatprep.subr.mxu0 0.0
      %2073 = vmatpush1.msra.mxu0 0.0
      %2074 = vmatprep.subr.mxu0 0.0
      %2075 = vmatpush1.msra.mxu0 0.0
      %2076 = vmatprep.subr.mxu0 0.0
      %2077 = vmatpush1.msra.mxu0 0.0
      %2078 = vmatprep.subr.mxu0 0.0
      %2079 = vmatpush1.msra.mxu0 0.0
      %2080 = vmatprep.subr.mxu0 0.0
      %2081 = vmatpush1.msra.mxu0 0.0
      %2082 = vmatprep.mubr.f32.mxu0 0.0
      %2083 = vmatmul.mubr.f32.gmra.mrb[0].mxu0 %v1937
      %v2084 = vpop.f32.mrb[0].mxu0
      %v2085 = vadd.f32 0.0, %v2084
      %v2086 = vpop.f32.mrb[0].mxu0
      %2087 = vmatprep.mubr.f32.mxu0 0.0
      %2088 = vmatmul.mubr.f32.gmra.mrb[0].mxu0 %v1939
      %v2089 = vpop.f32.mrb[0].mxu0
      %v2090 = vadd.f32 0.0, %v2089
      %v2091 = vpop.f32.mrb[0].mxu0
      %2092 = vdwg.mxu0
      %v2093 = vadd.f32 %v1904, %v2008
      %v2094 = vadd.f32 %v1905, %v2010
      %v2095 = vadd.f32 %v1906, %v2085
      %v2096 = vadd.f32 %v1907, %v2014
      %v2097 = vadd.f32 %v1908, %v2016
      %v2098 = vadd.f32 %v1909, %v2090
      %2099 = vrot.lane.b32.xlu0 %v766, 16
      %v2100 = vpop.permute.xlu0 %2099
      %2101 = vrot.lane.b32.xlu0 %v768, 16
      %v2102 = vpop.permute.xlu0 %2101
      %2103 = vrot.lane.b32.xlu0 %v773, 110
      %v2104 = vpop.permute.xlu0 %2103
      %2105 = vrot.lane.b32.xlu0 %v774, 110
      %v2106 = vpop.permute.xlu0 %2105
      %2107 = vrot.lane.b32.xlu0 %v775, 110
      %v2108 = vpop.permute.xlu0 %2107
      %2109 = vrot.lane.b32.xlu0 %v777, 110
      %v2110 = vpop.permute.xlu0 %2109
      %2111 = vrot.lane.b32.xlu0 %v778, 110
      %v2112 = vpop.permute.xlu0 %2111
      %2113 = vrot.lane.b32.xlu0 %v779, 110
      %v2114 = vpop.permute.xlu0 %2113
      %vm2115 = vcmask 900096
      %v2116 = vsel %vm2115, %v2104, %v2106
      %v2117 = vsel %vm2115, %v2106, %v2108
      %v2118 = vsel %vm2115, %v2110, %v2112
      %v2119 = vsel %vm2115, %v2112, %v2114
      %v2126 = vsel %vm823, %v2100, 0
      %v2128 = vsel %vm823, %v2102, 0
      %2130 = vmatprep.subr.mxu0 %v2117
      %2131 = vmatpush1.msra.mxu0 %v2116
      %2132 = vmatprep.subr.mxu0 %v2119
      %2133 = vmatpush1.msra.mxu0 %v2118
      %2134 = vmatprep.subr.mxu0 0.0
      %2135 = vmatpush1.msra.mxu0 0.0
      %2136 = vmatprep.subr.mxu0 0.0
      %2137 = vmatpush1.msra.mxu0 0.0
      %2138 = vmatprep.subr.mxu0 0.0
      %2139 = vmatpush1.msra.mxu0 0.0
      %2140 = vmatprep.subr.mxu0 0.0
      %2141 = vmatpush1.msra.mxu0 0.0
      %2142 = vmatprep.subr.mxu0 0.0
      %2143 = vmatpush1.msra.mxu0 0.0
      %2144 = vmatprep.subr.mxu0 0.0
      %2145 = vmatpush1.msra.mxu0 0.0
      %2146 = vmatprep.subr.mxu0 0.0
      %2147 = vmatpush1.msra.mxu0 0.0
      %2148 = vmatprep.subr.mxu0 0.0
      %2149 = vmatpush1.msra.mxu0 0.0
      %2150 = vmatprep.subr.mxu0 0.0
      %2151 = vmatpush1.msra.mxu0 0.0
      %2152 = vmatprep.subr.mxu0 0.0
      %2153 = vmatpush1.msra.mxu0 0.0
      %2154 = vmatprep.subr.mxu0 0.0
      %2155 = vmatpush1.msra.mxu0 0.0
      %2156 = vmatprep.subr.mxu0 0.0
      %2157 = vmatpush1.msra.mxu0 0.0
      %2158 = vmatprep.subr.mxu0 0.0
      %2159 = vmatpush1.msra.mxu0 0.0
      %2160 = vmatprep.subr.mxu0 0.0
      %2161 = vmatpush1.msra.mxu0 0.0
      %2162 = vmatprep.subr.mxu0 0.0
      %2163 = vmatpush1.msra.mxu0 0.0
      %2164 = vmatprep.subr.mxu0 0.0
      %2165 = vmatpush1.msra.mxu0 0.0
      %2166 = vmatprep.subr.mxu0 0.0
      %2167 = vmatpush1.msra.mxu0 0.0
      %2168 = vmatprep.subr.mxu0 0.0
      %2169 = vmatpush1.msra.mxu0 0.0
      %2170 = vmatprep.subr.mxu0 0.0
      %2171 = vmatpush1.msra.mxu0 0.0
      %2172 = vmatprep.subr.mxu0 0.0
      %2173 = vmatpush1.msra.mxu0 0.0
      %2174 = vmatprep.subr.mxu0 0.0
      %2175 = vmatpush1.msra.mxu0 0.0
      %2176 = vmatprep.subr.mxu0 0.0
      %2177 = vmatpush1.msra.mxu0 0.0
      %2178 = vmatprep.subr.mxu0 0.0
      %2179 = vmatpush1.msra.mxu0 0.0
      %2180 = vmatprep.subr.mxu0 0.0
      %2181 = vmatpush1.msra.mxu0 0.0
      %2182 = vmatprep.subr.mxu0 0.0
      %2183 = vmatpush1.msra.mxu0 0.0
      %2184 = vmatprep.subr.mxu0 0.0
      %2185 = vmatpush1.msra.mxu0 0.0
      %2186 = vmatprep.subr.mxu0 0.0
      %2187 = vmatpush1.msra.mxu0 0.0
      %2188 = vmatprep.subr.mxu0 0.0
      %2189 = vmatpush1.msra.mxu0 0.0
      %2190 = vmatprep.subr.mxu0 0.0
      %2191 = vmatpush1.msra.mxu0 0.0
      %2192 = vmatprep.subr.mxu0 0.0
      %2193 = vmatpush1.msra.mxu0 0.0
      %2194 = vmatprep.mubr.f32.mxu0 0.0
      %2195 = vmatmul.mubr.f32.gmra.mrb[0].mxu0 %v2126
      %v2196 = vpop.f32.mrb[0].mxu0
      %v2197 = vadd.f32 0.0, %v2196
      %v2198 = vpop.f32.mrb[0].mxu0
      %v2199 = vadd.f32 0.0, %v2198
      %2200 = vmatprep.mubr.f32.mxu0 0.0
      %2201 = vmatmul.mubr.f32.gmra.mrb[0].mxu0 %v2128
      %v2202 = vpop.f32.mrb[0].mxu0
      %v2203 = vadd.f32 0.0, %v2202
      %v2204 = vpop.f32.mrb[0].mxu0
      %v2205 = vadd.f32 0.0, %v2204
      %2206 = vdwg.mxu0
      %2207 = vmatprep.subr.mxu0 0.0
      %2208 = vmatpush1.msra.mxu0 %v2108
      %2209 = vmatprep.subr.mxu0 0.0
      %2210 = vmatpush1.msra.mxu0 %v2114
      %2211 = vmatprep.subr.mxu0 0.0
      %2212 = vmatpush1.msra.mxu0 0.0
      %2213 = vmatprep.subr.mxu0 0.0
      %2214 = vmatpush1.msra.mxu0 0.0
      %2215 = vmatprep.subr.mxu0 0.0
      %2216 = vmatpush1.msra.mxu0 0.0
      %2217 = vmatprep.subr.mxu0 0.0
      %2218 = vmatpush1.msra.mxu0 0.0
      %2219 = vmatprep.subr.mxu0 0.0
      %2220 = vmatpush1.msra.mxu0 0.0
      %2221 = vmatprep.subr.mxu0 0.0
      %2222 = vmatpush1.msra.mxu0 0.0
      %2223 = vmatprep.subr.mxu0 0.0
      %2224 = vmatpush1.msra.mxu0 0.0
      %2225 = vmatprep.subr.mxu0 0.0
      %2226 = vmatpush1.msra.mxu0 0.0
      %2227 = vmatprep.subr.mxu0 0.0
      %2228 = vmatpush1.msra.mxu0 0.0
      %2229 = vmatprep.subr.mxu0 0.0
      %2230 = vmatpush1.msra.mxu0 0.0
      %2231 = vmatprep.subr.mxu0 0.0
      %2232 = vmatpush1.msra.mxu0 0.0
      %2233 = vmatprep.subr.mxu0 0.0
      %2234 = vmatpush1.msra.mxu0 0.0
      %2235 = vmatprep.subr.mxu0 0.0
      %2236 = vmatpush1.msra.mxu0 0.0
      %2237 = vmatprep.subr.mxu0 0.0
      %2238 = vmatpush1.msra.mxu0 0.0
      %2239 = vmatprep.subr.mxu0 0.0
      %2240 = vmatpush1.msra.mxu0 0.0
      %2241 = vmatprep.subr.mxu0 0.0
      %2242 = vmatpush1.msra.mxu0 0.0
      %2243 = vmatprep.subr.mxu0 0.0
      %2244 = vmatpush1.msra.mxu0 0.0
      %2245 = vmatprep.subr.mxu0 0.0
      %2246 = vmatpush1.msra.mxu0 0.0
      %2247 = vmatprep.subr.mxu0 0.0
      %2248 = vmatpush1.msra.mxu0 0.0
      %2249 = vmatprep.subr.mxu0 0.0
      %2250 = vmatpush1.msra.mxu0 0.0
      %2251 = vmatprep.subr.mxu0 0.0
      %2252 = vmatpush1.msra.mxu0 0.0
      %2253 = vmatprep.subr.mxu0 0.0
      %2254 = vmatpush1.msra.mxu0 0.0
      %2255 = vmatprep.subr.mxu0 0.0
      %2256 = vmatpush1.msra.mxu0 0.0
      %2257 = vmatprep.subr.mxu0 0.0
      %2258 = vmatpush1.msra.mxu0 0.0
      %2259 = vmatprep.subr.mxu0 0.0
      %2260 = vmatpush1.msra.mxu0 0.0
      %2261 = vmatprep.subr.mxu0 0.0
      %2262 = vmatpush1.msra.mxu0 0.0
      %2263 = vmatprep.subr.mxu0 0.0
      %2264 = vmatpush1.msra.mxu0 0.0
      %2265 = vmatprep.subr.mxu0 0.0
      %2266 = vmatpush1.msra.mxu0 0.0
      %2267 = vmatprep.subr.mxu0 0.0
      %2268 = vmatpush1.msra.mxu0 0.0
      %2269 = vmatprep.subr.mxu0 0.0
      %2270 = vmatpush1.msra.mxu0 0.0
      %2271 = vmatprep.mubr.f32.mxu0 0.0
      %2272 = vmatmul.mubr.f32.gmra.mrb[0].mxu0 %v2126
      %v2273 = vpop.f32.mrb[0].mxu0
      %v2274 = vadd.f32 0.0, %v2273
      %v2275 = vpop.f32.mrb[0].mxu0
      %2276 = vmatprep.mubr.f32.mxu0 0.0
      %2277 = vmatmul.mubr.f32.gmra.mrb[0].mxu0 %v2128
      %v2278 = vpop.f32.mrb[0].mxu0
      %v2279 = vadd.f32 0.0, %v2278
      %v2280 = vpop.f32.mrb[0].mxu0
      %2281 = vdwg.mxu0
      %v2282 = vadd.f32 %v2093, %v2197
      %v2283 = vadd.f32 %v2094, %v2199
      %v2284 = vadd.f32 %v2095, %v2274
      %v2285 = vadd.f32 %v2096, %v2203
      %v2286 = vadd.f32 %v2097, %v2205
      %v2287 = vadd.f32 %v2098, %v2279
      %2288 = vrot.lane.b32.xlu0 %v773, 109
      %v2289 = vpop.permute.xlu0 %2288
      %2290 = vrot.lane.b32.xlu0 %v774, 109
      %v2291 = vpop.permute.xlu0 %2290
      %2292 = vrot.lane.b32.xlu0 %v775, 109
      %v2293 = vpop.permute.xlu0 %2292
      %2294 = vrot.lane.b32.xlu0 %v777, 109
      %v2295 = vpop.permute.xlu0 %2294
      %2296 = vrot.lane.b32.xlu0 %v778, 109
      %v2297 = vpop.permute.xlu0 %2296
      %2298 = vrot.lane.b32.xlu0 %v779, 109
      %v2299 = vpop.permute.xlu0 %2298
      %vm2300 = vcmask 891904
      %v2301 = vsel %vm2300, %v2289, %v2291
      %v2302 = vsel %vm2300, %v2291, %v2293
      %v2303 = vsel %vm2300, %v2295, %v2297
      %v2304 = vsel %vm2300, %v2297, %v2299
      %v2312 = vsel %vm823, %v767, 0
      %v2315 = vsel %vm823, %v769, 0
      %2317 = vmatprep.subr.mxu0 %v2302
      %2318 = vmatpush1.msra.mxu0 %v2301
      %2319 = vmatprep.subr.mxu0 %v2304
      %2320 = vmatpush1.msra.mxu0 %v2303
      %2321 = vmatprep.subr.mxu0 0.0
      %2322 = vmatpush1.msra.mxu0 0.0
      %2323 = vmatprep.subr.mxu0 0.0
      %2324 = vmatpush1.msra.mxu0 0.0
      %2325 = vmatprep.subr.mxu0 0.0
      %2326 = vmatpush1.msra.mxu0 0.0
      %2327 = vmatprep.subr.mxu0 0.0
      %2328 = vmatpush1.msra.mxu0 0.0
      %2329 = vmatprep.subr.mxu0 0.0
      %2330 = vmatpush1.msra.mxu0 0.0
      %2331 = vmatprep.subr.mxu0 0.0
      %2332 = vmatpush1.msra.mxu0 0.0
      %2333 = vmatprep.subr.mxu0 0.0
      %2334 = vmatpush1.msra.mxu0 0.0
      %2335 = vmatprep.subr.mxu0 0.0
      %2336 = vmatpush1.msra.mxu0 0.0
      %2337 = vmatprep.subr.mxu0 0.0
      %2338 = vmatpush1.msra.mxu0 0.0
      %2339 = vmatprep.subr.mxu0 0.0
      %2340 = vmatpush1.msra.mxu0 0.0
      %2341 = vmatprep.subr.mxu0 0.0
      %2342 = vmatpush1.msra.mxu0 0.0
      %2343 = vmatprep.subr.mxu0 0.0
      %2344 = vmatpush1.msra.mxu0 0.0
      %2345 = vmatprep.subr.mxu0 0.0
      %2346 = vmatpush1.msra.mxu0 0.0
      %2347 = vmatprep.subr.mxu0 0.0
      %2348 = vmatpush1.msra.mxu0 0.0
      %2349 = vmatprep.subr.mxu0 0.0
      %2350 = vmatpush1.msra.mxu0 0.0
      %2351 = vmatprep.subr.mxu0 0.0
      %2352 = vmatpush1.msra.mxu0 0.0
      %2353 = vmatprep.subr.mxu0 0.0
      %2354 = vmatpush1.msra.mxu0 0.0
      %2355 = vmatprep.subr.mxu0 0.0
      %2356 = vmatpush1.msra.mxu0 0.0
      %2357 = vmatprep.subr.mxu0 0.0
      %2358 = vmatpush1.msra.mxu0 0.0
      %2359 = vmatprep.subr.mxu0 0.0
      %2360 = vmatpush1.msra.mxu0 0.0
      %2361 = vmatprep.subr.mxu0 0.0
      %2362 = vmatpush1.msra.mxu0 0.0
      %2363 = vmatprep.subr.mxu0 0.0
      %2364 = vmatpush1.msra.mxu0 0.0
      %2365 = vmatprep.subr.mxu0 0.0
      %2366 = vmatpush1.msra.mxu0 0.0
      %2367 = vmatprep.subr.mxu0 0.0
      %2368 = vmatpush1.msra.mxu0 0.0
      %2369 = vmatprep.subr.mxu0 0.0
      %2370 = vmatpush1.msra.mxu0 0.0
      %2371 = vmatprep.subr.mxu0 0.0
      %2372 = vmatpush1.msra.mxu0 0.0
      %2373 = vmatprep.subr.mxu0 0.0
      %2374 = vmatpush1.msra.mxu0 0.0
      %2375 = vmatprep.subr.mxu0 0.0
      %2376 = vmatpush1.msra.mxu0 0.0
      %2377 = vmatprep.subr.mxu0 0.0
      %2378 = vmatpush1.msra.mxu0 0.0
      %2379 = vmatprep.subr.mxu0 0.0
      %2380 = vmatpush1.msra.mxu0 0.0
      %2381 = vmatprep.mubr.f32.mxu0 0.0
      %2382 = vmatmul.mubr.f32.gmra.mrb[0].mxu0 %v2312
      %v2383 = vpop.f32.mrb[0].mxu0
      %v2384 = vadd.f32 0.0, %v2383
      %v2385 = vpop.f32.mrb[0].mxu0
      %v2386 = vadd.f32 0.0, %v2385
      %2387 = vmatprep.mubr.f32.mxu0 0.0
      %2388 = vmatmul.mubr.f32.gmra.mrb[0].mxu0 %v2315
      %v2389 = vpop.f32.mrb[0].mxu0
      %v2390 = vadd.f32 0.0, %v2389
      %v2391 = vpop.f32.mrb[0].mxu0
      %v2392 = vadd.f32 0.0, %v2391
      %2393 = vdwg.mxu0
      %2394 = vmatprep.subr.mxu0 0.0
      %2395 = vmatpush1.msra.mxu0 %v2293
      %2396 = vmatprep.subr.mxu0 0.0
      %2397 = vmatpush1.msra.mxu0 %v2299
      %2398 = vmatprep.subr.mxu0 0.0
      %2399 = vmatpush1.msra.mxu0 0.0
      %2400 = vmatprep.subr.mxu0 0.0
      %2401 = vmatpush1.msra.mxu0 0.0
      %2402 = vmatprep.subr.mxu0 0.0
      %2403 = vmatpush1.msra.mxu0 0.0
      %2404 = vmatprep.subr.mxu0 0.0
      %2405 = vmatpush1.msra.mxu0 0.0
      %2406 = vmatprep.subr.mxu0 0.0
      %2407 = vmatpush1.msra.mxu0 0.0
      %2408 = vmatprep.subr.mxu0 0.0
      %2409 = vmatpush1.msra.mxu0 0.0
      %2410 = vmatprep.subr.mxu0 0.0
      %2411 = vmatpush1.msra.mxu0 0.0
      %2412 = vmatprep.subr.mxu0 0.0
      %2413 = vmatpush1.msra.mxu0 0.0
      %2414 = vmatprep.subr.mxu0 0.0
      %2415 = vmatpush1.msra.mxu0 0.0
      %2416 = vmatprep.subr.mxu0 0.0
      %2417 = vmatpush1.msra.mxu0 0.0
      %2418 = vmatprep.subr.mxu0 0.0
      %2419 = vmatpush1.msra.mxu0 0.0
      %2420 = vmatprep.subr.mxu0 0.0
      %2421 = vmatpush1.msra.mxu0 0.0
      %2422 = vmatprep.subr.mxu0 0.0
      %2423 = vmatpush1.msra.mxu0 0.0
      %2424 = vmatprep.subr.mxu0 0.0
      %2425 = vmatpush1.msra.mxu0 0.0
      %2426 = vmatprep.subr.mxu0 0.0
      %2427 = vmatpush1.msra.mxu0 0.0
      %2428 = vmatprep.subr.mxu0 0.0
      %2429 = vmatpush1.msra.mxu0 0.0
      %2430 = vmatprep.subr.mxu0 0.0
      %2431 = vmatpush1.msra.mxu0 0.0
      %2432 = vmatprep.subr.mxu0 0.0
      %2433 = vmatpush1.msra.mxu0 0.0
      %2434 = vmatprep.subr.mxu0 0.0
      %2435 = vmatpush1.msra.mxu0 0.0
      %2436 = vmatprep.subr.mxu0 0.0
      %2437 = vmatpush1.msra.mxu0 0.0
      %2438 = vmatprep.subr.mxu0 0.0
      %2439 = vmatpush1.msra.mxu0 0.0
      %2440 = vmatprep.subr.mxu0 0.0
      %2441 = vmatpush1.msra.mxu0 0.0
      %2442 = vmatprep.subr.mxu0 0.0
      %2443 = vmatpush1.msra.mxu0 0.0
      %2444 = vmatprep.subr.mxu0 0.0
      %2445 = vmatpush1.msra.mxu0 0.0
      %2446 = vmatprep.subr.mxu0 0.0
      %2447 = vmatpush1.msra.mxu0 0.0
      %2448 = vmatprep.subr.mxu0 0.0
      %2449 = vmatpush1.msra.mxu0 0.0
      %2450 = vmatprep.subr.mxu0 0.0
      %2451 = vmatpush1.msra.mxu0 0.0
      %2452 = vmatprep.subr.mxu0 0.0
      %2453 = vmatpush1.msra.mxu0 0.0
      %2454 = vmatprep.subr.mxu0 0.0
      %2455 = vmatpush1.msra.mxu0 0.0
      %2456 = vmatprep.subr.mxu0 0.0
      %2457 = vmatpush1.msra.mxu0 0.0
      %2458 = vmatprep.mubr.f32.mxu0 0.0
      %2459 = vmatmul.mubr.f32.gmra.mrb[0].mxu0 %v2312
      %v2460 = vpop.f32.mrb[0].mxu0
      %v2461 = vadd.f32 0.0, %v2460
      %v2462 = vpop.f32.mrb[0].mxu0
      %2463 = vmatprep.mubr.f32.mxu0 0.0
      %2464 = vmatmul.mubr.f32.gmra.mrb[0].mxu0 %v2315
      %v2465 = vpop.f32.mrb[0].mxu0
      %v2466 = vadd.f32 0.0, %v2465
      %v2467 = vpop.f32.mrb[0].mxu0
      %2468 = vdwg.mxu0
      %v2469 = vadd.f32 %v2282, %v2384
      %v2470 = vadd.f32 %v2283, %v2386
      %v2471 = vadd.f32 %v2284, %v2461
      %v2472 = vadd.f32 %v2285, %v2390
      %v2473 = vadd.f32 %v2286, %v2392
      %v2474 = vadd.f32 %v2287, %v2466
      %2476 = vset.pattern.permute.xlu0 0
      %2477 = vperm.xlu0 %2476, %v770
      %v2478 = vpop.permute.xlu0 %2477
      %2481 = vset.pattern.permute.xlu0 0
      %2482 = vperm.xlu0 %2481, %v771
      %v2483 = vpop.permute.xlu0 %2482
      %v2485 = vadd.f32 %v2469, %v2478
      %v2486 = vadd.f32 %v2470, %v2478
      %v2487 = vadd.f32 %v2471, %v2478
      %v2488 = vadd.f32 %v2472, %v2483
      %v2489 = vadd.f32 %v2473, %v2483
      %v2490 = vadd.f32 %v2474, %v2483
      %v2491 = vmax.f32 %v2485, 0.0
      %v2492 = vmax.f32 %v2486, 0.0
      %v2493 = vmax.f32 %v2487, 0.0
      %v2494 = vmax.f32 %v2488, 0.0
      %v2495 = vmax.f32 %v2489, 0.0
      %v2496 = vmax.f32 %v2490, 0.0
      %v2497 = vmul.f32 %v2491, %v742
      %v2498 = vmul.f32 %v2492, %v746
      %v2499 = vmul.f32 %v2493, %v750
      %v2500 = vmul.f32 %v2494, %v742
      %v2501 = vmul.f32 %v2495, %v746
      %v2502 = vmul.f32 %v2496, %v750
      %2503 = vst [vmem:[#allocation2 + $0x8] sm:$0xff] %v2497
      %2504 = vst [vmem:[#allocation2 + $0x10] sm:$0xff] %v2498
      %2505 = vst.msk [vmem:[#allocation2 + $0x18] sm:$0xff] %vm527, %v2499
      %2506 = vst [vmem:[#allocation2 + $0x30] sm:$0xff] %v2500
      %2507 = vst [vmem:[#allocation2 + $0x38] sm:$0xff] %v2501
      %2508 = vst.msk [vmem:[#allocation2 + $0x40] sm:$0xff] %vm527, %v2502
      %v2509 = vld [vmem:[%s6] sm:$0xff]
      %v2510 = vld [vmem:[%s6 + $0x8] sm:$0xff]
      %v2511 = vld [vmem:[%s6 + $0x10] sm:$0xff]
      %v2512 = vld [vmem:[%s6 + $0x18] sm:$0xff]
      %v2513 = vld [vmem:[%s7] sm:$0xff]
      %v2514 = vld [vmem:[%s7 + $0x8] sm:$0xff]
      %v2515 = vld [vmem:[#allocation2] sm:$0xff]
      %v2516 = vld [vmem:[#allocation2 + $0x8] sm:$0xff]
      %v2517 = vld [vmem:[#allocation2 + $0x10] sm:$0xff]
      %v2518 = vld [vmem:[#allocation2 + $0x18] sm:$0xff]
      %v2519 = vld [vmem:[#allocation2 + $0x28] sm:$0xff]
      %v2520 = vld [vmem:[#allocation2 + $0x30] sm:$0xff]
      %v2521 = vld [vmem:[#allocation2 + $0x38] sm:$0xff]
      %v2522 = vld [vmem:[#allocation2 + $0x40] sm:$0xff]
      %2525 = vrot.lane.b32.xlu0 %v2509, 112
      %v2526 = vpop.permute.xlu0 %2525
      %2527 = vrot.lane.b32.xlu0 %v2511, 112
      %v2528 = vpop.permute.xlu0 %2527
      %2537 = vrot.lane.b32.xlu0 %v2515, 18
      %v2538 = vpop.permute.xlu0 %2537
      %2539 = vrot.lane.b32.xlu0 %v2516, 18
      %v2540 = vpop.permute.xlu0 %2539
      %2541 = vrot.lane.b32.xlu0 %v2517, 18
      %v2542 = vpop.permute.xlu0 %2541
      %2543 = vrot.lane.b32.xlu0 %v2518, 18
      %v2544 = vpop.permute.xlu0 %2543
      %2545 = vrot.lane.b32.xlu0 %v2519, 18
      %v2546 = vpop.permute.xlu0 %2545
      %2547 = vrot.lane.b32.xlu0 %v2520, 18
      %v2548 = vpop.permute.xlu0 %2547
      %2549 = vrot.lane.b32.xlu0 %v2521, 18
      %v2550 = vpop.permute.xlu0 %2549
      %2551 = vrot.lane.b32.xlu0 %v2522, 18
      %v2552 = vpop.permute.xlu0 %2551
      %v2553 = vsel %vm810, %v2538, %v2540
      %v2554 = vsel %vm810, %v2540, %v2542
      %v2555 = vsel %vm810, %v2542, %v2544
      %v2556 = vsel %vm810, %v2546, %v2548
      %v2557 = vsel %vm810, %v2548, %v2550
      %v2558 = vsel %vm810, %v2550, %v2552
      %v2565 = vsel %vm823, %v2526, 0
      %v2567 = vsel %vm823, %v2528, 0
      %2569 = vmatprep.subr.mxu0 %v2554
      %2570 = vmatpush1.msra.mxu0 %v2553
      %2571 = vmatprep.subr.mxu0 %v2557
      %2572 = vmatpush1.msra.mxu0 %v2556
      %2573 = vmatprep.subr.mxu0 0.0
      %2574 = vmatpush1.msra.mxu0 0.0
      %2575 = vmatprep.subr.mxu0 0.0
      %2576 = vmatpush1.msra.mxu0 0.0
      %2577 = vmatprep.subr.mxu0 0.0
      %2578 = vmatpush1.msra.mxu0 0.0
      %2579 = vmatprep.subr.mxu0 0.0
      %2580 = vmatpush1.msra.mxu0 0.0
      %2581 = vmatprep.subr.mxu0 0.0
      %2582 = vmatpush1.msra.mxu0 0.0
      %2583 = vmatprep.subr.mxu0 0.0
      %2584 = vmatpush1.msra.mxu0 0.0
      %2585 = vmatprep.subr.mxu0 0.0
      %2586 = vmatpush1.msra.mxu0 0.0
      %2587 = vmatprep.subr.mxu0 0.0
      %2588 = vmatpush1.msra.mxu0 0.0
      %2589 = vmatprep.subr.mxu0 0.0
      %2590 = vmatpush1.msra.mxu0 0.0
      %2591 = vmatprep.subr.mxu0 0.0
      %2592 = vmatpush1.msra.mxu0 0.0
      %2593 = vmatprep.subr.mxu0 0.0
      %2594 = vmatpush1.msra.mxu0 0.0
      %2595 = vmatprep.subr.mxu0 0.0
      %2596 = vmatpush1.msra.mxu0 0.0
      %2597 = vmatprep.subr.mxu0 0.0
      %2598 = vmatpush1.msra.mxu0 0.0
      %2599 = vmatprep.subr.mxu0 0.0
      %2600 = vmatpush1.msra.mxu0 0.0
      %2601 = vmatprep.subr.mxu0 0.0
      %2602 = vmatpush1.msra.mxu0 0.0
      %2603 = vmatprep.subr.mxu0 0.0
      %2604 = vmatpush1.msra.mxu0 0.0
      %2605 = vmatprep.subr.mxu0 0.0
      %2606 = vmatpush1.msra.mxu0 0.0
      %2607 = vmatprep.subr.mxu0 0.0
      %2608 = vmatpush1.msra.mxu0 0.0
      %2609 = vmatprep.subr.mxu0 0.0
      %2610 = vmatpush1.msra.mxu0 0.0
      %2611 = vmatprep.subr.mxu0 0.0
      %2612 = vmatpush1.msra.mxu0 0.0
      %2613 = vmatprep.subr.mxu0 0.0
      %2614 = vmatpush1.msra.mxu0 0.0
      %2615 = vmatprep.subr.mxu0 0.0
      %2616 = vmatpush1.msra.mxu0 0.0
      %2617 = vmatprep.subr.mxu0 0.0
      %2618 = vmatpush1.msra.mxu0 0.0
      %2619 = vmatprep.subr.mxu0 0.0
      %2620 = vmatpush1.msra.mxu0 0.0
      %2621 = vmatprep.subr.mxu0 0.0
      %2622 = vmatpush1.msra.mxu0 0.0
      %2623 = vmatprep.subr.mxu0 0.0
      %2624 = vmatpush1.msra.mxu0 0.0
      %2625 = vmatprep.subr.mxu0 0.0
      %2626 = vmatpush1.msra.mxu0 0.0
      %2627 = vmatprep.subr.mxu0 0.0
      %2628 = vmatpush1.msra.mxu0 0.0
      %2629 = vmatprep.subr.mxu0 0.0
      %2630 = vmatpush1.msra.mxu0 0.0
      %2631 = vmatprep.subr.mxu0 0.0
      %2632 = vmatpush1.msra.mxu0 0.0
      %2633 = vmatprep.mubr.f32.mxu0 0.0
      %2634 = vmatmul.mubr.f32.gmra.mrb[0].mxu0 %v2565
      %v2635 = vpop.f32.mrb[0].mxu0
      %v2636 = vadd.f32 0.0, %v2635
      %v2637 = vpop.f32.mrb[0].mxu0
      %v2638 = vadd.f32 0.0, %v2637
      %2639 = vmatprep.mubr.f32.mxu0 0.0
      %2640 = vmatmul.mubr.f32.gmra.mrb[0].mxu0 %v2567
      %v2641 = vpop.f32.mrb[0].mxu0
      %v2642 = vadd.f32 0.0, %v2641
      %v2643 = vpop.f32.mrb[0].mxu0
      %v2644 = vadd.f32 0.0, %v2643
      %2645 = vdwg.mxu0
      %2646 = vmatprep.subr.mxu0 0.0
      %2647 = vmatpush1.msra.mxu0 %v2555
      %2648 = vmatprep.subr.mxu0 0.0
      %2649 = vmatpush1.msra.mxu0 %v2558
      %2650 = vmatprep.subr.mxu0 0.0
      %2651 = vmatpush1.msra.mxu0 0.0
      %2652 = vmatprep.subr.mxu0 0.0
      %2653 = vmatpush1.msra.mxu0 0.0
      %2654 = vmatprep.subr.mxu0 0.0
      %2655 = vmatpush1.msra.mxu0 0.0
      %2656 = vmatprep.subr.mxu0 0.0
      %2657 = vmatpush1.msra.mxu0 0.0
      %2658 = vmatprep.subr.mxu0 0.0
      %2659 = vmatpush1.msra.mxu0 0.0
      %2660 = vmatprep.subr.mxu0 0.0
      %2661 = vmatpush1.msra.mxu0 0.0
      %2662 = vmatprep.subr.mxu0 0.0
      %2663 = vmatpush1.msra.mxu0 0.0
      %2664 = vmatprep.subr.mxu0 0.0
      %2665 = vmatpush1.msra.mxu0 0.0
      %2666 = vmatprep.subr.mxu0 0.0
      %2667 = vmatpush1.msra.mxu0 0.0
      %2668 = vmatprep.subr.mxu0 0.0
      %2669 = vmatpush1.msra.mxu0 0.0
      %2670 = vmatprep.subr.mxu0 0.0
      %2671 = vmatpush1.msra.mxu0 0.0
      %2672 = vmatprep.subr.mxu0 0.0
      %2673 = vmatpush1.msra.mxu0 0.0
      %2674 = vmatprep.subr.mxu0 0.0
      %2675 = vmatpush1.msra.mxu0 0.0
      %2676 = vmatprep.subr.mxu0 0.0
      %2677 = vmatpush1.msra.mxu0 0.0
      %2678 = vmatprep.subr.mxu0 0.0
      %2679 = vmatpush1.msra.mxu0 0.0
      %2680 = vmatprep.subr.mxu0 0.0
      %2681 = vmatpush1.msra.mxu0 0.0
      %2682 = vmatprep.subr.mxu0 0.0
      %2683 = vmatpush1.msra.mxu0 0.0
      %2684 = vmatprep.subr.mxu0 0.0
      %2685 = vmatpush1.msra.mxu0 0.0
      %2686 = vmatprep.subr.mxu0 0.0
      %2687 = vmatpush1.msra.mxu0 0.0
      %2688 = vmatprep.subr.mxu0 0.0
      %2689 = vmatpush1.msra.mxu0 0.0
      %2690 = vmatprep.subr.mxu0 0.0
      %2691 = vmatpush1.msra.mxu0 0.0
      %2692 = vmatprep.subr.mxu0 0.0
      %2693 = vmatpush1.msra.mxu0 0.0
      %2694 = vmatprep.subr.mxu0 0.0
      %2695 = vmatpush1.msra.mxu0 0.0
      %2696 = vmatprep.subr.mxu0 0.0
      %2697 = vmatpush1.msra.mxu0 0.0
      %2698 = vmatprep.subr.mxu0 0.0
      %2699 = vmatpush1.msra.mxu0 0.0
      %2700 = vmatprep.subr.mxu0 0.0
      %2701 = vmatpush1.msra.mxu0 0.0
      %2702 = vmatprep.subr.mxu0 0.0
      %2703 = vmatpush1.msra.mxu0 0.0
      %2704 = vmatprep.subr.mxu0 0.0
      %2705 = vmatpush1.msra.mxu0 0.0
      %2706 = vmatprep.subr.mxu0 0.0
      %2707 = vmatpush1.msra.mxu0 0.0
      %2708 = vmatprep.subr.mxu0 0.0
      %2709 = vmatpush1.msra.mxu0 0.0
      %2710 = vmatprep.mubr.f32.mxu0 0.0
      %2711 = vmatmul.mubr.f32.gmra.mrb[0].mxu0 %v2565
      %v2712 = vpop.f32.mrb[0].mxu0
      %v2713 = vadd.f32 0.0, %v2712
      %v2714 = vpop.f32.mrb[0].mxu0
      %2715 = vmatprep.mubr.f32.mxu0 0.0
      %2716 = vmatmul.mubr.f32.gmra.mrb[0].mxu0 %v2567
      %v2717 = vpop.f32.mrb[0].mxu0
      %v2718 = vadd.f32 0.0, %v2717
      %v2719 = vpop.f32.mrb[0].mxu0
      %2720 = vdwg.mxu0
      %2721 = vrot.lane.b32.xlu0 %v2515, 19
      %v2722 = vpop.permute.xlu0 %2721
      %2723 = vrot.lane.b32.xlu0 %v2516, 19
      %v2724 = vpop.permute.xlu0 %2723
      %2725 = vrot.lane.b32.xlu0 %v2517, 19
      %v2726 = vpop.permute.xlu0 %2725
      %2727 = vrot.lane.b32.xlu0 %v2518, 19
      %v2728 = vpop.permute.xlu0 %2727
      %2729 = vrot.lane.b32.xlu0 %v2519, 19
      %v2730 = vpop.permute.xlu0 %2729
      %2731 = vrot.lane.b32.xlu0 %v2520, 19
      %v2732 = vpop.permute.xlu0 %2731
      %2733 = vrot.lane.b32.xlu0 %v2521, 19
      %v2734 = vpop.permute.xlu0 %2733
      %2735 = vrot.lane.b32.xlu0 %v2522, 19
      %v2736 = vpop.permute.xlu0 %2735
      %v2737 = vsel %vm996, %v2722, %v2724
      %v2738 = vsel %vm996, %v2724, %v2726
      %v2739 = vsel %vm996, %v2726, %v2728
      %v2740 = vsel %vm996, %v2730, %v2732
      %v2741 = vsel %vm996, %v2732, %v2734
      %v2742 = vsel %vm996, %v2734, %v2736
      %v2749 = vsel %vm823, %v2509, 0
      %v2751 = vsel %vm823, %v2511, 0
      %2753 = vmatprep.subr.mxu0 %v2738
      %2754 = vmatpush1.msra.mxu0 %v2737
      %2755 = vmatprep.subr.mxu0 %v2741
      %2756 = vmatpush1.msra.mxu0 %v2740
      %2757 = vmatprep.subr.mxu0 0.0
      %2758 = vmatpush1.msra.mxu0 0.0
      %2759 = vmatprep.subr.mxu0 0.0
      %2760 = vmatpush1.msra.mxu0 0.0
      %2761 = vmatprep.subr.mxu0 0.0
      %2762 = vmatpush1.msra.mxu0 0.0
      %2763 = vmatprep.subr.mxu0 0.0
      %2764 = vmatpush1.msra.mxu0 0.0
      %2765 = vmatprep.subr.mxu0 0.0
      %2766 = vmatpush1.msra.mxu0 0.0
      %2767 = vmatprep.subr.mxu0 0.0
      %2768 = vmatpush1.msra.mxu0 0.0
      %2769 = vmatprep.subr.mxu0 0.0
      %2770 = vmatpush1.msra.mxu0 0.0
      %2771 = vmatprep.subr.mxu0 0.0
      %2772 = vmatpush1.msra.mxu0 0.0
      %2773 = vmatprep.subr.mxu0 0.0
      %2774 = vmatpush1.msra.mxu0 0.0
      %2775 = vmatprep.subr.mxu0 0.0
      %2776 = vmatpush1.msra.mxu0 0.0
      %2777 = vmatprep.subr.mxu0 0.0
      %2778 = vmatpush1.msra.mxu0 0.0
      %2779 = vmatprep.subr.mxu0 0.0
      %2780 = vmatpush1.msra.mxu0 0.0
      %2781 = vmatprep.subr.mxu0 0.0
      %2782 = vmatpush1.msra.mxu0 0.0
      %2783 = vmatprep.subr.mxu0 0.0
      %2784 = vmatpush1.msra.mxu0 0.0
      %2785 = vmatprep.subr.mxu0 0.0
      %2786 = vmatpush1.msra.mxu0 0.0
      %2787 = vmatprep.subr.mxu0 0.0
      %2788 = vmatpush1.msra.mxu0 0.0
      %2789 = vmatprep.subr.mxu0 0.0
      %2790 = vmatpush1.msra.mxu0 0.0
      %2791 = vmatprep.subr.mxu0 0.0
      %2792 = vmatpush1.msra.mxu0 0.0
      %2793 = vmatprep.subr.mxu0 0.0
      %2794 = vmatpush1.msra.mxu0 0.0
      %2795 = vmatprep.subr.mxu0 0.0
      %2796 = vmatpush1.msra.mxu0 0.0
      %2797 = vmatprep.subr.mxu0 0.0
      %2798 = vmatpush1.msra.mxu0 0.0
      %2799 = vmatprep.subr.mxu0 0.0
      %2800 = vmatpush1.msra.mxu0 0.0
      %2801 = vmatprep.subr.mxu0 0.0
      %2802 = vmatpush1.msra.mxu0 0.0
      %2803 = vmatprep.subr.mxu0 0.0
      %2804 = vmatpush1.msra.mxu0 0.0
      %2805 = vmatprep.subr.mxu0 0.0
      %2806 = vmatpush1.msra.mxu0 0.0
      %2807 = vmatprep.subr.mxu0 0.0
      %2808 = vmatpush1.msra.mxu0 0.0
      %2809 = vmatprep.subr.mxu0 0.0
      %2810 = vmatpush1.msra.mxu0 0.0
      %2811 = vmatprep.subr.mxu0 0.0
      %2812 = vmatpush1.msra.mxu0 0.0
      %2813 = vmatprep.subr.mxu0 0.0
      %2814 = vmatpush1.msra.mxu0 0.0
      %2815 = vmatprep.subr.mxu0 0.0
      %2816 = vmatpush1.msra.mxu0 0.0
      %2817 = vmatprep.mubr.f32.mxu0 0.0
      %2818 = vmatmul.mubr.f32.gmra.mrb[0].mxu0 %v2749
      %v2819 = vpop.f32.mrb[0].mxu0
      %v2820 = vadd.f32 %v2636, %v2819
      %v2821 = vpop.f32.mrb[0].mxu0
      %v2822 = vadd.f32 %v2638, %v2821
      %2823 = vmatprep.mubr.f32.mxu0 0.0
      %2824 = vmatmul.mubr.f32.gmra.mrb[0].mxu0 %v2751
      %v2825 = vpop.f32.mrb[0].mxu0
      %v2826 = vadd.f32 %v2642, %v2825
      %v2827 = vpop.f32.mrb[0].mxu0
      %v2828 = vadd.f32 %v2644, %v2827
      %2829 = vdwg.mxu0
      %2830 = vmatprep.subr.mxu0 0.0
      %2831 = vmatpush1.msra.mxu0 %v2739
      %2832 = vmatprep.subr.mxu0 0.0
      %2833 = vmatpush1.msra.mxu0 %v2742
      %2834 = vmatprep.subr.mxu0 0.0
      %2835 = vmatpush1.msra.mxu0 0.0
      %2836 = vmatprep.subr.mxu0 0.0
      %2837 = vmatpush1.msra.mxu0 0.0
      %2838 = vmatprep.subr.mxu0 0.0
      %2839 = vmatpush1.msra.mxu0 0.0
      %2840 = vmatprep.subr.mxu0 0.0
      %2841 = vmatpush1.msra.mxu0 0.0
      %2842 = vmatprep.subr.mxu0 0.0
      %2843 = vmatpush1.msra.mxu0 0.0
      %2844 = vmatprep.subr.mxu0 0.0
      %2845 = vmatpush1.msra.mxu0 0.0
      %2846 = vmatprep.subr.mxu0 0.0
      %2847 = vmatpush1.msra.mxu0 0.0
      %2848 = vmatprep.subr.mxu0 0.0
      %2849 = vmatpush1.msra.mxu0 0.0
      %2850 = vmatprep.subr.mxu0 0.0
      %2851 = vmatpush1.msra.mxu0 0.0
      %2852 = vmatprep.subr.mxu0 0.0
      %2853 = vmatpush1.msra.mxu0 0.0
      %2854 = vmatprep.subr.mxu0 0.0
      %2855 = vmatpush1.msra.mxu0 0.0
      %2856 = vmatprep.subr.mxu0 0.0
      %2857 = vmatpush1.msra.mxu0 0.0
      %2858 = vmatprep.subr.mxu0 0.0
      %2859 = vmatpush1.msra.mxu0 0.0
      %2860 = vmatprep.subr.mxu0 0.0
      %2861 = vmatpush1.msra.mxu0 0.0
      %2862 = vmatprep.subr.mxu0 0.0
      %2863 = vmatpush1.msra.mxu0 0.0
      %2864 = vmatprep.subr.mxu0 0.0
      %2865 = vmatpush1.msra.mxu0 0.0
      %2866 = vmatprep.subr.mxu0 0.0
      %2867 = vmatpush1.msra.mxu0 0.0
      %2868 = vmatprep.subr.mxu0 0.0
      %2869 = vmatpush1.msra.mxu0 0.0
      %2870 = vmatprep.subr.mxu0 0.0
      %2871 = vmatpush1.msra.mxu0 0.0
      %2872 = vmatprep.subr.mxu0 0.0
      %2873 = vmatpush1.msra.mxu0 0.0
      %2874 = vmatprep.subr.mxu0 0.0
      %2875 = vmatpush1.msra.mxu0 0.0
      %2876 = vmatprep.subr.mxu0 0.0
      %2877 = vmatpush1.msra.mxu0 0.0
      %2878 = vmatprep.subr.mxu0 0.0
      %2879 = vmatpush1.msra.mxu0 0.0
      %2880 = vmatprep.subr.mxu0 0.0
      %2881 = vmatpush1.msra.mxu0 0.0
      %2882 = vmatprep.subr.mxu0 0.0
      %2883 = vmatpush1.msra.mxu0 0.0
      %2884 = vmatprep.subr.mxu0 0.0
      %2885 = vmatpush1.msra.mxu0 0.0
      %2886 = vmatprep.subr.mxu0 0.0
      %2887 = vmatpush1.msra.mxu0 0.0
      %2888 = vmatprep.subr.mxu0 0.0
      %2889 = vmatpush1.msra.mxu0 0.0
      %2890 = vmatprep.subr.mxu0 0.0
      %2891 = vmatpush1.msra.mxu0 0.0
      %2892 = vmatprep.subr.mxu0 0.0
      %2893 = vmatpush1.msra.mxu0 0.0
      %2894 = vmatprep.mubr.f32.mxu0 0.0
      %2895 = vmatmul.mubr.f32.gmra.mrb[0].mxu0 %v2749
      %v2896 = vpop.f32.mrb[0].mxu0
      %v2897 = vadd.f32 %v2713, %v2896
      %v2898 = vpop.f32.mrb[0].mxu0
      %2899 = vmatprep.mubr.f32.mxu0 0.0
      %2900 = vmatmul.mubr.f32.gmra.mrb[0].mxu0 %v2751
      %v2901 = vpop.f32.mrb[0].mxu0
      %v2902 = vadd.f32 %v2718, %v2901
      %v2903 = vpop.f32.mrb[0].mxu0
      %2904 = vdwg.mxu0
      %2905 = vrot.lane.b32.xlu0 %v2509, 96
      %v2906 = vpop.permute.xlu0 %2905
      %2907 = vrot.lane.b32.xlu0 %v2511, 96
      %v2908 = vpop.permute.xlu0 %2907
      %2909 = vrot.lane.b32.xlu0 %v2515, 17
      %v2910 = vpop.permute.xlu0 %2909
      %2911 = vrot.lane.b32.xlu0 %v2516, 17
      %v2912 = vpop.permute.xlu0 %2911
      %2913 = vrot.lane.b32.xlu0 %v2517, 17
      %v2914 = vpop.permute.xlu0 %2913
      %2915 = vrot.lane.b32.xlu0 %v2518, 17
      %v2916 = vpop.permute.xlu0 %2915
      %2917 = vrot.lane.b32.xlu0 %v2519, 17
      %v2918 = vpop.permute.xlu0 %2917
      %2919 = vrot.lane.b32.xlu0 %v2520, 17
      %v2920 = vpop.permute.xlu0 %2919
      %2921 = vrot.lane.b32.xlu0 %v2521, 17
      %v2922 = vpop.permute.xlu0 %2921
      %2923 = vrot.lane.b32.xlu0 %v2522, 17
      %v2924 = vpop.permute.xlu0 %2923
      %v2925 = vsel %vm1185, %v2910, %v2912
      %v2926 = vsel %vm1185, %v2912, %v2914
      %v2927 = vsel %vm1185, %v2914, %v2916
      %v2928 = vsel %vm1185, %v2918, %v2920
      %v2929 = vsel %vm1185, %v2920, %v2922
      %v2930 = vsel %vm1185, %v2922, %v2924
      %v2937 = vsel %vm823, %v2906, 0
      %v2939 = vsel %vm823, %v2908, 0
      %2941 = vmatprep.subr.mxu0 %v2926
      %2942 = vmatpush1.msra.mxu0 %v2925
      %2943 = vmatprep.subr.mxu0 %v2929
      %2944 = vmatpush1.msra.mxu0 %v2928
      %2945 = vmatprep.subr.mxu0 0.0
      %2946 = vmatpush1.msra.mxu0 0.0
      %2947 = vmatprep.subr.mxu0 0.0
      %2948 = vmatpush1.msra.mxu0 0.0
      %2949 = vmatprep.subr.mxu0 0.0
      %2950 = vmatpush1.msra.mxu0 0.0
      %2951 = vmatprep.subr.mxu0 0.0
      %2952 = vmatpush1.msra.mxu0 0.0
      %2953 = vmatprep.subr.mxu0 0.0
      %2954 = vmatpush1.msra.mxu0 0.0
      %2955 = vmatprep.subr.mxu0 0.0
      %2956 = vmatpush1.msra.mxu0 0.0
      %2957 = vmatprep.subr.mxu0 0.0
      %2958 = vmatpush1.msra.mxu0 0.0
      %2959 = vmatprep.subr.mxu0 0.0
      %2960 = vmatpush1.msra.mxu0 0.0
      %2961 = vmatprep.subr.mxu0 0.0
      %2962 = vmatpush1.msra.mxu0 0.0
      %2963 = vmatprep.subr.mxu0 0.0
      %2964 = vmatpush1.msra.mxu0 0.0
      %2965 = vmatprep.subr.mxu0 0.0
      %2966 = vmatpush1.msra.mxu0 0.0
      %2967 = vmatprep.subr.mxu0 0.0
      %2968 = vmatpush1.msra.mxu0 0.0
      %2969 = vmatprep.subr.mxu0 0.0
      %2970 = vmatpush1.msra.mxu0 0.0
      %2971 = vmatprep.subr.mxu0 0.0
      %2972 = vmatpush1.msra.mxu0 0.0
      %2973 = vmatprep.subr.mxu0 0.0
      %2974 = vmatpush1.msra.mxu0 0.0
      %2975 = vmatprep.subr.mxu0 0.0
      %2976 = vmatpush1.msra.mxu0 0.0
      %2977 = vmatprep.subr.mxu0 0.0
      %2978 = vmatpush1.msra.mxu0 0.0
      %2979 = vmatprep.subr.mxu0 0.0
      %2980 = vmatpush1.msra.mxu0 0.0
      %2981 = vmatprep.subr.mxu0 0.0
      %2982 = vmatpush1.msra.mxu0 0.0
      %2983 = vmatprep.subr.mxu0 0.0
      %2984 = vmatpush1.msra.mxu0 0.0
      %2985 = vmatprep.subr.mxu0 0.0
      %2986 = vmatpush1.msra.mxu0 0.0
      %2987 = vmatprep.subr.mxu0 0.0
      %2988 = vmatpush1.msra.mxu0 0.0
      %2989 = vmatprep.subr.mxu0 0.0
      %2990 = vmatpush1.msra.mxu0 0.0
      %2991 = vmatprep.subr.mxu0 0.0
      %2992 = vmatpush1.msra.mxu0 0.0
      %2993 = vmatprep.subr.mxu0 0.0
      %2994 = vmatpush1.msra.mxu0 0.0
      %2995 = vmatprep.subr.mxu0 0.0
      %2996 = vmatpush1.msra.mxu0 0.0
      %2997 = vmatprep.subr.mxu0 0.0
      %2998 = vmatpush1.msra.mxu0 0.0
      %2999 = vmatprep.subr.mxu0 0.0
      %3000 = vmatpush1.msra.mxu0 0.0
      %3001 = vmatprep.subr.mxu0 0.0
      %3002 = vmatpush1.msra.mxu0 0.0
      %3003 = vmatprep.subr.mxu0 0.0
      %3004 = vmatpush1.msra.mxu0 0.0
      %3005 = vmatprep.mubr.f32.mxu0 0.0
      %3006 = vmatmul.mubr.f32.gmra.mrb[0].mxu0 %v2937
      %v3007 = vpop.f32.mrb[0].mxu0
      %v3008 = vadd.f32 0.0, %v3007
      %v3009 = vpop.f32.mrb[0].mxu0
      %v3010 = vadd.f32 0.0, %v3009
      %3011 = vmatprep.mubr.f32.mxu0 0.0
      %3012 = vmatmul.mubr.f32.gmra.mrb[0].mxu0 %v2939
      %v3013 = vpop.f32.mrb[0].mxu0
      %v3014 = vadd.f32 0.0, %v3013
      %v3015 = vpop.f32.mrb[0].mxu0
      %v3016 = vadd.f32 0.0, %v3015
      %3017 = vdwg.mxu0
      %3018 = vmatprep.subr.mxu0 0.0
      %3019 = vmatpush1.msra.mxu0 %v2927
      %3020 = vmatprep.subr.mxu0 0.0
      %3021 = vmatpush1.msra.mxu0 %v2930
      %3022 = vmatprep.subr.mxu0 0.0
      %3023 = vmatpush1.msra.mxu0 0.0
      %3024 = vmatprep.subr.mxu0 0.0
      %3025 = vmatpush1.msra.mxu0 0.0
      %3026 = vmatprep.subr.mxu0 0.0
      %3027 = vmatpush1.msra.mxu0 0.0
      %3028 = vmatprep.subr.mxu0 0.0
      %3029 = vmatpush1.msra.mxu0 0.0
      %3030 = vmatprep.subr.mxu0 0.0
      %3031 = vmatpush1.msra.mxu0 0.0
      %3032 = vmatprep.subr.mxu0 0.0
      %3033 = vmatpush1.msra.mxu0 0.0
      %3034 = vmatprep.subr.mxu0 0.0
      %3035 = vmatpush1.msra.mxu0 0.0
      %3036 = vmatprep.subr.mxu0 0.0
      %3037 = vmatpush1.msra.mxu0 0.0
      %3038 = vmatprep.subr.mxu0 0.0
      %3039 = vmatpush1.msra.mxu0 0.0
      %3040 = vmatprep.subr.mxu0 0.0
      %3041 = vmatpush1.msra.mxu0 0.0
      %3042 = vmatprep.subr.mxu0 0.0
      %3043 = vmatpush1.msra.mxu0 0.0
      %3044 = vmatprep.subr.mxu0 0.0
      %3045 = vmatpush1.msra.mxu0 0.0
      %3046 = vmatprep.subr.mxu0 0.0
      %3047 = vmatpush1.msra.mxu0 0.0
      %3048 = vmatprep.subr.mxu0 0.0
      %3049 = vmatpush1.msra.mxu0 0.0
      %3050 = vmatprep.subr.mxu0 0.0
      %3051 = vmatpush1.msra.mxu0 0.0
      %3052 = vmatprep.subr.mxu0 0.0
      %3053 = vmatpush1.msra.mxu0 0.0
      %3054 = vmatprep.subr.mxu0 0.0
      %3055 = vmatpush1.msra.mxu0 0.0
      %3056 = vmatprep.subr.mxu0 0.0
      %3057 = vmatpush1.msra.mxu0 0.0
      %3058 = vmatprep.subr.mxu0 0.0
      %3059 = vmatpush1.msra.mxu0 0.0
      %3060 = vmatprep.subr.mxu0 0.0
      %3061 = vmatpush1.msra.mxu0 0.0
      %3062 = vmatprep.subr.mxu0 0.0
      %3063 = vmatpush1.msra.mxu0 0.0
      %3064 = vmatprep.subr.mxu0 0.0
      %3065 = vmatpush1.msra.mxu0 0.0
      %3066 = vmatprep.subr.mxu0 0.0
      %3067 = vmatpush1.msra.mxu0 0.0
      %3068 = vmatprep.subr.mxu0 0.0
      %3069 = vmatpush1.msra.mxu0 0.0
      %3070 = vmatprep.subr.mxu0 0.0
      %3071 = vmatpush1.msra.mxu0 0.0
      %3072 = vmatprep.subr.mxu0 0.0
      %3073 = vmatpush1.msra.mxu0 0.0
      %3074 = vmatprep.subr.mxu0 0.0
      %3075 = vmatpush1.msra.mxu0 0.0
      %3076 = vmatprep.subr.mxu0 0.0
      %3077 = vmatpush1.msra.mxu0 0.0
      %3078 = vmatprep.subr.mxu0 0.0
      %3079 = vmatpush1.msra.mxu0 0.0
      %3080 = vmatprep.subr.mxu0 0.0
      %3081 = vmatpush1.msra.mxu0 0.0
      %3082 = vmatprep.mubr.f32.mxu0 0.0
      %3083 = vmatmul.mubr.f32.gmra.mrb[0].mxu0 %v2937
      %v3084 = vpop.f32.mrb[0].mxu0
      %v3085 = vadd.f32 0.0, %v3084
      %v3086 = vpop.f32.mrb[0].mxu0
      %3087 = vmatprep.mubr.f32.mxu0 0.0
      %3088 = vmatmul.mubr.f32.gmra.mrb[0].mxu0 %v2939
      %v3089 = vpop.f32.mrb[0].mxu0
      %v3090 = vadd.f32 0.0, %v3089
      %v3091 = vpop.f32.mrb[0].mxu0
      %3092 = vdwg.mxu0
      %v3093 = vadd.f32 %v2820, %v3008
      %v3094 = vadd.f32 %v2822, %v3010
      %v3095 = vadd.f32 %v2897, %v3085
      %v3096 = vadd.f32 %v2826, %v3014
      %v3097 = vadd.f32 %v2828, %v3016
      %v3098 = vadd.f32 %v2902, %v3090
      %3099 = vrot.lane.b32.xlu0 %v2509, 80
      %v3100 = vpop.permute.xlu0 %3099
      %3101 = vrot.lane.b32.xlu0 %v2511, 80
      %v3102 = vpop.permute.xlu0 %3101
      %3103 = vrot.lane.b32.xlu0 %v2515, 1
      %v3104 = vpop.permute.xlu0 %3103
      %3105 = vrot.lane.b32.xlu0 %v2516, 1
      %v3106 = vpop.permute.xlu0 %3105
      %3107 = vrot.lane.b32.xlu0 %v2517, 1
      %v3108 = vpop.permute.xlu0 %3107
      %3109 = vrot.lane.b32.xlu0 %v2518, 1
      %v3110 = vpop.permute.xlu0 %3109
      %3111 = vrot.lane.b32.xlu0 %v2519, 1
      %v3112 = vpop.permute.xlu0 %3111
      %3113 = vrot.lane.b32.xlu0 %v2520, 1
      %v3114 = vpop.permute.xlu0 %3113
      %3115 = vrot.lane.b32.xlu0 %v2521, 1
      %v3116 = vpop.permute.xlu0 %3115
      %3117 = vrot.lane.b32.xlu0 %v2522, 1
      %v3118 = vpop.permute.xlu0 %3117
      %v3119 = vsel %vm1380, %v3104, %v3106
      %v3120 = vsel %vm1380, %v3106, %v3108
      %v3121 = vsel %vm1380, %v3108, %v3110
      %v3122 = vsel %vm1380, %v3112, %v3114
      %v3123 = vsel %vm1380, %v3114, %v3116
      %v3124 = vsel %vm1380, %v3116, %v3118
      %v3131 = vsel %vm823, %v3100, 0
      %v3133 = vsel %vm823, %v3102, 0
      %3135 = vmatprep.subr.mxu0 %v3120
      %3136 = vmatpush1.msra.mxu0 %v3119
      %3137 = vmatprep.subr.mxu0 %v3123
      %3138 = vmatpush1.msra.mxu0 %v3122
      %3139 = vmatprep.subr.mxu0 0.0
      %3140 = vmatpush1.msra.mxu0 0.0
      %3141 = vmatprep.subr.mxu0 0.0
      %3142 = vmatpush1.msra.mxu0 0.0
      %3143 = vmatprep.subr.mxu0 0.0
      %3144 = vmatpush1.msra.mxu0 0.0
      %3145 = vmatprep.subr.mxu0 0.0
      %3146 = vmatpush1.msra.mxu0 0.0
      %3147 = vmatprep.subr.mxu0 0.0
      %3148 = vmatpush1.msra.mxu0 0.0
      %3149 = vmatprep.subr.mxu0 0.0
      %3150 = vmatpush1.msra.mxu0 0.0
      %3151 = vmatprep.subr.mxu0 0.0
      %3152 = vmatpush1.msra.mxu0 0.0
      %3153 = vmatprep.subr.mxu0 0.0
      %3154 = vmatpush1.msra.mxu0 0.0
      %3155 = vmatprep.subr.mxu0 0.0
      %3156 = vmatpush1.msra.mxu0 0.0
      %3157 = vmatprep.subr.mxu0 0.0
      %3158 = vmatpush1.msra.mxu0 0.0
      %3159 = vmatprep.subr.mxu0 0.0
      %3160 = vmatpush1.msra.mxu0 0.0
      %3161 = vmatprep.subr.mxu0 0.0
      %3162 = vmatpush1.msra.mxu0 0.0
      %3163 = vmatprep.subr.mxu0 0.0
      %3164 = vmatpush1.msra.mxu0 0.0
      %3165 = vmatprep.subr.mxu0 0.0
      %3166 = vmatpush1.msra.mxu0 0.0
      %3167 = vmatprep.subr.mxu0 0.0
      %3168 = vmatpush1.msra.mxu0 0.0
      %3169 = vmatprep.subr.mxu0 0.0
      %3170 = vmatpush1.msra.mxu0 0.0
      %3171 = vmatprep.subr.mxu0 0.0
      %3172 = vmatpush1.msra.mxu0 0.0
      %3173 = vmatprep.subr.mxu0 0.0
      %3174 = vmatpush1.msra.mxu0 0.0
      %3175 = vmatprep.subr.mxu0 0.0
      %3176 = vmatpush1.msra.mxu0 0.0
      %3177 = vmatprep.subr.mxu0 0.0
      %3178 = vmatpush1.msra.mxu0 0.0
      %3179 = vmatprep.subr.mxu0 0.0
      %3180 = vmatpush1.msra.mxu0 0.0
      %3181 = vmatprep.subr.mxu0 0.0
      %3182 = vmatpush1.msra.mxu0 0.0
      %3183 = vmatprep.subr.mxu0 0.0
      %3184 = vmatpush1.msra.mxu0 0.0
      %3185 = vmatprep.subr.mxu0 0.0
      %3186 = vmatpush1.msra.mxu0 0.0
      %3187 = vmatprep.subr.mxu0 0.0
      %3188 = vmatpush1.msra.mxu0 0.0
      %3189 = vmatprep.subr.mxu0 0.0
      %3190 = vmatpush1.msra.mxu0 0.0
      %3191 = vmatprep.subr.mxu0 0.0
      %3192 = vmatpush1.msra.mxu0 0.0
      %3193 = vmatprep.subr.mxu0 0.0
      %3194 = vmatpush1.msra.mxu0 0.0
      %3195 = vmatprep.subr.mxu0 0.0
      %3196 = vmatpush1.msra.mxu0 0.0
      %3197 = vmatprep.subr.mxu0 0.0
      %3198 = vmatpush1.msra.mxu0 0.0
      %3199 = vmatprep.mubr.f32.mxu0 0.0
      %3200 = vmatmul.mubr.f32.gmra.mrb[0].mxu0 %v3131
      %v3201 = vpop.f32.mrb[0].mxu0
      %v3202 = vadd.f32 0.0, %v3201
      %v3203 = vpop.f32.mrb[0].mxu0
      %v3204 = vadd.f32 0.0, %v3203
      %3205 = vmatprep.mubr.f32.mxu0 0.0
      %3206 = vmatmul.mubr.f32.gmra.mrb[0].mxu0 %v3133
      %v3207 = vpop.f32.mrb[0].mxu0
      %v3208 = vadd.f32 0.0, %v3207
      %v3209 = vpop.f32.mrb[0].mxu0
      %v3210 = vadd.f32 0.0, %v3209
      %3211 = vdwg.mxu0
      %3212 = vmatprep.subr.mxu0 0.0
      %3213 = vmatpush1.msra.mxu0 %v3121
      %3214 = vmatprep.subr.mxu0 0.0
      %3215 = vmatpush1.msra.mxu0 %v3124
      %3216 = vmatprep.subr.mxu0 0.0
      %3217 = vmatpush1.msra.mxu0 0.0
      %3218 = vmatprep.subr.mxu0 0.0
      %3219 = vmatpush1.msra.mxu0 0.0
      %3220 = vmatprep.subr.mxu0 0.0
      %3221 = vmatpush1.msra.mxu0 0.0
      %3222 = vmatprep.subr.mxu0 0.0
      %3223 = vmatpush1.msra.mxu0 0.0
      %3224 = vmatprep.subr.mxu0 0.0
      %3225 = vmatpush1.msra.mxu0 0.0
      %3226 = vmatprep.subr.mxu0 0.0
      %3227 = vmatpush1.msra.mxu0 0.0
      %3228 = vmatprep.subr.mxu0 0.0
      %3229 = vmatpush1.msra.mxu0 0.0
      %3230 = vmatprep.subr.mxu0 0.0
      %3231 = vmatpush1.msra.mxu0 0.0
      %3232 = vmatprep.subr.mxu0 0.0
      %3233 = vmatpush1.msra.mxu0 0.0
      %3234 = vmatprep.subr.mxu0 0.0
      %3235 = vmatpush1.msra.mxu0 0.0
      %3236 = vmatprep.subr.mxu0 0.0
      %3237 = vmatpush1.msra.mxu0 0.0
      %3238 = vmatprep.subr.mxu0 0.0
      %3239 = vmatpush1.msra.mxu0 0.0
      %3240 = vmatprep.subr.mxu0 0.0
      %3241 = vmatpush1.msra.mxu0 0.0
      %3242 = vmatprep.subr.mxu0 0.0
      %3243 = vmatpush1.msra.mxu0 0.0
      %3244 = vmatprep.subr.mxu0 0.0
      %3245 = vmatpush1.msra.mxu0 0.0
      %3246 = vmatprep.subr.mxu0 0.0
      %3247 = vmatpush1.msra.mxu0 0.0
      %3248 = vmatprep.subr.mxu0 0.0
      %3249 = vmatpush1.msra.mxu0 0.0
      %3250 = vmatprep.subr.mxu0 0.0
      %3251 = vmatpush1.msra.mxu0 0.0
      %3252 = vmatprep.subr.mxu0 0.0
      %3253 = vmatpush1.msra.mxu0 0.0
      %3254 = vmatprep.subr.mxu0 0.0
      %3255 = vmatpush1.msra.mxu0 0.0
      %3256 = vmatprep.subr.mxu0 0.0
      %3257 = vmatpush1.msra.mxu0 0.0
      %3258 = vmatprep.subr.mxu0 0.0
      %3259 = vmatpush1.msra.mxu0 0.0
      %3260 = vmatprep.subr.mxu0 0.0
      %3261 = vmatpush1.msra.mxu0 0.0
      %3262 = vmatprep.subr.mxu0 0.0
      %3263 = vmatpush1.msra.mxu0 0.0
      %3264 = vmatprep.subr.mxu0 0.0
      %3265 = vmatpush1.msra.mxu0 0.0
      %3266 = vmatprep.subr.mxu0 0.0
      %3267 = vmatpush1.msra.mxu0 0.0
      %3268 = vmatprep.subr.mxu0 0.0
      %3269 = vmatpush1.msra.mxu0 0.0
      %3270 = vmatprep.subr.mxu0 0.0
      %3271 = vmatpush1.msra.mxu0 0.0
      %3272 = vmatprep.subr.mxu0 0.0
      %3273 = vmatpush1.msra.mxu0 0.0
      %3274 = vmatprep.subr.mxu0 0.0
      %3275 = vmatpush1.msra.mxu0 0.0
      %3276 = vmatprep.mubr.f32.mxu0 0.0
      %3277 = vmatmul.mubr.f32.gmra.mrb[0].mxu0 %v3131
      %v3278 = vpop.f32.mrb[0].mxu0
      %v3279 = vadd.f32 0.0, %v3278
      %v3280 = vpop.f32.mrb[0].mxu0
      %3281 = vmatprep.mubr.f32.mxu0 0.0
      %3282 = vmatmul.mubr.f32.gmra.mrb[0].mxu0 %v3133
      %v3283 = vpop.f32.mrb[0].mxu0
      %v3284 = vadd.f32 0.0, %v3283
      %v3285 = vpop.f32.mrb[0].mxu0
      %3286 = vdwg.mxu0
      %v3287 = vadd.f32 %v3093, %v3202
      %v3288 = vadd.f32 %v3094, %v3204
      %v3289 = vadd.f32 %v3095, %v3279
      %v3290 = vadd.f32 %v3096, %v3208
      %v3291 = vadd.f32 %v3097, %v3210
      %v3292 = vadd.f32 %v3098, %v3284
      %3293 = vrot.lane.b32.xlu0 %v2509, 64
      %v3294 = vpop.permute.xlu0 %3293
      %3295 = vrot.lane.b32.xlu0 %v2511, 64
      %v3296 = vpop.permute.xlu0 %3295
      %v3297 = vsel %vm823, %v3294, 0
      %v3299 = vsel %vm823, %v3296, 0
      %3301 = vmatprep.subr.mxu0 %v2517
      %3302 = vmatpush1.msra.mxu0 %v2516
      %3303 = vmatprep.subr.mxu0 %v2521
      %3304 = vmatpush1.msra.mxu0 %v2520
      %3305 = vmatprep.subr.mxu0 0.0
      %3306 = vmatpush1.msra.mxu0 0.0
      %3307 = vmatprep.subr.mxu0 0.0
      %3308 = vmatpush1.msra.mxu0 0.0
      %3309 = vmatprep.subr.mxu0 0.0
      %3310 = vmatpush1.msra.mxu0 0.0
      %3311 = vmatprep.subr.mxu0 0.0
      %3312 = vmatpush1.msra.mxu0 0.0
      %3313 = vmatprep.subr.mxu0 0.0
      %3314 = vmatpush1.msra.mxu0 0.0
      %3315 = vmatprep.subr.mxu0 0.0
      %3316 = vmatpush1.msra.mxu0 0.0
      %3317 = vmatprep.subr.mxu0 0.0
      %3318 = vmatpush1.msra.mxu0 0.0
      %3319 = vmatprep.subr.mxu0 0.0
      %3320 = vmatpush1.msra.mxu0 0.0
      %3321 = vmatprep.subr.mxu0 0.0
      %3322 = vmatpush1.msra.mxu0 0.0
      %3323 = vmatprep.subr.mxu0 0.0
      %3324 = vmatpush1.msra.mxu0 0.0
      %3325 = vmatprep.subr.mxu0 0.0
      %3326 = vmatpush1.msra.mxu0 0.0
      %3327 = vmatprep.subr.mxu0 0.0
      %3328 = vmatpush1.msra.mxu0 0.0
      %3329 = vmatprep.subr.mxu0 0.0
      %3330 = vmatpush1.msra.mxu0 0.0
      %3331 = vmatprep.subr.mxu0 0.0
      %3332 = vmatpush1.msra.mxu0 0.0
      %3333 = vmatprep.subr.mxu0 0.0
      %3334 = vmatpush1.msra.mxu0 0.0
      %3335 = vmatprep.subr.mxu0 0.0
      %3336 = vmatpush1.msra.mxu0 0.0
      %3337 = vmatprep.subr.mxu0 0.0
      %3338 = vmatpush1.msra.mxu0 0.0
      %3339 = vmatprep.subr.mxu0 0.0
      %3340 = vmatpush1.msra.mxu0 0.0
      %3341 = vmatprep.subr.mxu0 0.0
      %3342 = vmatpush1.msra.mxu0 0.0
      %3343 = vmatprep.subr.mxu0 0.0
      %3344 = vmatpush1.msra.mxu0 0.0
      %3345 = vmatprep.subr.mxu0 0.0
      %3346 = vmatpush1.msra.mxu0 0.0
      %3347 = vmatprep.subr.mxu0 0.0
      %3348 = vmatpush1.msra.mxu0 0.0
      %3349 = vmatprep.subr.mxu0 0.0
      %3350 = vmatpush1.msra.mxu0 0.0
      %3351 = vmatprep.subr.mxu0 0.0
      %3352 = vmatpush1.msra.mxu0 0.0
      %3353 = vmatprep.subr.mxu0 0.0
      %3354 = vmatpush1.msra.mxu0 0.0
      %3355 = vmatprep.subr.mxu0 0.0
      %3356 = vmatpush1.msra.mxu0 0.0
      %3357 = vmatprep.subr.mxu0 0.0
      %3358 = vmatpush1.msra.mxu0 0.0
      %3359 = vmatprep.subr.mxu0 0.0
      %3360 = vmatpush1.msra.mxu0 0.0
      %3361 = vmatprep.subr.mxu0 0.0
      %3362 = vmatpush1.msra.mxu0 0.0
      %3363 = vmatprep.subr.mxu0 0.0
      %3364 = vmatpush1.msra.mxu0 0.0
      %3365 = vmatprep.mubr.f32.mxu0 0.0
      %3366 = vmatmul.mubr.f32.gmra.mrb[0].mxu0 %v3297
      %v3367 = vpop.f32.mrb[0].mxu0
      %v3368 = vadd.f32 0.0, %v3367
      %v3369 = vpop.f32.mrb[0].mxu0
      %v3370 = vadd.f32 0.0, %v3369
      %3371 = vmatprep.mubr.f32.mxu0 0.0
      %3372 = vmatmul.mubr.f32.gmra.mrb[0].mxu0 %v3299
      %v3373 = vpop.f32.mrb[0].mxu0
      %v3374 = vadd.f32 0.0, %v3373
      %v3375 = vpop.f32.mrb[0].mxu0
      %v3376 = vadd.f32 0.0, %v3375
      %3377 = vdwg.mxu0
      %3378 = vmatprep.subr.mxu0 0.0
      %3379 = vmatpush1.msra.mxu0 %v2518
      %3380 = vmatprep.subr.mxu0 0.0
      %3381 = vmatpush1.msra.mxu0 %v2522
      %3382 = vmatprep.subr.mxu0 0.0
      %3383 = vmatpush1.msra.mxu0 0.0
      %3384 = vmatprep.subr.mxu0 0.0
      %3385 = vmatpush1.msra.mxu0 0.0
      %3386 = vmatprep.subr.mxu0 0.0
      %3387 = vmatpush1.msra.mxu0 0.0
      %3388 = vmatprep.subr.mxu0 0.0
      %3389 = vmatpush1.msra.mxu0 0.0
      %3390 = vmatprep.subr.mxu0 0.0
      %3391 = vmatpush1.msra.mxu0 0.0
      %3392 = vmatprep.subr.mxu0 0.0
      %3393 = vmatpush1.msra.mxu0 0.0
      %3394 = vmatprep.subr.mxu0 0.0
      %3395 = vmatpush1.msra.mxu0 0.0
      %3396 = vmatprep.subr.mxu0 0.0
      %3397 = vmatpush1.msra.mxu0 0.0
      %3398 = vmatprep.subr.mxu0 0.0
      %3399 = vmatpush1.msra.mxu0 0.0
      %3400 = vmatprep.subr.mxu0 0.0
      %3401 = vmatpush1.msra.mxu0 0.0
      %3402 = vmatprep.subr.mxu0 0.0
      %3403 = vmatpush1.msra.mxu0 0.0
      %3404 = vmatprep.subr.mxu0 0.0
      %3405 = vmatpush1.msra.mxu0 0.0
      %3406 = vmatprep.subr.mxu0 0.0
      %3407 = vmatpush1.msra.mxu0 0.0
      %3408 = vmatprep.subr.mxu0 0.0
      %3409 = vmatpush1.msra.mxu0 0.0
      %3410 = vmatprep.subr.mxu0 0.0
      %3411 = vmatpush1.msra.mxu0 0.0
      %3412 = vmatprep.subr.mxu0 0.0
      %3413 = vmatpush1.msra.mxu0 0.0
      %3414 = vmatprep.subr.mxu0 0.0
      %3415 = vmatpush1.msra.mxu0 0.0
      %3416 = vmatprep.subr.mxu0 0.0
      %3417 = vmatpush1.msra.mxu0 0.0
      %3418 = vmatprep.subr.mxu0 0.0
      %3419 = vmatpush1.msra.mxu0 0.0
      %3420 = vmatprep.subr.mxu0 0.0
      %3421 = vmatpush1.msra.mxu0 0.0
      %3422 = vmatprep.subr.mxu0 0.0
      %3423 = vmatpush1.msra.mxu0 0.0
      %3424 = vmatprep.subr.mxu0 0.0
      %3425 = vmatpush1.msra.mxu0 0.0
      %3426 = vmatprep.subr.mxu0 0.0
      %3427 = vmatpush1.msra.mxu0 0.0
      %3428 = vmatprep.subr.mxu0 0.0
      %3429 = vmatpush1.msra.mxu0 0.0
      %3430 = vmatprep.subr.mxu0 0.0
      %3431 = vmatpush1.msra.mxu0 0.0
      %3432 = vmatprep.subr.mxu0 0.0
      %3433 = vmatpush1.msra.mxu0 0.0
      %3434 = vmatprep.subr.mxu0 0.0
      %3435 = vmatpush1.msra.mxu0 0.0
      %3436 = vmatprep.subr.mxu0 0.0
      %3437 = vmatpush1.msra.mxu0 0.0
      %3438 = vmatprep.subr.mxu0 0.0
      %3439 = vmatpush1.msra.mxu0 0.0
      %3440 = vmatprep.subr.mxu0 0.0
      %3441 = vmatpush1.msra.mxu0 0.0
      %3442 = vmatprep.mubr.f32.mxu0 0.0
      %3443 = vmatmul.mubr.f32.gmra.mrb[0].mxu0 %v3297
      %v3444 = vpop.f32.mrb[0].mxu0
      %v3445 = vadd.f32 0.0, %v3444
      %v3446 = vpop.f32.mrb[0].mxu0
      %3447 = vmatprep.mubr.f32.mxu0 0.0
      %3448 = vmatmul.mubr.f32.gmra.mrb[0].mxu0 %v3299
      %v3449 = vpop.f32.mrb[0].mxu0
      %v3450 = vadd.f32 0.0, %v3449
      %v3451 = vpop.f32.mrb[0].mxu0
      %3452 = vdwg.mxu0
      %v3453 = vadd.f32 %v3287, %v3368
      %v3454 = vadd.f32 %v3288, %v3370
      %v3455 = vadd.f32 %v3289, %v3445
      %v3456 = vadd.f32 %v3290, %v3374
      %v3457 = vadd.f32 %v3291, %v3376
      %v3458 = vadd.f32 %v3292, %v3450
      %3459 = vrot.lane.b32.xlu0 %v2509, 48
      %v3460 = vpop.permute.xlu0 %3459
      %3461 = vrot.lane.b32.xlu0 %v2511, 48
      %v3462 = vpop.permute.xlu0 %3461
      %3463 = vrot.lane.b32.xlu0 %v2516, 127
      %v3464 = vpop.permute.xlu0 %3463
      %3465 = vrot.lane.b32.xlu0 %v2517, 127
      %v3466 = vpop.permute.xlu0 %3465
      %3467 = vrot.lane.b32.xlu0 %v2518, 127
      %v3468 = vpop.permute.xlu0 %3467
      %3469 = vrot.lane.b32.xlu0 %v2520, 127
      %v3470 = vpop.permute.xlu0 %3469
      %3471 = vrot.lane.b32.xlu0 %v2521, 127
      %v3472 = vpop.permute.xlu0 %3471
      %3473 = vrot.lane.b32.xlu0 %v2522, 127
      %v3474 = vpop.permute.xlu0 %3473
      %v3475 = vsel %vm1737, %v3464, %v3466
      %v3476 = vsel %vm1737, %v3466, %v3468
      %v3477 = vsel %vm1737, %v3470, %v3472
      %v3478 = vsel %vm1737, %v3472, %v3474
      %v3485 = vsel %vm823, %v3460, 0
      %v3487 = vsel %vm823, %v3462, 0
      %3489 = vmatprep.subr.mxu0 %v3476
      %3490 = vmatpush1.msra.mxu0 %v3475
      %3491 = vmatprep.subr.mxu0 %v3478
      %3492 = vmatpush1.msra.mxu0 %v3477
      %3493 = vmatprep.subr.mxu0 0.0
      %3494 = vmatpush1.msra.mxu0 0.0
      %3495 = vmatprep.subr.mxu0 0.0
      %3496 = vmatpush1.msra.mxu0 0.0
      %3497 = vmatprep.subr.mxu0 0.0
      %3498 = vmatpush1.msra.mxu0 0.0
      %3499 = vmatprep.subr.mxu0 0.0
      %3500 = vmatpush1.msra.mxu0 0.0
      %3501 = vmatprep.subr.mxu0 0.0
      %3502 = vmatpush1.msra.mxu0 0.0
      %3503 = vmatprep.subr.mxu0 0.0
      %3504 = vmatpush1.msra.mxu0 0.0
      %3505 = vmatprep.subr.mxu0 0.0
      %3506 = vmatpush1.msra.mxu0 0.0
      %3507 = vmatprep.subr.mxu0 0.0
      %3508 = vmatpush1.msra.mxu0 0.0
      %3509 = vmatprep.subr.mxu0 0.0
      %3510 = vmatpush1.msra.mxu0 0.0
      %3511 = vmatprep.subr.mxu0 0.0
      %3512 = vmatpush1.msra.mxu0 0.0
      %3513 = vmatprep.subr.mxu0 0.0
      %3514 = vmatpush1.msra.mxu0 0.0
      %3515 = vmatprep.subr.mxu0 0.0
      %3516 = vmatpush1.msra.mxu0 0.0
      %3517 = vmatprep.subr.mxu0 0.0
      %3518 = vmatpush1.msra.mxu0 0.0
      %3519 = vmatprep.subr.mxu0 0.0
      %3520 = vmatpush1.msra.mxu0 0.0
      %3521 = vmatprep.subr.mxu0 0.0
      %3522 = vmatpush1.msra.mxu0 0.0
      %3523 = vmatprep.subr.mxu0 0.0
      %3524 = vmatpush1.msra.mxu0 0.0
      %3525 = vmatprep.subr.mxu0 0.0
      %3526 = vmatpush1.msra.mxu0 0.0
      %3527 = vmatprep.subr.mxu0 0.0
      %3528 = vmatpush1.msra.mxu0 0.0
      %3529 = vmatprep.subr.mxu0 0.0
      %3530 = vmatpush1.msra.mxu0 0.0
      %3531 = vmatprep.subr.mxu0 0.0
      %3532 = vmatpush1.msra.mxu0 0.0
      %3533 = vmatprep.subr.mxu0 0.0
      %3534 = vmatpush1.msra.mxu0 0.0
      %3535 = vmatprep.subr.mxu0 0.0
      %3536 = vmatpush1.msra.mxu0 0.0
      %3537 = vmatprep.subr.mxu0 0.0
      %3538 = vmatpush1.msra.mxu0 0.0
      %3539 = vmatprep.subr.mxu0 0.0
      %3540 = vmatpush1.msra.mxu0 0.0
      %3541 = vmatprep.subr.mxu0 0.0
      %3542 = vmatpush1.msra.mxu0 0.0
      %3543 = vmatprep.subr.mxu0 0.0
      %3544 = vmatpush1.msra.mxu0 0.0
      %3545 = vmatprep.subr.mxu0 0.0
      %3546 = vmatpush1.msra.mxu0 0.0
      %3547 = vmatprep.subr.mxu0 0.0
      %3548 = vmatpush1.msra.mxu0 0.0
      %3549 = vmatprep.subr.mxu0 0.0
      %3550 = vmatpush1.msra.mxu0 0.0
      %3551 = vmatprep.subr.mxu0 0.0
      %3552 = vmatpush1.msra.mxu0 0.0
      %3553 = vmatprep.mubr.f32.mxu0 0.0
      %3554 = vmatmul.mubr.f32.gmra.mrb[0].mxu0 %v3485
      %v3555 = vpop.f32.mrb[0].mxu0
      %v3556 = vadd.f32 0.0, %v3555
      %v3557 = vpop.f32.mrb[0].mxu0
      %v3558 = vadd.f32 0.0, %v3557
      %3559 = vmatprep.mubr.f32.mxu0 0.0
      %3560 = vmatmul.mubr.f32.gmra.mrb[0].mxu0 %v3487
      %v3561 = vpop.f32.mrb[0].mxu0
      %v3562 = vadd.f32 0.0, %v3561
      %v3563 = vpop.f32.mrb[0].mxu0
      %v3564 = vadd.f32 0.0, %v3563
      %3565 = vdwg.mxu0
      %3566 = vmatprep.subr.mxu0 0.0
      %3567 = vmatpush1.msra.mxu0 %v3468
      %3568 = vmatprep.subr.mxu0 0.0
      %3569 = vmatpush1.msra.mxu0 %v3474
      %3570 = vmatprep.subr.mxu0 0.0
      %3571 = vmatpush1.msra.mxu0 0.0
      %3572 = vmatprep.subr.mxu0 0.0
      %3573 = vmatpush1.msra.mxu0 0.0
      %3574 = vmatprep.subr.mxu0 0.0
      %3575 = vmatpush1.msra.mxu0 0.0
      %3576 = vmatprep.subr.mxu0 0.0
      %3577 = vmatpush1.msra.mxu0 0.0
      %3578 = vmatprep.subr.mxu0 0.0
      %3579 = vmatpush1.msra.mxu0 0.0
      %3580 = vmatprep.subr.mxu0 0.0
      %3581 = vmatpush1.msra.mxu0 0.0
      %3582 = vmatprep.subr.mxu0 0.0
      %3583 = vmatpush1.msra.mxu0 0.0
      %3584 = vmatprep.subr.mxu0 0.0
      %3585 = vmatpush1.msra.mxu0 0.0
      %3586 = vmatprep.subr.mxu0 0.0
      %3587 = vmatpush1.msra.mxu0 0.0
      %3588 = vmatprep.subr.mxu0 0.0
      %3589 = vmatpush1.msra.mxu0 0.0
      %3590 = vmatprep.subr.mxu0 0.0
      %3591 = vmatpush1.msra.mxu0 0.0
      %3592 = vmatprep.subr.mxu0 0.0
      %3593 = vmatpush1.msra.mxu0 0.0
      %3594 = vmatprep.subr.mxu0 0.0
      %3595 = vmatpush1.msra.mxu0 0.0
      %3596 = vmatprep.subr.mxu0 0.0
      %3597 = vmatpush1.msra.mxu0 0.0
      %3598 = vmatprep.subr.mxu0 0.0
      %3599 = vmatpush1.msra.mxu0 0.0
      %3600 = vmatprep.subr.mxu0 0.0
      %3601 = vmatpush1.msra.mxu0 0.0
      %3602 = vmatprep.subr.mxu0 0.0
      %3603 = vmatpush1.msra.mxu0 0.0
      %3604 = vmatprep.subr.mxu0 0.0
      %3605 = vmatpush1.msra.mxu0 0.0
      %3606 = vmatprep.subr.mxu0 0.0
      %3607 = vmatpush1.msra.mxu0 0.0
      %3608 = vmatprep.subr.mxu0 0.0
      %3609 = vmatpush1.msra.mxu0 0.0
      %3610 = vmatprep.subr.mxu0 0.0
      %3611 = vmatpush1.msra.mxu0 0.0
      %3612 = vmatprep.subr.mxu0 0.0
      %3613 = vmatpush1.msra.mxu0 0.0
      %3614 = vmatprep.subr.mxu0 0.0
      %3615 = vmatpush1.msra.mxu0 0.0
      %3616 = vmatprep.subr.mxu0 0.0
      %3617 = vmatpush1.msra.mxu0 0.0
      %3618 = vmatprep.subr.mxu0 0.0
      %3619 = vmatpush1.msra.mxu0 0.0
      %3620 = vmatprep.subr.mxu0 0.0
      %3621 = vmatpush1.msra.mxu0 0.0
      %3622 = vmatprep.subr.mxu0 0.0
      %3623 = vmatpush1.msra.mxu0 0.0
      %3624 = vmatprep.subr.mxu0 0.0
      %3625 = vmatpush1.msra.mxu0 0.0
      %3626 = vmatprep.subr.mxu0 0.0
      %3627 = vmatpush1.msra.mxu0 0.0
      %3628 = vmatprep.subr.mxu0 0.0
      %3629 = vmatpush1.msra.mxu0 0.0
      %3630 = vmatprep.mubr.f32.mxu0 0.0
      %3631 = vmatmul.mubr.f32.gmra.mrb[0].mxu0 %v3485
      %v3632 = vpop.f32.mrb[0].mxu0
      %v3633 = vadd.f32 0.0, %v3632
      %v3634 = vpop.f32.mrb[0].mxu0
      %3635 = vmatprep.mubr.f32.mxu0 0.0
      %3636 = vmatmul.mubr.f32.gmra.mrb[0].mxu0 %v3487
      %v3637 = vpop.f32.mrb[0].mxu0
      %v3638 = vadd.f32 0.0, %v3637
      %v3639 = vpop.f32.mrb[0].mxu0
      %3640 = vdwg.mxu0
      %v3641 = vadd.f32 %v3453, %v3556
      %v3642 = vadd.f32 %v3454, %v3558
      %v3643 = vadd.f32 %v3455, %v3633
      %v3644 = vadd.f32 %v3456, %v3562
      %v3645 = vadd.f32 %v3457, %v3564
      %v3646 = vadd.f32 %v3458, %v3638
      %3647 = vrot.lane.b32.xlu0 %v2509, 32
      %v3648 = vpop.permute.xlu0 %3647
      %3649 = vrot.lane.b32.xlu0 %v2511, 32
      %v3650 = vpop.permute.xlu0 %3649
      %3651 = vrot.lane.b32.xlu0 %v2516, 111
      %v3652 = vpop.permute.xlu0 %3651
      %3653 = vrot.lane.b32.xlu0 %v2517, 111
      %v3654 = vpop.permute.xlu0 %3653
      %3655 = vrot.lane.b32.xlu0 %v2518, 111
      %v3656 = vpop.permute.xlu0 %3655
      %3657 = vrot.lane.b32.xlu0 %v2520, 111
      %v3658 = vpop.permute.xlu0 %3657
      %3659 = vrot.lane.b32.xlu0 %v2521, 111
      %v3660 = vpop.permute.xlu0 %3659
      %3661 = vrot.lane.b32.xlu0 %v2522, 111
      %v3662 = vpop.permute.xlu0 %3661
      %v3663 = vsel %vm1926, %v3652, %v3654
      %v3664 = vsel %vm1926, %v3654, %v3656
      %v3665 = vsel %vm1926, %v3658, %v3660
      %v3666 = vsel %vm1926, %v3660, %v3662
      %v3673 = vsel %vm823, %v3648, 0
      %v3675 = vsel %vm823, %v3650, 0
      %3677 = vmatprep.subr.mxu0 %v3664
      %3678 = vmatpush1.msra.mxu0 %v3663
      %3679 = vmatprep.subr.mxu0 %v3666
      %3680 = vmatpush1.msra.mxu0 %v3665
      %3681 = vmatprep.subr.mxu0 0.0
      %3682 = vmatpush1.msra.mxu0 0.0
      %3683 = vmatprep.subr.mxu0 0.0
      %3684 = vmatpush1.msra.mxu0 0.0
      %3685 = vmatprep.subr.mxu0 0.0
      %3686 = vmatpush1.msra.mxu0 0.0
      %3687 = vmatprep.subr.mxu0 0.0
      %3688 = vmatpush1.msra.mxu0 0.0
      %3689 = vmatprep.subr.mxu0 0.0
      %3690 = vmatpush1.msra.mxu0 0.0
      %3691 = vmatprep.subr.mxu0 0.0
      %3692 = vmatpush1.msra.mxu0 0.0
      %3693 = vmatprep.subr.mxu0 0.0
      %3694 = vmatpush1.msra.mxu0 0.0
      %3695 = vmatprep.subr.mxu0 0.0
      %3696 = vmatpush1.msra.mxu0 0.0
      %3697 = vmatprep.subr.mxu0 0.0
      %3698 = vmatpush1.msra.mxu0 0.0
      %3699 = vmatprep.subr.mxu0 0.0
      %3700 = vmatpush1.msra.mxu0 0.0
      %3701 = vmatprep.subr.mxu0 0.0
      %3702 = vmatpush1.msra.mxu0 0.0
      %3703 = vmatprep.subr.mxu0 0.0
      %3704 = vmatpush1.msra.mxu0 0.0
      %3705 = vmatprep.subr.mxu0 0.0
      %3706 = vmatpush1.msra.mxu0 0.0
      %3707 = vmatprep.subr.mxu0 0.0
      %3708 = vmatpush1.msra.mxu0 0.0
      %3709 = vmatprep.subr.mxu0 0.0
      %3710 = vmatpush1.msra.mxu0 0.0
      %3711 = vmatprep.subr.mxu0 0.0
      %3712 = vmatpush1.msra.mxu0 0.0
      %3713 = vmatprep.subr.mxu0 0.0
      %3714 = vmatpush1.msra.mxu0 0.0
      %3715 = vmatprep.subr.mxu0 0.0
      %3716 = vmatpush1.msra.mxu0 0.0
      %3717 = vmatprep.subr.mxu0 0.0
      %3718 = vmatpush1.msra.mxu0 0.0
      %3719 = vmatprep.subr.mxu0 0.0
      %3720 = vmatpush1.msra.mxu0 0.0
      %3721 = vmatprep.subr.mxu0 0.0
      %3722 = vmatpush1.msra.mxu0 0.0
      %3723 = vmatprep.subr.mxu0 0.0
      %3724 = vmatpush1.msra.mxu0 0.0
      %3725 = vmatprep.subr.mxu0 0.0
      %3726 = vmatpush1.msra.mxu0 0.0
      %3727 = vmatprep.subr.mxu0 0.0
      %3728 = vmatpush1.msra.mxu0 0.0
      %3729 = vmatprep.subr.mxu0 0.0
      %3730 = vmatpush1.msra.mxu0 0.0
      %3731 = vmatprep.subr.mxu0 0.0
      %3732 = vmatpush1.msra.mxu0 0.0
      %3733 = vmatprep.subr.mxu0 0.0
      %3734 = vmatpush1.msra.mxu0 0.0
      %3735 = vmatprep.subr.mxu0 0.0
      %3736 = vmatpush1.msra.mxu0 0.0
      %3737 = vmatprep.subr.mxu0 0.0
      %3738 = vmatpush1.msra.mxu0 0.0
      %3739 = vmatprep.subr.mxu0 0.0
      %3740 = vmatpush1.msra.mxu0 0.0
      %3741 = vmatprep.mubr.f32.mxu0 0.0
      %3742 = vmatmul.mubr.f32.gmra.mrb[0].mxu0 %v3673
      %v3743 = vpop.f32.mrb[0].mxu0
      %v3744 = vadd.f32 0.0, %v3743
      %v3745 = vpop.f32.mrb[0].mxu0
      %v3746 = vadd.f32 0.0, %v3745
      %3747 = vmatprep.mubr.f32.mxu0 0.0
      %3748 = vmatmul.mubr.f32.gmra.mrb[0].mxu0 %v3675
      %v3749 = vpop.f32.mrb[0].mxu0
      %v3750 = vadd.f32 0.0, %v3749
      %v3751 = vpop.f32.mrb[0].mxu0
      %v3752 = vadd.f32 0.0, %v3751
      %3753 = vdwg.mxu0
      %3754 = vmatprep.subr.mxu0 0.0
      %3755 = vmatpush1.msra.mxu0 %v3656
      %3756 = vmatprep.subr.mxu0 0.0
      %3757 = vmatpush1.msra.mxu0 %v3662
      %3758 = vmatprep.subr.mxu0 0.0
      %3759 = vmatpush1.msra.mxu0 0.0
      %3760 = vmatprep.subr.mxu0 0.0
      %3761 = vmatpush1.msra.mxu0 0.0
      %3762 = vmatprep.subr.mxu0 0.0
      %3763 = vmatpush1.msra.mxu0 0.0
      %3764 = vmatprep.subr.mxu0 0.0
      %3765 = vmatpush1.msra.mxu0 0.0
      %3766 = vmatprep.subr.mxu0 0.0
      %3767 = vmatpush1.msra.mxu0 0.0
      %3768 = vmatprep.subr.mxu0 0.0
      %3769 = vmatpush1.msra.mxu0 0.0
      %3770 = vmatprep.subr.mxu0 0.0
      %3771 = vmatpush1.msra.mxu0 0.0
      %3772 = vmatprep.subr.mxu0 0.0
      %3773 = vmatpush1.msra.mxu0 0.0
      %3774 = vmatprep.subr.mxu0 0.0
      %3775 = vmatpush1.msra.mxu0 0.0
      %3776 = vmatprep.subr.mxu0 0.0
      %3777 = vmatpush1.msra.mxu0 0.0
      %3778 = vmatprep.subr.mxu0 0.0
      %3779 = vmatpush1.msra.mxu0 0.0
      %3780 = vmatprep.subr.mxu0 0.0
      %3781 = vmatpush1.msra.mxu0 0.0
      %3782 = vmatprep.subr.mxu0 0.0
      %3783 = vmatpush1.msra.mxu0 0.0
      %3784 = vmatprep.subr.mxu0 0.0
      %3785 = vmatpush1.msra.mxu0 0.0
      %3786 = vmatprep.subr.mxu0 0.0
      %3787 = vmatpush1.msra.mxu0 0.0
      %3788 = vmatprep.subr.mxu0 0.0
      %3789 = vmatpush1.msra.mxu0 0.0
      %3790 = vmatprep.subr.mxu0 0.0
      %3791 = vmatpush1.msra.mxu0 0.0
      %3792 = vmatprep.subr.mxu0 0.0
      %3793 = vmatpush1.msra.mxu0 0.0
      %3794 = vmatprep.subr.mxu0 0.0
      %3795 = vmatpush1.msra.mxu0 0.0
      %3796 = vmatprep.subr.mxu0 0.0
      %3797 = vmatpush1.msra.mxu0 0.0
      %3798 = vmatprep.subr.mxu0 0.0
      %3799 = vmatpush1.msra.mxu0 0.0
      %3800 = vmatprep.subr.mxu0 0.0
      %3801 = vmatpush1.msra.mxu0 0.0
      %3802 = vmatprep.subr.mxu0 0.0
      %3803 = vmatpush1.msra.mxu0 0.0
      %3804 = vmatprep.subr.mxu0 0.0
      %3805 = vmatpush1.msra.mxu0 0.0
      %3806 = vmatprep.subr.mxu0 0.0
      %3807 = vmatpush1.msra.mxu0 0.0
      %3808 = vmatprep.subr.mxu0 0.0
      %3809 = vmatpush1.msra.mxu0 0.0
      %3810 = vmatprep.subr.mxu0 0.0
      %3811 = vmatpush1.msra.mxu0 0.0
      %3812 = vmatprep.subr.mxu0 0.0
      %3813 = vmatpush1.msra.mxu0 0.0
      %3814 = vmatprep.subr.mxu0 0.0
      %3815 = vmatpush1.msra.mxu0 0.0
      %3816 = vmatprep.subr.mxu0 0.0
      %3817 = vmatpush1.msra.mxu0 0.0
      %3818 = vmatprep.mubr.f32.mxu0 0.0
      %3819 = vmatmul.mubr.f32.gmra.mrb[0].mxu0 %v3673
      %v3820 = vpop.f32.mrb[0].mxu0
      %v3821 = vadd.f32 0.0, %v3820
      %v3822 = vpop.f32.mrb[0].mxu0
      %3823 = vmatprep.mubr.f32.mxu0 0.0
      %3824 = vmatmul.mubr.f32.gmra.mrb[0].mxu0 %v3675
      %v3825 = vpop.f32.mrb[0].mxu0
      %v3826 = vadd.f32 0.0, %v3825
      %v3827 = vpop.f32.mrb[0].mxu0
      %3828 = vdwg.mxu0
      %v3829 = vadd.f32 %v3641, %v3744
      %v3830 = vadd.f32 %v3642, %v3746
      %v3831 = vadd.f32 %v3643, %v3821
      %v3832 = vadd.f32 %v3644, %v3750
      %v3833 = vadd.f32 %v3645, %v3752
      %v3834 = vadd.f32 %v3646, %v3826
      %3835 = vrot.lane.b32.xlu0 %v2509, 16
      %v3836 = vpop.permute.xlu0 %3835
      %3837 = vrot.lane.b32.xlu0 %v2511, 16
      %v3838 = vpop.permute.xlu0 %3837
      %3839 = vrot.lane.b32.xlu0 %v2516, 110
      %v3840 = vpop.permute.xlu0 %3839
      %3841 = vrot.lane.b32.xlu0 %v2517, 110
      %v3842 = vpop.permute.xlu0 %3841
      %3843 = vrot.lane.b32.xlu0 %v2518, 110
      %v3844 = vpop.permute.xlu0 %3843
      %3845 = vrot.lane.b32.xlu0 %v2520, 110
      %v3846 = vpop.permute.xlu0 %3845
      %3847 = vrot.lane.b32.xlu0 %v2521, 110
      %v3848 = vpop.permute.xlu0 %3847
      %3849 = vrot.lane.b32.xlu0 %v2522, 110
      %v3850 = vpop.permute.xlu0 %3849
      %v3851 = vsel %vm2115, %v3840, %v3842
      %v3852 = vsel %vm2115, %v3842, %v3844
      %v3853 = vsel %vm2115, %v3846, %v3848
      %v3854 = vsel %vm2115, %v3848, %v3850
      %v3861 = vsel %vm823, %v3836, 0
      %v3863 = vsel %vm823, %v3838, 0
      %3865 = vmatprep.subr.mxu0 %v3852
      %3866 = vmatpush1.msra.mxu0 %v3851
      %3867 = vmatprep.subr.mxu0 %v3854
      %3868 = vmatpush1.msra.mxu0 %v3853
      %3869 = vmatprep.subr.mxu0 0.0
      %3870 = vmatpush1.msra.mxu0 0.0
      %3871 = vmatprep.subr.mxu0 0.0
      %3872 = vmatpush1.msra.mxu0 0.0
      %3873 = vmatprep.subr.mxu0 0.0
      %3874 = vmatpush1.msra.mxu0 0.0
      %3875 = vmatprep.subr.mxu0 0.0
      %3876 = vmatpush1.msra.mxu0 0.0
      %3877 = vmatprep.subr.mxu0 0.0
      %3878 = vmatpush1.msra.mxu0 0.0
      %3879 = vmatprep.subr.mxu0 0.0
      %3880 = vmatpush1.msra.mxu0 0.0
      %3881 = vmatprep.subr.mxu0 0.0
      %3882 = vmatpush1.msra.mxu0 0.0
      %3883 = vmatprep.subr.mxu0 0.0
      %3884 = vmatpush1.msra.mxu0 0.0
      %3885 = vmatprep.subr.mxu0 0.0
      %3886 = vmatpush1.msra.mxu0 0.0
      %3887 = vmatprep.subr.mxu0 0.0
      %3888 = vmatpush1.msra.mxu0 0.0
      %3889 = vmatprep.subr.mxu0 0.0
      %3890 = vmatpush1.msra.mxu0 0.0
      %3891 = vmatprep.subr.mxu0 0.0
      %3892 = vmatpush1.msra.mxu0 0.0
      %3893 = vmatprep.subr.mxu0 0.0
      %3894 = vmatpush1.msra.mxu0 0.0
      %3895 = vmatprep.subr.mxu0 0.0
      %3896 = vmatpush1.msra.mxu0 0.0
      %3897 = vmatprep.subr.mxu0 0.0
      %3898 = vmatpush1.msra.mxu0 0.0
      %3899 = vmatprep.subr.mxu0 0.0
      %3900 = vmatpush1.msra.mxu0 0.0
      %3901 = vmatprep.subr.mxu0 0.0
      %3902 = vmatpush1.msra.mxu0 0.0
      %3903 = vmatprep.subr.mxu0 0.0
      %3904 = vmatpush1.msra.mxu0 0.0
      %3905 = vmatprep.subr.mxu0 0.0
      %3906 = vmatpush1.msra.mxu0 0.0
      %3907 = vmatprep.subr.mxu0 0.0
      %3908 = vmatpush1.msra.mxu0 0.0
      %3909 = vmatprep.subr.mxu0 0.0
      %3910 = vmatpush1.msra.mxu0 0.0
      %3911 = vmatprep.subr.mxu0 0.0
      %3912 = vmatpush1.msra.mxu0 0.0
      %3913 = vmatprep.subr.mxu0 0.0
      %3914 = vmatpush1.msra.mxu0 0.0
      %3915 = vmatprep.subr.mxu0 0.0
      %3916 = vmatpush1.msra.mxu0 0.0
      %3917 = vmatprep.subr.mxu0 0.0
      %3918 = vmatpush1.msra.mxu0 0.0
      %3919 = vmatprep.subr.mxu0 0.0
      %3920 = vmatpush1.msra.mxu0 0.0
      %3921 = vmatprep.subr.mxu0 0.0
      %3922 = vmatpush1.msra.mxu0 0.0
      %3923 = vmatprep.subr.mxu0 0.0
      %3924 = vmatpush1.msra.mxu0 0.0
      %3925 = vmatprep.subr.mxu0 0.0
      %3926 = vmatpush1.msra.mxu0 0.0
      %3927 = vmatprep.subr.mxu0 0.0
      %3928 = vmatpush1.msra.mxu0 0.0
      %3929 = vmatprep.mubr.f32.mxu0 0.0
      %3930 = vmatmul.mubr.f32.gmra.mrb[0].mxu0 %v3861
      %v3931 = vpop.f32.mrb[0].mxu0
      %v3932 = vadd.f32 0.0, %v3931
      %v3933 = vpop.f32.mrb[0].mxu0
      %v3934 = vadd.f32 0.0, %v3933
      %3935 = vmatprep.mubr.f32.mxu0 0.0
      %3936 = vmatmul.mubr.f32.gmra.mrb[0].mxu0 %v3863
      %v3937 = vpop.f32.mrb[0].mxu0
      %v3938 = vadd.f32 0.0, %v3937
      %v3939 = vpop.f32.mrb[0].mxu0
      %v3940 = vadd.f32 0.0, %v3939
      %3941 = vdwg.mxu0
      %3942 = vmatprep.subr.mxu0 0.0
      %3943 = vmatpush1.msra.mxu0 %v3844
      %3944 = vmatprep.subr.mxu0 0.0
      %3945 = vmatpush1.msra.mxu0 %v3850
      %3946 = vmatprep.subr.mxu0 0.0
      %3947 = vmatpush1.msra.mxu0 0.0
      %3948 = vmatprep.subr.mxu0 0.0
      %3949 = vmatpush1.msra.mxu0 0.0
      %3950 = vmatprep.subr.mxu0 0.0
      %3951 = vmatpush1.msra.mxu0 0.0
      %3952 = vmatprep.subr.mxu0 0.0
      %3953 = vmatpush1.msra.mxu0 0.0
      %3954 = vmatprep.subr.mxu0 0.0
      %3955 = vmatpush1.msra.mxu0 0.0
      %3956 = vmatprep.subr.mxu0 0.0
      %3957 = vmatpush1.msra.mxu0 0.0
      %3958 = vmatprep.subr.mxu0 0.0
      %3959 = vmatpush1.msra.mxu0 0.0
      %3960 = vmatprep.subr.mxu0 0.0
      %3961 = vmatpush1.msra.mxu0 0.0
      %3962 = vmatprep.subr.mxu0 0.0
      %3963 = vmatpush1.msra.mxu0 0.0
      %3964 = vmatprep.subr.mxu0 0.0
      %3965 = vmatpush1.msra.mxu0 0.0
      %3966 = vmatprep.subr.mxu0 0.0
      %3967 = vmatpush1.msra.mxu0 0.0
      %3968 = vmatprep.subr.mxu0 0.0
      %3969 = vmatpush1.msra.mxu0 0.0
      %3970 = vmatprep.subr.mxu0 0.0
      %3971 = vmatpush1.msra.mxu0 0.0
      %3972 = vmatprep.subr.mxu0 0.0
      %3973 = vmatpush1.msra.mxu0 0.0
      %3974 = vmatprep.subr.mxu0 0.0
      %3975 = vmatpush1.msra.mxu0 0.0
      %3976 = vmatprep.subr.mxu0 0.0
      %3977 = vmatpush1.msra.mxu0 0.0
      %3978 = vmatprep.subr.mxu0 0.0
      %3979 = vmatpush1.msra.mxu0 0.0
      %3980 = vmatprep.subr.mxu0 0.0
      %3981 = vmatpush1.msra.mxu0 0.0
      %3982 = vmatprep.subr.mxu0 0.0
      %3983 = vmatpush1.msra.mxu0 0.0
      %3984 = vmatprep.subr.mxu0 0.0
      %3985 = vmatpush1.msra.mxu0 0.0
      %3986 = vmatprep.subr.mxu0 0.0
      %3987 = vmatpush1.msra.mxu0 0.0
      %3988 = vmatprep.subr.mxu0 0.0
      %3989 = vmatpush1.msra.mxu0 0.0
      %3990 = vmatprep.subr.mxu0 0.0
      %3991 = vmatpush1.msra.mxu0 0.0
      %3992 = vmatprep.subr.mxu0 0.0
      %3993 = vmatpush1.msra.mxu0 0.0
      %3994 = vmatprep.subr.mxu0 0.0
      %3995 = vmatpush1.msra.mxu0 0.0
      %3996 = vmatprep.subr.mxu0 0.0
      %3997 = vmatpush1.msra.mxu0 0.0
      %3998 = vmatprep.subr.mxu0 0.0
      %3999 = vmatpush1.msra.mxu0 0.0
      %4000 = vmatprep.subr.mxu0 0.0
      %4001 = vmatpush1.msra.mxu0 0.0
      %4002 = vmatprep.subr.mxu0 0.0
      %4003 = vmatpush1.msra.mxu0 0.0
      %4004 = vmatprep.subr.mxu0 0.0
      %4005 = vmatpush1.msra.mxu0 0.0
      %4006 = vmatprep.mubr.f32.mxu0 0.0
      %4007 = vmatmul.mubr.f32.gmra.mrb[0].mxu0 %v3861
      %v4008 = vpop.f32.mrb[0].mxu0
      %v4009 = vadd.f32 0.0, %v4008
      %v4010 = vpop.f32.mrb[0].mxu0
      %4011 = vmatprep.mubr.f32.mxu0 0.0
      %4012 = vmatmul.mubr.f32.gmra.mrb[0].mxu0 %v3863
      %v4013 = vpop.f32.mrb[0].mxu0
      %v4014 = vadd.f32 0.0, %v4013
      %v4015 = vpop.f32.mrb[0].mxu0
      %4016 = vdwg.mxu0
      %v4017 = vadd.f32 %v3829, %v3932
      %v4018 = vadd.f32 %v3830, %v3934
      %v4019 = vadd.f32 %v3831, %v4009
      %v4020 = vadd.f32 %v3832, %v3938
      %v4021 = vadd.f32 %v3833, %v3940
      %v4022 = vadd.f32 %v3834, %v4014
      %4023 = vrot.lane.b32.xlu0 %v2516, 109
      %v4024 = vpop.permute.xlu0 %4023
      %4025 = vrot.lane.b32.xlu0 %v2517, 109
      %v4026 = vpop.permute.xlu0 %4025
      %4027 = vrot.lane.b32.xlu0 %v2518, 109
      %v4028 = vpop.permute.xlu0 %4027
      %4029 = vrot.lane.b32.xlu0 %v2520, 109
      %v4030 = vpop.permute.xlu0 %4029
      %4031 = vrot.lane.b32.xlu0 %v2521, 109
      %v4032 = vpop.permute.xlu0 %4031
      %4033 = vrot.lane.b32.xlu0 %v2522, 109
      %v4034 = vpop.permute.xlu0 %4033
      %v4035 = vsel %vm2300, %v4024, %v4026
      %v4036 = vsel %vm2300, %v4026, %v4028
      %v4037 = vsel %vm2300, %v4030, %v4032
      %v4038 = vsel %vm2300, %v4032, %v4034
      %v4046 = vsel %vm823, %v2510, 0
      %v4049 = vsel %vm823, %v2512, 0
      %4051 = vmatprep.subr.mxu0 %v4036
      %4052 = vmatpush1.msra.mxu0 %v4035
      %4053 = vmatprep.subr.mxu0 %v4038
      %4054 = vmatpush1.msra.mxu0 %v4037
      %4055 = vmatprep.subr.mxu0 0.0
      %4056 = vmatpush1.msra.mxu0 0.0
      %4057 = vmatprep.subr.mxu0 0.0
      %4058 = vmatpush1.msra.mxu0 0.0
      %4059 = vmatprep.subr.mxu0 0.0
      %4060 = vmatpush1.msra.mxu0 0.0
      %4061 = vmatprep.subr.mxu0 0.0
      %4062 = vmatpush1.msra.mxu0 0.0
      %4063 = vmatprep.subr.mxu0 0.0
      %4064 = vmatpush1.msra.mxu0 0.0
      %4065 = vmatprep.subr.mxu0 0.0
      %4066 = vmatpush1.msra.mxu0 0.0
      %4067 = vmatprep.subr.mxu0 0.0
      %4068 = vmatpush1.msra.mxu0 0.0
      %4069 = vmatprep.subr.mxu0 0.0
      %4070 = vmatpush1.msra.mxu0 0.0
      %4071 = vmatprep.subr.mxu0 0.0
      %4072 = vmatpush1.msra.mxu0 0.0
      %4073 = vmatprep.subr.mxu0 0.0
      %4074 = vmatpush1.msra.mxu0 0.0
      %4075 = vmatprep.subr.mxu0 0.0
      %4076 = vmatpush1.msra.mxu0 0.0
      %4077 = vmatprep.subr.mxu0 0.0
      %4078 = vmatpush1.msra.mxu0 0.0
      %4079 = vmatprep.subr.mxu0 0.0
      %4080 = vmatpush1.msra.mxu0 0.0
      %4081 = vmatprep.subr.mxu0 0.0
      %4082 = vmatpush1.msra.mxu0 0.0
      %4083 = vmatprep.subr.mxu0 0.0
      %4084 = vmatpush1.msra.mxu0 0.0
      %4085 = vmatprep.subr.mxu0 0.0
      %4086 = vmatpush1.msra.mxu0 0.0
      %4087 = vmatprep.subr.mxu0 0.0
      %4088 = vmatpush1.msra.mxu0 0.0
      %4089 = vmatprep.subr.mxu0 0.0
      %4090 = vmatpush1.msra.mxu0 0.0
      %4091 = vmatprep.subr.mxu0 0.0
      %4092 = vmatpush1.msra.mxu0 0.0
      %4093 = vmatprep.subr.mxu0 0.0
      %4094 = vmatpush1.msra.mxu0 0.0
      %4095 = vmatprep.subr.mxu0 0.0
      %4096 = vmatpush1.msra.mxu0 0.0
      %4097 = vmatprep.subr.mxu0 0.0
      %4098 = vmatpush1.msra.mxu0 0.0
      %4099 = vmatprep.subr.mxu0 0.0
      %4100 = vmatpush1.msra.mxu0 0.0
      %4101 = vmatprep.subr.mxu0 0.0
      %4102 = vmatpush1.msra.mxu0 0.0
      %4103 = vmatprep.subr.mxu0 0.0
      %4104 = vmatpush1.msra.mxu0 0.0
      %4105 = vmatprep.subr.mxu0 0.0
      %4106 = vmatpush1.msra.mxu0 0.0
      %4107 = vmatprep.subr.mxu0 0.0
      %4108 = vmatpush1.msra.mxu0 0.0
      %4109 = vmatprep.subr.mxu0 0.0
      %4110 = vmatpush1.msra.mxu0 0.0
      %4111 = vmatprep.subr.mxu0 0.0
      %4112 = vmatpush1.msra.mxu0 0.0
      %4113 = vmatprep.subr.mxu0 0.0
      %4114 = vmatpush1.msra.mxu0 0.0
      %4115 = vmatprep.mubr.f32.mxu0 0.0
      %4116 = vmatmul.mubr.f32.gmra.mrb[0].mxu0 %v4046
      %v4117 = vpop.f32.mrb[0].mxu0
      %v4118 = vadd.f32 0.0, %v4117
      %v4119 = vpop.f32.mrb[0].mxu0
      %v4120 = vadd.f32 0.0, %v4119
      %4121 = vmatprep.mubr.f32.mxu0 0.0
      %4122 = vmatmul.mubr.f32.gmra.mrb[0].mxu0 %v4049
      %v4123 = vpop.f32.mrb[0].mxu0
      %v4124 = vadd.f32 0.0, %v4123
      %v4125 = vpop.f32.mrb[0].mxu0
      %v4126 = vadd.f32 0.0, %v4125
      %4127 = vdwg.mxu0
      %4128 = vmatprep.subr.mxu0 0.0
      %4129 = vmatpush1.msra.mxu0 %v4028
      %4130 = vmatprep.subr.mxu0 0.0
      %4131 = vmatpush1.msra.mxu0 %v4034
      %4132 = vmatprep.subr.mxu0 0.0
      %4133 = vmatpush1.msra.mxu0 0.0
      %4134 = vmatprep.subr.mxu0 0.0
      %4135 = vmatpush1.msra.mxu0 0.0
      %4136 = vmatprep.subr.mxu0 0.0
      %4137 = vmatpush1.msra.mxu0 0.0
      %4138 = vmatprep.subr.mxu0 0.0
      %4139 = vmatpush1.msra.mxu0 0.0
      %4140 = vmatprep.subr.mxu0 0.0
      %4141 = vmatpush1.msra.mxu0 0.0
      %4142 = vmatprep.subr.mxu0 0.0
      %4143 = vmatpush1.msra.mxu0 0.0
      %4144 = vmatprep.subr.mxu0 0.0
      %4145 = vmatpush1.msra.mxu0 0.0
      %4146 = vmatprep.subr.mxu0 0.0
      %4147 = vmatpush1.msra.mxu0 0.0
      %4148 = vmatprep.subr.mxu0 0.0
      %4149 = vmatpush1.msra.mxu0 0.0
      %4150 = vmatprep.subr.mxu0 0.0
      %4151 = vmatpush1.msra.mxu0 0.0
      %4152 = vmatprep.subr.mxu0 0.0
      %4153 = vmatpush1.msra.mxu0 0.0
      %4154 = vmatprep.subr.mxu0 0.0
      %4155 = vmatpush1.msra.mxu0 0.0
      %4156 = vmatprep.subr.mxu0 0.0
      %4157 = vmatpush1.msra.mxu0 0.0
      %4158 = vmatprep.subr.mxu0 0.0
      %4159 = vmatpush1.msra.mxu0 0.0
      %4160 = vmatprep.subr.mxu0 0.0
      %4161 = vmatpush1.msra.mxu0 0.0
      %4162 = vmatprep.subr.mxu0 0.0
      %4163 = vmatpush1.msra.mxu0 0.0
      %4164 = vmatprep.subr.mxu0 0.0
      %4165 = vmatpush1.msra.mxu0 0.0
      %4166 = vmatprep.subr.mxu0 0.0
      %4167 = vmatpush1.msra.mxu0 0.0
      %4168 = vmatprep.subr.mxu0 0.0
      %4169 = vmatpush1.msra.mxu0 0.0
      %4170 = vmatprep.subr.mxu0 0.0
      %4171 = vmatpush1.msra.mxu0 0.0
      %4172 = vmatprep.subr.mxu0 0.0
      %4173 = vmatpush1.msra.mxu0 0.0
      %4174 = vmatprep.subr.mxu0 0.0
      %4175 = vmatpush1.msra.mxu0 0.0
      %4176 = vmatprep.subr.mxu0 0.0
      %4177 = vmatpush1.msra.mxu0 0.0
      %4178 = vmatprep.subr.mxu0 0.0
      %4179 = vmatpush1.msra.mxu0 0.0
      %4180 = vmatprep.subr.mxu0 0.0
      %4181 = vmatpush1.msra.mxu0 0.0
      %4182 = vmatprep.subr.mxu0 0.0
      %4183 = vmatpush1.msra.mxu0 0.0
      %4184 = vmatprep.subr.mxu0 0.0
      %4185 = vmatpush1.msra.mxu0 0.0
      %4186 = vmatprep.subr.mxu0 0.0
      %4187 = vmatpush1.msra.mxu0 0.0
      %4188 = vmatprep.subr.mxu0 0.0
      %4189 = vmatpush1.msra.mxu0 0.0
      %4190 = vmatprep.subr.mxu0 0.0
      %4191 = vmatpush1.msra.mxu0 0.0
      %4192 = vmatprep.mubr.f32.mxu0 0.0
      %4193 = vmatmul.mubr.f32.gmra.mrb[0].mxu0 %v4046
      %v4194 = vpop.f32.mrb[0].mxu0
      %v4195 = vadd.f32 0.0, %v4194
      %v4196 = vpop.f32.mrb[0].mxu0
      %4197 = vmatprep.mubr.f32.mxu0 0.0
      %4198 = vmatmul.mubr.f32.gmra.mrb[0].mxu0 %v4049
      %v4199 = vpop.f32.mrb[0].mxu0
      %v4200 = vadd.f32 0.0, %v4199
      %v4201 = vpop.f32.mrb[0].mxu0
      %4202 = vdwg.mxu0
      %v4203 = vadd.f32 %v4017, %v4118
      %v4204 = vadd.f32 %v4018, %v4120
      %v4205 = vadd.f32 %v4019, %v4195
      %v4206 = vadd.f32 %v4020, %v4124
      %v4207 = vadd.f32 %v4021, %v4126
      %v4208 = vadd.f32 %v4022, %v4200
      %4210 = vset.pattern.permute.xlu0 0
      %4211 = vperm.xlu0 %4210, %v2513
      %v4212 = vpop.permute.xlu0 %4211
      %4215 = vset.pattern.permute.xlu0 0
      %4216 = vperm.xlu0 %4215, %v2514
      %v4217 = vpop.permute.xlu0 %4216
      %v4219 = vadd.f32 %v4203, %v4212
      %v4220 = vadd.f32 %v4204, %v4212
      %v4221 = vadd.f32 %v4205, %v4212
      %v4222 = vadd.f32 %v4206, %v4217
      %v4223 = vadd.f32 %v4207, %v4217
      %v4224 = vadd.f32 %v4208, %v4217
      %v4225 = vadd.f32 %v4219, %v754
      %v4226 = vadd.f32 %v4220, %v755
      %v4227 = vadd.f32 %v4221, %v756
      %v4228 = vadd.f32 %v4222, %v757
      %v4229 = vadd.f32 %v4223, %v758
      %v4230 = vadd.f32 %v4224, %v759
      %v4231 = vmax.f32 %v4225, 0.0
      %v4232 = vmax.f32 %v4226, 0.0
      %v4233 = vmax.f32 %v4227, 0.0
      %v4234 = vmax.f32 %v4228, 0.0
      %v4235 = vmax.f32 %v4229, 0.0
      %v4236 = vmax.f32 %v4230, 0.0
      %v4237 = vmul.f32 %v4231, %v742
      %v4238 = vmul.f32 %v4232, %v746
      %v4239 = vmul.f32 %v4233, %v750
      %v4240 = vmul.f32 %v4234, %v742
      %v4241 = vmul.f32 %v4235, %v746
      %v4242 = vmul.f32 %v4236, %v750
      %4243 = vst [vmem:[#allocation2 + $0x8] sm:$0xff] %v4237
      %4244 = vst [vmem:[#allocation2 + $0x10] sm:$0xff] %v4238
      %4245 = vst.msk [vmem:[#allocation2 + $0x18] sm:$0xff] %vm527, %v4239
      %4246 = vst [vmem:[#allocation2 + $0x30] sm:$0xff] %v4240
      %4247 = vst [vmem:[#allocation2 + $0x38] sm:$0xff] %v4241
      %4248 = vst.msk [vmem:[#allocation2 + $0x40] sm:$0xff] %vm527, %v4242
      %v4249 = vld [vmem:[%s8] sm:$0xff]
      %v4250 = vld [vmem:[%s8 + $0x8] sm:$0xff]
      %v4251 = vld [vmem:[%s8 + $0x10] sm:$0xff]
      %v4252 = vld [vmem:[%s8 + $0x18] sm:$0xff]
      %v4253 = vld [vmem:[%s8 + $0x20] sm:$0xff]
      %v4254 = vld [vmem:[%s8 + $0x28] sm:$0xff]
      %v4255 = vld [vmem:[%s8 + $0x30] sm:$0xff]
      %v4256 = vld [vmem:[%s8 + $0x38] sm:$0xff]
      %v4257 = vld [vmem:[%s9] sm:$0xff]
      %v4258 = vld [vmem:[%s9 + $0x8] sm:$0xff]
      %v4259 = vld [vmem:[%s9 + $0x10] sm:$0xff]
      %v4260 = vld [vmem:[%s9 + $0x18] sm:$0xff]
      %v4261 = vld [vmem:[#allocation2] sm:$0xff]
      %v4262 = vld [vmem:[#allocation2 + $0x8] sm:$0xff]
      %v4263 = vld [vmem:[#allocation2 + $0x10] sm:$0xff]
      %v4264 = vld [vmem:[#allocation2 + $0x18] sm:$0xff]
      %v4265 = vld [vmem:[#allocation2 + $0x28] sm:$0xff]
      %v4266 = vld [vmem:[#allocation2 + $0x30] sm:$0xff]
      %v4267 = vld [vmem:[#allocation2 + $0x38] sm:$0xff]
      %v4268 = vld [vmem:[#allocation2 + $0x40] sm:$0xff]
      %4273 = vrot.lane.b32.xlu0 %v4249, 112
      %v4274 = vpop.permute.xlu0 %4273
      %4275 = vrot.lane.b32.xlu0 %v4251, 112
      %v4276 = vpop.permute.xlu0 %4275
      %4277 = vrot.lane.b32.xlu0 %v4253, 112
      %v4278 = vpop.permute.xlu0 %4277
      %4279 = vrot.lane.b32.xlu0 %v4255, 112
      %v4280 = vpop.permute.xlu0 %4279
      %4289 = vrot.lane.b32.xlu0 %v4261, 18
      %v4290 = vpop.permute.xlu0 %4289
      %4291 = vrot.lane.b32.xlu0 %v4262, 18
      %v4292 = vpop.permute.xlu0 %4291
      %4293 = vrot.lane.b32.xlu0 %v4263, 18
      %v4294 = vpop.permute.xlu0 %4293
      %4295 = vrot.lane.b32.xlu0 %v4264, 18
      %v4296 = vpop.permute.xlu0 %4295
      %4297 = vrot.lane.b32.xlu0 %v4265, 18
      %v4298 = vpop.permute.xlu0 %4297
      %4299 = vrot.lane.b32.xlu0 %v4266, 18
      %v4300 = vpop.permute.xlu0 %4299
      %4301 = vrot.lane.b32.xlu0 %v4267, 18
      %v4302 = vpop.permute.xlu0 %4301
      %4303 = vrot.lane.b32.xlu0 %v4268, 18
      %v4304 = vpop.permute.xlu0 %4303
      %v4305 = vsel %vm810, %v4290, %v4292
      %v4306 = vsel %vm810, %v4292, %v4294
      %v4307 = vsel %vm810, %v4294, %v4296
      %v4308 = vsel %vm810, %v4298, %v4300
      %v4309 = vsel %vm810, %v4300, %v4302
      %v4310 = vsel %vm810, %v4302, %v4304
      %v4317 = vsel %vm823, %v4274, 0
      %v4319 = vsel %vm823, %v4276, 0
      %v4321 = vsel %vm823, %v4278, 0
      %v4323 = vsel %vm823, %v4280, 0
      %4325 = vmatprep.subr.mxu0 %v4306
      %4326 = vmatpush1.msra.mxu0 %v4305
      %4327 = vmatprep.subr.mxu0 %v4309
      %4328 = vmatpush1.msra.mxu0 %v4308
      %4329 = vmatprep.subr.mxu0 0.0
      %4330 = vmatpush1.msra.mxu0 0.0
      %4331 = vmatprep.subr.mxu0 0.0
      %4332 = vmatpush1.msra.mxu0 0.0
      %4333 = vmatprep.subr.mxu0 0.0
      %4334 = vmatpush1.msra.mxu0 0.0
      %4335 = vmatprep.subr.mxu0 0.0
      %4336 = vmatpush1.msra.mxu0 0.0
      %4337 = vmatprep.subr.mxu0 0.0
      %4338 = vmatpush1.msra.mxu0 0.0
      %4339 = vmatprep.subr.mxu0 0.0
      %4340 = vmatpush1.msra.mxu0 0.0
      %4341 = vmatprep.subr.mxu0 0.0
      %4342 = vmatpush1.msra.mxu0 0.0
      %4343 = vmatprep.subr.mxu0 0.0
      %4344 = vmatpush1.msra.mxu0 0.0
      %4345 = vmatprep.subr.mxu0 0.0
      %4346 = vmatpush1.msra.mxu0 0.0
      %4347 = vmatprep.subr.mxu0 0.0
      %4348 = vmatpush1.msra.mxu0 0.0
      %4349 = vmatprep.subr.mxu0 0.0
      %4350 = vmatpush1.msra.mxu0 0.0
      %4351 = vmatprep.subr.mxu0 0.0
      %4352 = vmatpush1.msra.mxu0 0.0
      %4353 = vmatprep.subr.mxu0 0.0
      %4354 = vmatpush1.msra.mxu0 0.0
      %4355 = vmatprep.subr.mxu0 0.0
      %4356 = vmatpush1.msra.mxu0 0.0
      %4357 = vmatprep.subr.mxu0 0.0
      %4358 = vmatpush1.msra.mxu0 0.0
      %4359 = vmatprep.subr.mxu0 0.0
      %4360 = vmatpush1.msra.mxu0 0.0
      %4361 = vmatprep.subr.mxu0 0.0
      %4362 = vmatpush1.msra.mxu0 0.0
      %4363 = vmatprep.subr.mxu0 0.0
      %4364 = vmatpush1.msra.mxu0 0.0
      %4365 = vmatprep.subr.mxu0 0.0
      %4366 = vmatpush1.msra.mxu0 0.0
      %4367 = vmatprep.subr.mxu0 0.0
      %4368 = vmatpush1.msra.mxu0 0.0
      %4369 = vmatprep.subr.mxu0 0.0
      %4370 = vmatpush1.msra.mxu0 0.0
      %4371 = vmatprep.subr.mxu0 0.0
      %4372 = vmatpush1.msra.mxu0 0.0
      %4373 = vmatprep.subr.mxu0 0.0
      %4374 = vmatpush1.msra.mxu0 0.0
      %4375 = vmatprep.subr.mxu0 0.0
      %4376 = vmatpush1.msra.mxu0 0.0
      %4377 = vmatprep.subr.mxu0 0.0
      %4378 = vmatpush1.msra.mxu0 0.0
      %4379 = vmatprep.subr.mxu0 0.0
      %4380 = vmatpush1.msra.mxu0 0.0
      %4381 = vmatprep.subr.mxu0 0.0
      %4382 = vmatpush1.msra.mxu0 0.0
      %4383 = vmatprep.subr.mxu0 0.0
      %4384 = vmatpush1.msra.mxu0 0.0
      %4385 = vmatprep.subr.mxu0 0.0
      %4386 = vmatpush1.msra.mxu0 0.0
      %4387 = vmatprep.subr.mxu0 0.0
      %4388 = vmatpush1.msra.mxu0 0.0
      %4389 = vmatprep.mubr.f32.mxu0 0.0
      %4390 = vmatmul.mubr.f32.gmra.mrb[0].mxu0 %v4317
      %v4391 = vpop.f32.mrb[0].mxu0
      %v4392 = vadd.f32 0.0, %v4391
      %v4393 = vpop.f32.mrb[0].mxu0
      %v4394 = vadd.f32 0.0, %v4393
      %4395 = vmatprep.mubr.f32.mxu0 0.0
      %4396 = vmatmul.mubr.f32.gmra.mrb[0].mxu0 %v4319
      %v4397 = vpop.f32.mrb[0].mxu0
      %v4398 = vadd.f32 0.0, %v4397
      %v4399 = vpop.f32.mrb[0].mxu0
      %v4400 = vadd.f32 0.0, %v4399
      %4401 = vmatprep.mubr.f32.mxu0 0.0
      %4402 = vmatmul.mubr.f32.gmra.mrb[0].mxu0 %v4321
      %v4403 = vpop.f32.mrb[0].mxu0
      %v4404 = vadd.f32 0.0, %v4403
      %v4405 = vpop.f32.mrb[0].mxu0
      %v4406 = vadd.f32 0.0, %v4405
      %4407 = vmatprep.mubr.f32.mxu0 0.0
      %4408 = vmatmul.mubr.f32.gmra.mrb[0].mxu0 %v4323
      %v4409 = vpop.f32.mrb[0].mxu0
      %v4410 = vadd.f32 0.0, %v4409
      %v4411 = vpop.f32.mrb[0].mxu0
      %v4412 = vadd.f32 0.0, %v4411
      %4413 = vdwg.mxu0
      %4414 = vmatprep.subr.mxu0 0.0
      %4415 = vmatpush1.msra.mxu0 %v4307
      %4416 = vmatprep.subr.mxu0 0.0
      %4417 = vmatpush1.msra.mxu0 %v4310
      %4418 = vmatprep.subr.mxu0 0.0
      %4419 = vmatpush1.msra.mxu0 0.0
      %4420 = vmatprep.subr.mxu0 0.0
      %4421 = vmatpush1.msra.mxu0 0.0
      %4422 = vmatprep.subr.mxu0 0.0
      %4423 = vmatpush1.msra.mxu0 0.0
      %4424 = vmatprep.subr.mxu0 0.0
      %4425 = vmatpush1.msra.mxu0 0.0
      %4426 = vmatprep.subr.mxu0 0.0
      %4427 = vmatpush1.msra.mxu0 0.0
      %4428 = vmatprep.subr.mxu0 0.0
      %4429 = vmatpush1.msra.mxu0 0.0
      %4430 = vmatprep.subr.mxu0 0.0
      %4431 = vmatpush1.msra.mxu0 0.0
      %4432 = vmatprep.subr.mxu0 0.0
      %4433 = vmatpush1.msra.mxu0 0.0
      %4434 = vmatprep.subr.mxu0 0.0
      %4435 = vmatpush1.msra.mxu0 0.0
      %4436 = vmatprep.subr.mxu0 0.0
      %4437 = vmatpush1.msra.mxu0 0.0
      %4438 = vmatprep.subr.mxu0 0.0
      %4439 = vmatpush1.msra.mxu0 0.0
      %4440 = vmatprep.subr.mxu0 0.0
      %4441 = vmatpush1.msra.mxu0 0.0
      %4442 = vmatprep.subr.mxu0 0.0
      %4443 = vmatpush1.msra.mxu0 0.0
      %4444 = vmatprep.subr.mxu0 0.0
      %4445 = vmatpush1.msra.mxu0 0.0
      %4446 = vmatprep.subr.mxu0 0.0
      %4447 = vmatpush1.msra.mxu0 0.0
      %4448 = vmatprep.subr.mxu0 0.0
      %4449 = vmatpush1.msra.mxu0 0.0
      %4450 = vmatprep.subr.mxu0 0.0
      %4451 = vmatpush1.msra.mxu0 0.0
      %4452 = vmatprep.subr.mxu0 0.0
      %4453 = vmatpush1.msra.mxu0 0.0
      %4454 = vmatprep.subr.mxu0 0.0
      %4455 = vmatpush1.msra.mxu0 0.0
      %4456 = vmatprep.subr.mxu0 0.0
      %4457 = vmatpush1.msra.mxu0 0.0
      %4458 = vmatprep.subr.mxu0 0.0
      %4459 = vmatpush1.msra.mxu0 0.0
      %4460 = vmatprep.subr.mxu0 0.0
      %4461 = vmatpush1.msra.mxu0 0.0
      %4462 = vmatprep.subr.mxu0 0.0
      %4463 = vmatpush1.msra.mxu0 0.0
      %4464 = vmatprep.subr.mxu0 0.0
      %4465 = vmatpush1.msra.mxu0 0.0
      %4466 = vmatprep.subr.mxu0 0.0
      %4467 = vmatpush1.msra.mxu0 0.0
      %4468 = vmatprep.subr.mxu0 0.0
      %4469 = vmatpush1.msra.mxu0 0.0
      %4470 = vmatprep.subr.mxu0 0.0
      %4471 = vmatpush1.msra.mxu0 0.0
      %4472 = vmatprep.subr.mxu0 0.0
      %4473 = vmatpush1.msra.mxu0 0.0
      %4474 = vmatprep.subr.mxu0 0.0
      %4475 = vmatpush1.msra.mxu0 0.0
      %4476 = vmatprep.subr.mxu0 0.0
      %4477 = vmatpush1.msra.mxu0 0.0
      %4478 = vmatprep.mubr.f32.mxu0 0.0
      %4479 = vmatmul.mubr.f32.gmra.mrb[0].mxu0 %v4317
      %v4480 = vpop.f32.mrb[0].mxu0
      %v4481 = vadd.f32 0.0, %v4480
      %v4482 = vpop.f32.mrb[0].mxu0
      %4483 = vmatprep.mubr.f32.mxu0 0.0
      %4484 = vmatmul.mubr.f32.gmra.mrb[0].mxu0 %v4319
      %v4485 = vpop.f32.mrb[0].mxu0
      %v4486 = vadd.f32 0.0, %v4485
      %v4487 = vpop.f32.mrb[0].mxu0
      %4488 = vmatprep.mubr.f32.mxu0 0.0
      %4489 = vmatmul.mubr.f32.gmra.mrb[0].mxu0 %v4321
      %v4490 = vpop.f32.mrb[0].mxu0
      %v4491 = vadd.f32 0.0, %v4490
      %v4492 = vpop.f32.mrb[0].mxu0
      %4493 = vmatprep.mubr.f32.mxu0 0.0
      %4494 = vmatmul.mubr.f32.gmra.mrb[0].mxu0 %v4323
      %v4495 = vpop.f32.mrb[0].mxu0
      %v4496 = vadd.f32 0.0, %v4495
      %v4497 = vpop.f32.mrb[0].mxu0
      %4498 = vdwg.mxu0
      %4499 = vrot.lane.b32.xlu0 %v4261, 19
      %v4500 = vpop.permute.xlu0 %4499
      %4501 = vrot.lane.b32.xlu0 %v4262, 19
      %v4502 = vpop.permute.xlu0 %4501
      %4503 = vrot.lane.b32.xlu0 %v4263, 19
      %v4504 = vpop.permute.xlu0 %4503
      %4505 = vrot.lane.b32.xlu0 %v4264, 19
      %v4506 = vpop.permute.xlu0 %4505
      %4507 = vrot.lane.b32.xlu0 %v4265, 19
      %v4508 = vpop.permute.xlu0 %4507
      %4509 = vrot.lane.b32.xlu0 %v4266, 19
      %v4510 = vpop.permute.xlu0 %4509
      %4511 = vrot.lane.b32.xlu0 %v4267, 19
      %v4512 = vpop.permute.xlu0 %4511
      %4513 = vrot.lane.b32.xlu0 %v4268, 19
      %v4514 = vpop.permute.xlu0 %4513
      %v4515 = vsel %vm996, %v4500, %v4502
      %v4516 = vsel %vm996, %v4502, %v4504
      %v4517 = vsel %vm996, %v4504, %v4506
      %v4518 = vsel %vm996, %v4508, %v4510
      %v4519 = vsel %vm996, %v4510, %v4512
      %v4520 = vsel %vm996, %v4512, %v4514
      %v4527 = vsel %vm823, %v4249, 0
      %v4529 = vsel %vm823, %v4251, 0
      %v4531 = vsel %vm823, %v4253, 0
      %v4533 = vsel %vm823, %v4255, 0
      %4535 = vmatprep.subr.mxu0 %v4516
      %4536 = vmatpush1.msra.mxu0 %v4515
      %4537 = vmatprep.subr.mxu0 %v4519
      %4538 = vmatpush1.msra.mxu0 %v4518
      %4539 = vmatprep.subr.mxu0 0.0
      %4540 = vmatpush1.msra.mxu0 0.0
      %4541 = vmatprep.subr.mxu0 0.0
      %4542 = vmatpush1.msra.mxu0 0.0
      %4543 = vmatprep.subr.mxu0 0.0
      %4544 = vmatpush1.msra.mxu0 0.0
      %4545 = vmatprep.subr.mxu0 0.0
      %4546 = vmatpush1.msra.mxu0 0.0
      %4547 = vmatprep.subr.mxu0 0.0
      %4548 = vmatpush1.msra.mxu0 0.0
      %4549 = vmatprep.subr.mxu0 0.0
      %4550 = vmatpush1.msra.mxu0 0.0
      %4551 = vmatprep.subr.mxu0 0.0
      %4552 = vmatpush1.msra.mxu0 0.0
      %4553 = vmatprep.subr.mxu0 0.0
      %4554 = vmatpush1.msra.mxu0 0.0
      %4555 = vmatprep.subr.mxu0 0.0
      %4556 = vmatpush1.msra.mxu0 0.0
      %4557 = vmatprep.subr.mxu0 0.0
      %4558 = vmatpush1.msra.mxu0 0.0
      %4559 = vmatprep.subr.mxu0 0.0
      %4560 = vmatpush1.msra.mxu0 0.0
      %4561 = vmatprep.subr.mxu0 0.0
      %4562 = vmatpush1.msra.mxu0 0.0
      %4563 = vmatprep.subr.mxu0 0.0
      %4564 = vmatpush1.msra.mxu0 0.0
      %4565 = vmatprep.subr.mxu0 0.0
      %4566 = vmatpush1.msra.mxu0 0.0
      %4567 = vmatprep.subr.mxu0 0.0
      %4568 = vmatpush1.msra.mxu0 0.0
      %4569 = vmatprep.subr.mxu0 0.0
      %4570 = vmatpush1.msra.mxu0 0.0
      %4571 = vmatprep.subr.mxu0 0.0
      %4572 = vmatpush1.msra.mxu0 0.0
      %4573 = vmatprep.subr.mxu0 0.0
      %4574 = vmatpush1.msra.mxu0 0.0
      %4575 = vmatprep.subr.mxu0 0.0
      %4576 = vmatpush1.msra.mxu0 0.0
      %4577 = vmatprep.subr.mxu0 0.0
      %4578 = vmatpush1.msra.mxu0 0.0
      %4579 = vmatprep.subr.mxu0 0.0
      %4580 = vmatpush1.msra.mxu0 0.0
      %4581 = vmatprep.subr.mxu0 0.0
      %4582 = vmatpush1.msra.mxu0 0.0
      %4583 = vmatprep.subr.mxu0 0.0
      %4584 = vmatpush1.msra.mxu0 0.0
      %4585 = vmatprep.subr.mxu0 0.0
      %4586 = vmatpush1.msra.mxu0 0.0
      %4587 = vmatprep.subr.mxu0 0.0
      %4588 = vmatpush1.msra.mxu0 0.0
      %4589 = vmatprep.subr.mxu0 0.0
      %4590 = vmatpush1.msra.mxu0 0.0
      %4591 = vmatprep.subr.mxu0 0.0
      %4592 = vmatpush1.msra.mxu0 0.0
      %4593 = vmatprep.subr.mxu0 0.0
      %4594 = vmatpush1.msra.mxu0 0.0
      %4595 = vmatprep.subr.mxu0 0.0
      %4596 = vmatpush1.msra.mxu0 0.0
      %4597 = vmatprep.subr.mxu0 0.0
      %4598 = vmatpush1.msra.mxu0 0.0
      %4599 = vmatprep.mubr.f32.mxu0 0.0
      %4600 = vmatmul.mubr.f32.gmra.mrb[0].mxu0 %v4527
      %v4601 = vpop.f32.mrb[0].mxu0
      %v4602 = vadd.f32 %v4392, %v4601
      %v4603 = vpop.f32.mrb[0].mxu0
      %v4604 = vadd.f32 %v4394, %v4603
      %4605 = vmatprep.mubr.f32.mxu0 0.0
      %4606 = vmatmul.mubr.f32.gmra.mrb[0].mxu0 %v4529
      %v4607 = vpop.f32.mrb[0].mxu0
      %v4608 = vadd.f32 %v4398, %v4607
      %v4609 = vpop.f32.mrb[0].mxu0
      %v4610 = vadd.f32 %v4400, %v4609
      %4611 = vmatprep.mubr.f32.mxu0 0.0
      %4612 = vmatmul.mubr.f32.gmra.mrb[0].mxu0 %v4531
      %v4613 = vpop.f32.mrb[0].mxu0
      %v4614 = vadd.f32 %v4404, %v4613
      %v4615 = vpop.f32.mrb[0].mxu0
      %v4616 = vadd.f32 %v4406, %v4615
      %4617 = vmatprep.mubr.f32.mxu0 0.0
      %4618 = vmatmul.mubr.f32.gmra.mrb[0].mxu0 %v4533
      %v4619 = vpop.f32.mrb[0].mxu0
      %v4620 = vadd.f32 %v4410, %v4619
      %v4621 = vpop.f32.mrb[0].mxu0
      %v4622 = vadd.f32 %v4412, %v4621
      %4623 = vdwg.mxu0
      %4624 = vmatprep.subr.mxu0 0.0
      %4625 = vmatpush1.msra.mxu0 %v4517
      %4626 = vmatprep.subr.mxu0 0.0
      %4627 = vmatpush1.msra.mxu0 %v4520
      %4628 = vmatprep.subr.mxu0 0.0
      %4629 = vmatpush1.msra.mxu0 0.0
      %4630 = vmatprep.subr.mxu0 0.0
      %4631 = vmatpush1.msra.mxu0 0.0
      %4632 = vmatprep.subr.mxu0 0.0
      %4633 = vmatpush1.msra.mxu0 0.0
      %4634 = vmatprep.subr.mxu0 0.0
      %4635 = vmatpush1.msra.mxu0 0.0
      %4636 = vmatprep.subr.mxu0 0.0
      %4637 = vmatpush1.msra.mxu0 0.0
      %4638 = vmatprep.subr.mxu0 0.0
      %4639 = vmatpush1.msra.mxu0 0.0
      %4640 = vmatprep.subr.mxu0 0.0
      %4641 = vmatpush1.msra.mxu0 0.0
      %4642 = vmatprep.subr.mxu0 0.0
      %4643 = vmatpush1.msra.mxu0 0.0
      %4644 = vmatprep.subr.mxu0 0.0
      %4645 = vmatpush1.msra.mxu0 0.0
      %4646 = vmatprep.subr.mxu0 0.0
      %4647 = vmatpush1.msra.mxu0 0.0
      %4648 = vmatprep.subr.mxu0 0.0
      %4649 = vmatpush1.msra.mxu0 0.0
      %4650 = vmatprep.subr.mxu0 0.0
      %4651 = vmatpush1.msra.mxu0 0.0
      %4652 = vmatprep.subr.mxu0 0.0
      %4653 = vmatpush1.msra.mxu0 0.0
      %4654 = vmatprep.subr.mxu0 0.0
      %4655 = vmatpush1.msra.mxu0 0.0
      %4656 = vmatprep.subr.mxu0 0.0
      %4657 = vmatpush1.msra.mxu0 0.0
      %4658 = vmatprep.subr.mxu0 0.0
      %4659 = vmatpush1.msra.mxu0 0.0
      %4660 = vmatprep.subr.mxu0 0.0
      %4661 = vmatpush1.msra.mxu0 0.0
      %4662 = vmatprep.subr.mxu0 0.0
      %4663 = vmatpush1.msra.mxu0 0.0
      %4664 = vmatprep.subr.mxu0 0.0
      %4665 = vmatpush1.msra.mxu0 0.0
      %4666 = vmatprep.subr.mxu0 0.0
      %4667 = vmatpush1.msra.mxu0 0.0
      %4668 = vmatprep.subr.mxu0 0.0
      %4669 = vmatpush1.msra.mxu0 0.0
      %4670 = vmatprep.subr.mxu0 0.0
      %4671 = vmatpush1.msra.mxu0 0.0
      %4672 = vmatprep.subr.mxu0 0.0
      %4673 = vmatpush1.msra.mxu0 0.0
      %4674 = vmatprep.subr.mxu0 0.0
      %4675 = vmatpush1.msra.mxu0 0.0
      %4676 = vmatprep.subr.mxu0 0.0
      %4677 = vmatpush1.msra.mxu0 0.0
      %4678 = vmatprep.subr.mxu0 0.0
      %4679 = vmatpush1.msra.mxu0 0.0
      %4680 = vmatprep.subr.mxu0 0.0
      %4681 = vmatpush1.msra.mxu0 0.0
      %4682 = vmatprep.subr.mxu0 0.0
      %4683 = vmatpush1.msra.mxu0 0.0
      %4684 = vmatprep.subr.mxu0 0.0
      %4685 = vmatpush1.msra.mxu0 0.0
      %4686 = vmatprep.subr.mxu0 0.0
      %4687 = vmatpush1.msra.mxu0 0.0
      %4688 = vmatprep.mubr.f32.mxu0 0.0
      %4689 = vmatmul.mubr.f32.gmra.mrb[0].mxu0 %v4527
      %v4690 = vpop.f32.mrb[0].mxu0
      %v4691 = vadd.f32 %v4481, %v4690
      %v4692 = vpop.f32.mrb[0].mxu0
      %4693 = vmatprep.mubr.f32.mxu0 0.0
      %4694 = vmatmul.mubr.f32.gmra.mrb[0].mxu0 %v4529
      %v4695 = vpop.f32.mrb[0].mxu0
      %v4696 = vadd.f32 %v4486, %v4695
      %v4697 = vpop.f32.mrb[0].mxu0
      %4698 = vmatprep.mubr.f32.mxu0 0.0
      %4699 = vmatmul.mubr.f32.gmra.mrb[0].mxu0 %v4531
      %v4700 = vpop.f32.mrb[0].mxu0
      %v4701 = vadd.f32 %v4491, %v4700
      %v4702 = vpop.f32.mrb[0].mxu0
      %4703 = vmatprep.mubr.f32.mxu0 0.0
      %4704 = vmatmul.mubr.f32.gmra.mrb[0].mxu0 %v4533
      %v4705 = vpop.f32.mrb[0].mxu0
      %v4706 = vadd.f32 %v4496, %v4705
      %v4707 = vpop.f32.mrb[0].mxu0
      %4708 = vdwg.mxu0
      %4709 = vrot.lane.b32.xlu0 %v4249, 96
      %v4710 = vpop.permute.xlu0 %4709
      %4711 = vrot.lane.b32.xlu0 %v4251, 96
      %v4712 = vpop.permute.xlu0 %4711
      %4713 = vrot.lane.b32.xlu0 %v4253, 96
      %v4714 = vpop.permute.xlu0 %4713
      %4715 = vrot.lane.b32.xlu0 %v4255, 96
      %v4716 = vpop.permute.xlu0 %4715
      %4717 = vrot.lane.b32.xlu0 %v4261, 17
      %v4718 = vpop.permute.xlu0 %4717
      %4719 = vrot.lane.b32.xlu0 %v4262, 17
      %v4720 = vpop.permute.xlu0 %4719
      %4721 = vrot.lane.b32.xlu0 %v4263, 17
      %v4722 = vpop.permute.xlu0 %4721
      %4723 = vrot.lane.b32.xlu0 %v4264, 17
      %v4724 = vpop.permute.xlu0 %4723
      %4725 = vrot.lane.b32.xlu0 %v4265, 17
      %v4726 = vpop.permute.xlu0 %4725
      %4727 = vrot.lane.b32.xlu0 %v4266, 17
      %v4728 = vpop.permute.xlu0 %4727
      %4729 = vrot.lane.b32.xlu0 %v4267, 17
      %v4730 = vpop.permute.xlu0 %4729
      %4731 = vrot.lane.b32.xlu0 %v4268, 17
      %v4732 = vpop.permute.xlu0 %4731
      %v4733 = vsel %vm1185, %v4718, %v4720
      %v4734 = vsel %vm1185, %v4720, %v4722
      %v4735 = vsel %vm1185, %v4722, %v4724
      %v4736 = vsel %vm1185, %v4726, %v4728
      %v4737 = vsel %vm1185, %v4728, %v4730
      %v4738 = vsel %vm1185, %v4730, %v4732
      %v4745 = vsel %vm823, %v4710, 0
      %v4747 = vsel %vm823, %v4712, 0
      %v4749 = vsel %vm823, %v4714, 0
      %v4751 = vsel %vm823, %v4716, 0
      %4753 = vmatprep.subr.mxu0 %v4734
      %4754 = vmatpush1.msra.mxu0 %v4733
      %4755 = vmatprep.subr.mxu0 %v4737
      %4756 = vmatpush1.msra.mxu0 %v4736
      %4757 = vmatprep.subr.mxu0 0.0
      %4758 = vmatpush1.msra.mxu0 0.0
      %4759 = vmatprep.subr.mxu0 0.0
      %4760 = vmatpush1.msra.mxu0 0.0
      %4761 = vmatprep.subr.mxu0 0.0
      %4762 = vmatpush1.msra.mxu0 0.0
      %4763 = vmatprep.subr.mxu0 0.0
      %4764 = vmatpush1.msra.mxu0 0.0
      %4765 = vmatprep.subr.mxu0 0.0
      %4766 = vmatpush1.msra.mxu0 0.0
      %4767 = vmatprep.subr.mxu0 0.0
      %4768 = vmatpush1.msra.mxu0 0.0
      %4769 = vmatprep.subr.mxu0 0.0
      %4770 = vmatpush1.msra.mxu0 0.0
      %4771 = vmatprep.subr.mxu0 0.0
      %4772 = vmatpush1.msra.mxu0 0.0
      %4773 = vmatprep.subr.mxu0 0.0
      %4774 = vmatpush1.msra.mxu0 0.0
      %4775 = vmatprep.subr.mxu0 0.0
      %4776 = vmatpush1.msra.mxu0 0.0
      %4777 = vmatprep.subr.mxu0 0.0
      %4778 = vmatpush1.msra.mxu0 0.0
      %4779 = vmatprep.subr.mxu0 0.0
      %4780 = vmatpush1.msra.mxu0 0.0
      %4781 = vmatprep.subr.mxu0 0.0
      %4782 = vmatpush1.msra.mxu0 0.0
      %4783 = vmatprep.subr.mxu0 0.0
      %4784 = vmatpush1.msra.mxu0 0.0
      %4785 = vmatprep.subr.mxu0 0.0
      %4786 = vmatpush1.msra.mxu0 0.0
      %4787 = vmatprep.subr.mxu0 0.0
      %4788 = vmatpush1.msra.mxu0 0.0
      %4789 = vmatprep.subr.mxu0 0.0
      %4790 = vmatpush1.msra.mxu0 0.0
      %4791 = vmatprep.subr.mxu0 0.0
      %4792 = vmatpush1.msra.mxu0 0.0
      %4793 = vmatprep.subr.mxu0 0.0
      %4794 = vmatpush1.msra.mxu0 0.0
      %4795 = vmatprep.subr.mxu0 0.0
      %4796 = vmatpush1.msra.mxu0 0.0
      %4797 = vmatprep.subr.mxu0 0.0
      %4798 = vmatpush1.msra.mxu0 0.0
      %4799 = vmatprep.subr.mxu0 0.0
      %4800 = vmatpush1.msra.mxu0 0.0
      %4801 = vmatprep.subr.mxu0 0.0
      %4802 = vmatpush1.msra.mxu0 0.0
      %4803 = vmatprep.subr.mxu0 0.0
      %4804 = vmatpush1.msra.mxu0 0.0
      %4805 = vmatprep.subr.mxu0 0.0
      %4806 = vmatpush1.msra.mxu0 0.0
      %4807 = vmatprep.subr.mxu0 0.0
      %4808 = vmatpush1.msra.mxu0 0.0
      %4809 = vmatprep.subr.mxu0 0.0
      %4810 = vmatpush1.msra.mxu0 0.0
      %4811 = vmatprep.subr.mxu0 0.0
      %4812 = vmatpush1.msra.mxu0 0.0
      %4813 = vmatprep.subr.mxu0 0.0
      %4814 = vmatpush1.msra.mxu0 0.0
      %4815 = vmatprep.subr.mxu0 0.0
      %4816 = vmatpush1.msra.mxu0 0.0
      %4817 = vmatprep.mubr.f32.mxu0 0.0
      %4818 = vmatmul.mubr.f32.gmra.mrb[0].mxu0 %v4745
      %v4819 = vpop.f32.mrb[0].mxu0
      %v4820 = vadd.f32 0.0, %v4819
      %v4821 = vpop.f32.mrb[0].mxu0
      %v4822 = vadd.f32 0.0, %v4821
      %4823 = vmatprep.mubr.f32.mxu0 0.0
      %4824 = vmatmul.mubr.f32.gmra.mrb[0].mxu0 %v4747
      %v4825 = vpop.f32.mrb[0].mxu0
      %v4826 = vadd.f32 0.0, %v4825
      %v4827 = vpop.f32.mrb[0].mxu0
      %v4828 = vadd.f32 0.0, %v4827
      %4829 = vmatprep.mubr.f32.mxu0 0.0
      %4830 = vmatmul.mubr.f32.gmra.mrb[0].mxu0 %v4749
      %v4831 = vpop.f32.mrb[0].mxu0
      %v4832 = vadd.f32 0.0, %v4831
      %v4833 = vpop.f32.mrb[0].mxu0
      %v4834 = vadd.f32 0.0, %v4833
      %4835 = vmatprep.mubr.f32.mxu0 0.0
      %4836 = vmatmul.mubr.f32.gmra.mrb[0].mxu0 %v4751
      %v4837 = vpop.f32.mrb[0].mxu0
      %v4838 = vadd.f32 0.0, %v4837
      %v4839 = vpop.f32.mrb[0].mxu0
      %v4840 = vadd.f32 0.0, %v4839
      %4841 = vdwg.mxu0
      %4842 = vmatprep.subr.mxu0 0.0
      %4843 = vmatpush1.msra.mxu0 %v4735
      %4844 = vmatprep.subr.mxu0 0.0
      %4845 = vmatpush1.msra.mxu0 %v4738
      %4846 = vmatprep.subr.mxu0 0.0
      %4847 = vmatpush1.msra.mxu0 0.0
      %4848 = vmatprep.subr.mxu0 0.0
      %4849 = vmatpush1.msra.mxu0 0.0
      %4850 = vmatprep.subr.mxu0 0.0
      %4851 = vmatpush1.msra.mxu0 0.0
      %4852 = vmatprep.subr.mxu0 0.0
      %4853 = vmatpush1.msra.mxu0 0.0
      %4854 = vmatprep.subr.mxu0 0.0
      %4855 = vmatpush1.msra.mxu0 0.0
      %4856 = vmatprep.subr.mxu0 0.0
      %4857 = vmatpush1.msra.mxu0 0.0
      %4858 = vmatprep.subr.mxu0 0.0
      %4859 = vmatpush1.msra.mxu0 0.0
      %4860 = vmatprep.subr.mxu0 0.0
      %4861 = vmatpush1.msra.mxu0 0.0
      %4862 = vmatprep.subr.mxu0 0.0
      %4863 = vmatpush1.msra.mxu0 0.0
      %4864 = vmatprep.subr.mxu0 0.0
      %4865 = vmatpush1.msra.mxu0 0.0
      %4866 = vmatprep.subr.mxu0 0.0
      %4867 = vmatpush1.msra.mxu0 0.0
      %4868 = vmatprep.subr.mxu0 0.0
      %4869 = vmatpush1.msra.mxu0 0.0
      %4870 = vmatprep.subr.mxu0 0.0
      %4871 = vmatpush1.msra.mxu0 0.0
      %4872 = vmatprep.subr.mxu0 0.0
      %4873 = vmatpush1.msra.mxu0 0.0
      %4874 = vmatprep.subr.mxu0 0.0
      %4875 = vmatpush1.msra.mxu0 0.0
      %4876 = vmatprep.subr.mxu0 0.0
      %4877 = vmatpush1.msra.mxu0 0.0
      %4878 = vmatprep.subr.mxu0 0.0
      %4879 = vmatpush1.msra.mxu0 0.0
      %4880 = vmatprep.subr.mxu0 0.0
      %4881 = vmatpush1.msra.mxu0 0.0
      %4882 = vmatprep.subr.mxu0 0.0
      %4883 = vmatpush1.msra.mxu0 0.0
      %4884 = vmatprep.subr.mxu0 0.0
      %4885 = vmatpush1.msra.mxu0 0.0
      %4886 = vmatprep.subr.mxu0 0.0
      %4887 = vmatpush1.msra.mxu0 0.0
      %4888 = vmatprep.subr.mxu0 0.0
      %4889 = vmatpush1.msra.mxu0 0.0
      %4890 = vmatprep.subr.mxu0 0.0
      %4891 = vmatpush1.msra.mxu0 0.0
      %4892 = vmatprep.subr.mxu0 0.0
      %4893 = vmatpush1.msra.mxu0 0.0
      %4894 = vmatprep.subr.mxu0 0.0
      %4895 = vmatpush1.msra.mxu0 0.0
      %4896 = vmatprep.subr.mxu0 0.0
      %4897 = vmatpush1.msra.mxu0 0.0
      %4898 = vmatprep.subr.mxu0 0.0
      %4899 = vmatpush1.msra.mxu0 0.0
      %4900 = vmatprep.subr.mxu0 0.0
      %4901 = vmatpush1.msra.mxu0 0.0
      %4902 = vmatprep.subr.mxu0 0.0
      %4903 = vmatpush1.msra.mxu0 0.0
      %4904 = vmatprep.subr.mxu0 0.0
      %4905 = vmatpush1.msra.mxu0 0.0
      %4906 = vmatprep.mubr.f32.mxu0 0.0
      %4907 = vmatmul.mubr.f32.gmra.mrb[0].mxu0 %v4745
      %v4908 = vpop.f32.mrb[0].mxu0
      %v4909 = vadd.f32 0.0, %v4908
      %v4910 = vpop.f32.mrb[0].mxu0
      %4911 = vmatprep.mubr.f32.mxu0 0.0
      %4912 = vmatmul.mubr.f32.gmra.mrb[0].mxu0 %v4747
      %v4913 = vpop.f32.mrb[0].mxu0
      %v4914 = vadd.f32 0.0, %v4913
      %v4915 = vpop.f32.mrb[0].mxu0
      %4916 = vmatprep.mubr.f32.mxu0 0.0
      %4917 = vmatmul.mubr.f32.gmra.mrb[0].mxu0 %v4749
      %v4918 = vpop.f32.mrb[0].mxu0
      %v4919 = vadd.f32 0.0, %v4918
      %v4920 = vpop.f32.mrb[0].mxu0
      %4921 = vmatprep.mubr.f32.mxu0 0.0
      %4922 = vmatmul.mubr.f32.gmra.mrb[0].mxu0 %v4751
      %v4923 = vpop.f32.mrb[0].mxu0
      %v4924 = vadd.f32 0.0, %v4923
      %v4925 = vpop.f32.mrb[0].mxu0
      %4926 = vdwg.mxu0
      %v4927 = vadd.f32 %v4602, %v4820
      %v4928 = vadd.f32 %v4604, %v4822
      %v4929 = vadd.f32 %v4691, %v4909
      %v4930 = vadd.f32 %v4608, %v4826
      %v4931 = vadd.f32 %v4610, %v4828
      %v4932 = vadd.f32 %v4696, %v4914
      %v4933 = vadd.f32 %v4614, %v4832
      %v4934 = vadd.f32 %v4616, %v4834
      %v4935 = vadd.f32 %v4701, %v4919
      %v4936 = vadd.f32 %v4620, %v4838
      %v4937 = vadd.f32 %v4622, %v4840
      %v4938 = vadd.f32 %v4706, %v4924
      %4939 = vrot.lane.b32.xlu0 %v4249, 80
      %v4940 = vpop.permute.xlu0 %4939
      %4941 = vrot.lane.b32.xlu0 %v4251, 80
      %v4942 = vpop.permute.xlu0 %4941
      %4943 = vrot.lane.b32.xlu0 %v4253, 80
      %v4944 = vpop.permute.xlu0 %4943
      %4945 = vrot.lane.b32.xlu0 %v4255, 80
      %v4946 = vpop.permute.xlu0 %4945
      %4947 = vrot.lane.b32.xlu0 %v4261, 1
      %v4948 = vpop.permute.xlu0 %4947
      %4949 = vrot.lane.b32.xlu0 %v4262, 1
      %v4950 = vpop.permute.xlu0 %4949
      %4951 = vrot.lane.b32.xlu0 %v4263, 1
      %v4952 = vpop.permute.xlu0 %4951
      %4953 = vrot.lane.b32.xlu0 %v4264, 1
      %v4954 = vpop.permute.xlu0 %4953
      %4955 = vrot.lane.b32.xlu0 %v4265, 1
      %v4956 = vpop.permute.xlu0 %4955
      %4957 = vrot.lane.b32.xlu0 %v4266, 1
      %v4958 = vpop.permute.xlu0 %4957
      %4959 = vrot.lane.b32.xlu0 %v4267, 1
      %v4960 = vpop.permute.xlu0 %4959
      %4961 = vrot.lane.b32.xlu0 %v4268, 1
      %v4962 = vpop.permute.xlu0 %4961
      %v4963 = vsel %vm1380, %v4948, %v4950
      %v4964 = vsel %vm1380, %v4950, %v4952
      %v4965 = vsel %vm1380, %v4952, %v4954
      %v4966 = vsel %vm1380, %v4956, %v4958
      %v4967 = vsel %vm1380, %v4958, %v4960
      %v4968 = vsel %vm1380, %v4960, %v4962
      %v4975 = vsel %vm823, %v4940, 0
      %v4977 = vsel %vm823, %v4942, 0
      %v4979 = vsel %vm823, %v4944, 0
      %v4981 = vsel %vm823, %v4946, 0
      %4983 = vmatprep.subr.mxu0 %v4964
      %4984 = vmatpush1.msra.mxu0 %v4963
      %4985 = vmatprep.subr.mxu0 %v4967
      %4986 = vmatpush1.msra.mxu0 %v4966
      %4987 = vmatprep.subr.mxu0 0.0
      %4988 = vmatpush1.msra.mxu0 0.0
      %4989 = vmatprep.subr.mxu0 0.0
      %4990 = vmatpush1.msra.mxu0 0.0
      %4991 = vmatprep.subr.mxu0 0.0
      %4992 = vmatpush1.msra.mxu0 0.0
      %4993 = vmatprep.subr.mxu0 0.0
      %4994 = vmatpush1.msra.mxu0 0.0
      %4995 = vmatprep.subr.mxu0 0.0
      %4996 = vmatpush1.msra.mxu0 0.0
      %4997 = vmatprep.subr.mxu0 0.0
      %4998 = vmatpush1.msra.mxu0 0.0
      %4999 = vmatprep.subr.mxu0 0.0
      %5000 = vmatpush1.msra.mxu0 0.0
      %5001 = vmatprep.subr.mxu0 0.0
      %5002 = vmatpush1.msra.mxu0 0.0
      %5003 = vmatprep.subr.mxu0 0.0
      %5004 = vmatpush1.msra.mxu0 0.0
      %5005 = vmatprep.subr.mxu0 0.0
      %5006 = vmatpush1.msra.mxu0 0.0
      %5007 = vmatprep.subr.mxu0 0.0
      %5008 = vmatpush1.msra.mxu0 0.0
      %5009 = vmatprep.subr.mxu0 0.0
      %5010 = vmatpush1.msra.mxu0 0.0
      %5011 = vmatprep.subr.mxu0 0.0
      %5012 = vmatpush1.msra.mxu0 0.0
      %5013 = vmatprep.subr.mxu0 0.0
      %5014 = vmatpush1.msra.mxu0 0.0
      %5015 = vmatprep.subr.mxu0 0.0
      %5016 = vmatpush1.msra.mxu0 0.0
      %5017 = vmatprep.subr.mxu0 0.0
      %5018 = vmatpush1.msra.mxu0 0.0
      %5019 = vmatprep.subr.mxu0 0.0
      %5020 = vmatpush1.msra.mxu0 0.0
      %5021 = vmatprep.subr.mxu0 0.0
      %5022 = vmatpush1.msra.mxu0 0.0
      %5023 = vmatprep.subr.mxu0 0.0
      %5024 = vmatpush1.msra.mxu0 0.0
      %5025 = vmatprep.subr.mxu0 0.0
      %5026 = vmatpush1.msra.mxu0 0.0
      %5027 = vmatprep.subr.mxu0 0.0
      %5028 = vmatpush1.msra.mxu0 0.0
      %5029 = vmatprep.subr.mxu0 0.0
      %5030 = vmatpush1.msra.mxu0 0.0
      %5031 = vmatprep.subr.mxu0 0.0
      %5032 = vmatpush1.msra.mxu0 0.0
      %5033 = vmatprep.subr.mxu0 0.0
      %5034 = vmatpush1.msra.mxu0 0.0
      %5035 = vmatprep.subr.mxu0 0.0
      %5036 = vmatpush1.msra.mxu0 0.0
      %5037 = vmatprep.subr.mxu0 0.0
      %5038 = vmatpush1.msra.mxu0 0.0
      %5039 = vmatprep.subr.mxu0 0.0
      %5040 = vmatpush1.msra.mxu0 0.0
      %5041 = vmatprep.subr.mxu0 0.0
      %5042 = vmatpush1.msra.mxu0 0.0
      %5043 = vmatprep.subr.mxu0 0.0
      %5044 = vmatpush1.msra.mxu0 0.0
      %5045 = vmatprep.subr.mxu0 0.0
      %5046 = vmatpush1.msra.mxu0 0.0
      %5047 = vmatprep.mubr.f32.mxu0 0.0
      %5048 = vmatmul.mubr.f32.gmra.mrb[0].mxu0 %v4975
      %v5049 = vpop.f32.mrb[0].mxu0
      %v5050 = vadd.f32 0.0, %v5049
      %v5051 = vpop.f32.mrb[0].mxu0
      %v5052 = vadd.f32 0.0, %v5051
      %5053 = vmatprep.mubr.f32.mxu0 0.0
      %5054 = vmatmul.mubr.f32.gmra.mrb[0].mxu0 %v4977
      %v5055 = vpop.f32.mrb[0].mxu0
      %v5056 = vadd.f32 0.0, %v5055
      %v5057 = vpop.f32.mrb[0].mxu0
      %v5058 = vadd.f32 0.0, %v5057
      %5059 = vmatprep.mubr.f32.mxu0 0.0
      %5060 = vmatmul.mubr.f32.gmra.mrb[0].mxu0 %v4979
      %v5061 = vpop.f32.mrb[0].mxu0
      %v5062 = vadd.f32 0.0, %v5061
      %v5063 = vpop.f32.mrb[0].mxu0
      %v5064 = vadd.f32 0.0, %v5063
      %5065 = vmatprep.mubr.f32.mxu0 0.0
      %5066 = vmatmul.mubr.f32.gmra.mrb[0].mxu0 %v4981
      %v5067 = vpop.f32.mrb[0].mxu0
      %v5068 = vadd.f32 0.0, %v5067
      %v5069 = vpop.f32.mrb[0].mxu0
      %v5070 = vadd.f32 0.0, %v5069
      %5071 = vdwg.mxu0
      %5072 = vmatprep.subr.mxu0 0.0
      %5073 = vmatpush1.msra.mxu0 %v4965
      %5074 = vmatprep.subr.mxu0 0.0
      %5075 = vmatpush1.msra.mxu0 %v4968
      %5076 = vmatprep.subr.mxu0 0.0
      %5077 = vmatpush1.msra.mxu0 0.0
      %5078 = vmatprep.subr.mxu0 0.0
      %5079 = vmatpush1.msra.mxu0 0.0
      %5080 = vmatprep.subr.mxu0 0.0
      %5081 = vmatpush1.msra.mxu0 0.0
      %5082 = vmatprep.subr.mxu0 0.0
      %5083 = vmatpush1.msra.mxu0 0.0
      %5084 = vmatprep.subr.mxu0 0.0
      %5085 = vmatpush1.msra.mxu0 0.0
      %5086 = vmatprep.subr.mxu0 0.0
      %5087 = vmatpush1.msra.mxu0 0.0
      %5088 = vmatprep.subr.mxu0 0.0
      %5089 = vmatpush1.msra.mxu0 0.0
      %5090 = vmatprep.subr.mxu0 0.0
      %5091 = vmatpush1.msra.mxu0 0.0
      %5092 = vmatprep.subr.mxu0 0.0
      %5093 = vmatpush1.msra.mxu0 0.0
      %5094 = vmatprep.subr.mxu0 0.0
      %5095 = vmatpush1.msra.mxu0 0.0
      %5096 = vmatprep.subr.mxu0 0.0
      %5097 = vmatpush1.msra.mxu0 0.0
      %5098 = vmatprep.subr.mxu0 0.0
      %5099 = vmatpush1.msra.mxu0 0.0
      %5100 = vmatprep.subr.mxu0 0.0
      %5101 = vmatpush1.msra.mxu0 0.0
      %5102 = vmatprep.subr.mxu0 0.0
      %5103 = vmatpush1.msra.mxu0 0.0
      %5104 = vmatprep.subr.mxu0 0.0
      %5105 = vmatpush1.msra.mxu0 0.0
      %5106 = vmatprep.subr.mxu0 0.0
      %5107 = vmatpush1.msra.mxu0 0.0
      %5108 = vmatprep.subr.mxu0 0.0
      %5109 = vmatpush1.msra.mxu0 0.0
      %5110 = vmatprep.subr.mxu0 0.0
      %5111 = vmatpush1.msra.mxu0 0.0
      %5112 = vmatprep.subr.mxu0 0.0
      %5113 = vmatpush1.msra.mxu0 0.0
      %5114 = vmatprep.subr.mxu0 0.0
      %5115 = vmatpush1.msra.mxu0 0.0
      %5116 = vmatprep.subr.mxu0 0.0
      %5117 = vmatpush1.msra.mxu0 0.0
      %5118 = vmatprep.subr.mxu0 0.0
      %5119 = vmatpush1.msra.mxu0 0.0
      %5120 = vmatprep.subr.mxu0 0.0
      %5121 = vmatpush1.msra.mxu0 0.0
      %5122 = vmatprep.subr.mxu0 0.0
      %5123 = vmatpush1.msra.mxu0 0.0
      %5124 = vmatprep.subr.mxu0 0.0
      %5125 = vmatpush1.msra.mxu0 0.0
      %5126 = vmatprep.subr.mxu0 0.0
      %5127 = vmatpush1.msra.mxu0 0.0
      %5128 = vmatprep.subr.mxu0 0.0
      %5129 = vmatpush1.msra.mxu0 0.0
      %5130 = vmatprep.subr.mxu0 0.0
      %5131 = vmatpush1.msra.mxu0 0.0
      %5132 = vmatprep.subr.mxu0 0.0
      %5133 = vmatpush1.msra.mxu0 0.0
      %5134 = vmatprep.subr.mxu0 0.0
      %5135 = vmatpush1.msra.mxu0 0.0
      %5136 = vmatprep.mubr.f32.mxu0 0.0
      %5137 = vmatmul.mubr.f32.gmra.mrb[0].mxu0 %v4975
      %v5138 = vpop.f32.mrb[0].mxu0
      %v5139 = vadd.f32 0.0, %v5138
      %v5140 = vpop.f32.mrb[0].mxu0
      %5141 = vmatprep.mubr.f32.mxu0 0.0
      %5142 = vmatmul.mubr.f32.gmra.mrb[0].mxu0 %v4977
      %v5143 = vpop.f32.mrb[0].mxu0
      %v5144 = vadd.f32 0.0, %v5143
      %v5145 = vpop.f32.mrb[0].mxu0
      %5146 = vmatprep.mubr.f32.mxu0 0.0
      %5147 = vmatmul.mubr.f32.gmra.mrb[0].mxu0 %v4979
      %v5148 = vpop.f32.mrb[0].mxu0
      %v5149 = vadd.f32 0.0, %v5148
      %v5150 = vpop.f32.mrb[0].mxu0
      %5151 = vmatprep.mubr.f32.mxu0 0.0
      %5152 = vmatmul.mubr.f32.gmra.mrb[0].mxu0 %v4981
      %v5153 = vpop.f32.mrb[0].mxu0
      %v5154 = vadd.f32 0.0, %v5153
      %v5155 = vpop.f32.mrb[0].mxu0
      %5156 = vdwg.mxu0
      %v5157 = vadd.f32 %v4927, %v5050
      %v5158 = vadd.f32 %v4928, %v5052
      %v5159 = vadd.f32 %v4929, %v5139
      %v5160 = vadd.f32 %v4930, %v5056
      %v5161 = vadd.f32 %v4931, %v5058
      %v5162 = vadd.f32 %v4932, %v5144
      %v5163 = vadd.f32 %v4933, %v5062
      %v5164 = vadd.f32 %v4934, %v5064
      %v5165 = vadd.f32 %v4935, %v5149
      %v5166 = vadd.f32 %v4936, %v5068
      %v5167 = vadd.f32 %v4937, %v5070
      %v5168 = vadd.f32 %v4938, %v5154
      %5169 = vrot.lane.b32.xlu0 %v4249, 64
      %v5170 = vpop.permute.xlu0 %5169
      %5171 = vrot.lane.b32.xlu0 %v4251, 64
      %v5172 = vpop.permute.xlu0 %5171
      %5173 = vrot.lane.b32.xlu0 %v4253, 64
      %v5174 = vpop.permute.xlu0 %5173
      %5175 = vrot.lane.b32.xlu0 %v4255, 64
      %v5176 = vpop.permute.xlu0 %5175
      %v5177 = vsel %vm823, %v5170, 0
      %v5179 = vsel %vm823, %v5172, 0
      %v5181 = vsel %vm823, %v5174, 0
      %v5183 = vsel %vm823, %v5176, 0
      %5185 = vmatprep.subr.mxu0 %v4263
      %5186 = vmatpush1.msra.mxu0 %v4262
      %5187 = vmatprep.subr.mxu0 %v4267
      %5188 = vmatpush1.msra.mxu0 %v4266
      %5189 = vmatprep.subr.mxu0 0.0
      %5190 = vmatpush1.msra.mxu0 0.0
      %5191 = vmatprep.subr.mxu0 0.0
      %5192 = vmatpush1.msra.mxu0 0.0
      %5193 = vmatprep.subr.mxu0 0.0
      %5194 = vmatpush1.msra.mxu0 0.0
      %5195 = vmatprep.subr.mxu0 0.0
      %5196 = vmatpush1.msra.mxu0 0.0
      %5197 = vmatprep.subr.mxu0 0.0
      %5198 = vmatpush1.msra.mxu0 0.0
      %5199 = vmatprep.subr.mxu0 0.0
      %5200 = vmatpush1.msra.mxu0 0.0
      %5201 = vmatprep.subr.mxu0 0.0
      %5202 = vmatpush1.msra.mxu0 0.0
      %5203 = vmatprep.subr.mxu0 0.0
      %5204 = vmatpush1.msra.mxu0 0.0
      %5205 = vmatprep.subr.mxu0 0.0
      %5206 = vmatpush1.msra.mxu0 0.0
      %5207 = vmatprep.subr.mxu0 0.0
      %5208 = vmatpush1.msra.mxu0 0.0
      %5209 = vmatprep.subr.mxu0 0.0
      %5210 = vmatpush1.msra.mxu0 0.0
      %5211 = vmatprep.subr.mxu0 0.0
      %5212 = vmatpush1.msra.mxu0 0.0
      %5213 = vmatprep.subr.mxu0 0.0
      %5214 = vmatpush1.msra.mxu0 0.0
      %5215 = vmatprep.subr.mxu0 0.0
      %5216 = vmatpush1.msra.mxu0 0.0
      %5217 = vmatprep.subr.mxu0 0.0
      %5218 = vmatpush1.msra.mxu0 0.0
      %5219 = vmatprep.subr.mxu0 0.0
      %5220 = vmatpush1.msra.mxu0 0.0
      %5221 = vmatprep.subr.mxu0 0.0
      %5222 = vmatpush1.msra.mxu0 0.0
      %5223 = vmatprep.subr.mxu0 0.0
      %5224 = vmatpush1.msra.mxu0 0.0
      %5225 = vmatprep.subr.mxu0 0.0
      %5226 = vmatpush1.msra.mxu0 0.0
      %5227 = vmatprep.subr.mxu0 0.0
      %5228 = vmatpush1.msra.mxu0 0.0
      %5229 = vmatprep.subr.mxu0 0.0
      %5230 = vmatpush1.msra.mxu0 0.0
      %5231 = vmatprep.subr.mxu0 0.0
      %5232 = vmatpush1.msra.mxu0 0.0
      %5233 = vmatprep.subr.mxu0 0.0
      %5234 = vmatpush1.msra.mxu0 0.0
      %5235 = vmatprep.subr.mxu0 0.0
      %5236 = vmatpush1.msra.mxu0 0.0
      %5237 = vmatprep.subr.mxu0 0.0
      %5238 = vmatpush1.msra.mxu0 0.0
      %5239 = vmatprep.subr.mxu0 0.0
      %5240 = vmatpush1.msra.mxu0 0.0
      %5241 = vmatprep.subr.mxu0 0.0
      %5242 = vmatpush1.msra.mxu0 0.0
      %5243 = vmatprep.subr.mxu0 0.0
      %5244 = vmatpush1.msra.mxu0 0.0
      %5245 = vmatprep.subr.mxu0 0.0
      %5246 = vmatpush1.msra.mxu0 0.0
      %5247 = vmatprep.subr.mxu0 0.0
      %5248 = vmatpush1.msra.mxu0 0.0
      %5249 = vmatprep.mubr.f32.mxu0 0.0
      %5250 = vmatmul.mubr.f32.gmra.mrb[0].mxu0 %v5177
      %v5251 = vpop.f32.mrb[0].mxu0
      %v5252 = vadd.f32 0.0, %v5251
      %v5253 = vpop.f32.mrb[0].mxu0
      %v5254 = vadd.f32 0.0, %v5253
      %5255 = vmatprep.mubr.f32.mxu0 0.0
      %5256 = vmatmul.mubr.f32.gmra.mrb[0].mxu0 %v5179
      %v5257 = vpop.f32.mrb[0].mxu0
      %v5258 = vadd.f32 0.0, %v5257
      %v5259 = vpop.f32.mrb[0].mxu0
      %v5260 = vadd.f32 0.0, %v5259
      %5261 = vmatprep.mubr.f32.mxu0 0.0
      %5262 = vmatmul.mubr.f32.gmra.mrb[0].mxu0 %v5181
      %v5263 = vpop.f32.mrb[0].mxu0
      %v5264 = vadd.f32 0.0, %v5263
      %v5265 = vpop.f32.mrb[0].mxu0
      %v5266 = vadd.f32 0.0, %v5265
      %5267 = vmatprep.mubr.f32.mxu0 0.0
      %5268 = vmatmul.mubr.f32.gmra.mrb[0].mxu0 %v5183
      %v5269 = vpop.f32.mrb[0].mxu0
      %v5270 = vadd.f32 0.0, %v5269
      %v5271 = vpop.f32.mrb[0].mxu0
      %v5272 = vadd.f32 0.0, %v5271
      %5273 = vdwg.mxu0
      %5274 = vmatprep.subr.mxu0 0.0
      %5275 = vmatpush1.msra.mxu0 %v4264
      %5276 = vmatprep.subr.mxu0 0.0
      %5277 = vmatpush1.msra.mxu0 %v4268
      %5278 = vmatprep.subr.mxu0 0.0
      %5279 = vmatpush1.msra.mxu0 0.0
      %5280 = vmatprep.subr.mxu0 0.0
      %5281 = vmatpush1.msra.mxu0 0.0
      %5282 = vmatprep.subr.mxu0 0.0
      %5283 = vmatpush1.msra.mxu0 0.0
      %5284 = vmatprep.subr.mxu0 0.0
      %5285 = vmatpush1.msra.mxu0 0.0
      %5286 = vmatprep.subr.mxu0 0.0
      %5287 = vmatpush1.msra.mxu0 0.0
      %5288 = vmatprep.subr.mxu0 0.0
      %5289 = vmatpush1.msra.mxu0 0.0
      %5290 = vmatprep.subr.mxu0 0.0
      %5291 = vmatpush1.msra.mxu0 0.0
      %5292 = vmatprep.subr.mxu0 0.0
      %5293 = vmatpush1.msra.mxu0 0.0
      %5294 = vmatprep.subr.mxu0 0.0
      %5295 = vmatpush1.msra.mxu0 0.0
      %5296 = vmatprep.subr.mxu0 0.0
      %5297 = vmatpush1.msra.mxu0 0.0
      %5298 = vmatprep.subr.mxu0 0.0
      %5299 = vmatpush1.msra.mxu0 0.0
      %5300 = vmatprep.subr.mxu0 0.0
      %5301 = vmatpush1.msra.mxu0 0.0
      %5302 = vmatprep.subr.mxu0 0.0
      %5303 = vmatpush1.msra.mxu0 0.0
      %5304 = vmatprep.subr.mxu0 0.0
      %5305 = vmatpush1.msra.mxu0 0.0
      %5306 = vmatprep.subr.mxu0 0.0
      %5307 = vmatpush1.msra.mxu0 0.0
      %5308 = vmatprep.subr.mxu0 0.0
      %5309 = vmatpush1.msra.mxu0 0.0
      %5310 = vmatprep.subr.mxu0 0.0
      %5311 = vmatpush1.msra.mxu0 0.0
      %5312 = vmatprep.subr.mxu0 0.0
      %5313 = vmatpush1.msra.mxu0 0.0
      %5314 = vmatprep.subr.mxu0 0.0
      %5315 = vmatpush1.msra.mxu0 0.0
      %5316 = vmatprep.subr.mxu0 0.0
      %5317 = vmatpush1.msra.mxu0 0.0
      %5318 = vmatprep.subr.mxu0 0.0
      %5319 = vmatpush1.msra.mxu0 0.0
      %5320 = vmatprep.subr.mxu0 0.0
      %5321 = vmatpush1.msra.mxu0 0.0
      %5322 = vmatprep.subr.mxu0 0.0
      %5323 = vmatpush1.msra.mxu0 0.0
      %5324 = vmatprep.subr.mxu0 0.0
      %5325 = vmatpush1.msra.mxu0 0.0
      %5326 = vmatprep.subr.mxu0 0.0
      %5327 = vmatpush1.msra.mxu0 0.0
      %5328 = vmatprep.subr.mxu0 0.0
      %5329 = vmatpush1.msra.mxu0 0.0
      %5330 = vmatprep.subr.mxu0 0.0
      %5331 = vmatpush1.msra.mxu0 0.0
      %5332 = vmatprep.subr.mxu0 0.0
      %5333 = vmatpush1.msra.mxu0 0.0
      %5334 = vmatprep.subr.mxu0 0.0
      %5335 = vmatpush1.msra.mxu0 0.0
      %5336 = vmatprep.subr.mxu0 0.0
      %5337 = vmatpush1.msra.mxu0 0.0
      %5338 = vmatprep.mubr.f32.mxu0 0.0
      %5339 = vmatmul.mubr.f32.gmra.mrb[0].mxu0 %v5177
      %v5340 = vpop.f32.mrb[0].mxu0
      %v5341 = vadd.f32 0.0, %v5340
      %v5342 = vpop.f32.mrb[0].mxu0
      %5343 = vmatprep.mubr.f32.mxu0 0.0
      %5344 = vmatmul.mubr.f32.gmra.mrb[0].mxu0 %v5179
      %v5345 = vpop.f32.mrb[0].mxu0
      %v5346 = vadd.f32 0.0, %v5345
      %v5347 = vpop.f32.mrb[0].mxu0
      %5348 = vmatprep.mubr.f32.mxu0 0.0
      %5349 = vmatmul.mubr.f32.gmra.mrb[0].mxu0 %v5181
      %v5350 = vpop.f32.mrb[0].mxu0
      %v5351 = vadd.f32 0.0, %v5350
      %v5352 = vpop.f32.mrb[0].mxu0
      %5353 = vmatprep.mubr.f32.mxu0 0.0
      %5354 = vmatmul.mubr.f32.gmra.mrb[0].mxu0 %v5183
      %v5355 = vpop.f32.mrb[0].mxu0
      %v5356 = vadd.f32 0.0, %v5355
      %v5357 = vpop.f32.mrb[0].mxu0
      %5358 = vdwg.mxu0
      %v5359 = vadd.f32 %v5157, %v5252
      %v5360 = vadd.f32 %v5158, %v5254
      %v5361 = vadd.f32 %v5159, %v5341
      %v5362 = vadd.f32 %v5160, %v5258
      %v5363 = vadd.f32 %v5161, %v5260
      %v5364 = vadd.f32 %v5162, %v5346
      %v5365 = vadd.f32 %v5163, %v5264
      %v5366 = vadd.f32 %v5164, %v5266
      %v5367 = vadd.f32 %v5165, %v5351
      %v5368 = vadd.f32 %v5166, %v5270
      %v5369 = vadd.f32 %v5167, %v5272
      %v5370 = vadd.f32 %v5168, %v5356
      %5371 = vrot.lane.b32.xlu0 %v4249, 48
      %v5372 = vpop.permute.xlu0 %5371
      %5373 = vrot.lane.b32.xlu0 %v4251, 48
      %v5374 = vpop.permute.xlu0 %5373
      %5375 = vrot.lane.b32.xlu0 %v4253, 48
      %v5376 = vpop.permute.xlu0 %5375
      %5377 = vrot.lane.b32.xlu0 %v4255, 48
      %v5378 = vpop.permute.xlu0 %5377
      %5379 = vrot.lane.b32.xlu0 %v4262, 127
      %v5380 = vpop.permute.xlu0 %5379
      %5381 = vrot.lane.b32.xlu0 %v4263, 127
      %v5382 = vpop.permute.xlu0 %5381
      %5383 = vrot.lane.b32.xlu0 %v4264, 127
      %v5384 = vpop.permute.xlu0 %5383
      %5385 = vrot.lane.b32.xlu0 %v4266, 127
      %v5386 = vpop.permute.xlu0 %5385
      %5387 = vrot.lane.b32.xlu0 %v4267, 127
      %v5388 = vpop.permute.xlu0 %5387
      %5389 = vrot.lane.b32.xlu0 %v4268, 127
      %v5390 = vpop.permute.xlu0 %5389
      %v5391 = vsel %vm1737, %v5380, %v5382
      %v5392 = vsel %vm1737, %v5382, %v5384
      %v5393 = vsel %vm1737, %v5386, %v5388
      %v5394 = vsel %vm1737, %v5388, %v5390
      %v5401 = vsel %vm823, %v5372, 0
      %v5403 = vsel %vm823, %v5374, 0
      %v5405 = vsel %vm823, %v5376, 0
      %v5407 = vsel %vm823, %v5378, 0
      %5409 = vmatprep.subr.mxu0 %v5392
      %5410 = vmatpush1.msra.mxu0 %v5391
      %5411 = vmatprep.subr.mxu0 %v5394
      %5412 = vmatpush1.msra.mxu0 %v5393
      %5413 = vmatprep.subr.mxu0 0.0
      %5414 = vmatpush1.msra.mxu0 0.0
      %5415 = vmatprep.subr.mxu0 0.0
      %5416 = vmatpush1.msra.mxu0 0.0
      %5417 = vmatprep.subr.mxu0 0.0
      %5418 = vmatpush1.msra.mxu0 0.0
      %5419 = vmatprep.subr.mxu0 0.0
      %5420 = vmatpush1.msra.mxu0 0.0
      %5421 = vmatprep.subr.mxu0 0.0
      %5422 = vmatpush1.msra.mxu0 0.0
      %5423 = vmatprep.subr.mxu0 0.0
      %5424 = vmatpush1.msra.mxu0 0.0
      %5425 = vmatprep.subr.mxu0 0.0
      %5426 = vmatpush1.msra.mxu0 0.0
      %5427 = vmatprep.subr.mxu0 0.0
      %5428 = vmatpush1.msra.mxu0 0.0
      %5429 = vmatprep.subr.mxu0 0.0
      %5430 = vmatpush1.msra.mxu0 0.0
      %5431 = vmatprep.subr.mxu0 0.0
      %5432 = vmatpush1.msra.mxu0 0.0
      %5433 = vmatprep.subr.mxu0 0.0
      %5434 = vmatpush1.msra.mxu0 0.0
      %5435 = vmatprep.subr.mxu0 0.0
      %5436 = vmatpush1.msra.mxu0 0.0
      %5437 = vmatprep.subr.mxu0 0.0
      %5438 = vmatpush1.msra.mxu0 0.0
      %5439 = vmatprep.subr.mxu0 0.0
      %5440 = vmatpush1.msra.mxu0 0.0
      %5441 = vmatprep.subr.mxu0 0.0
      %5442 = vmatpush1.msra.mxu0 0.0
      %5443 = vmatprep.subr.mxu0 0.0
      %5444 = vmatpush1.msra.mxu0 0.0
      %5445 = vmatprep.subr.mxu0 0.0
      %5446 = vmatpush1.msra.mxu0 0.0
      %5447 = vmatprep.subr.mxu0 0.0
      %5448 = vmatpush1.msra.mxu0 0.0
      %5449 = vmatprep.subr.mxu0 0.0
      %5450 = vmatpush1.msra.mxu0 0.0
      %5451 = vmatprep.subr.mxu0 0.0
      %5452 = vmatpush1.msra.mxu0 0.0
      %5453 = vmatprep.subr.mxu0 0.0
      %5454 = vmatpush1.msra.mxu0 0.0
      %5455 = vmatprep.subr.mxu0 0.0
      %5456 = vmatpush1.msra.mxu0 0.0
      %5457 = vmatprep.subr.mxu0 0.0
      %5458 = vmatpush1.msra.mxu0 0.0
      %5459 = vmatprep.subr.mxu0 0.0
      %5460 = vmatpush1.msra.mxu0 0.0
      %5461 = vmatprep.subr.mxu0 0.0
      %5462 = vmatpush1.msra.mxu0 0.0
      %5463 = vmatprep.subr.mxu0 0.0
      %5464 = vmatpush1.msra.mxu0 0.0
      %5465 = vmatprep.subr.mxu0 0.0
      %5466 = vmatpush1.msra.mxu0 0.0
      %5467 = vmatprep.subr.mxu0 0.0
      %5468 = vmatpush1.msra.mxu0 0.0
      %5469 = vmatprep.subr.mxu0 0.0
      %5470 = vmatpush1.msra.mxu0 0.0
      %5471 = vmatprep.subr.mxu0 0.0
      %5472 = vmatpush1.msra.mxu0 0.0
      %5473 = vmatprep.mubr.f32.mxu0 0.0
      %5474 = vmatmul.mubr.f32.gmra.mrb[0].mxu0 %v5401
      %v5475 = vpop.f32.mrb[0].mxu0
      %v5476 = vadd.f32 0.0, %v5475
      %v5477 = vpop.f32.mrb[0].mxu0
      %v5478 = vadd.f32 0.0, %v5477
      %5479 = vmatprep.mubr.f32.mxu0 0.0
      %5480 = vmatmul.mubr.f32.gmra.mrb[0].mxu0 %v5403
      %v5481 = vpop.f32.mrb[0].mxu0
      %v5482 = vadd.f32 0.0, %v5481
      %v5483 = vpop.f32.mrb[0].mxu0
      %v5484 = vadd.f32 0.0, %v5483
      %5485 = vmatprep.mubr.f32.mxu0 0.0
      %5486 = vmatmul.mubr.f32.gmra.mrb[0].mxu0 %v5405
      %v5487 = vpop.f32.mrb[0].mxu0
      %v5488 = vadd.f32 0.0, %v5487
      %v5489 = vpop.f32.mrb[0].mxu0
      %v5490 = vadd.f32 0.0, %v5489
      %5491 = vmatprep.mubr.f32.mxu0 0.0
      %5492 = vmatmul.mubr.f32.gmra.mrb[0].mxu0 %v5407
      %v5493 = vpop.f32.mrb[0].mxu0
      %v5494 = vadd.f32 0.0, %v5493
      %v5495 = vpop.f32.mrb[0].mxu0
      %v5496 = vadd.f32 0.0, %v5495
      %5497 = vdwg.mxu0
      %5498 = vmatprep.subr.mxu0 0.0
      %5499 = vmatpush1.msra.mxu0 %v5384
      %5500 = vmatprep.subr.mxu0 0.0
      %5501 = vmatpush1.msra.mxu0 %v5390
      %5502 = vmatprep.subr.mxu0 0.0
      %5503 = vmatpush1.msra.mxu0 0.0
      %5504 = vmatprep.subr.mxu0 0.0
      %5505 = vmatpush1.msra.mxu0 0.0
      %5506 = vmatprep.subr.mxu0 0.0
      %5507 = vmatpush1.msra.mxu0 0.0
      %5508 = vmatprep.subr.mxu0 0.0
      %5509 = vmatpush1.msra.mxu0 0.0
      %5510 = vmatprep.subr.mxu0 0.0
      %5511 = vmatpush1.msra.mxu0 0.0
      %5512 = vmatprep.subr.mxu0 0.0
      %5513 = vmatpush1.msra.mxu0 0.0
      %5514 = vmatprep.subr.mxu0 0.0
      %5515 = vmatpush1.msra.mxu0 0.0
      %5516 = vmatprep.subr.mxu0 0.0
      %5517 = vmatpush1.msra.mxu0 0.0
      %5518 = vmatprep.subr.mxu0 0.0
      %5519 = vmatpush1.msra.mxu0 0.0
      %5520 = vmatprep.subr.mxu0 0.0
      %5521 = vmatpush1.msra.mxu0 0.0
      %5522 = vmatprep.subr.mxu0 0.0
      %5523 = vmatpush1.msra.mxu0 0.0
      %5524 = vmatprep.subr.mxu0 0.0
      %5525 = vmatpush1.msra.mxu0 0.0
      %5526 = vmatprep.subr.mxu0 0.0
      %5527 = vmatpush1.msra.mxu0 0.0
      %5528 = vmatprep.subr.mxu0 0.0
      %5529 = vmatpush1.msra.mxu0 0.0
      %5530 = vmatprep.subr.mxu0 0.0
      %5531 = vmatpush1.msra.mxu0 0.0
      %5532 = vmatprep.subr.mxu0 0.0
      %5533 = vmatpush1.msra.mxu0 0.0
      %5534 = vmatprep.subr.mxu0 0.0
      %5535 = vmatpush1.msra.mxu0 0.0
      %5536 = vmatprep.subr.mxu0 0.0
      %5537 = vmatpush1.msra.mxu0 0.0
      %5538 = vmatprep.subr.mxu0 0.0
      %5539 = vmatpush1.msra.mxu0 0.0
      %5540 = vmatprep.subr.mxu0 0.0
      %5541 = vmatpush1.msra.mxu0 0.0
      %5542 = vmatprep.subr.mxu0 0.0
      %5543 = vmatpush1.msra.mxu0 0.0
      %5544 = vmatprep.subr.mxu0 0.0
      %5545 = vmatpush1.msra.mxu0 0.0
      %5546 = vmatprep.subr.mxu0 0.0
      %5547 = vmatpush1.msra.mxu0 0.0
      %5548 = vmatprep.subr.mxu0 0.0
      %5549 = vmatpush1.msra.mxu0 0.0
      %5550 = vmatprep.subr.mxu0 0.0
      %5551 = vmatpush1.msra.mxu0 0.0
      %5552 = vmatprep.subr.mxu0 0.0
      %5553 = vmatpush1.msra.mxu0 0.0
      %5554 = vmatprep.subr.mxu0 0.0
      %5555 = vmatpush1.msra.mxu0 0.0
      %5556 = vmatprep.subr.mxu0 0.0
      %5557 = vmatpush1.msra.mxu0 0.0
      %5558 = vmatprep.subr.mxu0 0.0
      %5559 = vmatpush1.msra.mxu0 0.0
      %5560 = vmatprep.subr.mxu0 0.0
      %5561 = vmatpush1.msra.mxu0 0.0
      %5562 = vmatprep.mubr.f32.mxu0 0.0
      %5563 = vmatmul.mubr.f32.gmra.mrb[0].mxu0 %v5401
      %v5564 = vpop.f32.mrb[0].mxu0
      %v5565 = vadd.f32 0.0, %v5564
      %v5566 = vpop.f32.mrb[0].mxu0
      %5567 = vmatprep.mubr.f32.mxu0 0.0
      %5568 = vmatmul.mubr.f32.gmra.mrb[0].mxu0 %v5403
      %v5569 = vpop.f32.mrb[0].mxu0
      %v5570 = vadd.f32 0.0, %v5569
      %v5571 = vpop.f32.mrb[0].mxu0
      %5572 = vmatprep.mubr.f32.mxu0 0.0
      %5573 = vmatmul.mubr.f32.gmra.mrb[0].mxu0 %v5405
      %v5574 = vpop.f32.mrb[0].mxu0
      %v5575 = vadd.f32 0.0, %v5574
      %v5576 = vpop.f32.mrb[0].mxu0
      %5577 = vmatprep.mubr.f32.mxu0 0.0
      %5578 = vmatmul.mubr.f32.gmra.mrb[0].mxu0 %v5407
      %v5579 = vpop.f32.mrb[0].mxu0
      %v5580 = vadd.f32 0.0, %v5579
      %v5581 = vpop.f32.mrb[0].mxu0
      %5582 = vdwg.mxu0
      %v5583 = vadd.f32 %v5359, %v5476
      %v5584 = vadd.f32 %v5360, %v5478
      %v5585 = vadd.f32 %v5361, %v5565
      %v5586 = vadd.f32 %v5362, %v5482
      %v5587 = vadd.f32 %v5363, %v5484
      %v5588 = vadd.f32 %v5364, %v5570
      %v5589 = vadd.f32 %v5365, %v5488
      %v5590 = vadd.f32 %v5366, %v5490
      %v5591 = vadd.f32 %v5367, %v5575
      %v5592 = vadd.f32 %v5368, %v5494
      %v5593 = vadd.f32 %v5369, %v5496
      %v5594 = vadd.f32 %v5370, %v5580
      %5595 = vrot.lane.b32.xlu0 %v4249, 32
      %v5596 = vpop.permute.xlu0 %5595
      %5597 = vrot.lane.b32.xlu0 %v4251, 32
      %v5598 = vpop.permute.xlu0 %5597
      %5599 = vrot.lane.b32.xlu0 %v4253, 32
      %v5600 = vpop.permute.xlu0 %5599
      %5601 = vrot.lane.b32.xlu0 %v4255, 32
      %v5602 = vpop.permute.xlu0 %5601
      %5603 = vrot.lane.b32.xlu0 %v4262, 111
      %v5604 = vpop.permute.xlu0 %5603
      %5605 = vrot.lane.b32.xlu0 %v4263, 111
      %v5606 = vpop.permute.xlu0 %5605
      %5607 = vrot.lane.b32.xlu0 %v4264, 111
      %v5608 = vpop.permute.xlu0 %5607
      %5609 = vrot.lane.b32.xlu0 %v4266, 111
      %v5610 = vpop.permute.xlu0 %5609
      %5611 = vrot.lane.b32.xlu0 %v4267, 111
      %v5612 = vpop.permute.xlu0 %5611
      %5613 = vrot.lane.b32.xlu0 %v4268, 111
      %v5614 = vpop.permute.xlu0 %5613
      %v5615 = vsel %vm1926, %v5604, %v5606
      %v5616 = vsel %vm1926, %v5606, %v5608
      %v5617 = vsel %vm1926, %v5610, %v5612
      %v5618 = vsel %vm1926, %v5612, %v5614
      %v5625 = vsel %vm823, %v5596, 0
      %v5627 = vsel %vm823, %v5598, 0
      %v5629 = vsel %vm823, %v5600, 0
      %v5631 = vsel %vm823, %v5602, 0
      %5633 = vmatprep.subr.mxu0 %v5616
      %5634 = vmatpush1.msra.mxu0 %v5615
      %5635 = vmatprep.subr.mxu0 %v5618
      %5636 = vmatpush1.msra.mxu0 %v5617
      %5637 = vmatprep.subr.mxu0 0.0
      %5638 = vmatpush1.msra.mxu0 0.0
      %5639 = vmatprep.subr.mxu0 0.0
      %5640 = vmatpush1.msra.mxu0 0.0
      %5641 = vmatprep.subr.mxu0 0.0
      %5642 = vmatpush1.msra.mxu0 0.0
      %5643 = vmatprep.subr.mxu0 0.0
      %5644 = vmatpush1.msra.mxu0 0.0
      %5645 = vmatprep.subr.mxu0 0.0
      %5646 = vmatpush1.msra.mxu0 0.0
      %5647 = vmatprep.subr.mxu0 0.0
      %5648 = vmatpush1.msra.mxu0 0.0
      %5649 = vmatprep.subr.mxu0 0.0
      %5650 = vmatpush1.msra.mxu0 0.0
      %5651 = vmatprep.subr.mxu0 0.0
      %5652 = vmatpush1.msra.mxu0 0.0
      %5653 = vmatprep.subr.mxu0 0.0
      %5654 = vmatpush1.msra.mxu0 0.0
      %5655 = vmatprep.subr.mxu0 0.0
      %5656 = vmatpush1.msra.mxu0 0.0
      %5657 = vmatprep.subr.mxu0 0.0
      %5658 = vmatpush1.msra.mxu0 0.0
      %5659 = vmatprep.subr.mxu0 0.0
      %5660 = vmatpush1.msra.mxu0 0.0
      %5661 = vmatprep.subr.mxu0 0.0
      %5662 = vmatpush1.msra.mxu0 0.0
      %5663 = vmatprep.subr.mxu0 0.0
      %5664 = vmatpush1.msra.mxu0 0.0
      %5665 = vmatprep.subr.mxu0 0.0
      %5666 = vmatpush1.msra.mxu0 0.0
      %5667 = vmatprep.subr.mxu0 0.0
      %5668 = vmatpush1.msra.mxu0 0.0
      %5669 = vmatprep.subr.mxu0 0.0
      %5670 = vmatpush1.msra.mxu0 0.0
      %5671 = vmatprep.subr.mxu0 0.0
      %5672 = vmatpush1.msra.mxu0 0.0
      %5673 = vmatprep.subr.mxu0 0.0
      %5674 = vmatpush1.msra.mxu0 0.0
      %5675 = vmatprep.subr.mxu0 0.0
      %5676 = vmatpush1.msra.mxu0 0.0
      %5677 = vmatprep.subr.mxu0 0.0
      %5678 = vmatpush1.msra.mxu0 0.0
      %5679 = vmatprep.subr.mxu0 0.0
      %5680 = vmatpush1.msra.mxu0 0.0
      %5681 = vmatprep.subr.mxu0 0.0
      %5682 = vmatpush1.msra.mxu0 0.0
      %5683 = vmatprep.subr.mxu0 0.0
      %5684 = vmatpush1.msra.mxu0 0.0
      %5685 = vmatprep.subr.mxu0 0.0
      %5686 = vmatpush1.msra.mxu0 0.0
      %5687 = vmatprep.subr.mxu0 0.0
      %5688 = vmatpush1.msra.mxu0 0.0
      %5689 = vmatprep.subr.mxu0 0.0
      %5690 = vmatpush1.msra.mxu0 0.0
      %5691 = vmatprep.subr.mxu0 0.0
      %5692 = vmatpush1.msra.mxu0 0.0
      %5693 = vmatprep.subr.mxu0 0.0
      %5694 = vmatpush1.msra.mxu0 0.0
      %5695 = vmatprep.subr.mxu0 0.0
      %5696 = vmatpush1.msra.mxu0 0.0
      %5697 = vmatprep.mubr.f32.mxu0 0.0
      %5698 = vmatmul.mubr.f32.gmra.mrb[0].mxu0 %v5625
      %v5699 = vpop.f32.mrb[0].mxu0
      %v5700 = vadd.f32 0.0, %v5699
      %v5701 = vpop.f32.mrb[0].mxu0
      %v5702 = vadd.f32 0.0, %v5701
      %5703 = vmatprep.mubr.f32.mxu0 0.0
      %5704 = vmatmul.mubr.f32.gmra.mrb[0].mxu0 %v5627
      %v5705 = vpop.f32.mrb[0].mxu0
      %v5706 = vadd.f32 0.0, %v5705
      %v5707 = vpop.f32.mrb[0].mxu0
      %v5708 = vadd.f32 0.0, %v5707
      %5709 = vmatprep.mubr.f32.mxu0 0.0
      %5710 = vmatmul.mubr.f32.gmra.mrb[0].mxu0 %v5629
      %v5711 = vpop.f32.mrb[0].mxu0
      %v5712 = vadd.f32 0.0, %v5711
      %v5713 = vpop.f32.mrb[0].mxu0
      %v5714 = vadd.f32 0.0, %v5713
      %5715 = vmatprep.mubr.f32.mxu0 0.0
      %5716 = vmatmul.mubr.f32.gmra.mrb[0].mxu0 %v5631
      %v5717 = vpop.f32.mrb[0].mxu0
      %v5718 = vadd.f32 0.0, %v5717
      %v5719 = vpop.f32.mrb[0].mxu0
      %v5720 = vadd.f32 0.0, %v5719
      %5721 = vdwg.mxu0
      %5722 = vmatprep.subr.mxu0 0.0
      %5723 = vmatpush1.msra.mxu0 %v5608
      %5724 = vmatprep.subr.mxu0 0.0
      %5725 = vmatpush1.msra.mxu0 %v5614
      %5726 = vmatprep.subr.mxu0 0.0
      %5727 = vmatpush1.msra.mxu0 0.0
      %5728 = vmatprep.subr.mxu0 0.0
      %5729 = vmatpush1.msra.mxu0 0.0
      %5730 = vmatprep.subr.mxu0 0.0
      %5731 = vmatpush1.msra.mxu0 0.0
      %5732 = vmatprep.subr.mxu0 0.0
      %5733 = vmatpush1.msra.mxu0 0.0
      %5734 = vmatprep.subr.mxu0 0.0
      %5735 = vmatpush1.msra.mxu0 0.0
      %5736 = vmatprep.subr.mxu0 0.0
      %5737 = vmatpush1.msra.mxu0 0.0
      %5738 = vmatprep.subr.mxu0 0.0
      %5739 = vmatpush1.msra.mxu0 0.0
      %5740 = vmatprep.subr.mxu0 0.0
      %5741 = vmatpush1.msra.mxu0 0.0
      %5742 = vmatprep.subr.mxu0 0.0
      %5743 = vmatpush1.msra.mxu0 0.0
      %5744 = vmatprep.subr.mxu0 0.0
      %5745 = vmatpush1.msra.mxu0 0.0
      %5746 = vmatprep.subr.mxu0 0.0
      %5747 = vmatpush1.msra.mxu0 0.0
      %5748 = vmatprep.subr.mxu0 0.0
      %5749 = vmatpush1.msra.mxu0 0.0
      %5750 = vmatprep.subr.mxu0 0.0
      %5751 = vmatpush1.msra.mxu0 0.0
      %5752 = vmatprep.subr.mxu0 0.0
      %5753 = vmatpush1.msra.mxu0 0.0
      %5754 = vmatprep.subr.mxu0 0.0
      %5755 = vmatpush1.msra.mxu0 0.0
      %5756 = vmatprep.subr.mxu0 0.0
      %5757 = vmatpush1.msra.mxu0 0.0
      %5758 = vmatprep.subr.mxu0 0.0
      %5759 = vmatpush1.msra.mxu0 0.0
      %5760 = vmatprep.subr.mxu0 0.0
      %5761 = vmatpush1.msra.mxu0 0.0
      %5762 = vmatprep.subr.mxu0 0.0
      %5763 = vmatpush1.msra.mxu0 0.0
      %5764 = vmatprep.subr.mxu0 0.0
      %5765 = vmatpush1.msra.mxu0 0.0
      %5766 = vmatprep.subr.mxu0 0.0
      %5767 = vmatpush1.msra.mxu0 0.0
      %5768 = vmatprep.subr.mxu0 0.0
      %5769 = vmatpush1.msra.mxu0 0.0
      %5770 = vmatprep.subr.mxu0 0.0
      %5771 = vmatpush1.msra.mxu0 0.0
      %5772 = vmatprep.subr.mxu0 0.0
      %5773 = vmatpush1.msra.mxu0 0.0
      %5774 = vmatprep.subr.mxu0 0.0
      %5775 = vmatpush1.msra.mxu0 0.0
      %5776 = vmatprep.subr.mxu0 0.0
      %5777 = vmatpush1.msra.mxu0 0.0
      %5778 = vmatprep.subr.mxu0 0.0
      %5779 = vmatpush1.msra.mxu0 0.0
      %5780 = vmatprep.subr.mxu0 0.0
      %5781 = vmatpush1.msra.mxu0 0.0
      %5782 = vmatprep.subr.mxu0 0.0
      %5783 = vmatpush1.msra.mxu0 0.0
      %5784 = vmatprep.subr.mxu0 0.0
      %5785 = vmatpush1.msra.mxu0 0.0
      %5786 = vmatprep.mubr.f32.mxu0 0.0
      %5787 = vmatmul.mubr.f32.gmra.mrb[0].mxu0 %v5625
      %v5788 = vpop.f32.mrb[0].mxu0
      %v5789 = vadd.f32 0.0, %v5788
      %v5790 = vpop.f32.mrb[0].mxu0
      %5791 = vmatprep.mubr.f32.mxu0 0.0
      %5792 = vmatmul.mubr.f32.gmra.mrb[0].mxu0 %v5627
      %v5793 = vpop.f32.mrb[0].mxu0
      %v5794 = vadd.f32 0.0, %v5793
      %v5795 = vpop.f32.mrb[0].mxu0
      %5796 = vmatprep.mubr.f32.mxu0 0.0
      %5797 = vmatmul.mubr.f32.gmra.mrb[0].mxu0 %v5629
      %v5798 = vpop.f32.mrb[0].mxu0
      %v5799 = vadd.f32 0.0, %v5798
      %v5800 = vpop.f32.mrb[0].mxu0
      %5801 = vmatprep.mubr.f32.mxu0 0.0
      %5802 = vmatmul.mubr.f32.gmra.mrb[0].mxu0 %v5631
      %v5803 = vpop.f32.mrb[0].mxu0
      %v5804 = vadd.f32 0.0, %v5803
      %v5805 = vpop.f32.mrb[0].mxu0
      %5806 = vdwg.mxu0
      %v5807 = vadd.f32 %v5583, %v5700
      %v5808 = vadd.f32 %v5584, %v5702
      %v5809 = vadd.f32 %v5585, %v5789
      %v5810 = vadd.f32 %v5586, %v5706
      %v5811 = vadd.f32 %v5587, %v5708
      %v5812 = vadd.f32 %v5588, %v5794
      %v5813 = vadd.f32 %v5589, %v5712
      %v5814 = vadd.f32 %v5590, %v5714
      %v5815 = vadd.f32 %v5591, %v5799
      %v5816 = vadd.f32 %v5592, %v5718
      %v5817 = vadd.f32 %v5593, %v5720
      %v5818 = vadd.f32 %v5594, %v5804
      %5819 = vrot.lane.b32.xlu0 %v4249, 16
      %v5820 = vpop.permute.xlu0 %5819
      %5821 = vrot.lane.b32.xlu0 %v4251, 16
      %v5822 = vpop.permute.xlu0 %5821
      %5823 = vrot.lane.b32.xlu0 %v4253, 16
      %v5824 = vpop.permute.xlu0 %5823
      %5825 = vrot.lane.b32.xlu0 %v4255, 16
      %v5826 = vpop.permute.xlu0 %5825
      %5827 = vrot.lane.b32.xlu0 %v4262, 110
      %v5828 = vpop.permute.xlu0 %5827
      %5829 = vrot.lane.b32.xlu0 %v4263, 110
      %v5830 = vpop.permute.xlu0 %5829
      %5831 = vrot.lane.b32.xlu0 %v4264, 110
      %v5832 = vpop.permute.xlu0 %5831
      %5833 = vrot.lane.b32.xlu0 %v4266, 110
      %v5834 = vpop.permute.xlu0 %5833
      %5835 = vrot.lane.b32.xlu0 %v4267, 110
      %v5836 = vpop.permute.xlu0 %5835
      %5837 = vrot.lane.b32.xlu0 %v4268, 110
      %v5838 = vpop.permute.xlu0 %5837
      %v5839 = vsel %vm2115, %v5828, %v5830
      %v5840 = vsel %vm2115, %v5830, %v5832
      %v5841 = vsel %vm2115, %v5834, %v5836
      %v5842 = vsel %vm2115, %v5836, %v5838
      %v5849 = vsel %vm823, %v5820, 0
      %v5851 = vsel %vm823, %v5822, 0
      %v5853 = vsel %vm823, %v5824, 0
      %v5855 = vsel %vm823, %v5826, 0
      %5857 = vmatprep.subr.mxu0 %v5840
      %5858 = vmatpush1.msra.mxu0 %v5839
      %5859 = vmatprep.subr.mxu0 %v5842
      %5860 = vmatpush1.msra.mxu0 %v5841
      %5861 = vmatprep.subr.mxu0 0.0
      %5862 = vmatpush1.msra.mxu0 0.0
      %5863 = vmatprep.subr.mxu0 0.0
      %5864 = vmatpush1.msra.mxu0 0.0
      %5865 = vmatprep.subr.mxu0 0.0
      %5866 = vmatpush1.msra.mxu0 0.0
      %5867 = vmatprep.subr.mxu0 0.0
      %5868 = vmatpush1.msra.mxu0 0.0
      %5869 = vmatprep.subr.mxu0 0.0
      %5870 = vmatpush1.msra.mxu0 0.0
      %5871 = vmatprep.subr.mxu0 0.0
      %5872 = vmatpush1.msra.mxu0 0.0
      %5873 = vmatprep.subr.mxu0 0.0
      %5874 = vmatpush1.msra.mxu0 0.0
      %5875 = vmatprep.subr.mxu0 0.0
      %5876 = vmatpush1.msra.mxu0 0.0
      %5877 = vmatprep.subr.mxu0 0.0
      %5878 = vmatpush1.msra.mxu0 0.0
      %5879 = vmatprep.subr.mxu0 0.0
      %5880 = vmatpush1.msra.mxu0 0.0
      %5881 = vmatprep.subr.mxu0 0.0
      %5882 = vmatpush1.msra.mxu0 0.0
      %5883 = vmatprep.subr.mxu0 0.0
      %5884 = vmatpush1.msra.mxu0 0.0
      %5885 = vmatprep.subr.mxu0 0.0
      %5886 = vmatpush1.msra.mxu0 0.0
      %5887 = vmatprep.subr.mxu0 0.0
      %5888 = vmatpush1.msra.mxu0 0.0
      %5889 = vmatprep.subr.mxu0 0.0
      %5890 = vmatpush1.msra.mxu0 0.0
      %5891 = vmatprep.subr.mxu0 0.0
      %5892 = vmatpush1.msra.mxu0 0.0
      %5893 = vmatprep.subr.mxu0 0.0
      %5894 = vmatpush1.msra.mxu0 0.0
      %5895 = vmatprep.subr.mxu0 0.0
      %5896 = vmatpush1.msra.mxu0 0.0
      %5897 = vmatprep.subr.mxu0 0.0
      %5898 = vmatpush1.msra.mxu0 0.0
      %5899 = vmatprep.subr.mxu0 0.0
      %5900 = vmatpush1.msra.mxu0 0.0
      %5901 = vmatprep.subr.mxu0 0.0
      %5902 = vmatpush1.msra.mxu0 0.0
      %5903 = vmatprep.subr.mxu0 0.0
      %5904 = vmatpush1.msra.mxu0 0.0
      %5905 = vmatprep.subr.mxu0 0.0
      %5906 = vmatpush1.msra.mxu0 0.0
      %5907 = vmatprep.subr.mxu0 0.0
      %5908 = vmatpush1.msra.mxu0 0.0
      %5909 = vmatprep.subr.mxu0 0.0
      %5910 = vmatpush1.msra.mxu0 0.0
      %5911 = vmatprep.subr.mxu0 0.0
      %5912 = vmatpush1.msra.mxu0 0.0
      %5913 = vmatprep.subr.mxu0 0.0
      %5914 = vmatpush1.msra.mxu0 0.0
      %5915 = vmatprep.subr.mxu0 0.0
      %5916 = vmatpush1.msra.mxu0 0.0
      %5917 = vmatprep.subr.mxu0 0.0
      %5918 = vmatpush1.msra.mxu0 0.0
      %5919 = vmatprep.subr.mxu0 0.0
      %5920 = vmatpush1.msra.mxu0 0.0
      %5921 = vmatprep.mubr.f32.mxu0 0.0
      %5922 = vmatmul.mubr.f32.gmra.mrb[0].mxu0 %v5849
      %v5923 = vpop.f32.mrb[0].mxu0
      %v5924 = vadd.f32 0.0, %v5923
      %v5925 = vpop.f32.mrb[0].mxu0
      %v5926 = vadd.f32 0.0, %v5925
      %5927 = vmatprep.mubr.f32.mxu0 0.0
      %5928 = vmatmul.mubr.f32.gmra.mrb[0].mxu0 %v5851
      %v5929 = vpop.f32.mrb[0].mxu0
      %v5930 = vadd.f32 0.0, %v5929
      %v5931 = vpop.f32.mrb[0].mxu0
      %v5932 = vadd.f32 0.0, %v5931
      %5933 = vmatprep.mubr.f32.mxu0 0.0
      %5934 = vmatmul.mubr.f32.gmra.mrb[0].mxu0 %v5853
      %v5935 = vpop.f32.mrb[0].mxu0
      %v5936 = vadd.f32 0.0, %v5935
      %v5937 = vpop.f32.mrb[0].mxu0
      %v5938 = vadd.f32 0.0, %v5937
      %5939 = vmatprep.mubr.f32.mxu0 0.0
      %5940 = vmatmul.mubr.f32.gmra.mrb[0].mxu0 %v5855
      %v5941 = vpop.f32.mrb[0].mxu0
      %v5942 = vadd.f32 0.0, %v5941
      %v5943 = vpop.f32.mrb[0].mxu0
      %v5944 = vadd.f32 0.0, %v5943
      %5945 = vdwg.mxu0
      %5946 = vmatprep.subr.mxu0 0.0
      %5947 = vmatpush1.msra.mxu0 %v5832
      %5948 = vmatprep.subr.mxu0 0.0
      %5949 = vmatpush1.msra.mxu0 %v5838
      %5950 = vmatprep.subr.mxu0 0.0
      %5951 = vmatpush1.msra.mxu0 0.0
      %5952 = vmatprep.subr.mxu0 0.0
      %5953 = vmatpush1.msra.mxu0 0.0
      %5954 = vmatprep.subr.mxu0 0.0
      %5955 = vmatpush1.msra.mxu0 0.0
      %5956 = vmatprep.subr.mxu0 0.0
      %5957 = vmatpush1.msra.mxu0 0.0
      %5958 = vmatprep.subr.mxu0 0.0
      %5959 = vmatpush1.msra.mxu0 0.0
      %5960 = vmatprep.subr.mxu0 0.0
      %5961 = vmatpush1.msra.mxu0 0.0
      %5962 = vmatprep.subr.mxu0 0.0
      %5963 = vmatpush1.msra.mxu0 0.0
      %5964 = vmatprep.subr.mxu0 0.0
      %5965 = vmatpush1.msra.mxu0 0.0
      %5966 = vmatprep.subr.mxu0 0.0
      %5967 = vmatpush1.msra.mxu0 0.0
      %5968 = vmatprep.subr.mxu0 0.0
      %5969 = vmatpush1.msra.mxu0 0.0
      %5970 = vmatprep.subr.mxu0 0.0
      %5971 = vmatpush1.msra.mxu0 0.0
      %5972 = vmatprep.subr.mxu0 0.0
      %5973 = vmatpush1.msra.mxu0 0.0
      %5974 = vmatprep.subr.mxu0 0.0
      %5975 = vmatpush1.msra.mxu0 0.0
      %5976 = vmatprep.subr.mxu0 0.0
      %5977 = vmatpush1.msra.mxu0 0.0
      %5978 = vmatprep.subr.mxu0 0.0
      %5979 = vmatpush1.msra.mxu0 0.0
      %5980 = vmatprep.subr.mxu0 0.0
      %5981 = vmatpush1.msra.mxu0 0.0
      %5982 = vmatprep.subr.mxu0 0.0
      %5983 = vmatpush1.msra.mxu0 0.0
      %5984 = vmatprep.subr.mxu0 0.0
      %5985 = vmatpush1.msra.mxu0 0.0
      %5986 = vmatprep.subr.mxu0 0.0
      %5987 = vmatpush1.msra.mxu0 0.0
      %5988 = vmatprep.subr.mxu0 0.0
      %5989 = vmatpush1.msra.mxu0 0.0
      %5990 = vmatprep.subr.mxu0 0.0
      %5991 = vmatpush1.msra.mxu0 0.0
      %5992 = vmatprep.subr.mxu0 0.0
      %5993 = vmatpush1.msra.mxu0 0.0
      %5994 = vmatprep.subr.mxu0 0.0
      %5995 = vmatpush1.msra.mxu0 0.0
      %5996 = vmatprep.subr.mxu0 0.0
      %5997 = vmatpush1.msra.mxu0 0.0
      %5998 = vmatprep.subr.mxu0 0.0
      %5999 = vmatpush1.msra.mxu0 0.0
      %6000 = vmatprep.subr.mxu0 0.0
      %6001 = vmatpush1.msra.mxu0 0.0
      %6002 = vmatprep.subr.mxu0 0.0
      %6003 = vmatpush1.msra.mxu0 0.0
      %6004 = vmatprep.subr.mxu0 0.0
      %6005 = vmatpush1.msra.mxu0 0.0
      %6006 = vmatprep.subr.mxu0 0.0
      %6007 = vmatpush1.msra.mxu0 0.0
      %6008 = vmatprep.subr.mxu0 0.0
      %6009 = vmatpush1.msra.mxu0 0.0
      %6010 = vmatprep.mubr.f32.mxu0 0.0
      %6011 = vmatmul.mubr.f32.gmra.mrb[0].mxu0 %v5849
      %v6012 = vpop.f32.mrb[0].mxu0
      %v6013 = vadd.f32 0.0, %v6012
      %v6014 = vpop.f32.mrb[0].mxu0
      %6015 = vmatprep.mubr.f32.mxu0 0.0
      %6016 = vmatmul.mubr.f32.gmra.mrb[0].mxu0 %v5851
      %v6017 = vpop.f32.mrb[0].mxu0
      %v6018 = vadd.f32 0.0, %v6017
      %v6019 = vpop.f32.mrb[0].mxu0
      %6020 = vmatprep.mubr.f32.mxu0 0.0
      %6021 = vmatmul.mubr.f32.gmra.mrb[0].mxu0 %v5853
      %v6022 = vpop.f32.mrb[0].mxu0
      %v6023 = vadd.f32 0.0, %v6022
      %v6024 = vpop.f32.mrb[0].mxu0
      %6025 = vmatprep.mubr.f32.mxu0 0.0
      %6026 = vmatmul.mubr.f32.gmra.mrb[0].mxu0 %v5855
      %v6027 = vpop.f32.mrb[0].mxu0
      %v6028 = vadd.f32 0.0, %v6027
      %v6029 = vpop.f32.mrb[0].mxu0
      %6030 = vdwg.mxu0
      %v6031 = vadd.f32 %v5807, %v5924
      %v6032 = vadd.f32 %v5808, %v5926
      %v6033 = vadd.f32 %v5809, %v6013
      %v6034 = vadd.f32 %v5810, %v5930
      %v6035 = vadd.f32 %v5811, %v5932
      %v6036 = vadd.f32 %v5812, %v6018
      %v6037 = vadd.f32 %v5813, %v5936
      %v6038 = vadd.f32 %v5814, %v5938
      %v6039 = vadd.f32 %v5815, %v6023
      %v6040 = vadd.f32 %v5816, %v5942
      %v6041 = vadd.f32 %v5817, %v5944
      %v6042 = vadd.f32 %v5818, %v6028
      %6043 = vrot.lane.b32.xlu0 %v4262, 109
      %v6044 = vpop.permute.xlu0 %6043
      %6045 = vrot.lane.b32.xlu0 %v4263, 109
      %v6046 = vpop.permute.xlu0 %6045
      %6047 = vrot.lane.b32.xlu0 %v4264, 109
      %v6048 = vpop.permute.xlu0 %6047
      %6049 = vrot.lane.b32.xlu0 %v4266, 109
      %v6050 = vpop.permute.xlu0 %6049
      %6051 = vrot.lane.b32.xlu0 %v4267, 109
      %v6052 = vpop.permute.xlu0 %6051
      %6053 = vrot.lane.b32.xlu0 %v4268, 109
      %v6054 = vpop.permute.xlu0 %6053
      %v6055 = vsel %vm2300, %v6044, %v6046
      %v6056 = vsel %vm2300, %v6046, %v6048
      %v6057 = vsel %vm2300, %v6050, %v6052
      %v6058 = vsel %vm2300, %v6052, %v6054
      %v6066 = vsel %vm823, %v4250, 0
      %v6069 = vsel %vm823, %v4252, 0
      %v6072 = vsel %vm823, %v4254, 0
      %v6075 = vsel %vm823, %v4256, 0
      %6077 = vmatprep.subr.mxu0 %v6056
      %6078 = vmatpush1.msra.mxu0 %v6055
      %6079 = vmatprep.subr.mxu0 %v6058
      %6080 = vmatpush1.msra.mxu0 %v6057
      %6081 = vmatprep.subr.mxu0 0.0
      %6082 = vmatpush1.msra.mxu0 0.0
      %6083 = vmatprep.subr.mxu0 0.0
      %6084 = vmatpush1.msra.mxu0 0.0
      %6085 = vmatprep.subr.mxu0 0.0
      %6086 = vmatpush1.msra.mxu0 0.0
      %6087 = vmatprep.subr.mxu0 0.0
      %6088 = vmatpush1.msra.mxu0 0.0
      %6089 = vmatprep.subr.mxu0 0.0
      %6090 = vmatpush1.msra.mxu0 0.0
      %6091 = vmatprep.subr.mxu0 0.0
      %6092 = vmatpush1.msra.mxu0 0.0
      %6093 = vmatprep.subr.mxu0 0.0
      %6094 = vmatpush1.msra.mxu0 0.0
      %6095 = vmatprep.subr.mxu0 0.0
      %6096 = vmatpush1.msra.mxu0 0.0
      %6097 = vmatprep.subr.mxu0 0.0
      %6098 = vmatpush1.msra.mxu0 0.0
      %6099 = vmatprep.subr.mxu0 0.0
      %6100 = vmatpush1.msra.mxu0 0.0
      %6101 = vmatprep.subr.mxu0 0.0
      %6102 = vmatpush1.msra.mxu0 0.0
      %6103 = vmatprep.subr.mxu0 0.0
      %6104 = vmatpush1.msra.mxu0 0.0
      %6105 = vmatprep.subr.mxu0 0.0
      %6106 = vmatpush1.msra.mxu0 0.0
      %6107 = vmatprep.subr.mxu0 0.0
      %6108 = vmatpush1.msra.mxu0 0.0
      %6109 = vmatprep.subr.mxu0 0.0
      %6110 = vmatpush1.msra.mxu0 0.0
      %6111 = vmatprep.subr.mxu0 0.0
      %6112 = vmatpush1.msra.mxu0 0.0
      %6113 = vmatprep.subr.mxu0 0.0
      %6114 = vmatpush1.msra.mxu0 0.0
      %6115 = vmatprep.subr.mxu0 0.0
      %6116 = vmatpush1.msra.mxu0 0.0
      %6117 = vmatprep.subr.mxu0 0.0
      %6118 = vmatpush1.msra.mxu0 0.0
      %6119 = vmatprep.subr.mxu0 0.0
      %6120 = vmatpush1.msra.mxu0 0.0
      %6121 = vmatprep.subr.mxu0 0.0
      %6122 = vmatpush1.msra.mxu0 0.0
      %6123 = vmatprep.subr.mxu0 0.0
      %6124 = vmatpush1.msra.mxu0 0.0
      %6125 = vmatprep.subr.mxu0 0.0
      %6126 = vmatpush1.msra.mxu0 0.0
      %6127 = vmatprep.subr.mxu0 0.0
      %6128 = vmatpush1.msra.mxu0 0.0
      %6129 = vmatprep.subr.mxu0 0.0
      %6130 = vmatpush1.msra.mxu0 0.0
      %6131 = vmatprep.subr.mxu0 0.0
      %6132 = vmatpush1.msra.mxu0 0.0
      %6133 = vmatprep.subr.mxu0 0.0
      %6134 = vmatpush1.msra.mxu0 0.0
      %6135 = vmatprep.subr.mxu0 0.0
      %6136 = vmatpush1.msra.mxu0 0.0
      %6137 = vmatprep.subr.mxu0 0.0
      %6138 = vmatpush1.msra.mxu0 0.0
      %6139 = vmatprep.subr.mxu0 0.0
      %6140 = vmatpush1.msra.mxu0 0.0
      %6141 = vmatprep.mubr.f32.mxu0 0.0
      %6142 = vmatmul.mubr.f32.gmra.mrb[0].mxu0 %v6066
      %v6143 = vpop.f32.mrb[0].mxu0
      %v6144 = vadd.f32 0.0, %v6143
      %v6145 = vpop.f32.mrb[0].mxu0
      %v6146 = vadd.f32 0.0, %v6145
      %6147 = vmatprep.mubr.f32.mxu0 0.0
      %6148 = vmatmul.mubr.f32.gmra.mrb[0].mxu0 %v6069
      %v6149 = vpop.f32.mrb[0].mxu0
      %v6150 = vadd.f32 0.0, %v6149
      %v6151 = vpop.f32.mrb[0].mxu0
      %v6152 = vadd.f32 0.0, %v6151
      %6153 = vmatprep.mubr.f32.mxu0 0.0
      %6154 = vmatmul.mubr.f32.gmra.mrb[0].mxu0 %v6072
      %v6155 = vpop.f32.mrb[0].mxu0
      %v6156 = vadd.f32 0.0, %v6155
      %v6157 = vpop.f32.mrb[0].mxu0
      %v6158 = vadd.f32 0.0, %v6157
      %6159 = vmatprep.mubr.f32.mxu0 0.0
      %6160 = vmatmul.mubr.f32.gmra.mrb[0].mxu0 %v6075
      %v6161 = vpop.f32.mrb[0].mxu0
      %v6162 = vadd.f32 0.0, %v6161
      %v6163 = vpop.f32.mrb[0].mxu0
      %v6164 = vadd.f32 0.0, %v6163
      %6165 = vdwg.mxu0
      %6166 = vmatprep.subr.mxu0 0.0
      %6167 = vmatpush1.msra.mxu0 %v6048
      %6168 = vmatprep.subr.mxu0 0.0
      %6169 = vmatpush1.msra.mxu0 %v6054
      %6170 = vmatprep.subr.mxu0 0.0
      %6171 = vmatpush1.msra.mxu0 0.0
      %6172 = vmatprep.subr.mxu0 0.0
      %6173 = vmatpush1.msra.mxu0 0.0
      %6174 = vmatprep.subr.mxu0 0.0
      %6175 = vmatpush1.msra.mxu0 0.0
      %6176 = vmatprep.subr.mxu0 0.0
      %6177 = vmatpush1.msra.mxu0 0.0
      %6178 = vmatprep.subr.mxu0 0.0
      %6179 = vmatpush1.msra.mxu0 0.0
      %6180 = vmatprep.subr.mxu0 0.0
      %6181 = vmatpush1.msra.mxu0 0.0
      %6182 = vmatprep.subr.mxu0 0.0
      %6183 = vmatpush1.msra.mxu0 0.0
      %6184 = vmatprep.subr.mxu0 0.0
      %6185 = vmatpush1.msra.mxu0 0.0
      %6186 = vmatprep.subr.mxu0 0.0
      %6187 = vmatpush1.msra.mxu0 0.0
      %6188 = vmatprep.subr.mxu0 0.0
      %6189 = vmatpush1.msra.mxu0 0.0
      %6190 = vmatprep.subr.mxu0 0.0
      %6191 = vmatpush1.msra.mxu0 0.0
      %6192 = vmatprep.subr.mxu0 0.0
      %6193 = vmatpush1.msra.mxu0 0.0
      %6194 = vmatprep.subr.mxu0 0.0
      %6195 = vmatpush1.msra.mxu0 0.0
      %6196 = vmatprep.subr.mxu0 0.0
      %6197 = vmatpush1.msra.mxu0 0.0
      %6198 = vmatprep.subr.mxu0 0.0
      %6199 = vmatpush1.msra.mxu0 0.0
      %6200 = vmatprep.subr.mxu0 0.0
      %6201 = vmatpush1.msra.mxu0 0.0
      %6202 = vmatprep.subr.mxu0 0.0
      %6203 = vmatpush1.msra.mxu0 0.0
      %6204 = vmatprep.subr.mxu0 0.0
      %6205 = vmatpush1.msra.mxu0 0.0
      %6206 = vmatprep.subr.mxu0 0.0
      %6207 = vmatpush1.msra.mxu0 0.0
      %6208 = vmatprep.subr.mxu0 0.0
      %6209 = vmatpush1.msra.mxu0 0.0
      %6210 = vmatprep.subr.mxu0 0.0
      %6211 = vmatpush1.msra.mxu0 0.0
      %6212 = vmatprep.subr.mxu0 0.0
      %6213 = vmatpush1.msra.mxu0 0.0
      %6214 = vmatprep.subr.mxu0 0.0
      %6215 = vmatpush1.msra.mxu0 0.0
      %6216 = vmatprep.subr.mxu0 0.0
      %6217 = vmatpush1.msra.mxu0 0.0
      %6218 = vmatprep.subr.mxu0 0.0
      %6219 = vmatpush1.msra.mxu0 0.0
      %6220 = vmatprep.subr.mxu0 0.0
      %6221 = vmatpush1.msra.mxu0 0.0
      %6222 = vmatprep.subr.mxu0 0.0
      %6223 = vmatpush1.msra.mxu0 0.0
      %6224 = vmatprep.subr.mxu0 0.0
      %6225 = vmatpush1.msra.mxu0 0.0
      %6226 = vmatprep.subr.mxu0 0.0
      %6227 = vmatpush1.msra.mxu0 0.0
      %6228 = vmatprep.subr.mxu0 0.0
      %6229 = vmatpush1.msra.mxu0 0.0
      %6230 = vmatprep.mubr.f32.mxu0 0.0
      %6231 = vmatmul.mubr.f32.gmra.mrb[0].mxu0 %v6066
      %v6232 = vpop.f32.mrb[0].mxu0
      %v6233 = vadd.f32 0.0, %v6232
      %v6234 = vpop.f32.mrb[0].mxu0
      %6235 = vmatprep.mubr.f32.mxu0 0.0
      %6236 = vmatmul.mubr.f32.gmra.mrb[0].mxu0 %v6069
      %v6237 = vpop.f32.mrb[0].mxu0
      %v6238 = vadd.f32 0.0, %v6237
      %v6239 = vpop.f32.mrb[0].mxu0
      %6240 = vmatprep.mubr.f32.mxu0 0.0
      %6241 = vmatmul.mubr.f32.gmra.mrb[0].mxu0 %v6072
      %v6242 = vpop.f32.mrb[0].mxu0
      %v6243 = vadd.f32 0.0, %v6242
      %v6244 = vpop.f32.mrb[0].mxu0
      %6245 = vmatprep.mubr.f32.mxu0 0.0
      %6246 = vmatmul.mubr.f32.gmra.mrb[0].mxu0 %v6075
      %v6247 = vpop.f32.mrb[0].mxu0
      %v6248 = vadd.f32 0.0, %v6247
      %v6249 = vpop.f32.mrb[0].mxu0
      %6250 = vdwg.mxu0
      %v6251 = vadd.f32 %v6031, %v6144
      %v6252 = vadd.f32 %v6032, %v6146
      %v6253 = vadd.f32 %v6033, %v6233
      %v6254 = vadd.f32 %v6034, %v6150
      %v6255 = vadd.f32 %v6035, %v6152
      %v6256 = vadd.f32 %v6036, %v6238
      %v6257 = vadd.f32 %v6037, %v6156
      %v6258 = vadd.f32 %v6038, %v6158
      %v6259 = vadd.f32 %v6039, %v6243
      %v6260 = vadd.f32 %v6040, %v6162
      %v6261 = vadd.f32 %v6041, %v6164
      %v6262 = vadd.f32 %v6042, %v6248
      %6264 = vset.pattern.permute.xlu0 0
      %6265 = vperm.xlu0 %6264, %v4257
      %v6266 = vpop.permute.xlu0 %6265
      %6269 = vset.pattern.permute.xlu0 0
      %6270 = vperm.xlu0 %6269, %v4258
      %v6271 = vpop.permute.xlu0 %6270
      %6274 = vset.pattern.permute.xlu0 0
      %6275 = vperm.xlu0 %6274, %v4259
      %v6276 = vpop.permute.xlu0 %6275
      %6279 = vset.pattern.permute.xlu0 0
      %6280 = vperm.xlu0 %6279, %v4260
      %v6281 = vpop.permute.xlu0 %6280
      %v6283 = vadd.f32 %v6251, %v6266
      %v6284 = vadd.f32 %v6252, %v6266
      %v6285 = vadd.f32 %v6253, %v6266
      %v6286 = vadd.f32 %v6254, %v6271
      %v6287 = vadd.f32 %v6255, %v6271
      %v6288 = vadd.f32 %v6256, %v6271
      %v6289 = vadd.f32 %v6257, %v6276
      %v6290 = vadd.f32 %v6258, %v6276
      %v6291 = vadd.f32 %v6259, %v6276
      %v6292 = vadd.f32 %v6260, %v6281
      %v6293 = vadd.f32 %v6261, %v6281
      %v6294 = vadd.f32 %v6262, %v6281
      %v6295 = vmax.f32 %v6283, 0.0
      %v6296 = vmax.f32 %v6284, 0.0
      %v6297 = vmax.f32 %v6285, 0.0
      %v6298 = vmax.f32 %v6286, 0.0
      %v6299 = vmax.f32 %v6287, 0.0
      %v6300 = vmax.f32 %v6288, 0.0
      %v6301 = vmax.f32 %v6289, 0.0
      %v6302 = vmax.f32 %v6290, 0.0
      %v6303 = vmax.f32 %v6291, 0.0
      %v6304 = vmax.f32 %v6292, 0.0
      %v6305 = vmax.f32 %v6293, 0.0
      %v6306 = vmax.f32 %v6294, 0.0
      %v6307 = vmul.f32 %v6295, %v742
      %v6308 = vmul.f32 %v6296, %v746
      %v6309 = vmul.f32 %v6297, %v750
      %v6310 = vmul.f32 %v6298, %v742
      %v6311 = vmul.f32 %v6299, %v746
      %v6312 = vmul.f32 %v6300, %v750
      %v6313 = vmul.f32 %v6301, %v742
      %v6314 = vmul.f32 %v6302, %v746
      %v6315 = vmul.f32 %v6303, %v750
      %v6316 = vmul.f32 %v6304, %v742
      %v6317 = vmul.f32 %v6305, %v746
      %v6318 = vmul.f32 %v6306, %v750
      %6319 = vst [vmem:[#allocation3 + $0x8] sm:$0xff] %v6307
      %6320 = vst [vmem:[#allocation3 + $0x10] sm:$0xff] %v6308
      %6321 = vst.msk [vmem:[#allocation3 + $0x18] sm:$0xff] %vm527, %v6309
      %6322 = vst [vmem:[#allocation3 + $0x30] sm:$0xff] %v6310
      %6323 = vst [vmem:[#allocation3 + $0x38] sm:$0xff] %v6311
      %6324 = vst.msk [vmem:[#allocation3 + $0x40] sm:$0xff] %vm527, %v6312
      %6325 = vst [vmem:[#allocation3 + $0x58] sm:$0xff] %v6313
      %6326 = vst [vmem:[#allocation3 + $0x60] sm:$0xff] %v6314
      %6327 = vst.msk [vmem:[#allocation3 + $0x68] sm:$0xff] %vm527, %v6315
      %6328 = vst [vmem:[#allocation3 + $0x80] sm:$0xff] %v6316
      %6329 = vst [vmem:[#allocation3 + $0x88] sm:$0xff] %v6317
      %6330 = vst.msk [vmem:[#allocation3 + $0x90] sm:$0xff] %vm527, %v6318
      %v6331 = vld [vmem:[%s12] sm:$0xff]
      %v6332 = vld [vmem:[%s12 + $0x8] sm:$0xff]
      %v6333 = vld [vmem:[%s12 + $0x10] sm:$0xff]
      %v6334 = vld [vmem:[%s12 + $0x18] sm:$0xff]
      %v6335 = vld [vmem:[%s13] sm:$0xff]
      %v6336 = vld [vmem:[%s13 + $0x8] sm:$0xff]
      %v6337 = vld [vmem:[%s13 + $0x10] sm:$0xff]
      %v6338 = vld [vmem:[%s13 + $0x18] sm:$0xff]
      %6340 = vset.pattern.permute.xlu0 0
      %6341 = vperm.xlu0 %6340, %v6335
      %v6342 = vpop.permute.xlu0 %6341
      %6345 = vset.pattern.permute.xlu0 0
      %6346 = vperm.xlu0 %6345, %v6336
      %v6347 = vpop.permute.xlu0 %6346
      %6350 = vset.pattern.permute.xlu0 0
      %6351 = vperm.xlu0 %6350, %v6337
      %v6352 = vpop.permute.xlu0 %6351
      %6355 = vset.pattern.permute.xlu0 0
      %6356 = vperm.xlu0 %6355, %v6338
      %v6357 = vpop.permute.xlu0 %6356
      %v6360 = vsel %vm823, %v6331, 0
      %v6363 = vsel %vm823, %v6332, 0
      %v6366 = vsel %vm823, %v6333, 0
      %v6369 = vsel %vm823, %v6334, 0
      %6371 = vmatprep.subr.mxu0 %v4238
      %6372 = vmatpush1.msra.mxu0 %v4237
      %6373 = vmatprep.subr.mxu0 %v4241
      %6374 = vmatpush1.msra.mxu0 %v4240
      %6375 = vmatprep.subr.mxu0 0.0
      %6376 = vmatpush1.msra.mxu0 0.0
      %6377 = vmatprep.subr.mxu0 0.0
      %6378 = vmatpush1.msra.mxu0 0.0
      %6379 = vmatprep.subr.mxu0 0.0
      %6380 = vmatpush1.msra.mxu0 0.0
      %6381 = vmatprep.subr.mxu0 0.0
      %6382 = vmatpush1.msra.mxu0 0.0
      %6383 = vmatprep.subr.mxu0 0.0
      %6384 = vmatpush1.msra.mxu0 0.0
      %6385 = vmatprep.subr.mxu0 0.0
      %6386 = vmatpush1.msra.mxu0 0.0
      %6387 = vmatprep.subr.mxu0 0.0
      %6388 = vmatpush1.msra.mxu0 0.0
      %6389 = vmatprep.subr.mxu0 0.0
      %6390 = vmatpush1.msra.mxu0 0.0
      %6391 = vmatprep.subr.mxu0 0.0
      %6392 = vmatpush1.msra.mxu0 0.0
      %6393 = vmatprep.subr.mxu0 0.0
      %6394 = vmatpush1.msra.mxu0 0.0
      %6395 = vmatprep.subr.mxu0 0.0
      %6396 = vmatpush1.msra.mxu0 0.0
      %6397 = vmatprep.subr.mxu0 0.0
      %6398 = vmatpush1.msra.mxu0 0.0
      %6399 = vmatprep.subr.mxu0 0.0
      %6400 = vmatpush1.msra.mxu0 0.0
      %6401 = vmatprep.subr.mxu0 0.0
      %6402 = vmatpush1.msra.mxu0 0.0
      %6403 = vmatprep.subr.mxu0 0.0
      %6404 = vmatpush1.msra.mxu0 0.0
      %6405 = vmatprep.subr.mxu0 0.0
      %6406 = vmatpush1.msra.mxu0 0.0
      %6407 = vmatprep.subr.mxu0 0.0
      %6408 = vmatpush1.msra.mxu0 0.0
      %6409 = vmatprep.subr.mxu0 0.0
      %6410 = vmatpush1.msra.mxu0 0.0
      %6411 = vmatprep.subr.mxu0 0.0
      %6412 = vmatpush1.msra.mxu0 0.0
      %6413 = vmatprep.subr.mxu0 0.0
      %6414 = vmatpush1.msra.mxu0 0.0
      %6415 = vmatprep.subr.mxu0 0.0
      %6416 = vmatpush1.msra.mxu0 0.0
      %6417 = vmatprep.subr.mxu0 0.0
      %6418 = vmatpush1.msra.mxu0 0.0
      %6419 = vmatprep.subr.mxu0 0.0
      %6420 = vmatpush1.msra.mxu0 0.0
      %6421 = vmatprep.subr.mxu0 0.0
      %6422 = vmatpush1.msra.mxu0 0.0
      %6423 = vmatprep.subr.mxu0 0.0
      %6424 = vmatpush1.msra.mxu0 0.0
      %6425 = vmatprep.subr.mxu0 0.0
      %6426 = vmatpush1.msra.mxu0 0.0
      %6427 = vmatprep.subr.mxu0 0.0
      %6428 = vmatpush1.msra.mxu0 0.0
      %6429 = vmatprep.subr.mxu0 0.0
      %6430 = vmatpush1.msra.mxu0 0.0
      %6431 = vmatprep.subr.mxu0 0.0
      %6432 = vmatpush1.msra.mxu0 0.0
      %6433 = vmatprep.subr.mxu0 0.0
      %6434 = vmatpush1.msra.mxu0 0.0
      %6435 = vmatprep.mubr.f32.mxu0 0.0
      %6436 = vmatmul.mubr.f32.gmra.mrb[0].mxu0 %v6360
      %v6437 = vpop.f32.mrb[0].mxu0
      %v6438 = vadd.f32 %v6342, %v6437
      %v6439 = vpop.f32.mrb[0].mxu0
      %v6440 = vadd.f32 %v6342, %v6439
      %6441 = vmatprep.mubr.f32.mxu0 0.0
      %6442 = vmatmul.mubr.f32.gmra.mrb[0].mxu0 %v6363
      %v6443 = vpop.f32.mrb[0].mxu0
      %v6444 = vadd.f32 %v6347, %v6443
      %v6445 = vpop.f32.mrb[0].mxu0
      %v6446 = vadd.f32 %v6347, %v6445
      %6447 = vmatprep.mubr.f32.mxu0 0.0
      %6448 = vmatmul.mubr.f32.gmra.mrb[0].mxu0 %v6366
      %v6449 = vpop.f32.mrb[0].mxu0
      %v6450 = vadd.f32 %v6352, %v6449
      %v6451 = vpop.f32.mrb[0].mxu0
      %v6452 = vadd.f32 %v6352, %v6451
      %6453 = vmatprep.mubr.f32.mxu0 0.0
      %6454 = vmatmul.mubr.f32.gmra.mrb[0].mxu0 %v6369
      %v6455 = vpop.f32.mrb[0].mxu0
      %v6456 = vadd.f32 %v6357, %v6455
      %v6457 = vpop.f32.mrb[0].mxu0
      %v6458 = vadd.f32 %v6357, %v6457
      %6459 = vdwg.mxu0
      %6460 = vmatprep.subr.mxu0 0.0
      %6461 = vmatpush1.msra.mxu0 %v4239
      %6462 = vmatprep.subr.mxu0 0.0
      %6463 = vmatpush1.msra.mxu0 %v4242
      %6464 = vmatprep.subr.mxu0 0.0
      %6465 = vmatpush1.msra.mxu0 0.0
      %6466 = vmatprep.subr.mxu0 0.0
      %6467 = vmatpush1.msra.mxu0 0.0
      %6468 = vmatprep.subr.mxu0 0.0
      %6469 = vmatpush1.msra.mxu0 0.0
      %6470 = vmatprep.subr.mxu0 0.0
      %6471 = vmatpush1.msra.mxu0 0.0
      %6472 = vmatprep.subr.mxu0 0.0
      %6473 = vmatpush1.msra.mxu0 0.0
      %6474 = vmatprep.subr.mxu0 0.0
      %6475 = vmatpush1.msra.mxu0 0.0
      %6476 = vmatprep.subr.mxu0 0.0
      %6477 = vmatpush1.msra.mxu0 0.0
      %6478 = vmatprep.subr.mxu0 0.0
      %6479 = vmatpush1.msra.mxu0 0.0
      %6480 = vmatprep.subr.mxu0 0.0
      %6481 = vmatpush1.msra.mxu0 0.0
      %6482 = vmatprep.subr.mxu0 0.0
      %6483 = vmatpush1.msra.mxu0 0.0
      %6484 = vmatprep.subr.mxu0 0.0
      %6485 = vmatpush1.msra.mxu0 0.0
      %6486 = vmatprep.subr.mxu0 0.0
      %6487 = vmatpush1.msra.mxu0 0.0
      %6488 = vmatprep.subr.mxu0 0.0
      %6489 = vmatpush1.msra.mxu0 0.0
      %6490 = vmatprep.subr.mxu0 0.0
      %6491 = vmatpush1.msra.mxu0 0.0
      %6492 = vmatprep.subr.mxu0 0.0
      %6493 = vmatpush1.msra.mxu0 0.0
      %6494 = vmatprep.subr.mxu0 0.0
      %6495 = vmatpush1.msra.mxu0 0.0
      %6496 = vmatprep.subr.mxu0 0.0
      %6497 = vmatpush1.msra.mxu0 0.0
      %6498 = vmatprep.subr.mxu0 0.0
      %6499 = vmatpush1.msra.mxu0 0.0
      %6500 = vmatprep.subr.mxu0 0.0
      %6501 = vmatpush1.msra.mxu0 0.0
      %6502 = vmatprep.subr.mxu0 0.0
      %6503 = vmatpush1.msra.mxu0 0.0
      %6504 = vmatprep.subr.mxu0 0.0
      %6505 = vmatpush1.msra.mxu0 0.0
      %6506 = vmatprep.subr.mxu0 0.0
      %6507 = vmatpush1.msra.mxu0 0.0
      %6508 = vmatprep.subr.mxu0 0.0
      %6509 = vmatpush1.msra.mxu0 0.0
      %6510 = vmatprep.subr.mxu0 0.0
      %6511 = vmatpush1.msra.mxu0 0.0
      %6512 = vmatprep.subr.mxu0 0.0
      %6513 = vmatpush1.msra.mxu0 0.0
      %6514 = vmatprep.subr.mxu0 0.0
      %6515 = vmatpush1.msra.mxu0 0.0
      %6516 = vmatprep.subr.mxu0 0.0
      %6517 = vmatpush1.msra.mxu0 0.0
      %6518 = vmatprep.subr.mxu0 0.0
      %6519 = vmatpush1.msra.mxu0 0.0
      %6520 = vmatprep.subr.mxu0 0.0
      %6521 = vmatpush1.msra.mxu0 0.0
      %6522 = vmatprep.subr.mxu0 0.0
      %6523 = vmatpush1.msra.mxu0 0.0
      %6524 = vmatprep.mubr.f32.mxu0 0.0
      %6525 = vmatmul.mubr.f32.gmra.mrb[0].mxu0 %v6360
      %v6526 = vpop.f32.mrb[0].mxu0
      %v6527 = vadd.f32 %v6342, %v6526
      %v6528 = vpop.f32.mrb[0].mxu0
      %6529 = vmatprep.mubr.f32.mxu0 0.0
      %6530 = vmatmul.mubr.f32.gmra.mrb[0].mxu0 %v6363
      %v6531 = vpop.f32.mrb[0].mxu0
      %v6532 = vadd.f32 %v6347, %v6531
      %v6533 = vpop.f32.mrb[0].mxu0
      %6534 = vmatprep.mubr.f32.mxu0 0.0
      %6535 = vmatmul.mubr.f32.gmra.mrb[0].mxu0 %v6366
      %v6536 = vpop.f32.mrb[0].mxu0
      %v6537 = vadd.f32 %v6352, %v6536
      %v6538 = vpop.f32.mrb[0].mxu0
      %6539 = vmatprep.mubr.f32.mxu0 0.0
      %6540 = vmatmul.mubr.f32.gmra.mrb[0].mxu0 %v6369
      %v6541 = vpop.f32.mrb[0].mxu0
      %v6542 = vadd.f32 %v6357, %v6541
      %v6543 = vpop.f32.mrb[0].mxu0
      %6544 = vdwg.mxu0
      %v6545 = vld [vmem:[%s10] sm:$0xff]
      %v6546 = vld [vmem:[%s10 + $0x8] sm:$0xff]
      %v6547 = vld [vmem:[%s10 + $0x10] sm:$0xff]
      %v6548 = vld [vmem:[%s10 + $0x18] sm:$0xff]
      %v6549 = vld [vmem:[%s10 + $0x20] sm:$0xff]
      %v6550 = vld [vmem:[%s10 + $0x28] sm:$0xff]
      %v6551 = vld [vmem:[%s10 + $0x30] sm:$0xff]
      %v6552 = vld [vmem:[%s10 + $0x38] sm:$0xff]
      %v6553 = vld [vmem:[%s10 + $0x40] sm:$0xff]
      %v6554 = vld [vmem:[%s10 + $0x48] sm:$0xff]
      %v6555 = vld [vmem:[%s10 + $0x50] sm:$0xff]
      %v6556 = vld [vmem:[%s10 + $0x58] sm:$0xff]
      %v6557 = vld [vmem:[%s11] sm:$0xff]
      %v6558 = vld [vmem:[%s11 + $0x8] sm:$0xff]
      %v6559 = vld [vmem:[%s11 + $0x10] sm:$0xff]
      %v6560 = vld [vmem:[%s11 + $0x18] sm:$0xff]
      %v6561 = vld [vmem:[#allocation3] sm:$0xff]
      %v6562 = vld [vmem:[#allocation3 + $0x8] sm:$0xff]
      %v6563 = vld [vmem:[#allocation3 + $0x10] sm:$0xff]
      %v6564 = vld [vmem:[#allocation3 + $0x18] sm:$0xff]
      %v6565 = vld [vmem:[#allocation3 + $0x28] sm:$0xff]
      %v6566 = vld [vmem:[#allocation3 + $0x30] sm:$0xff]
      %v6567 = vld [vmem:[#allocation3 + $0x38] sm:$0xff]
      %v6568 = vld [vmem:[#allocation3 + $0x40] sm:$0xff]
      %v6569 = vld [vmem:[#allocation3 + $0x50] sm:$0xff]
      %v6570 = vld [vmem:[#allocation3 + $0x58] sm:$0xff]
      %v6571 = vld [vmem:[#allocation3 + $0x60] sm:$0xff]
      %v6572 = vld [vmem:[#allocation3 + $0x68] sm:$0xff]
      %v6573 = vld [vmem:[#allocation3 + $0x78] sm:$0xff]
      %v6574 = vld [vmem:[#allocation3 + $0x80] sm:$0xff]
      %v6575 = vld [vmem:[#allocation3 + $0x88] sm:$0xff]
      %v6576 = vld [vmem:[#allocation3 + $0x90] sm:$0xff]
      %6581 = vrot.lane.b32.xlu0 %v6545, 96
      %v6582 = vpop.permute.xlu0 %6581
      %6583 = vrot.lane.b32.xlu0 %v6548, 96
      %v6584 = vpop.permute.xlu0 %6583
      %6585 = vrot.lane.b32.xlu0 %v6551, 96
      %v6586 = vpop.permute.xlu0 %6585
      %6587 = vrot.lane.b32.xlu0 %v6554, 96
      %v6588 = vpop.permute.xlu0 %6587
      %6605 = vrot.lane.b32.xlu0 %v6561, 36
      %v6606 = vpop.permute.xlu0 %6605
      %6607 = vrot.lane.b32.xlu0 %v6562, 36
      %v6608 = vpop.permute.xlu0 %6607
      %6609 = vrot.lane.b32.xlu0 %v6563, 36
      %v6610 = vpop.permute.xlu0 %6609
      %6611 = vrot.lane.b32.xlu0 %v6564, 36
      %v6612 = vpop.permute.xlu0 %6611
      %6613 = vrot.lane.b32.xlu0 %v6565, 36
      %v6614 = vpop.permute.xlu0 %6613
      %6615 = vrot.lane.b32.xlu0 %v6566, 36
      %v6616 = vpop.permute.xlu0 %6615
      %6617 = vrot.lane.b32.xlu0 %v6567, 36
      %v6618 = vpop.permute.xlu0 %6617
      %6619 = vrot.lane.b32.xlu0 %v6568, 36
      %v6620 = vpop.permute.xlu0 %6619
      %6621 = vrot.lane.b32.xlu0 %v6569, 36
      %v6622 = vpop.permute.xlu0 %6621
      %6623 = vrot.lane.b32.xlu0 %v6570, 36
      %v6624 = vpop.permute.xlu0 %6623
      %6625 = vrot.lane.b32.xlu0 %v6571, 36
      %v6626 = vpop.permute.xlu0 %6625
      %6627 = vrot.lane.b32.xlu0 %v6572, 36
      %v6628 = vpop.permute.xlu0 %6627
      %6629 = vrot.lane.b32.xlu0 %v6573, 36
      %v6630 = vpop.permute.xlu0 %6629
      %6631 = vrot.lane.b32.xlu0 %v6574, 36
      %v6632 = vpop.permute.xlu0 %6631
      %6633 = vrot.lane.b32.xlu0 %v6575, 36
      %v6634 = vpop.permute.xlu0 %6633
      %6635 = vrot.lane.b32.xlu0 %v6576, 36
      %v6636 = vpop.permute.xlu0 %6635
      %vm6637 = vcmask 293888
      %v6638 = vsel %vm6637, %v6606, %v6608
      %v6639 = vsel %vm6637, %v6608, %v6610
      %v6640 = vsel %vm6637, %v6610, %v6612
      %v6641 = vsel %vm6637, %v6614, %v6616
      %v6642 = vsel %vm6637, %v6616, %v6618
      %v6643 = vsel %vm6637, %v6618, %v6620
      %v6644 = vsel %vm6637, %v6622, %v6624
      %v6645 = vsel %vm6637, %v6624, %v6626
      %v6646 = vsel %vm6637, %v6626, %v6628
      %v6647 = vsel %vm6637, %v6630, %v6632
      %v6648 = vsel %vm6637, %v6632, %v6634
      %v6649 = vsel %vm6637, %v6634, %v6636
      %vm6662 = vcmask 261120
      %v6663 = vsel %vm6662, %v6582, 0
      %v6665 = vsel %vm6662, %v6584, 0
      %v6667 = vsel %vm6662, %v6586, 0
      %v6669 = vsel %vm6662, %v6588, 0
      %6671 = vmatprep.subr.mxu0 %v6639
      %6672 = vmatpush1.msra.mxu0 %v6638
      %6673 = vmatprep.subr.mxu0 %v6642
      %6674 = vmatpush1.msra.mxu0 %v6641
      %6675 = vmatprep.subr.mxu0 %v6645
      %6676 = vmatpush1.msra.mxu0 %v6644
      %6677 = vmatprep.subr.mxu0 %v6648
      %6678 = vmatpush1.msra.mxu0 %v6647
      %6679 = vmatprep.subr.mxu0 0.0
      %6680 = vmatpush1.msra.mxu0 0.0
      %6681 = vmatprep.subr.mxu0 0.0
      %6682 = vmatpush1.msra.mxu0 0.0
      %6683 = vmatprep.subr.mxu0 0.0
      %6684 = vmatpush1.msra.mxu0 0.0
      %6685 = vmatprep.subr.mxu0 0.0
      %6686 = vmatpush1.msra.mxu0 0.0
      %6687 = vmatprep.subr.mxu0 0.0
      %6688 = vmatpush1.msra.mxu0 0.0
      %6689 = vmatprep.subr.mxu0 0.0
      %6690 = vmatpush1.msra.mxu0 0.0
      %6691 = vmatprep.subr.mxu0 0.0
      %6692 = vmatpush1.msra.mxu0 0.0
      %6693 = vmatprep.subr.mxu0 0.0
      %6694 = vmatpush1.msra.mxu0 0.0
      %6695 = vmatprep.subr.mxu0 0.0
      %6696 = vmatpush1.msra.mxu0 0.0
      %6697 = vmatprep.subr.mxu0 0.0
      %6698 = vmatpush1.msra.mxu0 0.0
      %6699 = vmatprep.subr.mxu0 0.0
      %6700 = vmatpush1.msra.mxu0 0.0
      %6701 = vmatprep.subr.mxu0 0.0
      %6702 = vmatpush1.msra.mxu0 0.0
      %6703 = vmatprep.subr.mxu0 0.0
      %6704 = vmatpush1.msra.mxu0 0.0
      %6705 = vmatprep.subr.mxu0 0.0
      %6706 = vmatpush1.msra.mxu0 0.0
      %6707 = vmatprep.subr.mxu0 0.0
      %6708 = vmatpush1.msra.mxu0 0.0
      %6709 = vmatprep.subr.mxu0 0.0
      %6710 = vmatpush1.msra.mxu0 0.0
      %6711 = vmatprep.subr.mxu0 0.0
      %6712 = vmatpush1.msra.mxu0 0.0
      %6713 = vmatprep.subr.mxu0 0.0
      %6714 = vmatpush1.msra.mxu0 0.0
      %6715 = vmatprep.subr.mxu0 0.0
      %6716 = vmatpush1.msra.mxu0 0.0
      %6717 = vmatprep.subr.mxu0 0.0
      %6718 = vmatpush1.msra.mxu0 0.0
      %6719 = vmatprep.subr.mxu0 0.0
      %6720 = vmatpush1.msra.mxu0 0.0
      %6721 = vmatprep.subr.mxu0 0.0
      %6722 = vmatpush1.msra.mxu0 0.0
      %6723 = vmatprep.subr.mxu0 0.0
      %6724 = vmatpush1.msra.mxu0 0.0
      %6725 = vmatprep.subr.mxu0 0.0
      %6726 = vmatpush1.msra.mxu0 0.0
      %6727 = vmatprep.subr.mxu0 0.0
      %6728 = vmatpush1.msra.mxu0 0.0
      %6729 = vmatprep.subr.mxu0 0.0
      %6730 = vmatpush1.msra.mxu0 0.0
      %6731 = vmatprep.subr.mxu0 0.0
      %6732 = vmatpush1.msra.mxu0 0.0
      %6733 = vmatprep.subr.mxu0 0.0
      %6734 = vmatpush1.msra.mxu0 0.0
      %6735 = vmatprep.mubr.f32.mxu0 0.0
      %6736 = vmatmul.mubr.f32.gmra.mrb[0].mxu0 %v6663
      %v6737 = vpop.f32.mrb[0].mxu0
      %v6738 = vadd.f32 0.0, %v6737
      %v6739 = vpop.f32.mrb[0].mxu0
      %v6740 = vadd.f32 0.0, %v6739
      %6741 = vmatprep.mubr.f32.mxu0 0.0
      %6742 = vmatmul.mubr.f32.gmra.mrb[0].mxu0 %v6665
      %v6743 = vpop.f32.mrb[0].mxu0
      %v6744 = vadd.f32 0.0, %v6743
      %v6745 = vpop.f32.mrb[0].mxu0
      %v6746 = vadd.f32 0.0, %v6745
      %6747 = vmatprep.mubr.f32.mxu0 0.0
      %6748 = vmatmul.mubr.f32.gmra.mrb[0].mxu0 %v6667
      %v6749 = vpop.f32.mrb[0].mxu0
      %v6750 = vadd.f32 0.0, %v6749
      %v6751 = vpop.f32.mrb[0].mxu0
      %v6752 = vadd.f32 0.0, %v6751
      %6753 = vmatprep.mubr.f32.mxu0 0.0
      %6754 = vmatmul.mubr.f32.gmra.mrb[0].mxu0 %v6669
      %v6755 = vpop.f32.mrb[0].mxu0
      %v6756 = vadd.f32 0.0, %v6755
      %v6757 = vpop.f32.mrb[0].mxu0
      %v6758 = vadd.f32 0.0, %v6757
      %6759 = vdwg.mxu0
      %6760 = vmatprep.subr.mxu0 0.0
      %6761 = vmatpush1.msra.mxu0 %v6640
      %6762 = vmatprep.subr.mxu0 0.0
      %6763 = vmatpush1.msra.mxu0 %v6643
      %6764 = vmatprep.subr.mxu0 0.0
      %6765 = vmatpush1.msra.mxu0 %v6646
      %6766 = vmatprep.subr.mxu0 0.0
      %6767 = vmatpush1.msra.mxu0 %v6649
      %6768 = vmatprep.subr.mxu0 0.0
      %6769 = vmatpush1.msra.mxu0 0.0
      %6770 = vmatprep.subr.mxu0 0.0
      %6771 = vmatpush1.msra.mxu0 0.0
      %6772 = vmatprep.subr.mxu0 0.0
      %6773 = vmatpush1.msra.mxu0 0.0
      %6774 = vmatprep.subr.mxu0 0.0
      %6775 = vmatpush1.msra.mxu0 0.0
      %6776 = vmatprep.subr.mxu0 0.0
      %6777 = vmatpush1.msra.mxu0 0.0
      %6778 = vmatprep.subr.mxu0 0.0
      %6779 = vmatpush1.msra.mxu0 0.0
      %6780 = vmatprep.subr.mxu0 0.0
      %6781 = vmatpush1.msra.mxu0 0.0
      %6782 = vmatprep.subr.mxu0 0.0
      %6783 = vmatpush1.msra.mxu0 0.0
      %6784 = vmatprep.subr.mxu0 0.0
      %6785 = vmatpush1.msra.mxu0 0.0
      %6786 = vmatprep.subr.mxu0 0.0
      %6787 = vmatpush1.msra.mxu0 0.0
      %6788 = vmatprep.subr.mxu0 0.0
      %6789 = vmatpush1.msra.mxu0 0.0
      %6790 = vmatprep.subr.mxu0 0.0
      %6791 = vmatpush1.msra.mxu0 0.0
      %6792 = vmatprep.subr.mxu0 0.0
      %6793 = vmatpush1.msra.mxu0 0.0
      %6794 = vmatprep.subr.mxu0 0.0
      %6795 = vmatpush1.msra.mxu0 0.0
      %6796 = vmatprep.subr.mxu0 0.0
      %6797 = vmatpush1.msra.mxu0 0.0
      %6798 = vmatprep.subr.mxu0 0.0
      %6799 = vmatpush1.msra.mxu0 0.0
      %6800 = vmatprep.subr.mxu0 0.0
      %6801 = vmatpush1.msra.mxu0 0.0
      %6802 = vmatprep.subr.mxu0 0.0
      %6803 = vmatpush1.msra.mxu0 0.0
      %6804 = vmatprep.subr.mxu0 0.0
      %6805 = vmatpush1.msra.mxu0 0.0
      %6806 = vmatprep.subr.mxu0 0.0
      %6807 = vmatpush1.msra.mxu0 0.0
      %6808 = vmatprep.subr.mxu0 0.0
      %6809 = vmatpush1.msra.mxu0 0.0
      %6810 = vmatprep.subr.mxu0 0.0
      %6811 = vmatpush1.msra.mxu0 0.0
      %6812 = vmatprep.subr.mxu0 0.0
      %6813 = vmatpush1.msra.mxu0 0.0
      %6814 = vmatprep.subr.mxu0 0.0
      %6815 = vmatpush1.msra.mxu0 0.0
      %6816 = vmatprep.subr.mxu0 0.0
      %6817 = vmatpush1.msra.mxu0 0.0
      %6818 = vmatprep.subr.mxu0 0.0
      %6819 = vmatpush1.msra.mxu0 0.0
      %6820 = vmatprep.subr.mxu0 0.0
      %6821 = vmatpush1.msra.mxu0 0.0
      %6822 = vmatprep.subr.mxu0 0.0
      %6823 = vmatpush1.msra.mxu0 0.0
      %6824 = vmatprep.mubr.f32.mxu0 0.0
      %6825 = vmatmul.mubr.f32.gmra.mrb[0].mxu0 %v6663
      %v6826 = vpop.f32.mrb[0].mxu0
      %v6827 = vadd.f32 0.0, %v6826
      %v6828 = vpop.f32.mrb[0].mxu0
      %6829 = vmatprep.mubr.f32.mxu0 0.0
      %6830 = vmatmul.mubr.f32.gmra.mrb[0].mxu0 %v6665
      %v6831 = vpop.f32.mrb[0].mxu0
      %v6832 = vadd.f32 0.0, %v6831
      %v6833 = vpop.f32.mrb[0].mxu0
      %6834 = vmatprep.mubr.f32.mxu0 0.0
      %6835 = vmatmul.mubr.f32.gmra.mrb[0].mxu0 %v6667
      %v6836 = vpop.f32.mrb[0].mxu0
      %v6837 = vadd.f32 0.0, %v6836
      %v6838 = vpop.f32.mrb[0].mxu0
      %6839 = vmatprep.mubr.f32.mxu0 0.0
      %6840 = vmatmul.mubr.f32.gmra.mrb[0].mxu0 %v6669
      %v6841 = vpop.f32.mrb[0].mxu0
      %v6842 = vadd.f32 0.0, %v6841
      %v6843 = vpop.f32.mrb[0].mxu0
      %6844 = vdwg.mxu0
      %6845 = vrot.lane.b32.xlu0 %v6561, 38
      %v6846 = vpop.permute.xlu0 %6845
      %6847 = vrot.lane.b32.xlu0 %v6562, 38
      %v6848 = vpop.permute.xlu0 %6847
      %6849 = vrot.lane.b32.xlu0 %v6563, 38
      %v6850 = vpop.permute.xlu0 %6849
      %6851 = vrot.lane.b32.xlu0 %v6564, 38
      %v6852 = vpop.permute.xlu0 %6851
      %6853 = vrot.lane.b32.xlu0 %v6565, 38
      %v6854 = vpop.permute.xlu0 %6853
      %6855 = vrot.lane.b32.xlu0 %v6566, 38
      %v6856 = vpop.permute.xlu0 %6855
      %6857 = vrot.lane.b32.xlu0 %v6567, 38
      %v6858 = vpop.permute.xlu0 %6857
      %6859 = vrot.lane.b32.xlu0 %v6568, 38
      %v6860 = vpop.permute.xlu0 %6859
      %6861 = vrot.lane.b32.xlu0 %v6569, 38
      %v6862 = vpop.permute.xlu0 %6861
      %6863 = vrot.lane.b32.xlu0 %v6570, 38
      %v6864 = vpop.permute.xlu0 %6863
      %6865 = vrot.lane.b32.xlu0 %v6571, 38
      %v6866 = vpop.permute.xlu0 %6865
      %6867 = vrot.lane.b32.xlu0 %v6572, 38
      %v6868 = vpop.permute.xlu0 %6867
      %6869 = vrot.lane.b32.xlu0 %v6573, 38
      %v6870 = vpop.permute.xlu0 %6869
      %6871 = vrot.lane.b32.xlu0 %v6574, 38
      %v6872 = vpop.permute.xlu0 %6871
      %6873 = vrot.lane.b32.xlu0 %v6575, 38
      %v6874 = vpop.permute.xlu0 %6873
      %6875 = vrot.lane.b32.xlu0 %v6576, 38
      %v6876 = vpop.permute.xlu0 %6875
      %vm6877 = vcmask 310272
      %v6878 = vsel %vm6877, %v6846, %v6848
      %v6879 = vsel %vm6877, %v6848, %v6850
      %v6880 = vsel %vm6877, %v6850, %v6852
      %v6881 = vsel %vm6877, %v6854, %v6856
      %v6882 = vsel %vm6877, %v6856, %v6858
      %v6883 = vsel %vm6877, %v6858, %v6860
      %v6884 = vsel %vm6877, %v6862, %v6864
      %v6885 = vsel %vm6877, %v6864, %v6866
      %v6886 = vsel %vm6877, %v6866, %v6868
      %v6887 = vsel %vm6877, %v6870, %v6872
      %v6888 = vsel %vm6877, %v6872, %v6874
      %v6889 = vsel %vm6877, %v6874, %v6876
      %v6902 = vsel %vm6662, %v6545, 0
      %v6904 = vsel %vm6662, %v6548, 0
      %v6906 = vsel %vm6662, %v6551, 0
      %v6908 = vsel %vm6662, %v6554, 0
      %6910 = vmatprep.subr.mxu0 %v6879
      %6911 = vmatpush1.msra.mxu0 %v6878
      %6912 = vmatprep.subr.mxu0 %v6882
      %6913 = vmatpush1.msra.mxu0 %v6881
      %6914 = vmatprep.subr.mxu0 %v6885
      %6915 = vmatpush1.msra.mxu0 %v6884
      %6916 = vmatprep.subr.mxu0 %v6888
      %6917 = vmatpush1.msra.mxu0 %v6887
      %6918 = vmatprep.subr.mxu0 0.0
      %6919 = vmatpush1.msra.mxu0 0.0
      %6920 = vmatprep.subr.mxu0 0.0
      %6921 = vmatpush1.msra.mxu0 0.0
      %6922 = vmatprep.subr.mxu0 0.0
      %6923 = vmatpush1.msra.mxu0 0.0
      %6924 = vmatprep.subr.mxu0 0.0
      %6925 = vmatpush1.msra.mxu0 0.0
      %6926 = vmatprep.subr.mxu0 0.0
      %6927 = vmatpush1.msra.mxu0 0.0
      %6928 = vmatprep.subr.mxu0 0.0
      %6929 = vmatpush1.msra.mxu0 0.0
      %6930 = vmatprep.subr.mxu0 0.0
      %6931 = vmatpush1.msra.mxu0 0.0
      %6932 = vmatprep.subr.mxu0 0.0
      %6933 = vmatpush1.msra.mxu0 0.0
      %6934 = vmatprep.subr.mxu0 0.0
      %6935 = vmatpush1.msra.mxu0 0.0
      %6936 = vmatprep.subr.mxu0 0.0
      %6937 = vmatpush1.msra.mxu0 0.0
      %6938 = vmatprep.subr.mxu0 0.0
      %6939 = vmatpush1.msra.mxu0 0.0
      %6940 = vmatprep.subr.mxu0 0.0
      %6941 = vmatpush1.msra.mxu0 0.0
      %6942 = vmatprep.subr.mxu0 0.0
      %6943 = vmatpush1.msra.mxu0 0.0
      %6944 = vmatprep.subr.mxu0 0.0
      %6945 = vmatpush1.msra.mxu0 0.0
      %6946 = vmatprep.subr.mxu0 0.0
      %6947 = vmatpush1.msra.mxu0 0.0
      %6948 = vmatprep.subr.mxu0 0.0
      %6949 = vmatpush1.msra.mxu0 0.0
      %6950 = vmatprep.subr.mxu0 0.0
      %6951 = vmatpush1.msra.mxu0 0.0
      %6952 = vmatprep.subr.mxu0 0.0
      %6953 = vmatpush1.msra.mxu0 0.0
      %6954 = vmatprep.subr.mxu0 0.0
      %6955 = vmatpush1.msra.mxu0 0.0
      %6956 = vmatprep.subr.mxu0 0.0
      %6957 = vmatpush1.msra.mxu0 0.0
      %6958 = vmatprep.subr.mxu0 0.0
      %6959 = vmatpush1.msra.mxu0 0.0
      %6960 = vmatprep.subr.mxu0 0.0
      %6961 = vmatpush1.msra.mxu0 0.0
      %6962 = vmatprep.subr.mxu0 0.0
      %6963 = vmatpush1.msra.mxu0 0.0
      %6964 = vmatprep.subr.mxu0 0.0
      %6965 = vmatpush1.msra.mxu0 0.0
      %6966 = vmatprep.subr.mxu0 0.0
      %6967 = vmatpush1.msra.mxu0 0.0
      %6968 = vmatprep.subr.mxu0 0.0
      %6969 = vmatpush1.msra.mxu0 0.0
      %6970 = vmatprep.subr.mxu0 0.0
      %6971 = vmatpush1.msra.mxu0 0.0
      %6972 = vmatprep.subr.mxu0 0.0
      %6973 = vmatpush1.msra.mxu0 0.0
      %6974 = vmatprep.mubr.f32.mxu0 0.0
      %6975 = vmatmul.mubr.f32.gmra.mrb[0].mxu0 %v6902
      %v6976 = vpop.f32.mrb[0].mxu0
      %v6977 = vadd.f32 %v6738, %v6976
      %v6978 = vpop.f32.mrb[0].mxu0
      %v6979 = vadd.f32 %v6740, %v6978
      %6980 = vmatprep.mubr.f32.mxu0 0.0
      %6981 = vmatmul.mubr.f32.gmra.mrb[0].mxu0 %v6904
      %v6982 = vpop.f32.mrb[0].mxu0
      %v6983 = vadd.f32 %v6744, %v6982
      %v6984 = vpop.f32.mrb[0].mxu0
      %v6985 = vadd.f32 %v6746, %v6984
      %6986 = vmatprep.mubr.f32.mxu0 0.0
      %6987 = vmatmul.mubr.f32.gmra.mrb[0].mxu0 %v6906
      %v6988 = vpop.f32.mrb[0].mxu0
      %v6989 = vadd.f32 %v6750, %v6988
      %v6990 = vpop.f32.mrb[0].mxu0
      %v6991 = vadd.f32 %v6752, %v6990
      %6992 = vmatprep.mubr.f32.mxu0 0.0
      %6993 = vmatmul.mubr.f32.gmra.mrb[0].mxu0 %v6908
      %v6994 = vpop.f32.mrb[0].mxu0
      %v6995 = vadd.f32 %v6756, %v6994
      %v6996 = vpop.f32.mrb[0].mxu0
      %v6997 = vadd.f32 %v6758, %v6996
      %6998 = vdwg.mxu0
      %6999 = vmatprep.subr.mxu0 0.0
      %7000 = vmatpush1.msra.mxu0 %v6880
      %7001 = vmatprep.subr.mxu0 0.0
      %7002 = vmatpush1.msra.mxu0 %v6883
      %7003 = vmatprep.subr.mxu0 0.0
      %7004 = vmatpush1.msra.mxu0 %v6886
      %7005 = vmatprep.subr.mxu0 0.0
      %7006 = vmatpush1.msra.mxu0 %v6889
      %7007 = vmatprep.subr.mxu0 0.0
      %7008 = vmatpush1.msra.mxu0 0.0
      %7009 = vmatprep.subr.mxu0 0.0
      %7010 = vmatpush1.msra.mxu0 0.0
      %7011 = vmatprep.subr.mxu0 0.0
      %7012 = vmatpush1.msra.mxu0 0.0
      %7013 = vmatprep.subr.mxu0 0.0
      %7014 = vmatpush1.msra.mxu0 0.0
      %7015 = vmatprep.subr.mxu0 0.0
      %7016 = vmatpush1.msra.mxu0 0.0
      %7017 = vmatprep.subr.mxu0 0.0
      %7018 = vmatpush1.msra.mxu0 0.0
      %7019 = vmatprep.subr.mxu0 0.0
      %7020 = vmatpush1.msra.mxu0 0.0
      %7021 = vmatprep.subr.mxu0 0.0
      %7022 = vmatpush1.msra.mxu0 0.0
      %7023 = vmatprep.subr.mxu0 0.0
      %7024 = vmatpush1.msra.mxu0 0.0
      %7025 = vmatprep.subr.mxu0 0.0
      %7026 = vmatpush1.msra.mxu0 0.0
      %7027 = vmatprep.subr.mxu0 0.0
      %7028 = vmatpush1.msra.mxu0 0.0
      %7029 = vmatprep.subr.mxu0 0.0
      %7030 = vmatpush1.msra.mxu0 0.0
      %7031 = vmatprep.subr.mxu0 0.0
      %7032 = vmatpush1.msra.mxu0 0.0
      %7033 = vmatprep.subr.mxu0 0.0
      %7034 = vmatpush1.msra.mxu0 0.0
      %7035 = vmatprep.subr.mxu0 0.0
      %7036 = vmatpush1.msra.mxu0 0.0
      %7037 = vmatprep.subr.mxu0 0.0
      %7038 = vmatpush1.msra.mxu0 0.0
      %7039 = vmatprep.subr.mxu0 0.0
      %7040 = vmatpush1.msra.mxu0 0.0
      %7041 = vmatprep.subr.mxu0 0.0
      %7042 = vmatpush1.msra.mxu0 0.0
      %7043 = vmatprep.subr.mxu0 0.0
      %7044 = vmatpush1.msra.mxu0 0.0
      %7045 = vmatprep.subr.mxu0 0.0
      %7046 = vmatpush1.msra.mxu0 0.0
      %7047 = vmatprep.subr.mxu0 0.0
      %7048 = vmatpush1.msra.mxu0 0.0
      %7049 = vmatprep.subr.mxu0 0.0
      %7050 = vmatpush1.msra.mxu0 0.0
      %7051 = vmatprep.subr.mxu0 0.0
      %7052 = vmatpush1.msra.mxu0 0.0
      %7053 = vmatprep.subr.mxu0 0.0
      %7054 = vmatpush1.msra.mxu0 0.0
      %7055 = vmatprep.subr.mxu0 0.0
      %7056 = vmatpush1.msra.mxu0 0.0
      %7057 = vmatprep.subr.mxu0 0.0
      %7058 = vmatpush1.msra.mxu0 0.0
      %7059 = vmatprep.subr.mxu0 0.0
      %7060 = vmatpush1.msra.mxu0 0.0
      %7061 = vmatprep.subr.mxu0 0.0
      %7062 = vmatpush1.msra.mxu0 0.0
      %7063 = vmatprep.mubr.f32.mxu0 0.0
      %7064 = vmatmul.mubr.f32.gmra.mrb[0].mxu0 %v6902
      %v7065 = vpop.f32.mrb[0].mxu0
      %v7066 = vadd.f32 %v6827, %v7065
      %v7067 = vpop.f32.mrb[0].mxu0
      %7068 = vmatprep.mubr.f32.mxu0 0.0
      %7069 = vmatmul.mubr.f32.gmra.mrb[0].mxu0 %v6904
      %v7070 = vpop.f32.mrb[0].mxu0
      %v7071 = vadd.f32 %v6832, %v7070
      %v7072 = vpop.f32.mrb[0].mxu0
      %7073 = vmatprep.mubr.f32.mxu0 0.0
      %7074 = vmatmul.mubr.f32.gmra.mrb[0].mxu0 %v6906
      %v7075 = vpop.f32.mrb[0].mxu0
      %v7076 = vadd.f32 %v6837, %v7075
      %v7077 = vpop.f32.mrb[0].mxu0
      %7078 = vmatprep.mubr.f32.mxu0 0.0
      %7079 = vmatmul.mubr.f32.gmra.mrb[0].mxu0 %v6908
      %v7080 = vpop.f32.mrb[0].mxu0
      %v7081 = vadd.f32 %v6842, %v7080
      %v7082 = vpop.f32.mrb[0].mxu0
      %7083 = vdwg.mxu0
      %7084 = vrot.lane.b32.xlu0 %v6545, 64
      %v7085 = vpop.permute.xlu0 %7084
      %7086 = vrot.lane.b32.xlu0 %v6548, 64
      %v7087 = vpop.permute.xlu0 %7086
      %7088 = vrot.lane.b32.xlu0 %v6551, 64
      %v7089 = vpop.permute.xlu0 %7088
      %7090 = vrot.lane.b32.xlu0 %v6554, 64
      %v7091 = vpop.permute.xlu0 %7090
      %7092 = vrot.lane.b32.xlu0 %v6561, 34
      %v7093 = vpop.permute.xlu0 %7092
      %7094 = vrot.lane.b32.xlu0 %v6562, 34
      %v7095 = vpop.permute.xlu0 %7094
      %7096 = vrot.lane.b32.xlu0 %v6563, 34
      %v7097 = vpop.permute.xlu0 %7096
      %7098 = vrot.lane.b32.xlu0 %v6564, 34
      %v7099 = vpop.permute.xlu0 %7098
      %7100 = vrot.lane.b32.xlu0 %v6565, 34
      %v7101 = vpop.permute.xlu0 %7100
      %7102 = vrot.lane.b32.xlu0 %v6566, 34
      %v7103 = vpop.permute.xlu0 %7102
      %7104 = vrot.lane.b32.xlu0 %v6567, 34
      %v7105 = vpop.permute.xlu0 %7104
      %7106 = vrot.lane.b32.xlu0 %v6568, 34
      %v7107 = vpop.permute.xlu0 %7106
      %7108 = vrot.lane.b32.xlu0 %v6569, 34
      %v7109 = vpop.permute.xlu0 %7108
      %7110 = vrot.lane.b32.xlu0 %v6570, 34
      %v7111 = vpop.permute.xlu0 %7110
      %7112 = vrot.lane.b32.xlu0 %v6571, 34
      %v7113 = vpop.permute.xlu0 %7112
      %7114 = vrot.lane.b32.xlu0 %v6572, 34
      %v7115 = vpop.permute.xlu0 %7114
      %7116 = vrot.lane.b32.xlu0 %v6573, 34
      %v7117 = vpop.permute.xlu0 %7116
      %7118 = vrot.lane.b32.xlu0 %v6574, 34
      %v7119 = vpop.permute.xlu0 %7118
      %7120 = vrot.lane.b32.xlu0 %v6575, 34
      %v7121 = vpop.permute.xlu0 %7120
      %7122 = vrot.lane.b32.xlu0 %v6576, 34
      %v7123 = vpop.permute.xlu0 %7122
      %vm7124 = vcmask 277504
      %v7125 = vsel %vm7124, %v7093, %v7095
      %v7126 = vsel %vm7124, %v7095, %v7097
      %v7127 = vsel %vm7124, %v7097, %v7099
      %v7128 = vsel %vm7124, %v7101, %v7103
      %v7129 = vsel %vm7124, %v7103, %v7105
      %v7130 = vsel %vm7124, %v7105, %v7107
      %v7131 = vsel %vm7124, %v7109, %v7111
      %v7132 = vsel %vm7124, %v7111, %v7113
      %v7133 = vsel %vm7124, %v7113, %v7115
      %v7134 = vsel %vm7124, %v7117, %v7119
      %v7135 = vsel %vm7124, %v7119, %v7121
      %v7136 = vsel %vm7124, %v7121, %v7123
      %v7149 = vsel %vm6662, %v7085, 0
      %v7151 = vsel %vm6662, %v7087, 0
      %v7153 = vsel %vm6662, %v7089, 0
      %v7155 = vsel %vm6662, %v7091, 0
      %7157 = vmatprep.subr.mxu0 %v7126
      %7158 = vmatpush1.msra.mxu0 %v7125
      %7159 = vmatprep.subr.mxu0 %v7129
      %7160 = vmatpush1.msra.mxu0 %v7128
      %7161 = vmatprep.subr.mxu0 %v7132
      %7162 = vmatpush1.msra.mxu0 %v7131
      %7163 = vmatprep.subr.mxu0 %v7135
      %7164 = vmatpush1.msra.mxu0 %v7134
      %7165 = vmatprep.subr.mxu0 0.0
      %7166 = vmatpush1.msra.mxu0 0.0
      %7167 = vmatprep.subr.mxu0 0.0
      %7168 = vmatpush1.msra.mxu0 0.0
      %7169 = vmatprep.subr.mxu0 0.0
      %7170 = vmatpush1.msra.mxu0 0.0
      %7171 = vmatprep.subr.mxu0 0.0
      %7172 = vmatpush1.msra.mxu0 0.0
      %7173 = vmatprep.subr.mxu0 0.0
      %7174 = vmatpush1.msra.mxu0 0.0
      %7175 = vmatprep.subr.mxu0 0.0
      %7176 = vmatpush1.msra.mxu0 0.0
      %7177 = vmatprep.subr.mxu0 0.0
      %7178 = vmatpush1.msra.mxu0 0.0
      %7179 = vmatprep.subr.mxu0 0.0
      %7180 = vmatpush1.msra.mxu0 0.0
      %7181 = vmatprep.subr.mxu0 0.0
      %7182 = vmatpush1.msra.mxu0 0.0
      %7183 = vmatprep.subr.mxu0 0.0
      %7184 = vmatpush1.msra.mxu0 0.0
      %7185 = vmatprep.subr.mxu0 0.0
      %7186 = vmatpush1.msra.mxu0 0.0
      %7187 = vmatprep.subr.mxu0 0.0
      %7188 = vmatpush1.msra.mxu0 0.0
      %7189 = vmatprep.subr.mxu0 0.0
      %7190 = vmatpush1.msra.mxu0 0.0
      %7191 = vmatprep.subr.mxu0 0.0
      %7192 = vmatpush1.msra.mxu0 0.0
      %7193 = vmatprep.subr.mxu0 0.0
      %7194 = vmatpush1.msra.mxu0 0.0
      %7195 = vmatprep.subr.mxu0 0.0
      %7196 = vmatpush1.msra.mxu0 0.0
      %7197 = vmatprep.subr.mxu0 0.0
      %7198 = vmatpush1.msra.mxu0 0.0
      %7199 = vmatprep.subr.mxu0 0.0
      %7200 = vmatpush1.msra.mxu0 0.0
      %7201 = vmatprep.subr.mxu0 0.0
      %7202 = vmatpush1.msra.mxu0 0.0
      %7203 = vmatprep.subr.mxu0 0.0
      %7204 = vmatpush1.msra.mxu0 0.0
      %7205 = vmatprep.subr.mxu0 0.0
      %7206 = vmatpush1.msra.mxu0 0.0
      %7207 = vmatprep.subr.mxu0 0.0
      %7208 = vmatpush1.msra.mxu0 0.0
      %7209 = vmatprep.subr.mxu0 0.0
      %7210 = vmatpush1.msra.mxu0 0.0
      %7211 = vmatprep.subr.mxu0 0.0
      %7212 = vmatpush1.msra.mxu0 0.0
      %7213 = vmatprep.subr.mxu0 0.0
      %7214 = vmatpush1.msra.mxu0 0.0
      %7215 = vmatprep.subr.mxu0 0.0
      %7216 = vmatpush1.msra.mxu0 0.0
      %7217 = vmatprep.subr.mxu0 0.0
      %7218 = vmatpush1.msra.mxu0 0.0
      %7219 = vmatprep.subr.mxu0 0.0
      %7220 = vmatpush1.msra.mxu0 0.0
      %7221 = vmatprep.mubr.f32.mxu0 0.0
      %7222 = vmatmul.mubr.f32.gmra.mrb[0].mxu0 %v7149
      %v7223 = vpop.f32.mrb[0].mxu0
      %v7224 = vadd.f32 0.0, %v7223
      %v7225 = vpop.f32.mrb[0].mxu0
      %v7226 = vadd.f32 0.0, %v7225
      %7227 = vmatprep.mubr.f32.mxu0 0.0
      %7228 = vmatmul.mubr.f32.gmra.mrb[0].mxu0 %v7151
      %v7229 = vpop.f32.mrb[0].mxu0
      %v7230 = vadd.f32 0.0, %v7229
      %v7231 = vpop.f32.mrb[0].mxu0
      %v7232 = vadd.f32 0.0, %v7231
      %7233 = vmatprep.mubr.f32.mxu0 0.0
      %7234 = vmatmul.mubr.f32.gmra.mrb[0].mxu0 %v7153
      %v7235 = vpop.f32.mrb[0].mxu0
      %v7236 = vadd.f32 0.0, %v7235
      %v7237 = vpop.f32.mrb[0].mxu0
      %v7238 = vadd.f32 0.0, %v7237
      %7239 = vmatprep.mubr.f32.mxu0 0.0
      %7240 = vmatmul.mubr.f32.gmra.mrb[0].mxu0 %v7155
      %v7241 = vpop.f32.mrb[0].mxu0
      %v7242 = vadd.f32 0.0, %v7241
      %v7243 = vpop.f32.mrb[0].mxu0
      %v7244 = vadd.f32 0.0, %v7243
      %7245 = vdwg.mxu0
      %7246 = vmatprep.subr.mxu0 0.0
      %7247 = vmatpush1.msra.mxu0 %v7127
      %7248 = vmatprep.subr.mxu0 0.0
      %7249 = vmatpush1.msra.mxu0 %v7130
      %7250 = vmatprep.subr.mxu0 0.0
      %7251 = vmatpush1.msra.mxu0 %v7133
      %7252 = vmatprep.subr.mxu0 0.0
      %7253 = vmatpush1.msra.mxu0 %v7136
      %7254 = vmatprep.subr.mxu0 0.0
      %7255 = vmatpush1.msra.mxu0 0.0
      %7256 = vmatprep.subr.mxu0 0.0
      %7257 = vmatpush1.msra.mxu0 0.0
      %7258 = vmatprep.subr.mxu0 0.0
      %7259 = vmatpush1.msra.mxu0 0.0
      %7260 = vmatprep.subr.mxu0 0.0
      %7261 = vmatpush1.msra.mxu0 0.0
      %7262 = vmatprep.subr.mxu0 0.0
      %7263 = vmatpush1.msra.mxu0 0.0
      %7264 = vmatprep.subr.mxu0 0.0
      %7265 = vmatpush1.msra.mxu0 0.0
      %7266 = vmatprep.subr.mxu0 0.0
      %7267 = vmatpush1.msra.mxu0 0.0
      %7268 = vmatprep.subr.mxu0 0.0
      %7269 = vmatpush1.msra.mxu0 0.0
      %7270 = vmatprep.subr.mxu0 0.0
      %7271 = vmatpush1.msra.mxu0 0.0
      %7272 = vmatprep.subr.mxu0 0.0
      %7273 = vmatpush1.msra.mxu0 0.0
      %7274 = vmatprep.subr.mxu0 0.0
      %7275 = vmatpush1.msra.mxu0 0.0
      %7276 = vmatprep.subr.mxu0 0.0
      %7277 = vmatpush1.msra.mxu0 0.0
      %7278 = vmatprep.subr.mxu0 0.0
      %7279 = vmatpush1.msra.mxu0 0.0
      %7280 = vmatprep.subr.mxu0 0.0
      %7281 = vmatpush1.msra.mxu0 0.0
      %7282 = vmatprep.subr.mxu0 0.0
      %7283 = vmatpush1.msra.mxu0 0.0
      %7284 = vmatprep.subr.mxu0 0.0
      %7285 = vmatpush1.msra.mxu0 0.0
      %7286 = vmatprep.subr.mxu0 0.0
      %7287 = vmatpush1.msra.mxu0 0.0
      %7288 = vmatprep.subr.mxu0 0.0
      %7289 = vmatpush1.msra.mxu0 0.0
      %7290 = vmatprep.subr.mxu0 0.0
      %7291 = vmatpush1.msra.mxu0 0.0
      %7292 = vmatprep.subr.mxu0 0.0
      %7293 = vmatpush1.msra.mxu0 0.0
      %7294 = vmatprep.subr.mxu0 0.0
      %7295 = vmatpush1.msra.mxu0 0.0
      %7296 = vmatprep.subr.mxu0 0.0
      %7297 = vmatpush1.msra.mxu0 0.0
      %7298 = vmatprep.subr.mxu0 0.0
      %7299 = vmatpush1.msra.mxu0 0.0
      %7300 = vmatprep.subr.mxu0 0.0
      %7301 = vmatpush1.msra.mxu0 0.0
      %7302 = vmatprep.subr.mxu0 0.0
      %7303 = vmatpush1.msra.mxu0 0.0
      %7304 = vmatprep.subr.mxu0 0.0
      %7305 = vmatpush1.msra.mxu0 0.0
      %7306 = vmatprep.subr.mxu0 0.0
      %7307 = vmatpush1.msra.mxu0 0.0
      %7308 = vmatprep.subr.mxu0 0.0
      %7309 = vmatpush1.msra.mxu0 0.0
      %7310 = vmatprep.mubr.f32.mxu0 0.0
      %7311 = vmatmul.mubr.f32.gmra.mrb[0].mxu0 %v7149
      %v7312 = vpop.f32.mrb[0].mxu0
      %v7313 = vadd.f32 0.0, %v7312
      %v7314 = vpop.f32.mrb[0].mxu0
      %7315 = vmatprep.mubr.f32.mxu0 0.0
      %7316 = vmatmul.mubr.f32.gmra.mrb[0].mxu0 %v7151
      %v7317 = vpop.f32.mrb[0].mxu0
      %v7318 = vadd.f32 0.0, %v7317
      %v7319 = vpop.f32.mrb[0].mxu0
      %7320 = vmatprep.mubr.f32.mxu0 0.0
      %7321 = vmatmul.mubr.f32.gmra.mrb[0].mxu0 %v7153
      %v7322 = vpop.f32.mrb[0].mxu0
      %v7323 = vadd.f32 0.0, %v7322
      %v7324 = vpop.f32.mrb[0].mxu0
      %7325 = vmatprep.mubr.f32.mxu0 0.0
      %7326 = vmatmul.mubr.f32.gmra.mrb[0].mxu0 %v7155
      %v7327 = vpop.f32.mrb[0].mxu0
      %v7328 = vadd.f32 0.0, %v7327
      %v7329 = vpop.f32.mrb[0].mxu0
      %7330 = vdwg.mxu0
      %v7331 = vadd.f32 %v6977, %v7224
      %v7332 = vadd.f32 %v6979, %v7226
      %v7333 = vadd.f32 %v7066, %v7313
      %v7334 = vadd.f32 %v6983, %v7230
      %v7335 = vadd.f32 %v6985, %v7232
      %v7336 = vadd.f32 %v7071, %v7318
      %v7337 = vadd.f32 %v6989, %v7236
      %v7338 = vadd.f32 %v6991, %v7238
      %v7339 = vadd.f32 %v7076, %v7323
      %v7340 = vadd.f32 %v6995, %v7242
      %v7341 = vadd.f32 %v6997, %v7244
      %v7342 = vadd.f32 %v7081, %v7328
      %7343 = vrot.lane.b32.xlu0 %v6545, 32
      %v7344 = vpop.permute.xlu0 %7343
      %7345 = vrot.lane.b32.xlu0 %v6548, 32
      %v7346 = vpop.permute.xlu0 %7345
      %7347 = vrot.lane.b32.xlu0 %v6551, 32
      %v7348 = vpop.permute.xlu0 %7347
      %7349 = vrot.lane.b32.xlu0 %v6554, 32
      %v7350 = vpop.permute.xlu0 %7349
      %7351 = vrot.lane.b32.xlu0 %v6561, 2
      %v7352 = vpop.permute.xlu0 %7351
      %7353 = vrot.lane.b32.xlu0 %v6562, 2
      %v7354 = vpop.permute.xlu0 %7353
      %7355 = vrot.lane.b32.xlu0 %v6563, 2
      %v7356 = vpop.permute.xlu0 %7355
      %7357 = vrot.lane.b32.xlu0 %v6564, 2
      %v7358 = vpop.permute.xlu0 %7357
      %7359 = vrot.lane.b32.xlu0 %v6565, 2
      %v7360 = vpop.permute.xlu0 %7359
      %7361 = vrot.lane.b32.xlu0 %v6566, 2
      %v7362 = vpop.permute.xlu0 %7361
      %7363 = vrot.lane.b32.xlu0 %v6567, 2
      %v7364 = vpop.permute.xlu0 %7363
      %7365 = vrot.lane.b32.xlu0 %v6568, 2
      %v7366 = vpop.permute.xlu0 %7365
      %7367 = vrot.lane.b32.xlu0 %v6569, 2
      %v7368 = vpop.permute.xlu0 %7367
      %7369 = vrot.lane.b32.xlu0 %v6570, 2
      %v7370 = vpop.permute.xlu0 %7369
      %7371 = vrot.lane.b32.xlu0 %v6571, 2
      %v7372 = vpop.permute.xlu0 %7371
      %7373 = vrot.lane.b32.xlu0 %v6572, 2
      %v7374 = vpop.permute.xlu0 %7373
      %7375 = vrot.lane.b32.xlu0 %v6573, 2
      %v7376 = vpop.permute.xlu0 %7375
      %7377 = vrot.lane.b32.xlu0 %v6574, 2
      %v7378 = vpop.permute.xlu0 %7377
      %7379 = vrot.lane.b32.xlu0 %v6575, 2
      %v7380 = vpop.permute.xlu0 %7379
      %7381 = vrot.lane.b32.xlu0 %v6576, 2
      %v7382 = vpop.permute.xlu0 %7381
      %vm7383 = vcmask 15360
      %v7384 = vsel %vm7383, %v7352, %v7354
      %v7385 = vsel %vm7383, %v7354, %v7356
      %v7386 = vsel %vm7383, %v7356, %v7358
      %v7387 = vsel %vm7383, %v7360, %v7362
      %v7388 = vsel %vm7383, %v7362, %v7364
      %v7389 = vsel %vm7383, %v7364, %v7366
      %v7390 = vsel %vm7383, %v7368, %v7370
      %v7391 = vsel %vm7383, %v7370, %v7372
      %v7392 = vsel %vm7383, %v7372, %v7374
      %v7393 = vsel %vm7383, %v7376, %v7378
      %v7394 = vsel %vm7383, %v7378, %v7380
      %v7395 = vsel %vm7383, %v7380, %v7382
      %v7408 = vsel %vm6662, %v7344, 0
      %v7410 = vsel %vm6662, %v7346, 0
      %v7412 = vsel %vm6662, %v7348, 0
      %v7414 = vsel %vm6662, %v7350, 0
      %7416 = vmatprep.subr.mxu0 %v7385
      %7417 = vmatpush1.msra.mxu0 %v7384
      %7418 = vmatprep.subr.mxu0 %v7388
      %7419 = vmatpush1.msra.mxu0 %v7387
      %7420 = vmatprep.subr.mxu0 %v7391
      %7421 = vmatpush1.msra.mxu0 %v7390
      %7422 = vmatprep.subr.mxu0 %v7394
      %7423 = vmatpush1.msra.mxu0 %v7393
      %7424 = vmatprep.subr.mxu0 0.0
      %7425 = vmatpush1.msra.mxu0 0.0
      %7426 = vmatprep.subr.mxu0 0.0
      %7427 = vmatpush1.msra.mxu0 0.0
      %7428 = vmatprep.subr.mxu0 0.0
      %7429 = vmatpush1.msra.mxu0 0.0
      %7430 = vmatprep.subr.mxu0 0.0
      %7431 = vmatpush1.msra.mxu0 0.0
      %7432 = vmatprep.subr.mxu0 0.0
      %7433 = vmatpush1.msra.mxu0 0.0
      %7434 = vmatprep.subr.mxu0 0.0
      %7435 = vmatpush1.msra.mxu0 0.0
      %7436 = vmatprep.subr.mxu0 0.0
      %7437 = vmatpush1.msra.mxu0 0.0
      %7438 = vmatprep.subr.mxu0 0.0
      %7439 = vmatpush1.msra.mxu0 0.0
      %7440 = vmatprep.subr.mxu0 0.0
      %7441 = vmatpush1.msra.mxu0 0.0
      %7442 = vmatprep.subr.mxu0 0.0
      %7443 = vmatpush1.msra.mxu0 0.0
      %7444 = vmatprep.subr.mxu0 0.0
      %7445 = vmatpush1.msra.mxu0 0.0
      %7446 = vmatprep.subr.mxu0 0.0
      %7447 = vmatpush1.msra.mxu0 0.0
      %7448 = vmatprep.subr.mxu0 0.0
      %7449 = vmatpush1.msra.mxu0 0.0
      %7450 = vmatprep.subr.mxu0 0.0
      %7451 = vmatpush1.msra.mxu0 0.0
      %7452 = vmatprep.subr.mxu0 0.0
      %7453 = vmatpush1.msra.mxu0 0.0
      %7454 = vmatprep.subr.mxu0 0.0
      %7455 = vmatpush1.msra.mxu0 0.0
      %7456 = vmatprep.subr.mxu0 0.0
      %7457 = vmatpush1.msra.mxu0 0.0
      %7458 = vmatprep.subr.mxu0 0.0
      %7459 = vmatpush1.msra.mxu0 0.0
      %7460 = vmatprep.subr.mxu0 0.0
      %7461 = vmatpush1.msra.mxu0 0.0
      %7462 = vmatprep.subr.mxu0 0.0
      %7463 = vmatpush1.msra.mxu0 0.0
      %7464 = vmatprep.subr.mxu0 0.0
      %7465 = vmatpush1.msra.mxu0 0.0
      %7466 = vmatprep.subr.mxu0 0.0
      %7467 = vmatpush1.msra.mxu0 0.0
      %7468 = vmatprep.subr.mxu0 0.0
      %7469 = vmatpush1.msra.mxu0 0.0
      %7470 = vmatprep.subr.mxu0 0.0
      %7471 = vmatpush1.msra.mxu0 0.0
      %7472 = vmatprep.subr.mxu0 0.0
      %7473 = vmatpush1.msra.mxu0 0.0
      %7474 = vmatprep.subr.mxu0 0.0
      %7475 = vmatpush1.msra.mxu0 0.0
      %7476 = vmatprep.subr.mxu0 0.0
      %7477 = vmatpush1.msra.mxu0 0.0
      %7478 = vmatprep.subr.mxu0 0.0
      %7479 = vmatpush1.msra.mxu0 0.0
      %7480 = vmatprep.mubr.f32.mxu0 0.0
      %7481 = vmatmul.mubr.f32.gmra.mrb[0].mxu0 %v7408
      %v7482 = vpop.f32.mrb[0].mxu0
      %v7483 = vadd.f32 0.0, %v7482
      %v7484 = vpop.f32.mrb[0].mxu0
      %v7485 = vadd.f32 0.0, %v7484
      %7486 = vmatprep.mubr.f32.mxu0 0.0
      %7487 = vmatmul.mubr.f32.gmra.mrb[0].mxu0 %v7410
      %v7488 = vpop.f32.mrb[0].mxu0
      %v7489 = vadd.f32 0.0, %v7488
      %v7490 = vpop.f32.mrb[0].mxu0
      %v7491 = vadd.f32 0.0, %v7490
      %7492 = vmatprep.mubr.f32.mxu0 0.0
      %7493 = vmatmul.mubr.f32.gmra.mrb[0].mxu0 %v7412
      %v7494 = vpop.f32.mrb[0].mxu0
      %v7495 = vadd.f32 0.0, %v7494
      %v7496 = vpop.f32.mrb[0].mxu0
      %v7497 = vadd.f32 0.0, %v7496
      %7498 = vmatprep.mubr.f32.mxu0 0.0
      %7499 = vmatmul.mubr.f32.gmra.mrb[0].mxu0 %v7414
      %v7500 = vpop.f32.mrb[0].mxu0
      %v7501 = vadd.f32 0.0, %v7500
      %v7502 = vpop.f32.mrb[0].mxu0
      %v7503 = vadd.f32 0.0, %v7502
      %7504 = vdwg.mxu0
      %7505 = vmatprep.subr.mxu0 0.0
      %7506 = vmatpush1.msra.mxu0 %v7386
      %7507 = vmatprep.subr.mxu0 0.0
      %7508 = vmatpush1.msra.mxu0 %v7389
      %7509 = vmatprep.subr.mxu0 0.0
      %7510 = vmatpush1.msra.mxu0 %v7392
      %7511 = vmatprep.subr.mxu0 0.0
      %7512 = vmatpush1.msra.mxu0 %v7395
      %7513 = vmatprep.subr.mxu0 0.0
      %7514 = vmatpush1.msra.mxu0 0.0
      %7515 = vmatprep.subr.mxu0 0.0
      %7516 = vmatpush1.msra.mxu0 0.0
      %7517 = vmatprep.subr.mxu0 0.0
      %7518 = vmatpush1.msra.mxu0 0.0
      %7519 = vmatprep.subr.mxu0 0.0
      %7520 = vmatpush1.msra.mxu0 0.0
      %7521 = vmatprep.subr.mxu0 0.0
      %7522 = vmatpush1.msra.mxu0 0.0
      %7523 = vmatprep.subr.mxu0 0.0
      %7524 = vmatpush1.msra.mxu0 0.0
      %7525 = vmatprep.subr.mxu0 0.0
      %7526 = vmatpush1.msra.mxu0 0.0
      %7527 = vmatprep.subr.mxu0 0.0
      %7528 = vmatpush1.msra.mxu0 0.0
      %7529 = vmatprep.subr.mxu0 0.0
      %7530 = vmatpush1.msra.mxu0 0.0
      %7531 = vmatprep.subr.mxu0 0.0
      %7532 = vmatpush1.msra.mxu0 0.0
      %7533 = vmatprep.subr.mxu0 0.0
      %7534 = vmatpush1.msra.mxu0 0.0
      %7535 = vmatprep.subr.mxu0 0.0
      %7536 = vmatpush1.msra.mxu0 0.0
      %7537 = vmatprep.subr.mxu0 0.0
      %7538 = vmatpush1.msra.mxu0 0.0
      %7539 = vmatprep.subr.mxu0 0.0
      %7540 = vmatpush1.msra.mxu0 0.0
      %7541 = vmatprep.subr.mxu0 0.0
      %7542 = vmatpush1.msra.mxu0 0.0
      %7543 = vmatprep.subr.mxu0 0.0
      %7544 = vmatpush1.msra.mxu0 0.0
      %7545 = vmatprep.subr.mxu0 0.0
      %7546 = vmatpush1.msra.mxu0 0.0
      %7547 = vmatprep.subr.mxu0 0.0
      %7548 = vmatpush1.msra.mxu0 0.0
      %7549 = vmatprep.subr.mxu0 0.0
      %7550 = vmatpush1.msra.mxu0 0.0
      %7551 = vmatprep.subr.mxu0 0.0
      %7552 = vmatpush1.msra.mxu0 0.0
      %7553 = vmatprep.subr.mxu0 0.0
      %7554 = vmatpush1.msra.mxu0 0.0
      %7555 = vmatprep.subr.mxu0 0.0
      %7556 = vmatpush1.msra.mxu0 0.0
      %7557 = vmatprep.subr.mxu0 0.0
      %7558 = vmatpush1.msra.mxu0 0.0
      %7559 = vmatprep.subr.mxu0 0.0
      %7560 = vmatpush1.msra.mxu0 0.0
      %7561 = vmatprep.subr.mxu0 0.0
      %7562 = vmatpush1.msra.mxu0 0.0
      %7563 = vmatprep.subr.mxu0 0.0
      %7564 = vmatpush1.msra.mxu0 0.0
      %7565 = vmatprep.subr.mxu0 0.0
      %7566 = vmatpush1.msra.mxu0 0.0
      %7567 = vmatprep.subr.mxu0 0.0
      %7568 = vmatpush1.msra.mxu0 0.0
      %7569 = vmatprep.mubr.f32.mxu0 0.0
      %7570 = vmatmul.mubr.f32.gmra.mrb[0].mxu0 %v7408
      %v7571 = vpop.f32.mrb[0].mxu0
      %v7572 = vadd.f32 0.0, %v7571
      %v7573 = vpop.f32.mrb[0].mxu0
      %7574 = vmatprep.mubr.f32.mxu0 0.0
      %7575 = vmatmul.mubr.f32.gmra.mrb[0].mxu0 %v7410
      %v7576 = vpop.f32.mrb[0].mxu0
      %v7577 = vadd.f32 0.0, %v7576
      %v7578 = vpop.f32.mrb[0].mxu0
      %7579 = vmatprep.mubr.f32.mxu0 0.0
      %7580 = vmatmul.mubr.f32.gmra.mrb[0].mxu0 %v7412
      %v7581 = vpop.f32.mrb[0].mxu0
      %v7582 = vadd.f32 0.0, %v7581
      %v7583 = vpop.f32.mrb[0].mxu0
      %7584 = vmatprep.mubr.f32.mxu0 0.0
      %7585 = vmatmul.mubr.f32.gmra.mrb[0].mxu0 %v7414
      %v7586 = vpop.f32.mrb[0].mxu0
      %v7587 = vadd.f32 0.0, %v7586
      %v7588 = vpop.f32.mrb[0].mxu0
      %7589 = vdwg.mxu0
      %v7590 = vadd.f32 %v7331, %v7483
      %v7591 = vadd.f32 %v7332, %v7485
      %v7592 = vadd.f32 %v7333, %v7572
      %v7593 = vadd.f32 %v7334, %v7489
      %v7594 = vadd.f32 %v7335, %v7491
      %v7595 = vadd.f32 %v7336, %v7577
      %v7596 = vadd.f32 %v7337, %v7495
      %v7597 = vadd.f32 %v7338, %v7497
      %v7598 = vadd.f32 %v7339, %v7582
      %v7599 = vadd.f32 %v7340, %v7501
      %v7600 = vadd.f32 %v7341, %v7503
      %v7601 = vadd.f32 %v7342, %v7587
      %v7603 = vsel %vm6662, %v6546, 0
      %v7606 = vsel %vm6662, %v6549, 0
      %v7609 = vsel %vm6662, %v6552, 0
      %v7612 = vsel %vm6662, %v6555, 0
      %7614 = vmatprep.subr.mxu0 %v6563
      %7615 = vmatpush1.msra.mxu0 %v6562
      %7616 = vmatprep.subr.mxu0 %v6567
      %7617 = vmatpush1.msra.mxu0 %v6566
      %7618 = vmatprep.subr.mxu0 %v6571
      %7619 = vmatpush1.msra.mxu0 %v6570
      %7620 = vmatprep.subr.mxu0 %v6575
      %7621 = vmatpush1.msra.mxu0 %v6574
      %7622 = vmatprep.subr.mxu0 0.0
      %7623 = vmatpush1.msra.mxu0 0.0
      %7624 = vmatprep.subr.mxu0 0.0
      %7625 = vmatpush1.msra.mxu0 0.0
      %7626 = vmatprep.subr.mxu0 0.0
      %7627 = vmatpush1.msra.mxu0 0.0
      %7628 = vmatprep.subr.mxu0 0.0
      %7629 = vmatpush1.msra.mxu0 0.0
      %7630 = vmatprep.subr.mxu0 0.0
      %7631 = vmatpush1.msra.mxu0 0.0
      %7632 = vmatprep.subr.mxu0 0.0
      %7633 = vmatpush1.msra.mxu0 0.0
      %7634 = vmatprep.subr.mxu0 0.0
      %7635 = vmatpush1.msra.mxu0 0.0
      %7636 = vmatprep.subr.mxu0 0.0
      %7637 = vmatpush1.msra.mxu0 0.0
      %7638 = vmatprep.subr.mxu0 0.0
      %7639 = vmatpush1.msra.mxu0 0.0
      %7640 = vmatprep.subr.mxu0 0.0
      %7641 = vmatpush1.msra.mxu0 0.0
      %7642 = vmatprep.subr.mxu0 0.0
      %7643 = vmatpush1.msra.mxu0 0.0
      %7644 = vmatprep.subr.mxu0 0.0
      %7645 = vmatpush1.msra.mxu0 0.0
      %7646 = vmatprep.subr.mxu0 0.0
      %7647 = vmatpush1.msra.mxu0 0.0
      %7648 = vmatprep.subr.mxu0 0.0
      %7649 = vmatpush1.msra.mxu0 0.0
      %7650 = vmatprep.subr.mxu0 0.0
      %7651 = vmatpush1.msra.mxu0 0.0
      %7652 = vmatprep.subr.mxu0 0.0
      %7653 = vmatpush1.msra.mxu0 0.0
      %7654 = vmatprep.subr.mxu0 0.0
      %7655 = vmatpush1.msra.mxu0 0.0
      %7656 = vmatprep.subr.mxu0 0.0
      %7657 = vmatpush1.msra.mxu0 0.0
      %7658 = vmatprep.subr.mxu0 0.0
      %7659 = vmatpush1.msra.mxu0 0.0
      %7660 = vmatprep.subr.mxu0 0.0
      %7661 = vmatpush1.msra.mxu0 0.0
      %7662 = vmatprep.subr.mxu0 0.0
      %7663 = vmatpush1.msra.mxu0 0.0
      %7664 = vmatprep.subr.mxu0 0.0
      %7665 = vmatpush1.msra.mxu0 0.0
      %7666 = vmatprep.subr.mxu0 0.0
      %7667 = vmatpush1.msra.mxu0 0.0
      %7668 = vmatprep.subr.mxu0 0.0
      %7669 = vmatpush1.msra.mxu0 0.0
      %7670 = vmatprep.subr.mxu0 0.0
      %7671 = vmatpush1.msra.mxu0 0.0
      %7672 = vmatprep.subr.mxu0 0.0
      %7673 = vmatpush1.msra.mxu0 0.0
      %7674 = vmatprep.subr.mxu0 0.0
      %7675 = vmatpush1.msra.mxu0 0.0
      %7676 = vmatprep.subr.mxu0 0.0
      %7677 = vmatpush1.msra.mxu0 0.0
      %7678 = vmatprep.mubr.f32.mxu0 0.0
      %7679 = vmatmul.mubr.f32.gmra.mrb[0].mxu0 %v7603
      %v7680 = vpop.f32.mrb[0].mxu0
      %v7681 = vadd.f32 0.0, %v7680
      %v7682 = vpop.f32.mrb[0].mxu0
      %v7683 = vadd.f32 0.0, %v7682
      %7684 = vmatprep.mubr.f32.mxu0 0.0
      %7685 = vmatmul.mubr.f32.gmra.mrb[0].mxu0 %v7606
      %v7686 = vpop.f32.mrb[0].mxu0
      %v7687 = vadd.f32 0.0, %v7686
      %v7688 = vpop.f32.mrb[0].mxu0
      %v7689 = vadd.f32 0.0, %v7688
      %7690 = vmatprep.mubr.f32.mxu0 0.0
      %7691 = vmatmul.mubr.f32.gmra.mrb[0].mxu0 %v7609
      %v7692 = vpop.f32.mrb[0].mxu0
      %v7693 = vadd.f32 0.0, %v7692
      %v7694 = vpop.f32.mrb[0].mxu0
      %v7695 = vadd.f32 0.0, %v7694
      %7696 = vmatprep.mubr.f32.mxu0 0.0
      %7697 = vmatmul.mubr.f32.gmra.mrb[0].mxu0 %v7612
      %v7698 = vpop.f32.mrb[0].mxu0
      %v7699 = vadd.f32 0.0, %v7698
      %v7700 = vpop.f32.mrb[0].mxu0
      %v7701 = vadd.f32 0.0, %v7700
      %7702 = vdwg.mxu0
      %7703 = vmatprep.subr.mxu0 0.0
      %7704 = vmatpush1.msra.mxu0 %v6564
      %7705 = vmatprep.subr.mxu0 0.0
      %7706 = vmatpush1.msra.mxu0 %v6568
      %7707 = vmatprep.subr.mxu0 0.0
      %7708 = vmatpush1.msra.mxu0 %v6572
      %7709 = vmatprep.subr.mxu0 0.0
      %7710 = vmatpush1.msra.mxu0 %v6576
      %7711 = vmatprep.subr.mxu0 0.0
      %7712 = vmatpush1.msra.mxu0 0.0
      %7713 = vmatprep.subr.mxu0 0.0
      %7714 = vmatpush1.msra.mxu0 0.0
      %7715 = vmatprep.subr.mxu0 0.0
      %7716 = vmatpush1.msra.mxu0 0.0
      %7717 = vmatprep.subr.mxu0 0.0
      %7718 = vmatpush1.msra.mxu0 0.0
      %7719 = vmatprep.subr.mxu0 0.0
      %7720 = vmatpush1.msra.mxu0 0.0
      %7721 = vmatprep.subr.mxu0 0.0
      %7722 = vmatpush1.msra.mxu0 0.0
      %7723 = vmatprep.subr.mxu0 0.0
      %7724 = vmatpush1.msra.mxu0 0.0
      %7725 = vmatprep.subr.mxu0 0.0
      %7726 = vmatpush1.msra.mxu0 0.0
      %7727 = vmatprep.subr.mxu0 0.0
      %7728 = vmatpush1.msra.mxu0 0.0
      %7729 = vmatprep.subr.mxu0 0.0
      %7730 = vmatpush1.msra.mxu0 0.0
      %7731 = vmatprep.subr.mxu0 0.0
      %7732 = vmatpush1.msra.mxu0 0.0
      %7733 = vmatprep.subr.mxu0 0.0
      %7734 = vmatpush1.msra.mxu0 0.0
      %7735 = vmatprep.subr.mxu0 0.0
      %7736 = vmatpush1.msra.mxu0 0.0
      %7737 = vmatprep.subr.mxu0 0.0
      %7738 = vmatpush1.msra.mxu0 0.0
      %7739 = vmatprep.subr.mxu0 0.0
      %7740 = vmatpush1.msra.mxu0 0.0
      %7741 = vmatprep.subr.mxu0 0.0
      %7742 = vmatpush1.msra.mxu0 0.0
      %7743 = vmatprep.subr.mxu0 0.0
      %7744 = vmatpush1.msra.mxu0 0.0
      %7745 = vmatprep.subr.mxu0 0.0
      %7746 = vmatpush1.msra.mxu0 0.0
      %7747 = vmatprep.subr.mxu0 0.0
      %7748 = vmatpush1.msra.mxu0 0.0
      %7749 = vmatprep.subr.mxu0 0.0
      %7750 = vmatpush1.msra.mxu0 0.0
      %7751 = vmatprep.subr.mxu0 0.0
      %7752 = vmatpush1.msra.mxu0 0.0
      %7753 = vmatprep.subr.mxu0 0.0
      %7754 = vmatpush1.msra.mxu0 0.0
      %7755 = vmatprep.subr.mxu0 0.0
      %7756 = vmatpush1.msra.mxu0 0.0
      %7757 = vmatprep.subr.mxu0 0.0
      %7758 = vmatpush1.msra.mxu0 0.0
      %7759 = vmatprep.subr.mxu0 0.0
      %7760 = vmatpush1.msra.mxu0 0.0
      %7761 = vmatprep.subr.mxu0 0.0
      %7762 = vmatpush1.msra.mxu0 0.0
      %7763 = vmatprep.subr.mxu0 0.0
      %7764 = vmatpush1.msra.mxu0 0.0
      %7765 = vmatprep.subr.mxu0 0.0
      %7766 = vmatpush1.msra.mxu0 0.0
      %7767 = vmatprep.mubr.f32.mxu0 0.0
      %7768 = vmatmul.mubr.f32.gmra.mrb[0].mxu0 %v7603
      %v7769 = vpop.f32.mrb[0].mxu0
      %v7770 = vadd.f32 0.0, %v7769
      %v7771 = vpop.f32.mrb[0].mxu0
      %7772 = vmatprep.mubr.f32.mxu0 0.0
      %7773 = vmatmul.mubr.f32.gmra.mrb[0].mxu0 %v7606
      %v7774 = vpop.f32.mrb[0].mxu0
      %v7775 = vadd.f32 0.0, %v7774
      %v7776 = vpop.f32.mrb[0].mxu0
      %7777 = vmatprep.mubr.f32.mxu0 0.0
      %7778 = vmatmul.mubr.f32.gmra.mrb[0].mxu0 %v7609
      %v7779 = vpop.f32.mrb[0].mxu0
      %v7780 = vadd.f32 0.0, %v7779
      %v7781 = vpop.f32.mrb[0].mxu0
      %7782 = vmatprep.mubr.f32.mxu0 0.0
      %7783 = vmatmul.mubr.f32.gmra.mrb[0].mxu0 %v7612
      %v7784 = vpop.f32.mrb[0].mxu0
      %v7785 = vadd.f32 0.0, %v7784
      %v7786 = vpop.f32.mrb[0].mxu0
      %7787 = vdwg.mxu0
      %v7788 = vadd.f32 %v7590, %v7681
      %v7789 = vadd.f32 %v7591, %v7683
      %v7790 = vadd.f32 %v7592, %v7770
      %v7791 = vadd.f32 %v7593, %v7687
      %v7792 = vadd.f32 %v7594, %v7689
      %v7793 = vadd.f32 %v7595, %v7775
      %v7794 = vadd.f32 %v7596, %v7693
      %v7795 = vadd.f32 %v7597, %v7695
      %v7796 = vadd.f32 %v7598, %v7780
      %v7797 = vadd.f32 %v7599, %v7699
      %v7798 = vadd.f32 %v7600, %v7701
      %v7799 = vadd.f32 %v7601, %v7785
      %7800 = vrot.lane.b32.xlu0 %v6546, 96
      %v7801 = vpop.permute.xlu0 %7800
      %7802 = vrot.lane.b32.xlu0 %v6549, 96
      %v7803 = vpop.permute.xlu0 %7802
      %7804 = vrot.lane.b32.xlu0 %v6552, 96
      %v7805 = vpop.permute.xlu0 %7804
      %7806 = vrot.lane.b32.xlu0 %v6555, 96
      %v7807 = vpop.permute.xlu0 %7806
      %7808 = vrot.lane.b32.xlu0 %v6562, 126
      %v7809 = vpop.permute.xlu0 %7808
      %7810 = vrot.lane.b32.xlu0 %v6563, 126
      %v7811 = vpop.permute.xlu0 %7810
      %7812 = vrot.lane.b32.xlu0 %v6564, 126
      %v7813 = vpop.permute.xlu0 %7812
      %7814 = vrot.lane.b32.xlu0 %v6566, 126
      %v7815 = vpop.permute.xlu0 %7814
      %7816 = vrot.lane.b32.xlu0 %v6567, 126
      %v7817 = vpop.permute.xlu0 %7816
      %7818 = vrot.lane.b32.xlu0 %v6568, 126
      %v7819 = vpop.permute.xlu0 %7818
      %7820 = vrot.lane.b32.xlu0 %v6570, 126
      %v7821 = vpop.permute.xlu0 %7820
      %7822 = vrot.lane.b32.xlu0 %v6571, 126
      %v7823 = vpop.permute.xlu0 %7822
      %7824 = vrot.lane.b32.xlu0 %v6572, 126
      %v7825 = vpop.permute.xlu0 %7824
      %7826 = vrot.lane.b32.xlu0 %v6574, 126
      %v7827 = vpop.permute.xlu0 %7826
      %7828 = vrot.lane.b32.xlu0 %v6575, 126
      %v7829 = vpop.permute.xlu0 %7828
      %7830 = vrot.lane.b32.xlu0 %v6576, 126
      %v7831 = vpop.permute.xlu0 %7830
      %vm7832 = vcmask 1031168
      %v7833 = vsel %vm7832, %v7809, %v7811
      %v7834 = vsel %vm7832, %v7811, %v7813
      %v7835 = vsel %vm7832, %v7815, %v7817
      %v7836 = vsel %vm7832, %v7817, %v7819
      %v7837 = vsel %vm7832, %v7821, %v7823
      %v7838 = vsel %vm7832, %v7823, %v7825
      %v7839 = vsel %vm7832, %v7827, %v7829
      %v7840 = vsel %vm7832, %v7829, %v7831
      %v7853 = vsel %vm6662, %v7801, 0
      %v7855 = vsel %vm6662, %v7803, 0
      %v7857 = vsel %vm6662, %v7805, 0
      %v7859 = vsel %vm6662, %v7807, 0
      %7861 = vmatprep.subr.mxu0 %v7834
      %7862 = vmatpush1.msra.mxu0 %v7833
      %7863 = vmatprep.subr.mxu0 %v7836
      %7864 = vmatpush1.msra.mxu0 %v7835
      %7865 = vmatprep.subr.mxu0 %v7838
      %7866 = vmatpush1.msra.mxu0 %v7837
      %7867 = vmatprep.subr.mxu0 %v7840
      %7868 = vmatpush1.msra.mxu0 %v7839
      %7869 = vmatprep.subr.mxu0 0.0
      %7870 = vmatpush1.msra.mxu0 0.0
      %7871 = vmatprep.subr.mxu0 0.0
      %7872 = vmatpush1.msra.mxu0 0.0
      %7873 = vmatprep.subr.mxu0 0.0
      %7874 = vmatpush1.msra.mxu0 0.0
      %7875 = vmatprep.subr.mxu0 0.0
      %7876 = vmatpush1.msra.mxu0 0.0
      %7877 = vmatprep.subr.mxu0 0.0
      %7878 = vmatpush1.msra.mxu0 0.0
      %7879 = vmatprep.subr.mxu0 0.0
      %7880 = vmatpush1.msra.mxu0 0.0
      %7881 = vmatprep.subr.mxu0 0.0
      %7882 = vmatpush1.msra.mxu0 0.0
      %7883 = vmatprep.subr.mxu0 0.0
      %7884 = vmatpush1.msra.mxu0 0.0
      %7885 = vmatprep.subr.mxu0 0.0
      %7886 = vmatpush1.msra.mxu0 0.0
      %7887 = vmatprep.subr.mxu0 0.0
      %7888 = vmatpush1.msra.mxu0 0.0
      %7889 = vmatprep.subr.mxu0 0.0
      %7890 = vmatpush1.msra.mxu0 0.0
      %7891 = vmatprep.subr.mxu0 0.0
      %7892 = vmatpush1.msra.mxu0 0.0
      %7893 = vmatprep.subr.mxu0 0.0
      %7894 = vmatpush1.msra.mxu0 0.0
      %7895 = vmatprep.subr.mxu0 0.0
      %7896 = vmatpush1.msra.mxu0 0.0
      %7897 = vmatprep.subr.mxu0 0.0
      %7898 = vmatpush1.msra.mxu0 0.0
      %7899 = vmatprep.subr.mxu0 0.0
      %7900 = vmatpush1.msra.mxu0 0.0
      %7901 = vmatprep.subr.mxu0 0.0
      %7902 = vmatpush1.msra.mxu0 0.0
      %7903 = vmatprep.subr.mxu0 0.0
      %7904 = vmatpush1.msra.mxu0 0.0
      %7905 = vmatprep.subr.mxu0 0.0
      %7906 = vmatpush1.msra.mxu0 0.0
      %7907 = vmatprep.subr.mxu0 0.0
      %7908 = vmatpush1.msra.mxu0 0.0
      %7909 = vmatprep.subr.mxu0 0.0
      %7910 = vmatpush1.msra.mxu0 0.0
      %7911 = vmatprep.subr.mxu0 0.0
      %7912 = vmatpush1.msra.mxu0 0.0
      %7913 = vmatprep.subr.mxu0 0.0
      %7914 = vmatpush1.msra.mxu0 0.0
      %7915 = vmatprep.subr.mxu0 0.0
      %7916 = vmatpush1.msra.mxu0 0.0
      %7917 = vmatprep.subr.mxu0 0.0
      %7918 = vmatpush1.msra.mxu0 0.0
      %7919 = vmatprep.subr.mxu0 0.0
      %7920 = vmatpush1.msra.mxu0 0.0
      %7921 = vmatprep.subr.mxu0 0.0
      %7922 = vmatpush1.msra.mxu0 0.0
      %7923 = vmatprep.subr.mxu0 0.0
      %7924 = vmatpush1.msra.mxu0 0.0
      %7925 = vmatprep.mubr.f32.mxu0 0.0
      %7926 = vmatmul.mubr.f32.gmra.mrb[0].mxu0 %v7853
      %v7927 = vpop.f32.mrb[0].mxu0
      %v7928 = vadd.f32 0.0, %v7927
      %v7929 = vpop.f32.mrb[0].mxu0
      %v7930 = vadd.f32 0.0, %v7929
      %7931 = vmatprep.mubr.f32.mxu0 0.0
      %7932 = vmatmul.mubr.f32.gmra.mrb[0].mxu0 %v7855
      %v7933 = vpop.f32.mrb[0].mxu0
      %v7934 = vadd.f32 0.0, %v7933
      %v7935 = vpop.f32.mrb[0].mxu0
      %v7936 = vadd.f32 0.0, %v7935
      %7937 = vmatprep.mubr.f32.mxu0 0.0
      %7938 = vmatmul.mubr.f32.gmra.mrb[0].mxu0 %v7857
      %v7939 = vpop.f32.mrb[0].mxu0
      %v7940 = vadd.f32 0.0, %v7939
      %v7941 = vpop.f32.mrb[0].mxu0
      %v7942 = vadd.f32 0.0, %v7941
      %7943 = vmatprep.mubr.f32.mxu0 0.0
      %7944 = vmatmul.mubr.f32.gmra.mrb[0].mxu0 %v7859
      %v7945 = vpop.f32.mrb[0].mxu0
      %v7946 = vadd.f32 0.0, %v7945
      %v7947 = vpop.f32.mrb[0].mxu0
      %v7948 = vadd.f32 0.0, %v7947
      %7949 = vdwg.mxu0
      %7950 = vmatprep.subr.mxu0 0.0
      %7951 = vmatpush1.msra.mxu0 %v7813
      %7952 = vmatprep.subr.mxu0 0.0
      %7953 = vmatpush1.msra.mxu0 %v7819
      %7954 = vmatprep.subr.mxu0 0.0
      %7955 = vmatpush1.msra.mxu0 %v7825
      %7956 = vmatprep.subr.mxu0 0.0
      %7957 = vmatpush1.msra.mxu0 %v7831
      %7958 = vmatprep.subr.mxu0 0.0
      %7959 = vmatpush1.msra.mxu0 0.0
      %7960 = vmatprep.subr.mxu0 0.0
      %7961 = vmatpush1.msra.mxu0 0.0
      %7962 = vmatprep.subr.mxu0 0.0
      %7963 = vmatpush1.msra.mxu0 0.0
      %7964 = vmatprep.subr.mxu0 0.0
      %7965 = vmatpush1.msra.mxu0 0.0
      %7966 = vmatprep.subr.mxu0 0.0
      %7967 = vmatpush1.msra.mxu0 0.0
      %7968 = vmatprep.subr.mxu0 0.0
      %7969 = vmatpush1.msra.mxu0 0.0
      %7970 = vmatprep.subr.mxu0 0.0
      %7971 = vmatpush1.msra.mxu0 0.0
      %7972 = vmatprep.subr.mxu0 0.0
      %7973 = vmatpush1.msra.mxu0 0.0
      %7974 = vmatprep.subr.mxu0 0.0
      %7975 = vmatpush1.msra.mxu0 0.0
      %7976 = vmatprep.subr.mxu0 0.0
      %7977 = vmatpush1.msra.mxu0 0.0
      %7978 = vmatprep.subr.mxu0 0.0
      %7979 = vmatpush1.msra.mxu0 0.0
      %7980 = vmatprep.subr.mxu0 0.0
      %7981 = vmatpush1.msra.mxu0 0.0
      %7982 = vmatprep.subr.mxu0 0.0
      %7983 = vmatpush1.msra.mxu0 0.0
      %7984 = vmatprep.subr.mxu0 0.0
      %7985 = vmatpush1.msra.mxu0 0.0
      %7986 = vmatprep.subr.mxu0 0.0
      %7987 = vmatpush1.msra.mxu0 0.0
      %7988 = vmatprep.subr.mxu0 0.0
      %7989 = vmatpush1.msra.mxu0 0.0
      %7990 = vmatprep.subr.mxu0 0.0
      %7991 = vmatpush1.msra.mxu0 0.0
      %7992 = vmatprep.subr.mxu0 0.0
      %7993 = vmatpush1.msra.mxu0 0.0
      %7994 = vmatprep.subr.mxu0 0.0
      %7995 = vmatpush1.msra.mxu0 0.0
      %7996 = vmatprep.subr.mxu0 0.0
      %7997 = vmatpush1.msra.mxu0 0.0
      %7998 = vmatprep.subr.mxu0 0.0
      %7999 = vmatpush1.msra.mxu0 0.0
      %8000 = vmatprep.subr.mxu0 0.0
      %8001 = vmatpush1.msra.mxu0 0.0
      %8002 = vmatprep.subr.mxu0 0.0
      %8003 = vmatpush1.msra.mxu0 0.0
      %8004 = vmatprep.subr.mxu0 0.0
      %8005 = vmatpush1.msra.mxu0 0.0
      %8006 = vmatprep.subr.mxu0 0.0
      %8007 = vmatpush1.msra.mxu0 0.0
      %8008 = vmatprep.subr.mxu0 0.0
      %8009 = vmatpush1.msra.mxu0 0.0
      %8010 = vmatprep.subr.mxu0 0.0
      %8011 = vmatpush1.msra.mxu0 0.0
      %8012 = vmatprep.subr.mxu0 0.0
      %8013 = vmatpush1.msra.mxu0 0.0
      %8014 = vmatprep.mubr.f32.mxu0 0.0
      %8015 = vmatmul.mubr.f32.gmra.mrb[0].mxu0 %v7853
      %v8016 = vpop.f32.mrb[0].mxu0
      %v8017 = vadd.f32 0.0, %v8016
      %v8018 = vpop.f32.mrb[0].mxu0
      %8019 = vmatprep.mubr.f32.mxu0 0.0
      %8020 = vmatmul.mubr.f32.gmra.mrb[0].mxu0 %v7855
      %v8021 = vpop.f32.mrb[0].mxu0
      %v8022 = vadd.f32 0.0, %v8021
      %v8023 = vpop.f32.mrb[0].mxu0
      %8024 = vmatprep.mubr.f32.mxu0 0.0
      %8025 = vmatmul.mubr.f32.gmra.mrb[0].mxu0 %v7857
      %v8026 = vpop.f32.mrb[0].mxu0
      %v8027 = vadd.f32 0.0, %v8026
      %v8028 = vpop.f32.mrb[0].mxu0
      %8029 = vmatprep.mubr.f32.mxu0 0.0
      %8030 = vmatmul.mubr.f32.gmra.mrb[0].mxu0 %v7859
      %v8031 = vpop.f32.mrb[0].mxu0
      %v8032 = vadd.f32 0.0, %v8031
      %v8033 = vpop.f32.mrb[0].mxu0
      %8034 = vdwg.mxu0
      %v8035 = vadd.f32 %v7788, %v7928
      %v8036 = vadd.f32 %v7789, %v7930
      %v8037 = vadd.f32 %v7790, %v8017
      %v8038 = vadd.f32 %v7791, %v7934
      %v8039 = vadd.f32 %v7792, %v7936
      %v8040 = vadd.f32 %v7793, %v8022
      %v8041 = vadd.f32 %v7794, %v7940
      %v8042 = vadd.f32 %v7795, %v7942
      %v8043 = vadd.f32 %v7796, %v8027
      %v8044 = vadd.f32 %v7797, %v7946
      %v8045 = vadd.f32 %v7798, %v7948
      %v8046 = vadd.f32 %v7799, %v8032
      %8047 = vrot.lane.b32.xlu0 %v6546, 64
      %v8048 = vpop.permute.xlu0 %8047
      %8049 = vrot.lane.b32.xlu0 %v6549, 64
      %v8050 = vpop.permute.xlu0 %8049
      %8051 = vrot.lane.b32.xlu0 %v6552, 64
      %v8052 = vpop.permute.xlu0 %8051
      %8053 = vrot.lane.b32.xlu0 %v6555, 64
      %v8054 = vpop.permute.xlu0 %8053
      %8055 = vrot.lane.b32.xlu0 %v6562, 94
      %v8056 = vpop.permute.xlu0 %8055
      %8057 = vrot.lane.b32.xlu0 %v6563, 94
      %v8058 = vpop.permute.xlu0 %8057
      %8059 = vrot.lane.b32.xlu0 %v6564, 94
      %v8060 = vpop.permute.xlu0 %8059
      %8061 = vrot.lane.b32.xlu0 %v6566, 94
      %v8062 = vpop.permute.xlu0 %8061
      %8063 = vrot.lane.b32.xlu0 %v6567, 94
      %v8064 = vpop.permute.xlu0 %8063
      %8065 = vrot.lane.b32.xlu0 %v6568, 94
      %v8066 = vpop.permute.xlu0 %8065
      %8067 = vrot.lane.b32.xlu0 %v6570, 94
      %v8068 = vpop.permute.xlu0 %8067
      %8069 = vrot.lane.b32.xlu0 %v6571, 94
      %v8070 = vpop.permute.xlu0 %8069
      %8071 = vrot.lane.b32.xlu0 %v6572, 94
      %v8072 = vpop.permute.xlu0 %8071
      %8073 = vrot.lane.b32.xlu0 %v6574, 94
      %v8074 = vpop.permute.xlu0 %8073
      %8075 = vrot.lane.b32.xlu0 %v6575, 94
      %v8076 = vpop.permute.xlu0 %8075
      %8077 = vrot.lane.b32.xlu0 %v6576, 94
      %v8078 = vpop.permute.xlu0 %8077
      %vm8079 = vcmask 769024
      %v8080 = vsel %vm8079, %v8056, %v8058
      %v8081 = vsel %vm8079, %v8058, %v8060
      %v8082 = vsel %vm8079, %v8062, %v8064
      %v8083 = vsel %vm8079, %v8064, %v8066
      %v8084 = vsel %vm8079, %v8068, %v8070
      %v8085 = vsel %vm8079, %v8070, %v8072
      %v8086 = vsel %vm8079, %v8074, %v8076
      %v8087 = vsel %vm8079, %v8076, %v8078
      %v8100 = vsel %vm6662, %v8048, 0
      %v8102 = vsel %vm6662, %v8050, 0
      %v8104 = vsel %vm6662, %v8052, 0
      %v8106 = vsel %vm6662, %v8054, 0
      %8108 = vmatprep.subr.mxu0 %v8081
      %8109 = vmatpush1.msra.mxu0 %v8080
      %8110 = vmatprep.subr.mxu0 %v8083
      %8111 = vmatpush1.msra.mxu0 %v8082
      %8112 = vmatprep.subr.mxu0 %v8085
      %8113 = vmatpush1.msra.mxu0 %v8084
      %8114 = vmatprep.subr.mxu0 %v8087
      %8115 = vmatpush1.msra.mxu0 %v8086
      %8116 = vmatprep.subr.mxu0 0.0
      %8117 = vmatpush1.msra.mxu0 0.0
      %8118 = vmatprep.subr.mxu0 0.0
      %8119 = vmatpush1.msra.mxu0 0.0
      %8120 = vmatprep.subr.mxu0 0.0
      %8121 = vmatpush1.msra.mxu0 0.0
      %8122 = vmatprep.subr.mxu0 0.0
      %8123 = vmatpush1.msra.mxu0 0.0
      %8124 = vmatprep.subr.mxu0 0.0
      %8125 = vmatpush1.msra.mxu0 0.0
      %8126 = vmatprep.subr.mxu0 0.0
      %8127 = vmatpush1.msra.mxu0 0.0
      %8128 = vmatprep.subr.mxu0 0.0
      %8129 = vmatpush1.msra.mxu0 0.0
      %8130 = vmatprep.subr.mxu0 0.0
      %8131 = vmatpush1.msra.mxu0 0.0
      %8132 = vmatprep.subr.mxu0 0.0
      %8133 = vmatpush1.msra.mxu0 0.0
      %8134 = vmatprep.subr.mxu0 0.0
      %8135 = vmatpush1.msra.mxu0 0.0
      %8136 = vmatprep.subr.mxu0 0.0
      %8137 = vmatpush1.msra.mxu0 0.0
      %8138 = vmatprep.subr.mxu0 0.0
      %8139 = vmatpush1.msra.mxu0 0.0
      %8140 = vmatprep.subr.mxu0 0.0
      %8141 = vmatpush1.msra.mxu0 0.0
      %8142 = vmatprep.subr.mxu0 0.0
      %8143 = vmatpush1.msra.mxu0 0.0
      %8144 = vmatprep.subr.mxu0 0.0
      %8145 = vmatpush1.msra.mxu0 0.0
      %8146 = vmatprep.subr.mxu0 0.0
      %8147 = vmatpush1.msra.mxu0 0.0
      %8148 = vmatprep.subr.mxu0 0.0
      %8149 = vmatpush1.msra.mxu0 0.0
      %8150 = vmatprep.subr.mxu0 0.0
      %8151 = vmatpush1.msra.mxu0 0.0
      %8152 = vmatprep.subr.mxu0 0.0
      %8153 = vmatpush1.msra.mxu0 0.0
      %8154 = vmatprep.subr.mxu0 0.0
      %8155 = vmatpush1.msra.mxu0 0.0
      %8156 = vmatprep.subr.mxu0 0.0
      %8157 = vmatpush1.msra.mxu0 0.0
      %8158 = vmatprep.subr.mxu0 0.0
      %8159 = vmatpush1.msra.mxu0 0.0
      %8160 = vmatprep.subr.mxu0 0.0
      %8161 = vmatpush1.msra.mxu0 0.0
      %8162 = vmatprep.subr.mxu0 0.0
      %8163 = vmatpush1.msra.mxu0 0.0
      %8164 = vmatprep.subr.mxu0 0.0
      %8165 = vmatpush1.msra.mxu0 0.0
      %8166 = vmatprep.subr.mxu0 0.0
      %8167 = vmatpush1.msra.mxu0 0.0
      %8168 = vmatprep.subr.mxu0 0.0
      %8169 = vmatpush1.msra.mxu0 0.0
      %8170 = vmatprep.subr.mxu0 0.0
      %8171 = vmatpush1.msra.mxu0 0.0
      %8172 = vmatprep.mubr.f32.mxu0 0.0
      %8173 = vmatmul.mubr.f32.gmra.mrb[0].mxu0 %v8100
      %v8174 = vpop.f32.mrb[0].mxu0
      %v8175 = vadd.f32 0.0, %v8174
      %v8176 = vpop.f32.mrb[0].mxu0
      %v8177 = vadd.f32 0.0, %v8176
      %8178 = vmatprep.mubr.f32.mxu0 0.0
      %8179 = vmatmul.mubr.f32.gmra.mrb[0].mxu0 %v8102
      %v8180 = vpop.f32.mrb[0].mxu0
      %v8181 = vadd.f32 0.0, %v8180
      %v8182 = vpop.f32.mrb[0].mxu0
      %v8183 = vadd.f32 0.0, %v8182
      %8184 = vmatprep.mubr.f32.mxu0 0.0
      %8185 = vmatmul.mubr.f32.gmra.mrb[0].mxu0 %v8104
      %v8186 = vpop.f32.mrb[0].mxu0
      %v8187 = vadd.f32 0.0, %v8186
      %v8188 = vpop.f32.mrb[0].mxu0
      %v8189 = vadd.f32 0.0, %v8188
      %8190 = vmatprep.mubr.f32.mxu0 0.0
      %8191 = vmatmul.mubr.f32.gmra.mrb[0].mxu0 %v8106
      %v8192 = vpop.f32.mrb[0].mxu0
      %v8193 = vadd.f32 0.0, %v8192
      %v8194 = vpop.f32.mrb[0].mxu0
      %v8195 = vadd.f32 0.0, %v8194
      %8196 = vdwg.mxu0
      %8197 = vmatprep.subr.mxu0 0.0
      %8198 = vmatpush1.msra.mxu0 %v8060
      %8199 = vmatprep.subr.mxu0 0.0
      %8200 = vmatpush1.msra.mxu0 %v8066
      %8201 = vmatprep.subr.mxu0 0.0
      %8202 = vmatpush1.msra.mxu0 %v8072
      %8203 = vmatprep.subr.mxu0 0.0
      %8204 = vmatpush1.msra.mxu0 %v8078
      %8205 = vmatprep.subr.mxu0 0.0
      %8206 = vmatpush1.msra.mxu0 0.0
      %8207 = vmatprep.subr.mxu0 0.0
      %8208 = vmatpush1.msra.mxu0 0.0
      %8209 = vmatprep.subr.mxu0 0.0
      %8210 = vmatpush1.msra.mxu0 0.0
      %8211 = vmatprep.subr.mxu0 0.0
      %8212 = vmatpush1.msra.mxu0 0.0
      %8213 = vmatprep.subr.mxu0 0.0
      %8214 = vmatpush1.msra.mxu0 0.0
      %8215 = vmatprep.subr.mxu0 0.0
      %8216 = vmatpush1.msra.mxu0 0.0
      %8217 = vmatprep.subr.mxu0 0.0
      %8218 = vmatpush1.msra.mxu0 0.0
      %8219 = vmatprep.subr.mxu0 0.0
      %8220 = vmatpush1.msra.mxu0 0.0
      %8221 = vmatprep.subr.mxu0 0.0
      %8222 = vmatpush1.msra.mxu0 0.0
      %8223 = vmatprep.subr.mxu0 0.0
      %8224 = vmatpush1.msra.mxu0 0.0
      %8225 = vmatprep.subr.mxu0 0.0
      %8226 = vmatpush1.msra.mxu0 0.0
      %8227 = vmatprep.subr.mxu0 0.0
      %8228 = vmatpush1.msra.mxu0 0.0
      %8229 = vmatprep.subr.mxu0 0.0
      %8230 = vmatpush1.msra.mxu0 0.0
      %8231 = vmatprep.subr.mxu0 0.0
      %8232 = vmatpush1.msra.mxu0 0.0
      %8233 = vmatprep.subr.mxu0 0.0
      %8234 = vmatpush1.msra.mxu0 0.0
      %8235 = vmatprep.subr.mxu0 0.0
      %8236 = vmatpush1.msra.mxu0 0.0
      %8237 = vmatprep.subr.mxu0 0.0
      %8238 = vmatpush1.msra.mxu0 0.0
      %8239 = vmatprep.subr.mxu0 0.0
      %8240 = vmatpush1.msra.mxu0 0.0
      %8241 = vmatprep.subr.mxu0 0.0
      %8242 = vmatpush1.msra.mxu0 0.0
      %8243 = vmatprep.subr.mxu0 0.0
      %8244 = vmatpush1.msra.mxu0 0.0
      %8245 = vmatprep.subr.mxu0 0.0
      %8246 = vmatpush1.msra.mxu0 0.0
      %8247 = vmatprep.subr.mxu0 0.0
      %8248 = vmatpush1.msra.mxu0 0.0
      %8249 = vmatprep.subr.mxu0 0.0
      %8250 = vmatpush1.msra.mxu0 0.0
      %8251 = vmatprep.subr.mxu0 0.0
      %8252 = vmatpush1.msra.mxu0 0.0
      %8253 = vmatprep.subr.mxu0 0.0
      %8254 = vmatpush1.msra.mxu0 0.0
      %8255 = vmatprep.subr.mxu0 0.0
      %8256 = vmatpush1.msra.mxu0 0.0
      %8257 = vmatprep.subr.mxu0 0.0
      %8258 = vmatpush1.msra.mxu0 0.0
      %8259 = vmatprep.subr.mxu0 0.0
      %8260 = vmatpush1.msra.mxu0 0.0
      %8261 = vmatprep.mubr.f32.mxu0 0.0
      %8262 = vmatmul.mubr.f32.gmra.mrb[0].mxu0 %v8100
      %v8263 = vpop.f32.mrb[0].mxu0
      %v8264 = vadd.f32 0.0, %v8263
      %v8265 = vpop.f32.mrb[0].mxu0
      %8266 = vmatprep.mubr.f32.mxu0 0.0
      %8267 = vmatmul.mubr.f32.gmra.mrb[0].mxu0 %v8102
      %v8268 = vpop.f32.mrb[0].mxu0
      %v8269 = vadd.f32 0.0, %v8268
      %v8270 = vpop.f32.mrb[0].mxu0
      %8271 = vmatprep.mubr.f32.mxu0 0.0
      %8272 = vmatmul.mubr.f32.gmra.mrb[0].mxu0 %v8104
      %v8273 = vpop.f32.mrb[0].mxu0
      %v8274 = vadd.f32 0.0, %v8273
      %v8275 = vpop.f32.mrb[0].mxu0
      %8276 = vmatprep.mubr.f32.mxu0 0.0
      %8277 = vmatmul.mubr.f32.gmra.mrb[0].mxu0 %v8106
      %v8278 = vpop.f32.mrb[0].mxu0
      %v8279 = vadd.f32 0.0, %v8278
      %v8280 = vpop.f32.mrb[0].mxu0
      %8281 = vdwg.mxu0
      %v8282 = vadd.f32 %v8035, %v8175
      %v8283 = vadd.f32 %v8036, %v8177
      %v8284 = vadd.f32 %v8037, %v8264
      %v8285 = vadd.f32 %v8038, %v8181
      %v8286 = vadd.f32 %v8039, %v8183
      %v8287 = vadd.f32 %v8040, %v8269
      %v8288 = vadd.f32 %v8041, %v8187
      %v8289 = vadd.f32 %v8042, %v8189
      %v8290 = vadd.f32 %v8043, %v8274
      %v8291 = vadd.f32 %v8044, %v8193
      %v8292 = vadd.f32 %v8045, %v8195
      %v8293 = vadd.f32 %v8046, %v8279
      %8294 = vrot.lane.b32.xlu0 %v6546, 32
      %v8295 = vpop.permute.xlu0 %8294
      %8296 = vrot.lane.b32.xlu0 %v6549, 32
      %v8297 = vpop.permute.xlu0 %8296
      %8298 = vrot.lane.b32.xlu0 %v6552, 32
      %v8299 = vpop.permute.xlu0 %8298
      %8300 = vrot.lane.b32.xlu0 %v6555, 32
      %v8301 = vpop.permute.xlu0 %8300
      %8302 = vrot.lane.b32.xlu0 %v6562, 92
      %v8303 = vpop.permute.xlu0 %8302
      %8304 = vrot.lane.b32.xlu0 %v6563, 92
      %v8305 = vpop.permute.xlu0 %8304
      %8306 = vrot.lane.b32.xlu0 %v6564, 92
      %v8307 = vpop.permute.xlu0 %8306
      %8308 = vrot.lane.b32.xlu0 %v6566, 92
      %v8309 = vpop.permute.xlu0 %8308
      %8310 = vrot.lane.b32.xlu0 %v6567, 92
      %v8311 = vpop.permute.xlu0 %8310
      %8312 = vrot.lane.b32.xlu0 %v6568, 92
      %v8313 = vpop.permute.xlu0 %8312
      %8314 = vrot.lane.b32.xlu0 %v6570, 92
      %v8315 = vpop.permute.xlu0 %8314
      %8316 = vrot.lane.b32.xlu0 %v6571, 92
      %v8317 = vpop.permute.xlu0 %8316
      %8318 = vrot.lane.b32.xlu0 %v6572, 92
      %v8319 = vpop.permute.xlu0 %8318
      %8320 = vrot.lane.b32.xlu0 %v6574, 92
      %v8321 = vpop.permute.xlu0 %8320
      %8322 = vrot.lane.b32.xlu0 %v6575, 92
      %v8323 = vpop.permute.xlu0 %8322
      %8324 = vrot.lane.b32.xlu0 %v6576, 92
      %v8325 = vpop.permute.xlu0 %8324
      %vm8326 = vcmask 752640
      %v8327 = vsel %vm8326, %v8303, %v8305
      %v8328 = vsel %vm8326, %v8305, %v8307
      %v8329 = vsel %vm8326, %v8309, %v8311
      %v8330 = vsel %vm8326, %v8311, %v8313
      %v8331 = vsel %vm8326, %v8315, %v8317
      %v8332 = vsel %vm8326, %v8317, %v8319
      %v8333 = vsel %vm8326, %v8321, %v8323
      %v8334 = vsel %vm8326, %v8323, %v8325
      %v8347 = vsel %vm6662, %v8295, 0
      %v8349 = vsel %vm6662, %v8297, 0
      %v8351 = vsel %vm6662, %v8299, 0
      %v8353 = vsel %vm6662, %v8301, 0
      %8355 = vmatprep.subr.mxu0 %v8328
      %8356 = vmatpush1.msra.mxu0 %v8327
      %8357 = vmatprep.subr.mxu0 %v8330
      %8358 = vmatpush1.msra.mxu0 %v8329
      %8359 = vmatprep.subr.mxu0 %v8332
      %8360 = vmatpush1.msra.mxu0 %v8331
      %8361 = vmatprep.subr.mxu0 %v8334
      %8362 = vmatpush1.msra.mxu0 %v8333
      %8363 = vmatprep.subr.mxu0 0.0
      %8364 = vmatpush1.msra.mxu0 0.0
      %8365 = vmatprep.subr.mxu0 0.0
      %8366 = vmatpush1.msra.mxu0 0.0
      %8367 = vmatprep.subr.mxu0 0.0
      %8368 = vmatpush1.msra.mxu0 0.0
      %8369 = vmatprep.subr.mxu0 0.0
      %8370 = vmatpush1.msra.mxu0 0.0
      %8371 = vmatprep.subr.mxu0 0.0
      %8372 = vmatpush1.msra.mxu0 0.0
      %8373 = vmatprep.subr.mxu0 0.0
      %8374 = vmatpush1.msra.mxu0 0.0
      %8375 = vmatprep.subr.mxu0 0.0
      %8376 = vmatpush1.msra.mxu0 0.0
      %8377 = vmatprep.subr.mxu0 0.0
      %8378 = vmatpush1.msra.mxu0 0.0
      %8379 = vmatprep.subr.mxu0 0.0
      %8380 = vmatpush1.msra.mxu0 0.0
      %8381 = vmatprep.subr.mxu0 0.0
      %8382 = vmatpush1.msra.mxu0 0.0
      %8383 = vmatprep.subr.mxu0 0.0
      %8384 = vmatpush1.msra.mxu0 0.0
      %8385 = vmatprep.subr.mxu0 0.0
      %8386 = vmatpush1.msra.mxu0 0.0
      %8387 = vmatprep.subr.mxu0 0.0
      %8388 = vmatpush1.msra.mxu0 0.0
      %8389 = vmatprep.subr.mxu0 0.0
      %8390 = vmatpush1.msra.mxu0 0.0
      %8391 = vmatprep.subr.mxu0 0.0
      %8392 = vmatpush1.msra.mxu0 0.0
      %8393 = vmatprep.subr.mxu0 0.0
      %8394 = vmatpush1.msra.mxu0 0.0
      %8395 = vmatprep.subr.mxu0 0.0
      %8396 = vmatpush1.msra.mxu0 0.0
      %8397 = vmatprep.subr.mxu0 0.0
      %8398 = vmatpush1.msra.mxu0 0.0
      %8399 = vmatprep.subr.mxu0 0.0
      %8400 = vmatpush1.msra.mxu0 0.0
      %8401 = vmatprep.subr.mxu0 0.0
      %8402 = vmatpush1.msra.mxu0 0.0
      %8403 = vmatprep.subr.mxu0 0.0
      %8404 = vmatpush1.msra.mxu0 0.0
      %8405 = vmatprep.subr.mxu0 0.0
      %8406 = vmatpush1.msra.mxu0 0.0
      %8407 = vmatprep.subr.mxu0 0.0
      %8408 = vmatpush1.msra.mxu0 0.0
      %8409 = vmatprep.subr.mxu0 0.0
      %8410 = vmatpush1.msra.mxu0 0.0
      %8411 = vmatprep.subr.mxu0 0.0
      %8412 = vmatpush1.msra.mxu0 0.0
      %8413 = vmatprep.subr.mxu0 0.0
      %8414 = vmatpush1.msra.mxu0 0.0
      %8415 = vmatprep.subr.mxu0 0.0
      %8416 = vmatpush1.msra.mxu0 0.0
      %8417 = vmatprep.subr.mxu0 0.0
      %8418 = vmatpush1.msra.mxu0 0.0
      %8419 = vmatprep.mubr.f32.mxu0 0.0
      %8420 = vmatmul.mubr.f32.gmra.mrb[0].mxu0 %v8347
      %v8421 = vpop.f32.mrb[0].mxu0
      %v8422 = vadd.f32 0.0, %v8421
      %v8423 = vpop.f32.mrb[0].mxu0
      %v8424 = vadd.f32 0.0, %v8423
      %8425 = vmatprep.mubr.f32.mxu0 0.0
      %8426 = vmatmul.mubr.f32.gmra.mrb[0].mxu0 %v8349
      %v8427 = vpop.f32.mrb[0].mxu0
      %v8428 = vadd.f32 0.0, %v8427
      %v8429 = vpop.f32.mrb[0].mxu0
      %v8430 = vadd.f32 0.0, %v8429
      %8431 = vmatprep.mubr.f32.mxu0 0.0
      %8432 = vmatmul.mubr.f32.gmra.mrb[0].mxu0 %v8351
      %v8433 = vpop.f32.mrb[0].mxu0
      %v8434 = vadd.f32 0.0, %v8433
      %v8435 = vpop.f32.mrb[0].mxu0
      %v8436 = vadd.f32 0.0, %v8435
      %8437 = vmatprep.mubr.f32.mxu0 0.0
      %8438 = vmatmul.mubr.f32.gmra.mrb[0].mxu0 %v8353
      %v8439 = vpop.f32.mrb[0].mxu0
      %v8440 = vadd.f32 0.0, %v8439
      %v8441 = vpop.f32.mrb[0].mxu0
      %v8442 = vadd.f32 0.0, %v8441
      %8443 = vdwg.mxu0
      %8444 = vmatprep.subr.mxu0 0.0
      %8445 = vmatpush1.msra.mxu0 %v8307
      %8446 = vmatprep.subr.mxu0 0.0
      %8447 = vmatpush1.msra.mxu0 %v8313
      %8448 = vmatprep.subr.mxu0 0.0
      %8449 = vmatpush1.msra.mxu0 %v8319
      %8450 = vmatprep.subr.mxu0 0.0
      %8451 = vmatpush1.msra.mxu0 %v8325
      %8452 = vmatprep.subr.mxu0 0.0
      %8453 = vmatpush1.msra.mxu0 0.0
      %8454 = vmatprep.subr.mxu0 0.0
      %8455 = vmatpush1.msra.mxu0 0.0
      %8456 = vmatprep.subr.mxu0 0.0
      %8457 = vmatpush1.msra.mxu0 0.0
      %8458 = vmatprep.subr.mxu0 0.0
      %8459 = vmatpush1.msra.mxu0 0.0
      %8460 = vmatprep.subr.mxu0 0.0
      %8461 = vmatpush1.msra.mxu0 0.0
      %8462 = vmatprep.subr.mxu0 0.0
      %8463 = vmatpush1.msra.mxu0 0.0
      %8464 = vmatprep.subr.mxu0 0.0
      %8465 = vmatpush1.msra.mxu0 0.0
      %8466 = vmatprep.subr.mxu0 0.0
      %8467 = vmatpush1.msra.mxu0 0.0
      %8468 = vmatprep.subr.mxu0 0.0
      %8469 = vmatpush1.msra.mxu0 0.0
      %8470 = vmatprep.subr.mxu0 0.0
      %8471 = vmatpush1.msra.mxu0 0.0
      %8472 = vmatprep.subr.mxu0 0.0
      %8473 = vmatpush1.msra.mxu0 0.0
      %8474 = vmatprep.subr.mxu0 0.0
      %8475 = vmatpush1.msra.mxu0 0.0
      %8476 = vmatprep.subr.mxu0 0.0
      %8477 = vmatpush1.msra.mxu0 0.0
      %8478 = vmatprep.subr.mxu0 0.0
      %8479 = vmatpush1.msra.mxu0 0.0
      %8480 = vmatprep.subr.mxu0 0.0
      %8481 = vmatpush1.msra.mxu0 0.0
      %8482 = vmatprep.subr.mxu0 0.0
      %8483 = vmatpush1.msra.mxu0 0.0
      %8484 = vmatprep.subr.mxu0 0.0
      %8485 = vmatpush1.msra.mxu0 0.0
      %8486 = vmatprep.subr.mxu0 0.0
      %8487 = vmatpush1.msra.mxu0 0.0
      %8488 = vmatprep.subr.mxu0 0.0
      %8489 = vmatpush1.msra.mxu0 0.0
      %8490 = vmatprep.subr.mxu0 0.0
      %8491 = vmatpush1.msra.mxu0 0.0
      %8492 = vmatprep.subr.mxu0 0.0
      %8493 = vmatpush1.msra.mxu0 0.0
      %8494 = vmatprep.subr.mxu0 0.0
      %8495 = vmatpush1.msra.mxu0 0.0
      %8496 = vmatprep.subr.mxu0 0.0
      %8497 = vmatpush1.msra.mxu0 0.0
      %8498 = vmatprep.subr.mxu0 0.0
      %8499 = vmatpush1.msra.mxu0 0.0
      %8500 = vmatprep.subr.mxu0 0.0
      %8501 = vmatpush1.msra.mxu0 0.0
      %8502 = vmatprep.subr.mxu0 0.0
      %8503 = vmatpush1.msra.mxu0 0.0
      %8504 = vmatprep.subr.mxu0 0.0
      %8505 = vmatpush1.msra.mxu0 0.0
      %8506 = vmatprep.subr.mxu0 0.0
      %8507 = vmatpush1.msra.mxu0 0.0
      %8508 = vmatprep.mubr.f32.mxu0 0.0
      %8509 = vmatmul.mubr.f32.gmra.mrb[0].mxu0 %v8347
      %v8510 = vpop.f32.mrb[0].mxu0
      %v8511 = vadd.f32 0.0, %v8510
      %v8512 = vpop.f32.mrb[0].mxu0
      %8513 = vmatprep.mubr.f32.mxu0 0.0
      %8514 = vmatmul.mubr.f32.gmra.mrb[0].mxu0 %v8349
      %v8515 = vpop.f32.mrb[0].mxu0
      %v8516 = vadd.f32 0.0, %v8515
      %v8517 = vpop.f32.mrb[0].mxu0
      %8518 = vmatprep.mubr.f32.mxu0 0.0
      %8519 = vmatmul.mubr.f32.gmra.mrb[0].mxu0 %v8351
      %v8520 = vpop.f32.mrb[0].mxu0
      %v8521 = vadd.f32 0.0, %v8520
      %v8522 = vpop.f32.mrb[0].mxu0
      %8523 = vmatprep.mubr.f32.mxu0 0.0
      %8524 = vmatmul.mubr.f32.gmra.mrb[0].mxu0 %v8353
      %v8525 = vpop.f32.mrb[0].mxu0
      %v8526 = vadd.f32 0.0, %v8525
      %v8527 = vpop.f32.mrb[0].mxu0
      %8528 = vdwg.mxu0
      %v8529 = vadd.f32 %v8282, %v8422
      %v8530 = vadd.f32 %v8283, %v8424
      %v8531 = vadd.f32 %v8284, %v8511
      %v8532 = vadd.f32 %v8285, %v8428
      %v8533 = vadd.f32 %v8286, %v8430
      %v8534 = vadd.f32 %v8287, %v8516
      %v8535 = vadd.f32 %v8288, %v8434
      %v8536 = vadd.f32 %v8289, %v8436
      %v8537 = vadd.f32 %v8290, %v8521
      %v8538 = vadd.f32 %v8291, %v8440
      %v8539 = vadd.f32 %v8292, %v8442
      %v8540 = vadd.f32 %v8293, %v8526
      %8541 = vrot.lane.b32.xlu0 %v6562, 90
      %v8542 = vpop.permute.xlu0 %8541
      %8543 = vrot.lane.b32.xlu0 %v6563, 90
      %v8544 = vpop.permute.xlu0 %8543
      %8545 = vrot.lane.b32.xlu0 %v6564, 90
      %v8546 = vpop.permute.xlu0 %8545
      %8547 = vrot.lane.b32.xlu0 %v6566, 90
      %v8548 = vpop.permute.xlu0 %8547
      %8549 = vrot.lane.b32.xlu0 %v6567, 90
      %v8550 = vpop.permute.xlu0 %8549
      %8551 = vrot.lane.b32.xlu0 %v6568, 90
      %v8552 = vpop.permute.xlu0 %8551
      %8553 = vrot.lane.b32.xlu0 %v6570, 90
      %v8554 = vpop.permute.xlu0 %8553
      %8555 = vrot.lane.b32.xlu0 %v6571, 90
      %v8556 = vpop.permute.xlu0 %8555
      %8557 = vrot.lane.b32.xlu0 %v6572, 90
      %v8558 = vpop.permute.xlu0 %8557
      %8559 = vrot.lane.b32.xlu0 %v6574, 90
      %v8560 = vpop.permute.xlu0 %8559
      %8561 = vrot.lane.b32.xlu0 %v6575, 90
      %v8562 = vpop.permute.xlu0 %8561
      %8563 = vrot.lane.b32.xlu0 %v6576, 90
      %v8564 = vpop.permute.xlu0 %8563
      %vm8565 = vcmask 736256
      %v8566 = vsel %vm8565, %v8542, %v8544
      %v8567 = vsel %vm8565, %v8544, %v8546
      %v8568 = vsel %vm8565, %v8548, %v8550
      %v8569 = vsel %vm8565, %v8550, %v8552
      %v8570 = vsel %vm8565, %v8554, %v8556
      %v8571 = vsel %vm8565, %v8556, %v8558
      %v8572 = vsel %vm8565, %v8560, %v8562
      %v8573 = vsel %vm8565, %v8562, %v8564
      %v8587 = vsel %vm6662, %v6547, 0
      %v8590 = vsel %vm6662, %v6550, 0
      %v8593 = vsel %vm6662, %v6553, 0
      %v8596 = vsel %vm6662, %v6556, 0
      %8598 = vmatprep.subr.mxu0 %v8567
      %8599 = vmatpush1.msra.mxu0 %v8566
      %8600 = vmatprep.subr.mxu0 %v8569
      %8601 = vmatpush1.msra.mxu0 %v8568
      %8602 = vmatprep.subr.mxu0 %v8571
      %8603 = vmatpush1.msra.mxu0 %v8570
      %8604 = vmatprep.subr.mxu0 %v8573
      %8605 = vmatpush1.msra.mxu0 %v8572
      %8606 = vmatprep.subr.mxu0 0.0
      %8607 = vmatpush1.msra.mxu0 0.0
      %8608 = vmatprep.subr.mxu0 0.0
      %8609 = vmatpush1.msra.mxu0 0.0
      %8610 = vmatprep.subr.mxu0 0.0
      %8611 = vmatpush1.msra.mxu0 0.0
      %8612 = vmatprep.subr.mxu0 0.0
      %8613 = vmatpush1.msra.mxu0 0.0
      %8614 = vmatprep.subr.mxu0 0.0
      %8615 = vmatpush1.msra.mxu0 0.0
      %8616 = vmatprep.subr.mxu0 0.0
      %8617 = vmatpush1.msra.mxu0 0.0
      %8618 = vmatprep.subr.mxu0 0.0
      %8619 = vmatpush1.msra.mxu0 0.0
      %8620 = vmatprep.subr.mxu0 0.0
      %8621 = vmatpush1.msra.mxu0 0.0
      %8622 = vmatprep.subr.mxu0 0.0
      %8623 = vmatpush1.msra.mxu0 0.0
      %8624 = vmatprep.subr.mxu0 0.0
      %8625 = vmatpush1.msra.mxu0 0.0
      %8626 = vmatprep.subr.mxu0 0.0
      %8627 = vmatpush1.msra.mxu0 0.0
      %8628 = vmatprep.subr.mxu0 0.0
      %8629 = vmatpush1.msra.mxu0 0.0
      %8630 = vmatprep.subr.mxu0 0.0
      %8631 = vmatpush1.msra.mxu0 0.0
      %8632 = vmatprep.subr.mxu0 0.0
      %8633 = vmatpush1.msra.mxu0 0.0
      %8634 = vmatprep.subr.mxu0 0.0
      %8635 = vmatpush1.msra.mxu0 0.0
      %8636 = vmatprep.subr.mxu0 0.0
      %8637 = vmatpush1.msra.mxu0 0.0
      %8638 = vmatprep.subr.mxu0 0.0
      %8639 = vmatpush1.msra.mxu0 0.0
      %8640 = vmatprep.subr.mxu0 0.0
      %8641 = vmatpush1.msra.mxu0 0.0
      %8642 = vmatprep.subr.mxu0 0.0
      %8643 = vmatpush1.msra.mxu0 0.0
      %8644 = vmatprep.subr.mxu0 0.0
      %8645 = vmatpush1.msra.mxu0 0.0
      %8646 = vmatprep.subr.mxu0 0.0
      %8647 = vmatpush1.msra.mxu0 0.0
      %8648 = vmatprep.subr.mxu0 0.0
      %8649 = vmatpush1.msra.mxu0 0.0
      %8650 = vmatprep.subr.mxu0 0.0
      %8651 = vmatpush1.msra.mxu0 0.0
      %8652 = vmatprep.subr.mxu0 0.0
      %8653 = vmatpush1.msra.mxu0 0.0
      %8654 = vmatprep.subr.mxu0 0.0
      %8655 = vmatpush1.msra.mxu0 0.0
      %8656 = vmatprep.subr.mxu0 0.0
      %8657 = vmatpush1.msra.mxu0 0.0
      %8658 = vmatprep.subr.mxu0 0.0
      %8659 = vmatpush1.msra.mxu0 0.0
      %8660 = vmatprep.subr.mxu0 0.0
      %8661 = vmatpush1.msra.mxu0 0.0
      %8662 = vmatprep.mubr.f32.mxu0 0.0
      %8663 = vmatmul.mubr.f32.gmra.mrb[0].mxu0 %v8587
      %v8664 = vpop.f32.mrb[0].mxu0
      %v8665 = vadd.f32 0.0, %v8664
      %v8666 = vpop.f32.mrb[0].mxu0
      %v8667 = vadd.f32 0.0, %v8666
      %8668 = vmatprep.mubr.f32.mxu0 0.0
      %8669 = vmatmul.mubr.f32.gmra.mrb[0].mxu0 %v8590
      %v8670 = vpop.f32.mrb[0].mxu0
      %v8671 = vadd.f32 0.0, %v8670
      %v8672 = vpop.f32.mrb[0].mxu0
      %v8673 = vadd.f32 0.0, %v8672
      %8674 = vmatprep.mubr.f32.mxu0 0.0
      %8675 = vmatmul.mubr.f32.gmra.mrb[0].mxu0 %v8593
      %v8676 = vpop.f32.mrb[0].mxu0
      %v8677 = vadd.f32 0.0, %v8676
      %v8678 = vpop.f32.mrb[0].mxu0
      %v8679 = vadd.f32 0.0, %v8678
      %8680 = vmatprep.mubr.f32.mxu0 0.0
      %8681 = vmatmul.mubr.f32.gmra.mrb[0].mxu0 %v8596
      %v8682 = vpop.f32.mrb[0].mxu0
      %v8683 = vadd.f32 0.0, %v8682
      %v8684 = vpop.f32.mrb[0].mxu0
      %v8685 = vadd.f32 0.0, %v8684
      %8686 = vdwg.mxu0
      %8687 = vmatprep.subr.mxu0 0.0
      %8688 = vmatpush1.msra.mxu0 %v8546
      %8689 = vmatprep.subr.mxu0 0.0
      %8690 = vmatpush1.msra.mxu0 %v8552
      %8691 = vmatprep.subr.mxu0 0.0
      %8692 = vmatpush1.msra.mxu0 %v8558
      %8693 = vmatprep.subr.mxu0 0.0
      %8694 = vmatpush1.msra.mxu0 %v8564
      %8695 = vmatprep.subr.mxu0 0.0
      %8696 = vmatpush1.msra.mxu0 0.0
      %8697 = vmatprep.subr.mxu0 0.0
      %8698 = vmatpush1.msra.mxu0 0.0
      %8699 = vmatprep.subr.mxu0 0.0
      %8700 = vmatpush1.msra.mxu0 0.0
      %8701 = vmatprep.subr.mxu0 0.0
      %8702 = vmatpush1.msra.mxu0 0.0
      %8703 = vmatprep.subr.mxu0 0.0
      %8704 = vmatpush1.msra.mxu0 0.0
      %8705 = vmatprep.subr.mxu0 0.0
      %8706 = vmatpush1.msra.mxu0 0.0
      %8707 = vmatprep.subr.mxu0 0.0
      %8708 = vmatpush1.msra.mxu0 0.0
      %8709 = vmatprep.subr.mxu0 0.0
      %8710 = vmatpush1.msra.mxu0 0.0
      %8711 = vmatprep.subr.mxu0 0.0
      %8712 = vmatpush1.msra.mxu0 0.0
      %8713 = vmatprep.subr.mxu0 0.0
      %8714 = vmatpush1.msra.mxu0 0.0
      %8715 = vmatprep.subr.mxu0 0.0
      %8716 = vmatpush1.msra.mxu0 0.0
      %8717 = vmatprep.subr.mxu0 0.0
      %8718 = vmatpush1.msra.mxu0 0.0
      %8719 = vmatprep.subr.mxu0 0.0
      %8720 = vmatpush1.msra.mxu0 0.0
      %8721 = vmatprep.subr.mxu0 0.0
      %8722 = vmatpush1.msra.mxu0 0.0
      %8723 = vmatprep.subr.mxu0 0.0
      %8724 = vmatpush1.msra.mxu0 0.0
      %8725 = vmatprep.subr.mxu0 0.0
      %8726 = vmatpush1.msra.mxu0 0.0
      %8727 = vmatprep.subr.mxu0 0.0
      %8728 = vmatpush1.msra.mxu0 0.0
      %8729 = vmatprep.subr.mxu0 0.0
      %8730 = vmatpush1.msra.mxu0 0.0
      %8731 = vmatprep.subr.mxu0 0.0
      %8732 = vmatpush1.msra.mxu0 0.0
      %8733 = vmatprep.subr.mxu0 0.0
      %8734 = vmatpush1.msra.mxu0 0.0
      %8735 = vmatprep.subr.mxu0 0.0
      %8736 = vmatpush1.msra.mxu0 0.0
      %8737 = vmatprep.subr.mxu0 0.0
      %8738 = vmatpush1.msra.mxu0 0.0
      %8739 = vmatprep.subr.mxu0 0.0
      %8740 = vmatpush1.msra.mxu0 0.0
      %8741 = vmatprep.subr.mxu0 0.0
      %8742 = vmatpush1.msra.mxu0 0.0
      %8743 = vmatprep.subr.mxu0 0.0
      %8744 = vmatpush1.msra.mxu0 0.0
      %8745 = vmatprep.subr.mxu0 0.0
      %8746 = vmatpush1.msra.mxu0 0.0
      %8747 = vmatprep.subr.mxu0 0.0
      %8748 = vmatpush1.msra.mxu0 0.0
      %8749 = vmatprep.subr.mxu0 0.0
      %8750 = vmatpush1.msra.mxu0 0.0
      %8751 = vmatprep.mubr.f32.mxu0 0.0
      %8752 = vmatmul.mubr.f32.gmra.mrb[0].mxu0 %v8587
      %v8753 = vpop.f32.mrb[0].mxu0
      %v8754 = vadd.f32 0.0, %v8753
      %v8755 = vpop.f32.mrb[0].mxu0
      %8756 = vmatprep.mubr.f32.mxu0 0.0
      %8757 = vmatmul.mubr.f32.gmra.mrb[0].mxu0 %v8590
      %v8758 = vpop.f32.mrb[0].mxu0
      %v8759 = vadd.f32 0.0, %v8758
      %v8760 = vpop.f32.mrb[0].mxu0
      %8761 = vmatprep.mubr.f32.mxu0 0.0
      %8762 = vmatmul.mubr.f32.gmra.mrb[0].mxu0 %v8593
      %v8763 = vpop.f32.mrb[0].mxu0
      %v8764 = vadd.f32 0.0, %v8763
      %v8765 = vpop.f32.mrb[0].mxu0
      %8766 = vmatprep.mubr.f32.mxu0 0.0
      %8767 = vmatmul.mubr.f32.gmra.mrb[0].mxu0 %v8596
      %v8768 = vpop.f32.mrb[0].mxu0
      %v8769 = vadd.f32 0.0, %v8768
      %v8770 = vpop.f32.mrb[0].mxu0
      %8771 = vdwg.mxu0
      %v8772 = vadd.f32 %v8529, %v8665
      %v8773 = vadd.f32 %v8530, %v8667
      %v8774 = vadd.f32 %v8531, %v8754
      %v8775 = vadd.f32 %v8532, %v8671
      %v8776 = vadd.f32 %v8533, %v8673
      %v8777 = vadd.f32 %v8534, %v8759
      %v8778 = vadd.f32 %v8535, %v8677
      %v8779 = vadd.f32 %v8536, %v8679
      %v8780 = vadd.f32 %v8537, %v8764
      %v8781 = vadd.f32 %v8538, %v8683
      %v8782 = vadd.f32 %v8539, %v8685
      %v8783 = vadd.f32 %v8540, %v8769
      %8785 = vset.pattern.permute.xlu0 0
      %8786 = vperm.xlu0 %8785, %v6557
      %v8787 = vpop.permute.xlu0 %8786
      %8790 = vset.pattern.permute.xlu0 0
      %8791 = vperm.xlu0 %8790, %v6558
      %v8792 = vpop.permute.xlu0 %8791
      %8795 = vset.pattern.permute.xlu0 0
      %8796 = vperm.xlu0 %8795, %v6559
      %v8797 = vpop.permute.xlu0 %8796
      %8800 = vset.pattern.permute.xlu0 0
      %8801 = vperm.xlu0 %8800, %v6560
      %v8802 = vpop.permute.xlu0 %8801
      %v8804 = vadd.f32 %v8772, %v8787
      %v8805 = vadd.f32 %v8773, %v8787
      %v8806 = vadd.f32 %v8774, %v8787
      %v8807 = vadd.f32 %v8775, %v8792
      %v8808 = vadd.f32 %v8776, %v8792
      %v8809 = vadd.f32 %v8777, %v8792
      %v8810 = vadd.f32 %v8778, %v8797
      %v8811 = vadd.f32 %v8779, %v8797
      %v8812 = vadd.f32 %v8780, %v8797
      %v8813 = vadd.f32 %v8781, %v8802
      %v8814 = vadd.f32 %v8782, %v8802
      %v8815 = vadd.f32 %v8783, %v8802
      %v8816 = vadd.f32 %v8804, %v6438
      %v8817 = vadd.f32 %v8805, %v6440
      %v8818 = vadd.f32 %v8806, %v6527
      %v8819 = vadd.f32 %v8807, %v6444
      %v8820 = vadd.f32 %v8808, %v6446
      %v8821 = vadd.f32 %v8809, %v6532
      %v8822 = vadd.f32 %v8810, %v6450
      %v8823 = vadd.f32 %v8811, %v6452
      %v8824 = vadd.f32 %v8812, %v6537
      %v8825 = vadd.f32 %v8813, %v6456
      %v8826 = vadd.f32 %v8814, %v6458
      %v8827 = vadd.f32 %v8815, %v6542
      %v8828 = vmax.f32 %v8816, 0.0
      %v8829 = vmax.f32 %v8817, 0.0
      %v8830 = vmax.f32 %v8818, 0.0
      %v8831 = vmax.f32 %v8819, 0.0
      %v8832 = vmax.f32 %v8820, 0.0
      %v8833 = vmax.f32 %v8821, 0.0
      %v8834 = vmax.f32 %v8822, 0.0
      %v8835 = vmax.f32 %v8823, 0.0
      %v8836 = vmax.f32 %v8824, 0.0
      %v8837 = vmax.f32 %v8825, 0.0
      %v8838 = vmax.f32 %v8826, 0.0
      %v8839 = vmax.f32 %v8827, 0.0
      %v8841 = vlaneseq
      %v8842 = vshrl.u32 %v8841, 7
      %v8843 = vsub.s32 0, %v8842
      %v8844 = vrot.slane %v522, %v8843
      %v8845 = vlaneseq
      %v8846 = vshrl.u32 %v8845, 7
      %v8847 = vsub.s32 1, %v8846
      %v8848 = vrot.slane %v522, %v8847
      %v8849 = vlaneseq
      %v8850 = vshrl.u32 %v8849, 7
      %v8851 = vsub.s32 2, %v8850
      %v8852 = vrot.slane %v522, %v8851
      %v8856 = vmul.f32 %v8828, %v8844
      %v8857 = vmul.f32 %v8829, %v8848
      %v8858 = vmul.f32 %v8830, %v8852
      %v8859 = vmul.f32 %v8831, %v8844
      %v8860 = vmul.f32 %v8832, %v8848
      %v8861 = vmul.f32 %v8833, %v8852
      %v8862 = vmul.f32 %v8834, %v8844
      %v8863 = vmul.f32 %v8835, %v8848
      %v8864 = vmul.f32 %v8836, %v8852
      %v8865 = vmul.f32 %v8837, %v8844
      %v8866 = vmul.f32 %v8838, %v8848
      %v8867 = vmul.f32 %v8839, %v8852
      %v8868 = vadd.f32 %v8856, %v8857
      %v8869 = vsel %vm527, %v8858, 0.0
      %v8870 = vadd.f32 %v8868, %v8869
      %8871 = vadd.xlane.f32.xlu0 %v8870
      %v8872 = vpop.xlane.xlu0 %8871
      %v8873 = vadd.f32 %v8859, %v8860
      %v8874 = vsel %vm527, %v8861, 0.0
      %v8875 = vadd.f32 %v8873, %v8874
      %8876 = vadd.xlane.f32.xlu0 %v8875
      %v8877 = vpop.xlane.xlu0 %8876
      %v8878 = vadd.f32 %v8862, %v8863
      %v8879 = vsel %vm527, %v8864, 0.0
      %v8880 = vadd.f32 %v8878, %v8879
      %8881 = vadd.xlane.f32.xlu0 %v8880
      %v8882 = vpop.xlane.xlu0 %8881
      %v8883 = vadd.f32 %v8865, %v8866
      %v8884 = vsel %vm527, %v8867, 0.0
      %v8885 = vadd.f32 %v8883, %v8884
      %8886 = vadd.xlane.f32.xlu0 %v8885
      %v8887 = vpop.xlane.xlu0 %8886
      %v8888 = vld [vmem:[%s14] sm:$0x3]
      %v8889 = vld [vmem:[%s15] sm:$0x3]
      %v8891 = vsel %vm6662, %v8888, 0
      %8893 = vmatprep.subr.mxu0 0.0
      %8894 = vmatpush1.msra.mxu0 %v8872
      %8895 = vmatprep.subr.mxu0 0.0
      %8896 = vmatpush1.msra.mxu0 %v8877
      %8897 = vmatprep.subr.mxu0 0.0
      %8898 = vmatpush1.msra.mxu0 %v8882
      %8899 = vmatprep.subr.mxu0 0.0
      %8900 = vmatpush1.msra.mxu0 %v8887
      %8901 = vmatprep.subr.mxu0 0.0
      %8902 = vmatpush1.msra.mxu0 0.0
      %8903 = vmatprep.subr.mxu0 0.0
      %8904 = vmatpush1.msra.mxu0 0.0
      %8905 = vmatprep.subr.mxu0 0.0
      %8906 = vmatpush1.msra.mxu0 0.0
      %8907 = vmatprep.subr.mxu0 0.0
      %8908 = vmatpush1.msra.mxu0 0.0
      %8909 = vmatprep.subr.mxu0 0.0
      %8910 = vmatpush1.msra.mxu0 0.0
      %8911 = vmatprep.subr.mxu0 0.0
      %8912 = vmatpush1.msra.mxu0 0.0
      %8913 = vmatprep.subr.mxu0 0.0
      %8914 = vmatpush1.msra.mxu0 0.0
      %8915 = vmatprep.subr.mxu0 0.0
      %8916 = vmatpush1.msra.mxu0 0.0
      %8917 = vmatprep.subr.mxu0 0.0
      %8918 = vmatpush1.msra.mxu0 0.0
      %8919 = vmatprep.subr.mxu0 0.0
      %8920 = vmatpush1.msra.mxu0 0.0
      %8921 = vmatprep.subr.mxu0 0.0
      %8922 = vmatpush1.msra.mxu0 0.0
      %8923 = vmatprep.subr.mxu0 0.0
      %8924 = vmatpush1.msra.mxu0 0.0
      %8925 = vmatprep.subr.mxu0 0.0
      %8926 = vmatpush1.msra.mxu0 0.0
      %8927 = vmatprep.subr.mxu0 0.0
      %8928 = vmatpush1.msra.mxu0 0.0
      %8929 = vmatprep.subr.mxu0 0.0
      %8930 = vmatpush1.msra.mxu0 0.0
      %8931 = vmatprep.subr.mxu0 0.0
      %8932 = vmatpush1.msra.mxu0 0.0
      %8933 = vmatprep.subr.mxu0 0.0
      %8934 = vmatpush1.msra.mxu0 0.0
      %8935 = vmatprep.subr.mxu0 0.0
      %8936 = vmatpush1.msra.mxu0 0.0
      %8937 = vmatprep.subr.mxu0 0.0
      %8938 = vmatpush1.msra.mxu0 0.0
      %8939 = vmatprep.subr.mxu0 0.0
      %8940 = vmatpush1.msra.mxu0 0.0
      %8941 = vmatprep.subr.mxu0 0.0
      %8942 = vmatpush1.msra.mxu0 0.0
      %8943 = vmatprep.subr.mxu0 0.0
      %8944 = vmatpush1.msra.mxu0 0.0
      %8945 = vmatprep.subr.mxu0 0.0
      %8946 = vmatpush1.msra.mxu0 0.0
      %8947 = vmatprep.subr.mxu0 0.0
      %8948 = vmatpush1.msra.mxu0 0.0
      %8949 = vmatprep.subr.mxu0 0.0
      %8950 = vmatpush1.msra.mxu0 0.0
      %8951 = vmatprep.subr.mxu0 0.0
      %8952 = vmatpush1.msra.mxu0 0.0
      %8953 = vmatprep.subr.mxu0 0.0
      %8954 = vmatpush1.msra.mxu0 0.0
      %8955 = vmatprep.subr.mxu0 0.0
      %8956 = vmatpush1.msra.mxu0 0.0
      %8957 = vmatprep.mubr.f32.mxu0 0.0
      %8958 = vmatmul.mubr.f32.gmra.mrb[0].mxu0 %v8891
      %v8959 = vpop.f32.mrb[0].mxu0
      %v8960 = vadd.f32 %v8889, %v8959
      %v8961 = vpop.f32.mrb[0].mxu0
      %8962 = vdwg.mxu0
      %vm8963 = vcmask 1024
      %v8964 = vsel %vm8963, %v8960, -inf
      %v8965 = vrot.slane %v8964, 4
      %v8966 = vmax.f32 %v8964, %v8965
      %v8967 = vrot.slane %v8966, 2
      %v8968 = vmax.f32 %v8966, %v8967
      %v8969 = vrot.slane %v8968, 1
      %v8970 = vmax.f32 %v8968, %v8969
      %v8971 = vsub.f32 %v8960, %v8970
      %v8972 = vmul.f32 %v8971, 1.442695
      %v8973 = vpow.pop %v8972
      %v8974 = vsel %vm8963, %v8973, 0.0
      %v8975 = vrot.slane %v8974, 4
      %v8976 = vadd.f32 %v8974, %v8975
      %v8977 = vrot.slane %v8976, 2
      %v8978 = vadd.f32 %v8976, %v8977
      %v8979 = vrot.slane %v8978, 1
      %v8980 = vadd.f32 %v8978, %v8979
      %v8981 = vlog2.pop %v8980
      %v8982 = vmul.f32 %v8981, 0.6931472
      %v8983 = vsub.f32 %v8971, %v8982
      %8984 = vst.msk [vmem:[%s519] sm:$0x3] %vm8963, %v8983
      %p8985 = scmp.lt.s32.totalorder %s27, 1
      %s8986 = scalar_select %p8985, %s27, 1
      %s8987 = smul.addr %s8986, 2
      %s8988 = scalar_lea.vmem %s16, %s8987
      // Predicated region
      $region85: #{shallow_resnet_forward.1} parent=83 // pred_check
        %p8989 = pneg %p386
      $region86: #{shallow_resnet_forward.1} parent=83 // pred_check_branch
        %8991 = sbr.rel (%p8989) target = $region88
      $region87: #{shallow_resnet_forward.1} parent=83 // pred_region
        _
      $region88: #{shallow_resnet_forward.1} parent=83 // pred_fallthru
        _
    $region84: #{shallow_resnet_forward.1} parent=5 // pred_fallthru
      _
    %p8992 = scmp.le.s32.totalorder 2, %s22
    // Predicated region
    $region89: #{shallow_resnet_forward.1} parent=5 // pred_check
      %p8993 = pneg %p8992
    $region90: #{shallow_resnet_forward.1} parent=5 // pred_check_branch
      %8995 = sbr.rel (%p8993) target = $region92
    $region91: #{shallow_resnet_forward.1} parent=5 // pred_region
      %s8996 = ssub.s32 %s22, 2
      // Predicated region
      $region93: #{shallow_resnet_forward.1} parent=91 // pred_check
        %p8997 = pneg %p392
      $region94: #{shallow_resnet_forward.1} parent=91 // pred_check_branch
        %8999 = sbr.rel (%p8997) target = $region96
      $region95: #{shallow_resnet_forward.1} parent=91 // pred_region
        %p9000 = scmp.lt.s32.totalorder %s28, 1
        %s9001 = scalar_select %p9000, %s28, 1
        %s9002 = smul.addr %s9001, 2
        %s9003 = scalar_lea.vmem %s16, %s9002
      $region96: #{shallow_resnet_forward.1} parent=91 // pred_fallthru
        _
    $region92: #{shallow_resnet_forward.1} parent=5 // pred_fallthru
      _
  $region6: #{shallow_resnet_forward.1} parent=0 // loop_footer
    %s26 = sadd.s32 1, %s22
  $region7: #{shallow_resnet_forward.1} parent=0 // loop_footer_branch
    %21 = sbr.rel target = $region3
  $region8: #{shallow_resnet_forward.1} parent=0 // loop_exit
    _

</llo_original>
